<compile_context>
chip_gen: v7x
topology: tpu7x:2x2x1
jax: 0.10.0
libtpu: 0.0.40
codegen_flags: <defaults>
</compile_context>

<pallas_src>
import math

import numpy as np
import jax
import jax.numpy as jnp
from jax import lax
from jax.experimental import pallas as pl
from jax.experimental.pallas import tpu as pltpu


# (name, Cin, Cout) for every fused "3x3 conv + BN(inference) + ReLU" block, in
# the order they are passed to (and consumed by) the fused kernel.
# Config: channels = [8, 16, 32, 64], down_ratio = 2 -> first_level = 1,
#         last_level = 3, planes = 16.
_CONVS = (
    # synthetic base pyramid (strides 1, 2, 4, 8)
    ('base0', 3, 8), ('base1', 8, 16), ('base2', 16, 32), ('base3', 32, 64),
    # DLAUp.ida_0  (inplanes [32, 64] -> plane 32)
    ('dla_ida0_proj1', 64, 32), ('dla_ida0_node1', 32, 32),
    # DLAUp.ida_1  (inplanes [16, 32, 32] -> plane 16)
    ('dla_ida1_proj1', 32, 16), ('dla_ida1_node1', 16, 16),
    ('dla_ida1_proj2', 32, 16), ('dla_ida1_node2', 16, 16),
    # DLACompose.ida_up (inplanes [16, 32] -> plane 16)
    ('ida_up_proj1', 32, 16), ('ida_up_node1', 16, 16),
)


# ----------------------------------------------------------------------------
# Constant matrices (host-side, trace-time): stride-2 selection & bilinear 2x
# upsample over flat spatial indices.  Largest is (64, 256) f32 = 64 KiB.
# ----------------------------------------------------------------------------
def _subsample_matrix(H, W):
    """S so that S @ flat(y) == flat(y[::2, ::2, :]) for a (H, W, C) map."""
    H2, W2 = H // 2, W // 2
    S = np.zeros((H2 * W2, H * W), np.float32)
    for i in range(H2):
        for j in range(W2):
            S[i * W2 + j, (2 * i) * W + 2 * j] = 1.0
    return jnp.asarray(S)


def _upsample_matrix(H, W):
    """B so that B @ flat(x) == flat(ConvTranspose2d(C,C,4,2,1,groups=C)(x)) with
    fill_up_weights (separable [0.25, 0.75, 0.75, 0.25] bilinear kernel)."""
    g = np.array([0.25, 0.75, 0.75, 0.25], np.float32)
    B = np.zeros((4 * H * W, H * W), np.float32)
    for hh in range(2 * H):
        for ww in range(2 * W):
            for m in range(H):
                for n in range(W):
                    di, dj = hh + 1 - 2 * m, ww + 1 - 2 * n
                    if 0 <= di < 4 and 0 <= dj < 4:
                        B[hh * 2 * W + ww, m * W + n] = g[di] * g[dj]
    return jnp.asarray(B)


# ----------------------------------------------------------------------------
# The single fused kernel: one batch element per grid step.
# ----------------------------------------------------------------------------
def _dla_fused_kernel(*refs):
    x_ref = refs[0]
    wb = {name: (refs[1 + 2 * i], refs[2 + 2 * i])
          for i, (name, _, _) in enumerate(_CONVS)}
    base = 1 + 2 * len(_CONVS)
    s16_ref, s8_ref, s4_ref = refs[base], refs[base + 1], refs[base + 2]
    up2_ref, up4_ref = refs[base + 3], refs[base + 4]
    o_ref = refs[-1]

    def conv3x3(x, H, W, name, residual=None):
        """3x3 conv (pad=1, stride=1) + folded-BN bias + ReLU on a flat (H*W, Cin) map.
        im2col is built with masked sublane shifts -> one MXU matmul per conv."""
        if residual is not None:                       # IDAUp node: conv(x + skip)
            x = x + residual
        R, cin = H * W, x.shape[1]
        # column (w) index of each flat row; W is a power of two.
        w_pos = lax.broadcasted_iota(jnp.int32, (R, cin), 0) & (W - 1)
        pieces = []
        for dh in (-1, 0, 1):
            for dw in (-1, 0, 1):
                s = dh * W + dw                        # flat-index shift
                if s > 0:
                    sh = jnp.concatenate(
                        [x[s:], jnp.zeros((s, cin), x.dtype)], axis=0)
                elif s < 0:
                    sh = jnp.concatenate(
                        [jnp.zeros((-s, cin), x.dtype), x[:R + s]], axis=0)
                else:
                    sh = x
                if dw == -1:                           # no left neighbour at w == 0
                    sh = jnp.where(w_pos == 0, 0.0, sh)
                elif dw == 1:                          # no right neighbour at w == W-1
                    sh = jnp.where(w_pos == W - 1, 0.0, sh)
                pieces.append(sh)
        patch = jnp.concatenate(pieces, axis=1)        # (H*W, 9*Cin), (kh,kw,ci) order
        wf = wb[name][0][...]                          # (9*Cin, Cout)  BN scale folded
        b = wb[name][1][...]                           # (1, Cout)
        y = jnp.dot(patch, wf, preferred_element_type=jnp.float32) + b
        return jnp.maximum(y, 0.0)

    def mm(a_ref, y):                                  # constant-matrix multiply
        return jnp.dot(a_ref[...], y, preferred_element_type=jnp.float32)

    x = x_ref[0]                                       # (256, 3)

    # ---- base(x): feature pyramid, strides 1, 2, 4, 8 ----
    l0 = conv3x3(x, 16, 16, 'base0')                   # (256,  8)   16x16
    l1 = mm(s16_ref, conv3x3(l0, 16, 16, 'base1'))     # ( 64, 16)    8x8
    l2 = mm(s8_ref, conv3x3(l1, 8, 8, 'base2'))        # ( 16, 32)    4x4
    l3 = mm(s4_ref, conv3x3(l2, 4, 4, 'base3'))        # (  4, 64)    2x2

    # ---- DLAUp.ida_0 : layers[3] = node(up(proj(layers[3])) + layers[2]) ----
    t = mm(up2_ref, conv3x3(l3, 2, 2, 'dla_ida0_proj1'))     # ( 16, 32)  4x4
    l3a = conv3x3(t, 4, 4, 'dla_ida0_node1', residual=l2)    # ( 16, 32)

    # ---- DLAUp.ida_1 : i = 2 then i = 3 ----
    t = mm(up4_ref, conv3x3(l2, 4, 4, 'dla_ida1_proj1'))     # ( 64, 16)  8x8
    l2a = conv3x3(t, 8, 8, 'dla_ida1_node1', residual=l1)    # ( 64, 16)
    t = mm(up4_ref, conv3x3(l3a, 4, 4, 'dla_ida1_proj2'))    # ( 64, 16)
    l3b = conv3x3(t, 8, 8, 'dla_ida1_node2', residual=l2a)   # ( 64, 16)

    # ---- IDAUp over y = [out[0], out[1]] = [l3b, l3a] ----
    t = mm(up4_ref, conv3x3(l3a, 4, 4, 'ida_up_proj1'))      # ( 64, 16)
    y1 = conv3x3(t, 8, 8, 'ida_up_node1', residual=l3b)      # ( 64, 16)

    o_ref[0] = y1


# ----------------------------------------------------------------------------
# Wrapper
# ----------------------------------------------------------------------------
def dla_compose_forward(x, params):
    """x: (N, 16, 16, 3) NHWC -> (N, 8, 8, 16)  (down_ratio=2, planes=16)."""
    N, H, W, Cin = x.shape
    assert (H, W, Cin) == (16, 16, 3)

    args = [x.reshape(N, H * W, Cin).astype(jnp.float32)]
    in_specs = [pl.BlockSpec((1, H * W, Cin), lambda n: (n, 0, 0))]

    for name, cin, cout in _CONVS:
        w, scale, bias = params[name]
        # Fold the BN scale into the conv weights; BN bias applied in-kernel.
        wf = (w * scale[None, None, None, :]).reshape(9 * cin, cout).astype(jnp.float32)
        b = bias.reshape(1, cout).astype(jnp.float32)
        args += [wf, b]
        in_specs += [pl.BlockSpec((9 * cin, cout), lambda n: (0, 0)),
                     pl.BlockSpec((1, cout), lambda n: (0, 0))]

    consts = [_subsample_matrix(16, 16), _subsample_matrix(8, 8),
              _subsample_matrix(4, 4), _upsample_matrix(2, 2), _upsample_matrix(4, 4)]
    for c in consts:
        args.append(c)
        in_specs.append(pl.BlockSpec(c.shape, lambda n: (0, 0)))

    out_flat = pl.pallas_call(
        _dla_fused_kernel,
        out_shape=jax.ShapeDtypeStruct((N, (H // 2) * (W // 2), 16), jnp.float32),
        grid=(N,),
        in_specs=in_specs,
        out_specs=pl.BlockSpec((1, (H // 2) * (W // 2), 16), lambda n: (n, 0, 0)),
        compiler_params=pltpu.CompilerParams(dimension_semantics=("parallel",)),
    )(*args)
    return out_flat.reshape(N, H // 2, W // 2, 16)


# ----------------------------------------------------------------------------
# Deterministic synthetic parameters (BN in inference mode, mean=0, var=1)
# ----------------------------------------------------------------------------
def init_params(key):
    eps = 1e-5
    params = {}
    for i, (name, cin, cout) in enumerate(_CONVS):
        k = jax.random.fold_in(key, i)
        kw_, kg, kb = jax.random.split(k, 3)
        w = jax.random.normal(kw_, (3, 3, cin, cout), jnp.float32) / math.sqrt(9 * cin)
        gamma = 1.0 + 0.1 * jax.random.normal(kg, (cout,), jnp.float32)
        beta = 0.1 * jax.random.normal(kb, (cout,), jnp.float32)
        scale = gamma / jnp.sqrt(1.0 + eps)
        params[name] = (w, scale, beta)
    return params


# ----------------------------------------------------------------------------
# Pure-JAX (XLA conv) reference used only for the runtime sanity check.
# ----------------------------------------------------------------------------
def _ref_conv_bn_relu(x, param, stride=1):
    w, scale, bias = param
    y = lax.conv_general_dilated(
        x, w * scale[None, None, None, :], (stride, stride), ((1, 1), (1, 1)),
        dimension_numbers=('NHWC', 'HWIO', 'NHWC'),
        precision=lax.Precision.HIGHEST)
    return jnp.maximum(y + bias, 0.0)


def _ref_upsample2x(x):
    # depthwise ConvTranspose2d(C, C, 4, stride=2, pad=1, groups=C), fill_up_weights,
    # written as an lhs-dilated conv (kernel is symmetric -> no flip needed).
    C = x.shape[-1]
    g = jnp.array([0.25, 0.75, 0.75, 0.25], jnp.float32)
    k = jnp.tile((g[:, None] * g[None, :])[:, :, None, None], (1, 1, 1, C))
    return lax.conv_general_dilated(
        x, k, window_strides=(1, 1), padding=((2, 2), (2, 2)),
        lhs_dilation=(2, 2), dimension_numbers=('NHWC', 'HWIO', 'NHWC'),
        feature_group_count=C, precision=lax.Precision.HIGHEST)


def dla_compose_reference(x, P):
    c, up = _ref_conv_bn_relu, _ref_upsample2x
    l0 = c(x, P['base0'])
    l1 = c(l0, P['base1'], stride=2)
    l2 = c(l1, P['base2'], stride=2)
    l3 = c(l2, P['base3'], stride=2)
    l3a = c(up(c(l3, P['dla_ida0_proj1'])) + l2, P['dla_ida0_node1'])
    l2a = c(up(c(l2, P['dla_ida1_proj1'])) + l1, P['dla_ida1_node1'])
    l3b = c(up(c(l3a, P['dla_ida1_proj2'])) + l2a, P['dla_ida1_node2'])
    y1 = c(up(c(l3a, P['ida_up_proj1'])) + l3b, P['ida_up_node1'])
    return y1


if __name__ == "__main__":
    key = jax.random.PRNGKey(0)
    k_x, k_p = jax.random.split(key)
    N, H, W = 2, 16, 16
    x = jax.random.normal(k_x, (N, H, W, 3), jnp.float32)   # NHWC (== NCHW (2, 3, 16, 16))
    params = init_params(k_p)

    out = jax.jit(dla_compose_forward)(x, params)
    out = jax.block_until_ready(out)
    assert out.shape == (N, H // 2, W // 2, 16), out.shape
    assert bool(jnp.all(jnp.isfinite(out)))

    # sanity check the fused Pallas kernel against the pure-JAX reference
    ref = dla_compose_reference(x, params)
    max_err = float(jnp.max(jnp.abs(out - ref)))
    assert max_err < 5e-2, f"mismatch vs reference: max abs err = {max_err}"

    print("KERNEL_OK")
</pallas_src>

<mosaic_0001>
module attributes {stable_mosaic.version = 11 : i64} {
  func.func @_dla_fused_kernel(%arg0: i32, %arg1: memref<1x256x3xf32, #tpu.memory_space<vmem>>, %arg2: memref<27x8xf32, #tpu.memory_space<vmem>>, %arg3: memref<1x8xf32, #tpu.memory_space<vmem>>, %arg4: memref<72x16xf32, #tpu.memory_space<vmem>>, %arg5: memref<1x16xf32, #tpu.memory_space<vmem>>, %arg6: memref<144x32xf32, #tpu.memory_space<vmem>>, %arg7: memref<1x32xf32, #tpu.memory_space<vmem>>, %arg8: memref<288x64xf32, #tpu.memory_space<vmem>>, %arg9: memref<1x64xf32, #tpu.memory_space<vmem>>, %arg10: memref<576x32xf32, #tpu.memory_space<vmem>>, %arg11: memref<1x32xf32, #tpu.memory_space<vmem>>, %arg12: memref<288x32xf32, #tpu.memory_space<vmem>>, %arg13: memref<1x32xf32, #tpu.memory_space<vmem>>, %arg14: memref<288x16xf32, #tpu.memory_space<vmem>>, %arg15: memref<1x16xf32, #tpu.memory_space<vmem>>, %arg16: memref<144x16xf32, #tpu.memory_space<vmem>>, %arg17: memref<1x16xf32, #tpu.memory_space<vmem>>, %arg18: memref<288x16xf32, #tpu.memory_space<vmem>>, %arg19: memref<1x16xf32, #tpu.memory_space<vmem>>, %arg20: memref<144x16xf32, #tpu.memory_space<vmem>>, %arg21: memref<1x16xf32, #tpu.memory_space<vmem>>, %arg22: memref<288x16xf32, #tpu.memory_space<vmem>>, %arg23: memref<1x16xf32, #tpu.memory_space<vmem>>, %arg24: memref<144x16xf32, #tpu.memory_space<vmem>>, %arg25: memref<1x16xf32, #tpu.memory_space<vmem>>, %arg26: memref<64x256xf32, #tpu.memory_space<vmem>>, %arg27: memref<16x64xf32, #tpu.memory_space<vmem>>, %arg28: memref<4x16xf32, #tpu.memory_space<vmem>>, %arg29: memref<16x4xf32, #tpu.memory_space<vmem>>, %arg30: memref<64x16xf32, #tpu.memory_space<vmem>>, %arg31: memref<1x64x16xf32, #tpu.memory_space<vmem>>) attributes {dimension_semantics = [#tpu.dimension_semantics<parallel>], iteration_bounds = array<i64: 2>, scalar_prefetch = 0 : i64, scratch_operands = 0 : i64, tpu.core_type = #tpu.core_type<tc>, window_params = [{transform_indices = @transform_0, window_bounds = array<i64: 1, 256, 3>}, {pipeline_mode = #tpu.pipeline_mode<synchronous>, transform_indices = @transform_1, window_bounds = array<i64: 27, 8>}, {pipeline_mode = #tpu.pipeline_mode<synchronous>, transform_indices = @transform_2, window_bounds = array<i64: 1, 8>}, {pipeline_mode = #tpu.pipeline_mode<synchronous>, transform_indices = @transform_3, window_bounds = array<i64: 72, 16>}, {pipeline_mode = #tpu.pipeline_mode<synchronous>, transform_indices = @transform_4, window_bounds = array<i64: 1, 16>}, {pipeline_mode = #tpu.pipeline_mode<synchronous>, transform_indices = @transform_5, window_bounds = array<i64: 144, 32>}, {pipeline_mode = #tpu.pipeline_mode<synchronous>, transform_indices = @transform_6, window_bounds = array<i64: 1, 32>}, {pipeline_mode = #tpu.pipeline_mode<synchronous>, transform_indices = @transform_7, window_bounds = array<i64: 288, 64>}, {pipeline_mode = #tpu.pipeline_mode<synchronous>, transform_indices = @transform_8, window_bounds = array<i64: 1, 64>}, {pipeline_mode = #tpu.pipeline_mode<synchronous>, transform_indices = @transform_9, window_bounds = array<i64: 576, 32>}, {pipeline_mode = #tpu.pipeline_mode<synchronous>, transform_indices = @transform_10, window_bounds = array<i64: 1, 32>}, {pipeline_mode = #tpu.pipeline_mode<synchronous>, transform_indices = @transform_11, window_bounds = array<i64: 288, 32>}, {pipeline_mode = #tpu.pipeline_mode<synchronous>, transform_indices = @transform_12, window_bounds = array<i64: 1, 32>}, {pipeline_mode = #tpu.pipeline_mode<synchronous>, transform_indices = @transform_13, window_bounds = array<i64: 288, 16>}, {pipeline_mode = #tpu.pipeline_mode<synchronous>, transform_indices = @transform_14, window_bounds = array<i64: 1, 16>}, {pipeline_mode = #tpu.pipeline_mode<synchronous>, transform_indices = @transform_15, window_bounds = array<i64: 144, 16>}, {pipeline_mode = #tpu.pipeline_mode<synchronous>, transform_indices = @transform_16, window_bounds = array<i64: 1, 16>}, {pipeline_mode = #tpu.pipeline_mode<synchronous>, transform_indices = @transform_17, window_bounds = array<i64: 288, 16>}, {pipeline_mode = #tpu.pipeline_mode<synchronous>, transform_indices = @transform_18, window_bounds = array<i64: 1, 16>}, {pipeline_mode = #tpu.pipeline_mode<synchronous>, transform_indices = @transform_19, window_bounds = array<i64: 144, 16>}, {pipeline_mode = #tpu.pipeline_mode<synchronous>, transform_indices = @transform_20, window_bounds = array<i64: 1, 16>}, {pipeline_mode = #tpu.pipeline_mode<synchronous>, transform_indices = @transform_21, window_bounds = array<i64: 288, 16>}, {pipeline_mode = #tpu.pipeline_mode<synchronous>, transform_indices = @transform_22, window_bounds = array<i64: 1, 16>}, {pipeline_mode = #tpu.pipeline_mode<synchronous>, transform_indices = @transform_23, window_bounds = array<i64: 144, 16>}, {pipeline_mode = #tpu.pipeline_mode<synchronous>, transform_indices = @transform_24, window_bounds = array<i64: 1, 16>}, {pipeline_mode = #tpu.pipeline_mode<synchronous>, transform_indices = @transform_25, window_bounds = array<i64: 64, 256>}, {pipeline_mode = #tpu.pipeline_mode<synchronous>, transform_indices = @transform_26, window_bounds = array<i64: 16, 64>}, {pipeline_mode = #tpu.pipeline_mode<synchronous>, transform_indices = @transform_27, window_bounds = array<i64: 4, 16>}, {pipeline_mode = #tpu.pipeline_mode<synchronous>, transform_indices = @transform_28, window_bounds = array<i64: 16, 4>}, {pipeline_mode = #tpu.pipeline_mode<synchronous>, transform_indices = @transform_29, window_bounds = array<i64: 64, 16>}, {transform_indices = @transform_30, window_bounds = array<i64: 1, 64, 16>}]} {
    %c0 = arith.constant 0 : index
    %c0_0 = arith.constant 0 : index
    %c0_1 = arith.constant 0 : index
    %0 = vector.load %arg1[%c0, %c0_0, %c0_1] : memref<1x256x3xf32, #tpu.memory_space<vmem>>, vector<1x256x3xf32>
    %1 = vector.shape_cast %0 : vector<1x256x3xf32> to vector<256x3xf32>
    %2 = tpu.iota {dimensions = array<i32: 0>} : vector<256x3xi32>
    %c15_i32 = arith.constant 15 : i32
    %3 = vector.broadcast %c15_i32 : i32 to vector<256x3xi32>
    %4 = arith.andi %2, %3 : vector<256x3xi32>
    %cst = arith.constant 0.000000e+00 : f32
    %5 = vector.broadcast %cst : f32 to vector<17x3xf32>
    %6 = vector.extract_strided_slice %1 {offsets = [0, 0], sizes = [239, 3], strides = [1, 1]} : vector<256x3xf32> to vector<239x3xf32>
    %7 = tpu.concatenate %5, %6 in 0 : vector<17x3xf32>, vector<239x3xf32> -> vector<256x3xf32>
    %c0_i32 = arith.constant 0 : i32
    %8 = vector.broadcast %c0_i32 : i32 to vector<256x3xi32>
    %9 = arith.cmpi eq, %4, %8 : vector<256x3xi32>
    %cst_2 = arith.constant 0.000000e+00 : f32
    %10 = vector.broadcast %cst_2 : f32 to vector<256x3xf32>
    %11 = arith.select %9, %10, %7 : vector<256x3xi1>, vector<256x3xf32>
    %cst_3 = arith.constant 0.000000e+00 : f32
    %12 = vector.broadcast %cst_3 : f32 to vector<16x3xf32>
    %13 = vector.extract_strided_slice %1 {offsets = [0, 0], sizes = [240, 3], strides = [1, 1]} : vector<256x3xf32> to vector<240x3xf32>
    %14 = tpu.concatenate %12, %13 in 0 : vector<16x3xf32>, vector<240x3xf32> -> vector<256x3xf32>
    %cst_4 = arith.constant 0.000000e+00 : f32
    %15 = vector.broadcast %cst_4 : f32 to vector<15x3xf32>
    %16 = vector.extract_strided_slice %1 {offsets = [0, 0], sizes = [241, 3], strides = [1, 1]} : vector<256x3xf32> to vector<241x3xf32>
    %17 = tpu.concatenate %15, %16 in 0 : vector<15x3xf32>, vector<241x3xf32> -> vector<256x3xf32>
    %c15_i32_5 = arith.constant 15 : i32
    %18 = vector.broadcast %c15_i32_5 : i32 to vector<256x3xi32>
    %19 = arith.cmpi eq, %4, %18 : vector<256x3xi32>
    %cst_6 = arith.constant 0.000000e+00 : f32
    %20 = vector.broadcast %cst_6 : f32 to vector<256x3xf32>
    %21 = arith.select %19, %20, %17 : vector<256x3xi1>, vector<256x3xf32>
    %cst_7 = arith.constant 0.000000e+00 : f32
    %22 = vector.broadcast %cst_7 : f32 to vector<1x3xf32>
    %23 = vector.extract_strided_slice %1 {offsets = [0, 0], sizes = [255, 3], strides = [1, 1]} : vector<256x3xf32> to vector<255x3xf32>
    %24 = tpu.concatenate %22, %23 in 0 : vector<1x3xf32>, vector<255x3xf32> -> vector<256x3xf32>
    %c0_i32_8 = arith.constant 0 : i32
    %25 = vector.broadcast %c0_i32_8 : i32 to vector<256x3xi32>
    %26 = arith.cmpi eq, %4, %25 : vector<256x3xi32>
    %cst_9 = arith.constant 0.000000e+00 : f32
    %27 = vector.broadcast %cst_9 : f32 to vector<256x3xf32>
    %28 = arith.select %26, %27, %24 : vector<256x3xi1>, vector<256x3xf32>
    %29 = vector.extract_strided_slice %1 {offsets = [1, 0], sizes = [255, 3], strides = [1, 1]} : vector<256x3xf32> to vector<255x3xf32>
    %cst_10 = arith.constant 0.000000e+00 : f32
    %30 = vector.broadcast %cst_10 : f32 to vector<1x3xf32>
    %31 = tpu.concatenate %29, %30 in 0 : vector<255x3xf32>, vector<1x3xf32> -> vector<256x3xf32>
    %c15_i32_11 = arith.constant 15 : i32
    %32 = vector.broadcast %c15_i32_11 : i32 to vector<256x3xi32>
    %33 = arith.cmpi eq, %4, %32 : vector<256x3xi32>
    %cst_12 = arith.constant 0.000000e+00 : f32
    %34 = vector.broadcast %cst_12 : f32 to vector<256x3xf32>
    %35 = arith.select %33, %34, %31 : vector<256x3xi1>, vector<256x3xf32>
    %36 = vector.extract_strided_slice %1 {offsets = [15, 0], sizes = [241, 3], strides = [1, 1]} : vector<256x3xf32> to vector<241x3xf32>
    %cst_13 = arith.constant 0.000000e+00 : f32
    %37 = vector.broadcast %cst_13 : f32 to vector<15x3xf32>
    %38 = tpu.concatenate %36, %37 in 0 : vector<241x3xf32>, vector<15x3xf32> -> vector<256x3xf32>
    %c0_i32_14 = arith.constant 0 : i32
    %39 = vector.broadcast %c0_i32_14 : i32 to vector<256x3xi32>
    %40 = arith.cmpi eq, %4, %39 : vector<256x3xi32>
    %cst_15 = arith.constant 0.000000e+00 : f32
    %41 = vector.broadcast %cst_15 : f32 to vector<256x3xf32>
    %42 = arith.select %40, %41, %38 : vector<256x3xi1>, vector<256x3xf32>
    %43 = vector.extract_strided_slice %1 {offsets = [16, 0], sizes = [240, 3], strides = [1, 1]} : vector<256x3xf32> to vector<240x3xf32>
    %cst_16 = arith.constant 0.000000e+00 : f32
    %44 = vector.broadcast %cst_16 : f32 to vector<16x3xf32>
    %45 = tpu.concatenate %43, %44 in 0 : vector<240x3xf32>, vector<16x3xf32> -> vector<256x3xf32>
    %46 = vector.extract_strided_slice %1 {offsets = [17, 0], sizes = [239, 3], strides = [1, 1]} : vector<256x3xf32> to vector<239x3xf32>
    %cst_17 = arith.constant 0.000000e+00 : f32
    %47 = vector.broadcast %cst_17 : f32 to vector<17x3xf32>
    %48 = tpu.concatenate %46, %47 in 0 : vector<239x3xf32>, vector<17x3xf32> -> vector<256x3xf32>
    %c15_i32_18 = arith.constant 15 : i32
    %49 = vector.broadcast %c15_i32_18 : i32 to vector<256x3xi32>
    %50 = arith.cmpi eq, %4, %49 : vector<256x3xi32>
    %cst_19 = arith.constant 0.000000e+00 : f32
    %51 = vector.broadcast %cst_19 : f32 to vector<256x3xf32>
    %52 = arith.select %50, %51, %48 : vector<256x3xi1>, vector<256x3xf32>
    %53 = tpu.concatenate %11, %14, %21, %28, %1, %35, %42, %45, %52 in 1 : vector<256x3xf32>, vector<256x3xf32>, vector<256x3xf32>, vector<256x3xf32>, vector<256x3xf32>, vector<256x3xf32>, vector<256x3xf32>, vector<256x3xf32>, vector<256x3xf32> -> vector<256x27xf32>
    %c0_20 = arith.constant 0 : index
    %c0_21 = arith.constant 0 : index
    %54 = vector.load %arg2[%c0_20, %c0_21] : memref<27x8xf32, #tpu.memory_space<vmem>>, vector<27x8xf32>
    %c0_22 = arith.constant 0 : index
    %c0_23 = arith.constant 0 : index
    %55 = vector.load %arg3[%c0_22, %c0_23] : memref<1x8xf32, #tpu.memory_space<vmem>>, vector<1x8xf32>
    %cst_24 = arith.constant dense<0.000000e+00> : vector<256x8xf32>
    %56 = tpu.matmul %53, %54, %cst_24 {dimension_numbers = #tpu.dot_dimension_numbers<[1], [0], [0], [1], [0, 0, 1, 1], [], []>} : vector<256x27xf32>, vector<27x8xf32>, vector<256x8xf32> -> vector<256x8xf32>
    %57 = vector.broadcast %55 : vector<1x8xf32> to vector<256x8xf32>
    %58 = arith.addf %56, %57 : vector<256x8xf32>
    %cst_25 = arith.constant 0.000000e+00 : f32
    %59 = vector.broadcast %cst_25 : f32 to vector<256x8xf32>
    %60 = arith.maximumf %58, %59 : vector<256x8xf32>
    %61 = tpu.iota {dimensions = array<i32: 0>} : vector<256x8xi32>
    %c15_i32_26 = arith.constant 15 : i32
    %62 = vector.broadcast %c15_i32_26 : i32 to vector<256x8xi32>
    %63 = arith.andi %61, %62 : vector<256x8xi32>
    %cst_27 = arith.constant 0.000000e+00 : f32
    %64 = vector.broadcast %cst_27 : f32 to vector<17x8xf32>
    %65 = vector.extract_strided_slice %60 {offsets = [0, 0], sizes = [239, 8], strides = [1, 1]} : vector<256x8xf32> to vector<239x8xf32>
    %66 = tpu.concatenate %64, %65 in 0 : vector<17x8xf32>, vector<239x8xf32> -> vector<256x8xf32>
    %c0_i32_28 = arith.constant 0 : i32
    %67 = vector.broadcast %c0_i32_28 : i32 to vector<256x8xi32>
    %68 = arith.cmpi eq, %63, %67 : vector<256x8xi32>
    %cst_29 = arith.constant 0.000000e+00 : f32
    %69 = vector.broadcast %cst_29 : f32 to vector<256x8xf32>
    %70 = arith.select %68, %69, %66 : vector<256x8xi1>, vector<256x8xf32>
    %cst_30 = arith.constant 0.000000e+00 : f32
    %71 = vector.broadcast %cst_30 : f32 to vector<16x8xf32>
    %72 = vector.extract_strided_slice %60 {offsets = [0, 0], sizes = [240, 8], strides = [1, 1]} : vector<256x8xf32> to vector<240x8xf32>
    %73 = tpu.concatenate %71, %72 in 0 : vector<16x8xf32>, vector<240x8xf32> -> vector<256x8xf32>
    %cst_31 = arith.constant 0.000000e+00 : f32
    %74 = vector.broadcast %cst_31 : f32 to vector<15x8xf32>
    %75 = vector.extract_strided_slice %60 {offsets = [0, 0], sizes = [241, 8], strides = [1, 1]} : vector<256x8xf32> to vector<241x8xf32>
    %76 = tpu.concatenate %74, %75 in 0 : vector<15x8xf32>, vector<241x8xf32> -> vector<256x8xf32>
    %c15_i32_32 = arith.constant 15 : i32
    %77 = vector.broadcast %c15_i32_32 : i32 to vector<256x8xi32>
    %78 = arith.cmpi eq, %63, %77 : vector<256x8xi32>
    %cst_33 = arith.constant 0.000000e+00 : f32
    %79 = vector.broadcast %cst_33 : f32 to vector<256x8xf32>
    %80 = arith.select %78, %79, %76 : vector<256x8xi1>, vector<256x8xf32>
    %cst_34 = arith.constant 0.000000e+00 : f32
    %81 = vector.broadcast %cst_34 : f32 to vector<1x8xf32>
    %82 = vector.extract_strided_slice %60 {offsets = [0, 0], sizes = [255, 8], strides = [1, 1]} : vector<256x8xf32> to vector<255x8xf32>
    %83 = tpu.concatenate %81, %82 in 0 : vector<1x8xf32>, vector<255x8xf32> -> vector<256x8xf32>
    %c0_i32_35 = arith.constant 0 : i32
    %84 = vector.broadcast %c0_i32_35 : i32 to vector<256x8xi32>
    %85 = arith.cmpi eq, %63, %84 : vector<256x8xi32>
    %cst_36 = arith.constant 0.000000e+00 : f32
    %86 = vector.broadcast %cst_36 : f32 to vector<256x8xf32>
    %87 = arith.select %85, %86, %83 : vector<256x8xi1>, vector<256x8xf32>
    %88 = vector.extract_strided_slice %60 {offsets = [1, 0], sizes = [255, 8], strides = [1, 1]} : vector<256x8xf32> to vector<255x8xf32>
    %cst_37 = arith.constant 0.000000e+00 : f32
    %89 = vector.broadcast %cst_37 : f32 to vector<1x8xf32>
    %90 = tpu.concatenate %88, %89 in 0 : vector<255x8xf32>, vector<1x8xf32> -> vector<256x8xf32>
    %c15_i32_38 = arith.constant 15 : i32
    %91 = vector.broadcast %c15_i32_38 : i32 to vector<256x8xi32>
    %92 = arith.cmpi eq, %63, %91 : vector<256x8xi32>
    %cst_39 = arith.constant 0.000000e+00 : f32
    %93 = vector.broadcast %cst_39 : f32 to vector<256x8xf32>
    %94 = arith.select %92, %93, %90 : vector<256x8xi1>, vector<256x8xf32>
    %95 = vector.extract_strided_slice %60 {offsets = [15, 0], sizes = [241, 8], strides = [1, 1]} : vector<256x8xf32> to vector<241x8xf32>
    %cst_40 = arith.constant 0.000000e+00 : f32
    %96 = vector.broadcast %cst_40 : f32 to vector<15x8xf32>
    %97 = tpu.concatenate %95, %96 in 0 : vector<241x8xf32>, vector<15x8xf32> -> vector<256x8xf32>
    %c0_i32_41 = arith.constant 0 : i32
    %98 = vector.broadcast %c0_i32_41 : i32 to vector<256x8xi32>
    %99 = arith.cmpi eq, %63, %98 : vector<256x8xi32>
    %cst_42 = arith.constant 0.000000e+00 : f32
    %100 = vector.broadcast %cst_42 : f32 to vector<256x8xf32>
    %101 = arith.select %99, %100, %97 : vector<256x8xi1>, vector<256x8xf32>
    %102 = vector.extract_strided_slice %60 {offsets = [16, 0], sizes = [240, 8], strides = [1, 1]} : vector<256x8xf32> to vector<240x8xf32>
    %cst_43 = arith.constant 0.000000e+00 : f32
    %103 = vector.broadcast %cst_43 : f32 to vector<16x8xf32>
    %104 = tpu.concatenate %102, %103 in 0 : vector<240x8xf32>, vector<16x8xf32> -> vector<256x8xf32>
    %105 = vector.extract_strided_slice %60 {offsets = [17, 0], sizes = [239, 8], strides = [1, 1]} : vector<256x8xf32> to vector<239x8xf32>
    %cst_44 = arith.constant 0.000000e+00 : f32
    %106 = vector.broadcast %cst_44 : f32 to vector<17x8xf32>
    %107 = tpu.concatenate %105, %106 in 0 : vector<239x8xf32>, vector<17x8xf32> -> vector<256x8xf32>
    %c15_i32_45 = arith.constant 15 : i32
    %108 = vector.broadcast %c15_i32_45 : i32 to vector<256x8xi32>
    %109 = arith.cmpi eq, %63, %108 : vector<256x8xi32>
    %cst_46 = arith.constant 0.000000e+00 : f32
    %110 = vector.broadcast %cst_46 : f32 to vector<256x8xf32>
    %111 = arith.select %109, %110, %107 : vector<256x8xi1>, vector<256x8xf32>
    %112 = tpu.concatenate %70, %73, %80, %87, %60, %94, %101, %104, %111 in 1 : vector<256x8xf32>, vector<256x8xf32>, vector<256x8xf32>, vector<256x8xf32>, vector<256x8xf32>, vector<256x8xf32>, vector<256x8xf32>, vector<256x8xf32>, vector<256x8xf32> -> vector<256x72xf32>
    %c0_47 = arith.constant 0 : index
    %c0_48 = arith.constant 0 : index
    %113 = vector.load %arg4[%c0_47, %c0_48] : memref<72x16xf32, #tpu.memory_space<vmem>>, vector<72x16xf32>
    %c0_49 = arith.constant 0 : index
    %c0_50 = arith.constant 0 : index
    %114 = vector.load %arg5[%c0_49, %c0_50] : memref<1x16xf32, #tpu.memory_space<vmem>>, vector<1x16xf32>
    %cst_51 = arith.constant dense<0.000000e+00> : vector<256x16xf32>
    %115 = tpu.matmul %112, %113, %cst_51 {dimension_numbers = #tpu.dot_dimension_numbers<[1], [0], [0], [1], [0, 0, 1, 1], [], []>} : vector<256x72xf32>, vector<72x16xf32>, vector<256x16xf32> -> vector<256x16xf32>
    %116 = vector.broadcast %114 : vector<1x16xf32> to vector<256x16xf32>
    %117 = arith.addf %115, %116 : vector<256x16xf32>
    %cst_52 = arith.constant 0.000000e+00 : f32
    %118 = vector.broadcast %cst_52 : f32 to vector<256x16xf32>
    %119 = arith.maximumf %117, %118 : vector<256x16xf32>
    %c0_53 = arith.constant 0 : index
    %c0_54 = arith.constant 0 : index
    %120 = vector.load %arg26[%c0_53, %c0_54] : memref<64x256xf32, #tpu.memory_space<vmem>>, vector<64x256xf32>
    %cst_55 = arith.constant dense<0.000000e+00> : vector<64x16xf32>
    %121 = tpu.matmul %120, %119, %cst_55 {dimension_numbers = #tpu.dot_dimension_numbers<[1], [0], [0], [1], [0, 0, 1, 1], [], []>} : vector<64x256xf32>, vector<256x16xf32>, vector<64x16xf32> -> vector<64x16xf32>
    %122 = tpu.iota {dimensions = array<i32: 0>} : vector<64x16xi32>
    %c7_i32 = arith.constant 7 : i32
    %123 = vector.broadcast %c7_i32 : i32 to vector<64x16xi32>
    %124 = arith.andi %122, %123 : vector<64x16xi32>
    %cst_56 = arith.constant 0.000000e+00 : f32
    %125 = vector.broadcast %cst_56 : f32 to vector<9x16xf32>
    %126 = vector.extract_strided_slice %121 {offsets = [0, 0], sizes = [55, 16], strides = [1, 1]} : vector<64x16xf32> to vector<55x16xf32>
    %127 = tpu.concatenate %125, %126 in 0 : vector<9x16xf32>, vector<55x16xf32> -> vector<64x16xf32>
    %c0_i32_57 = arith.constant 0 : i32
    %128 = vector.broadcast %c0_i32_57 : i32 to vector<64x16xi32>
    %129 = arith.cmpi eq, %124, %128 : vector<64x16xi32>
    %cst_58 = arith.constant 0.000000e+00 : f32
    %130 = vector.broadcast %cst_58 : f32 to vector<64x16xf32>
    %131 = arith.select %129, %130, %127 : vector<64x16xi1>, vector<64x16xf32>
    %cst_59 = arith.constant 0.000000e+00 : f32
    %132 = vector.broadcast %cst_59 : f32 to vector<8x16xf32>
    %133 = vector.extract_strided_slice %121 {offsets = [0, 0], sizes = [56, 16], strides = [1, 1]} : vector<64x16xf32> to vector<56x16xf32>
    %134 = tpu.concatenate %132, %133 in 0 : vector<8x16xf32>, vector<56x16xf32> -> vector<64x16xf32>
    %cst_60 = arith.constant 0.000000e+00 : f32
    %135 = vector.broadcast %cst_60 : f32 to vector<7x16xf32>
    %136 = vector.extract_strided_slice %121 {offsets = [0, 0], sizes = [57, 16], strides = [1, 1]} : vector<64x16xf32> to vector<57x16xf32>
    %137 = tpu.concatenate %135, %136 in 0 : vector<7x16xf32>, vector<57x16xf32> -> vector<64x16xf32>
    %c7_i32_61 = arith.constant 7 : i32
    %138 = vector.broadcast %c7_i32_61 : i32 to vector<64x16xi32>
    %139 = arith.cmpi eq, %124, %138 : vector<64x16xi32>
    %cst_62 = arith.constant 0.000000e+00 : f32
    %140 = vector.broadcast %cst_62 : f32 to vector<64x16xf32>
    %141 = arith.select %139, %140, %137 : vector<64x16xi1>, vector<64x16xf32>
    %cst_63 = arith.constant 0.000000e+00 : f32
    %142 = vector.broadcast %cst_63 : f32 to vector<1x16xf32>
    %143 = vector.extract_strided_slice %121 {offsets = [0, 0], sizes = [63, 16], strides = [1, 1]} : vector<64x16xf32> to vector<63x16xf32>
    %144 = tpu.concatenate %142, %143 in 0 : vector<1x16xf32>, vector<63x16xf32> -> vector<64x16xf32>
    %c0_i32_64 = arith.constant 0 : i32
    %145 = vector.broadcast %c0_i32_64 : i32 to vector<64x16xi32>
    %146 = arith.cmpi eq, %124, %145 : vector<64x16xi32>
    %cst_65 = arith.constant 0.000000e+00 : f32
    %147 = vector.broadcast %cst_65 : f32 to vector<64x16xf32>
    %148 = arith.select %146, %147, %144 : vector<64x16xi1>, vector<64x16xf32>
    %149 = vector.extract_strided_slice %121 {offsets = [1, 0], sizes = [63, 16], strides = [1, 1]} : vector<64x16xf32> to vector<63x16xf32>
    %cst_66 = arith.constant 0.000000e+00 : f32
    %150 = vector.broadcast %cst_66 : f32 to vector<1x16xf32>
    %151 = tpu.concatenate %149, %150 in 0 : vector<63x16xf32>, vector<1x16xf32> -> vector<64x16xf32>
    %c7_i32_67 = arith.constant 7 : i32
    %152 = vector.broadcast %c7_i32_67 : i32 to vector<64x16xi32>
    %153 = arith.cmpi eq, %124, %152 : vector<64x16xi32>
    %cst_68 = arith.constant 0.000000e+00 : f32
    %154 = vector.broadcast %cst_68 : f32 to vector<64x16xf32>
    %155 = arith.select %153, %154, %151 : vector<64x16xi1>, vector<64x16xf32>
    %156 = vector.extract_strided_slice %121 {offsets = [7, 0], sizes = [57, 16], strides = [1, 1]} : vector<64x16xf32> to vector<57x16xf32>
    %cst_69 = arith.constant 0.000000e+00 : f32
    %157 = vector.broadcast %cst_69 : f32 to vector<7x16xf32>
    %158 = tpu.concatenate %156, %157 in 0 : vector<57x16xf32>, vector<7x16xf32> -> vector<64x16xf32>
    %c0_i32_70 = arith.constant 0 : i32
    %159 = vector.broadcast %c0_i32_70 : i32 to vector<64x16xi32>
    %160 = arith.cmpi eq, %124, %159 : vector<64x16xi32>
    %cst_71 = arith.constant 0.000000e+00 : f32
    %161 = vector.broadcast %cst_71 : f32 to vector<64x16xf32>
    %162 = arith.select %160, %161, %158 : vector<64x16xi1>, vector<64x16xf32>
    %163 = vector.extract_strided_slice %121 {offsets = [8, 0], sizes = [56, 16], strides = [1, 1]} : vector<64x16xf32> to vector<56x16xf32>
    %cst_72 = arith.constant 0.000000e+00 : f32
    %164 = vector.broadcast %cst_72 : f32 to vector<8x16xf32>
    %165 = tpu.concatenate %163, %164 in 0 : vector<56x16xf32>, vector<8x16xf32> -> vector<64x16xf32>
    %166 = vector.extract_strided_slice %121 {offsets = [9, 0], sizes = [55, 16], strides = [1, 1]} : vector<64x16xf32> to vector<55x16xf32>
    %cst_73 = arith.constant 0.000000e+00 : f32
    %167 = vector.broadcast %cst_73 : f32 to vector<9x16xf32>
    %168 = tpu.concatenate %166, %167 in 0 : vector<55x16xf32>, vector<9x16xf32> -> vector<64x16xf32>
    %c7_i32_74 = arith.constant 7 : i32
    %169 = vector.broadcast %c7_i32_74 : i32 to vector<64x16xi32>
    %170 = arith.cmpi eq, %124, %169 : vector<64x16xi32>
    %cst_75 = arith.constant 0.000000e+00 : f32
    %171 = vector.broadcast %cst_75 : f32 to vector<64x16xf32>
    %172 = arith.select %170, %171, %168 : vector<64x16xi1>, vector<64x16xf32>
    %173 = tpu.concatenate %131, %134, %141, %148, %121, %155, %162, %165, %172 in 1 : vector<64x16xf32>, vector<64x16xf32>, vector<64x16xf32>, vector<64x16xf32>, vector<64x16xf32>, vector<64x16xf32>, vector<64x16xf32>, vector<64x16xf32>, vector<64x16xf32> -> vector<64x144xf32>
    %c0_76 = arith.constant 0 : index
    %c0_77 = arith.constant 0 : index
    %174 = vector.load %arg6[%c0_76, %c0_77] : memref<144x32xf32, #tpu.memory_space<vmem>>, vector<144x32xf32>
    %c0_78 = arith.constant 0 : index
    %c0_79 = arith.constant 0 : index
    %175 = vector.load %arg7[%c0_78, %c0_79] : memref<1x32xf32, #tpu.memory_space<vmem>>, vector<1x32xf32>
    %cst_80 = arith.constant dense<0.000000e+00> : vector<64x32xf32>
    %176 = tpu.matmul %173, %174, %cst_80 {dimension_numbers = #tpu.dot_dimension_numbers<[1], [0], [0], [1], [0, 0, 1, 1], [], []>} : vector<64x144xf32>, vector<144x32xf32>, vector<64x32xf32> -> vector<64x32xf32>
    %177 = vector.broadcast %175 : vector<1x32xf32> to vector<64x32xf32>
    %178 = arith.addf %176, %177 : vector<64x32xf32>
    %cst_81 = arith.constant 0.000000e+00 : f32
    %179 = vector.broadcast %cst_81 : f32 to vector<64x32xf32>
    %180 = arith.maximumf %178, %179 : vector<64x32xf32>
    %c0_82 = arith.constant 0 : index
    %c0_83 = arith.constant 0 : index
    %181 = vector.load %arg27[%c0_82, %c0_83] : memref<16x64xf32, #tpu.memory_space<vmem>>, vector<16x64xf32>
    %cst_84 = arith.constant dense<0.000000e+00> : vector<16x32xf32>
    %182 = tpu.matmul %181, %180, %cst_84 {dimension_numbers = #tpu.dot_dimension_numbers<[1], [0], [0], [1], [0, 0, 1, 1], [], []>} : vector<16x64xf32>, vector<64x32xf32>, vector<16x32xf32> -> vector<16x32xf32>
    %183 = tpu.iota {dimensions = array<i32: 0>} : vector<16x32xi32>
    %c3_i32 = arith.constant 3 : i32
    %184 = vector.broadcast %c3_i32 : i32 to vector<16x32xi32>
    %185 = arith.andi %183, %184 : vector<16x32xi32>
    %cst_85 = arith.constant 0.000000e+00 : f32
    %186 = vector.broadcast %cst_85 : f32 to vector<5x32xf32>
    %187 = vector.extract_strided_slice %182 {offsets = [0, 0], sizes = [11, 32], strides = [1, 1]} : vector<16x32xf32> to vector<11x32xf32>
    %188 = tpu.concatenate %186, %187 in 0 : vector<5x32xf32>, vector<11x32xf32> -> vector<16x32xf32>
    %c0_i32_86 = arith.constant 0 : i32
    %189 = vector.broadcast %c0_i32_86 : i32 to vector<16x32xi32>
    %190 = arith.cmpi eq, %185, %189 : vector<16x32xi32>
    %cst_87 = arith.constant 0.000000e+00 : f32
    %191 = vector.broadcast %cst_87 : f32 to vector<16x32xf32>
    %192 = arith.select %190, %191, %188 : vector<16x32xi1>, vector<16x32xf32>
    %cst_88 = arith.constant 0.000000e+00 : f32
    %193 = vector.broadcast %cst_88 : f32 to vector<4x32xf32>
    %194 = vector.extract_strided_slice %182 {offsets = [0, 0], sizes = [12, 32], strides = [1, 1]} : vector<16x32xf32> to vector<12x32xf32>
    %195 = tpu.concatenate %193, %194 in 0 : vector<4x32xf32>, vector<12x32xf32> -> vector<16x32xf32>
    %cst_89 = arith.constant 0.000000e+00 : f32
    %196 = vector.broadcast %cst_89 : f32 to vector<3x32xf32>
    %197 = vector.extract_strided_slice %182 {offsets = [0, 0], sizes = [13, 32], strides = [1, 1]} : vector<16x32xf32> to vector<13x32xf32>
    %198 = tpu.concatenate %196, %197 in 0 : vector<3x32xf32>, vector<13x32xf32> -> vector<16x32xf32>
    %c3_i32_90 = arith.constant 3 : i32
    %199 = vector.broadcast %c3_i32_90 : i32 to vector<16x32xi32>
    %200 = arith.cmpi eq, %185, %199 : vector<16x32xi32>
    %cst_91 = arith.constant 0.000000e+00 : f32
    %201 = vector.broadcast %cst_91 : f32 to vector<16x32xf32>
    %202 = arith.select %200, %201, %198 : vector<16x32xi1>, vector<16x32xf32>
    %cst_92 = arith.constant 0.000000e+00 : f32
    %203 = vector.broadcast %cst_92 : f32 to vector<1x32xf32>
    %204 = vector.extract_strided_slice %182 {offsets = [0, 0], sizes = [15, 32], strides = [1, 1]} : vector<16x32xf32> to vector<15x32xf32>
    %205 = tpu.concatenate %203, %204 in 0 : vector<1x32xf32>, vector<15x32xf32> -> vector<16x32xf32>
    %c0_i32_93 = arith.constant 0 : i32
    %206 = vector.broadcast %c0_i32_93 : i32 to vector<16x32xi32>
    %207 = arith.cmpi eq, %185, %206 : vector<16x32xi32>
    %cst_94 = arith.constant 0.000000e+00 : f32
    %208 = vector.broadcast %cst_94 : f32 to vector<16x32xf32>
    %209 = arith.select %207, %208, %205 : vector<16x32xi1>, vector<16x32xf32>
    %210 = vector.extract_strided_slice %182 {offsets = [1, 0], sizes = [15, 32], strides = [1, 1]} : vector<16x32xf32> to vector<15x32xf32>
    %cst_95 = arith.constant 0.000000e+00 : f32
    %211 = vector.broadcast %cst_95 : f32 to vector<1x32xf32>
    %212 = tpu.concatenate %210, %211 in 0 : vector<15x32xf32>, vector<1x32xf32> -> vector<16x32xf32>
    %c3_i32_96 = arith.constant 3 : i32
    %213 = vector.broadcast %c3_i32_96 : i32 to vector<16x32xi32>
    %214 = arith.cmpi eq, %185, %213 : vector<16x32xi32>
    %cst_97 = arith.constant 0.000000e+00 : f32
    %215 = vector.broadcast %cst_97 : f32 to vector<16x32xf32>
    %216 = arith.select %214, %215, %212 : vector<16x32xi1>, vector<16x32xf32>
    %217 = vector.extract_strided_slice %182 {offsets = [3, 0], sizes = [13, 32], strides = [1, 1]} : vector<16x32xf32> to vector<13x32xf32>
    %cst_98 = arith.constant 0.000000e+00 : f32
    %218 = vector.broadcast %cst_98 : f32 to vector<3x32xf32>
    %219 = tpu.concatenate %217, %218 in 0 : vector<13x32xf32>, vector<3x32xf32> -> vector<16x32xf32>
    %c0_i32_99 = arith.constant 0 : i32
    %220 = vector.broadcast %c0_i32_99 : i32 to vector<16x32xi32>
    %221 = arith.cmpi eq, %185, %220 : vector<16x32xi32>
    %cst_100 = arith.constant 0.000000e+00 : f32
    %222 = vector.broadcast %cst_100 : f32 to vector<16x32xf32>
    %223 = arith.select %221, %222, %219 : vector<16x32xi1>, vector<16x32xf32>
    %224 = vector.extract_strided_slice %182 {offsets = [4, 0], sizes = [12, 32], strides = [1, 1]} : vector<16x32xf32> to vector<12x32xf32>
    %cst_101 = arith.constant 0.000000e+00 : f32
    %225 = vector.broadcast %cst_101 : f32 to vector<4x32xf32>
    %226 = tpu.concatenate %224, %225 in 0 : vector<12x32xf32>, vector<4x32xf32> -> vector<16x32xf32>
    %227 = vector.extract_strided_slice %182 {offsets = [5, 0], sizes = [11, 32], strides = [1, 1]} : vector<16x32xf32> to vector<11x32xf32>
    %cst_102 = arith.constant 0.000000e+00 : f32
    %228 = vector.broadcast %cst_102 : f32 to vector<5x32xf32>
    %229 = tpu.concatenate %227, %228 in 0 : vector<11x32xf32>, vector<5x32xf32> -> vector<16x32xf32>
    %c3_i32_103 = arith.constant 3 : i32
    %230 = vector.broadcast %c3_i32_103 : i32 to vector<16x32xi32>
    %231 = arith.cmpi eq, %185, %230 : vector<16x32xi32>
    %cst_104 = arith.constant 0.000000e+00 : f32
    %232 = vector.broadcast %cst_104 : f32 to vector<16x32xf32>
    %233 = arith.select %231, %232, %229 : vector<16x32xi1>, vector<16x32xf32>
    %234 = tpu.concatenate %192, %195, %202, %209, %182, %216, %223, %226, %233 in 1 : vector<16x32xf32>, vector<16x32xf32>, vector<16x32xf32>, vector<16x32xf32>, vector<16x32xf32>, vector<16x32xf32>, vector<16x32xf32>, vector<16x32xf32>, vector<16x32xf32> -> vector<16x288xf32>
    %c0_105 = arith.constant 0 : index
    %c0_106 = arith.constant 0 : index
    %235 = vector.load %arg8[%c0_105, %c0_106] : memref<288x64xf32, #tpu.memory_space<vmem>>, vector<288x64xf32>
    %c0_107 = arith.constant 0 : index
    %c0_108 = arith.constant 0 : index
    %236 = vector.load %arg9[%c0_107, %c0_108] : memref<1x64xf32, #tpu.memory_space<vmem>>, vector<1x64xf32>
    %cst_109 = arith.constant dense<0.000000e+00> : vector<16x64xf32>
    %237 = tpu.matmul %234, %235, %cst_109 {dimension_numbers = #tpu.dot_dimension_numbers<[1], [0], [0], [1], [0, 0, 1, 1], [], []>} : vector<16x288xf32>, vector<288x64xf32>, vector<16x64xf32> -> vector<16x64xf32>
    %238 = vector.broadcast %236 : vector<1x64xf32> to vector<16x64xf32>
    %239 = arith.addf %237, %238 : vector<16x64xf32>
    %cst_110 = arith.constant 0.000000e+00 : f32
    %240 = vector.broadcast %cst_110 : f32 to vector<16x64xf32>
    %241 = arith.maximumf %239, %240 : vector<16x64xf32>
    %c0_111 = arith.constant 0 : index
    %c0_112 = arith.constant 0 : index
    %242 = vector.load %arg28[%c0_111, %c0_112] : memref<4x16xf32, #tpu.memory_space<vmem>>, vector<4x16xf32>
    %cst_113 = arith.constant dense<0.000000e+00> : vector<4x64xf32>
    %243 = tpu.matmul %242, %241, %cst_113 {dimension_numbers = #tpu.dot_dimension_numbers<[1], [0], [0], [1], [0, 0, 1, 1], [], []>} : vector<4x16xf32>, vector<16x64xf32>, vector<4x64xf32> -> vector<4x64xf32>
    %244 = tpu.iota {dimensions = array<i32: 0>} : vector<4x64xi32>
    %c1_i32 = arith.constant 1 : i32
    %245 = vector.broadcast %c1_i32 : i32 to vector<4x64xi32>
    %246 = arith.andi %244, %245 : vector<4x64xi32>
    %cst_114 = arith.constant 0.000000e+00 : f32
    %247 = vector.broadcast %cst_114 : f32 to vector<3x64xf32>
    %248 = vector.extract_strided_slice %243 {offsets = [0, 0], sizes = [1, 64], strides = [1, 1]} : vector<4x64xf32> to vector<1x64xf32>
    %249 = tpu.concatenate %247, %248 in 0 : vector<3x64xf32>, vector<1x64xf32> -> vector<4x64xf32>
    %c0_i32_115 = arith.constant 0 : i32
    %250 = vector.broadcast %c0_i32_115 : i32 to vector<4x64xi32>
    %251 = arith.cmpi eq, %246, %250 : vector<4x64xi32>
    %cst_116 = arith.constant 0.000000e+00 : f32
    %252 = vector.broadcast %cst_116 : f32 to vector<4x64xf32>
    %253 = arith.select %251, %252, %249 : vector<4x64xi1>, vector<4x64xf32>
    %cst_117 = arith.constant 0.000000e+00 : f32
    %254 = vector.broadcast %cst_117 : f32 to vector<2x64xf32>
    %255 = vector.extract_strided_slice %243 {offsets = [0, 0], sizes = [2, 64], strides = [1, 1]} : vector<4x64xf32> to vector<2x64xf32>
    %256 = tpu.concatenate %254, %255 in 0 : vector<2x64xf32>, vector<2x64xf32> -> vector<4x64xf32>
    %cst_118 = arith.constant 0.000000e+00 : f32
    %257 = vector.broadcast %cst_118 : f32 to vector<1x64xf32>
    %258 = vector.extract_strided_slice %243 {offsets = [0, 0], sizes = [3, 64], strides = [1, 1]} : vector<4x64xf32> to vector<3x64xf32>
    %259 = tpu.concatenate %257, %258 in 0 : vector<1x64xf32>, vector<3x64xf32> -> vector<4x64xf32>
    %c1_i32_119 = arith.constant 1 : i32
    %260 = vector.broadcast %c1_i32_119 : i32 to vector<4x64xi32>
    %261 = arith.cmpi eq, %246, %260 : vector<4x64xi32>
    %cst_120 = arith.constant 0.000000e+00 : f32
    %262 = vector.broadcast %cst_120 : f32 to vector<4x64xf32>
    %263 = arith.select %261, %262, %259 : vector<4x64xi1>, vector<4x64xf32>
    %cst_121 = arith.constant 0.000000e+00 : f32
    %264 = vector.broadcast %cst_121 : f32 to vector<1x64xf32>
    %265 = vector.extract_strided_slice %243 {offsets = [0, 0], sizes = [3, 64], strides = [1, 1]} : vector<4x64xf32> to vector<3x64xf32>
    %266 = tpu.concatenate %264, %265 in 0 : vector<1x64xf32>, vector<3x64xf32> -> vector<4x64xf32>
    %c0_i32_122 = arith.constant 0 : i32
    %267 = vector.broadcast %c0_i32_122 : i32 to vector<4x64xi32>
    %268 = arith.cmpi eq, %246, %267 : vector<4x64xi32>
    %cst_123 = arith.constant 0.000000e+00 : f32
    %269 = vector.broadcast %cst_123 : f32 to vector<4x64xf32>
    %270 = arith.select %268, %269, %266 : vector<4x64xi1>, vector<4x64xf32>
    %271 = vector.extract_strided_slice %243 {offsets = [1, 0], sizes = [3, 64], strides = [1, 1]} : vector<4x64xf32> to vector<3x64xf32>
    %cst_124 = arith.constant 0.000000e+00 : f32
    %272 = vector.broadcast %cst_124 : f32 to vector<1x64xf32>
    %273 = tpu.concatenate %271, %272 in 0 : vector<3x64xf32>, vector<1x64xf32> -> vector<4x64xf32>
    %c1_i32_125 = arith.constant 1 : i32
    %274 = vector.broadcast %c1_i32_125 : i32 to vector<4x64xi32>
    %275 = arith.cmpi eq, %246, %274 : vector<4x64xi32>
    %cst_126 = arith.constant 0.000000e+00 : f32
    %276 = vector.broadcast %cst_126 : f32 to vector<4x64xf32>
    %277 = arith.select %275, %276, %273 : vector<4x64xi1>, vector<4x64xf32>
    %278 = vector.extract_strided_slice %243 {offsets = [1, 0], sizes = [3, 64], strides = [1, 1]} : vector<4x64xf32> to vector<3x64xf32>
    %cst_127 = arith.constant 0.000000e+00 : f32
    %279 = vector.broadcast %cst_127 : f32 to vector<1x64xf32>
    %280 = tpu.concatenate %278, %279 in 0 : vector<3x64xf32>, vector<1x64xf32> -> vector<4x64xf32>
    %c0_i32_128 = arith.constant 0 : i32
    %281 = vector.broadcast %c0_i32_128 : i32 to vector<4x64xi32>
    %282 = arith.cmpi eq, %246, %281 : vector<4x64xi32>
    %cst_129 = arith.constant 0.000000e+00 : f32
    %283 = vector.broadcast %cst_129 : f32 to vector<4x64xf32>
    %284 = arith.select %282, %283, %280 : vector<4x64xi1>, vector<4x64xf32>
    %285 = vector.extract_strided_slice %243 {offsets = [2, 0], sizes = [2, 64], strides = [1, 1]} : vector<4x64xf32> to vector<2x64xf32>
    %cst_130 = arith.constant 0.000000e+00 : f32
    %286 = vector.broadcast %cst_130 : f32 to vector<2x64xf32>
    %287 = tpu.concatenate %285, %286 in 0 : vector<2x64xf32>, vector<2x64xf32> -> vector<4x64xf32>
    %288 = vector.extract_strided_slice %243 {offsets = [3, 0], sizes = [1, 64], strides = [1, 1]} : vector<4x64xf32> to vector<1x64xf32>
    %cst_131 = arith.constant 0.000000e+00 : f32
    %289 = vector.broadcast %cst_131 : f32 to vector<3x64xf32>
    %290 = tpu.concatenate %288, %289 in 0 : vector<1x64xf32>, vector<3x64xf32> -> vector<4x64xf32>
    %c1_i32_132 = arith.constant 1 : i32
    %291 = vector.broadcast %c1_i32_132 : i32 to vector<4x64xi32>
    %292 = arith.cmpi eq, %246, %291 : vector<4x64xi32>
    %cst_133 = arith.constant 0.000000e+00 : f32
    %293 = vector.broadcast %cst_133 : f32 to vector<4x64xf32>
    %294 = arith.select %292, %293, %290 : vector<4x64xi1>, vector<4x64xf32>
    %295 = tpu.concatenate %253, %256, %263, %270, %243, %277, %284, %287, %294 in 1 : vector<4x64xf32>, vector<4x64xf32>, vector<4x64xf32>, vector<4x64xf32>, vector<4x64xf32>, vector<4x64xf32>, vector<4x64xf32>, vector<4x64xf32>, vector<4x64xf32> -> vector<4x576xf32>
    %c0_134 = arith.constant 0 : index
    %c0_135 = arith.constant 0 : index
    %296 = vector.load %arg10[%c0_134, %c0_135] : memref<576x32xf32, #tpu.memory_space<vmem>>, vector<576x32xf32>
    %c0_136 = arith.constant 0 : index
    %c0_137 = arith.constant 0 : index
    %297 = vector.load %arg11[%c0_136, %c0_137] : memref<1x32xf32, #tpu.memory_space<vmem>>, vector<1x32xf32>
    %cst_138 = arith.constant dense<0.000000e+00> : vector<4x32xf32>
    %298 = tpu.matmul %295, %296, %cst_138 {dimension_numbers = #tpu.dot_dimension_numbers<[1], [0], [0], [1], [0, 0, 1, 1], [], []>} : vector<4x576xf32>, vector<576x32xf32>, vector<4x32xf32> -> vector<4x32xf32>
    %299 = vector.broadcast %297 : vector<1x32xf32> to vector<4x32xf32>
    %300 = arith.addf %298, %299 : vector<4x32xf32>
    %cst_139 = arith.constant 0.000000e+00 : f32
    %301 = vector.broadcast %cst_139 : f32 to vector<4x32xf32>
    %302 = arith.maximumf %300, %301 : vector<4x32xf32>
    %c0_140 = arith.constant 0 : index
    %c0_141 = arith.constant 0 : index
    %303 = vector.load %arg29[%c0_140, %c0_141] : memref<16x4xf32, #tpu.memory_space<vmem>>, vector<16x4xf32>
    %cst_142 = arith.constant dense<0.000000e+00> : vector<16x32xf32>
    %304 = tpu.matmul %303, %302, %cst_142 {dimension_numbers = #tpu.dot_dimension_numbers<[1], [0], [0], [1], [0, 0, 1, 1], [], []>} : vector<16x4xf32>, vector<4x32xf32>, vector<16x32xf32> -> vector<16x32xf32>
    %305 = arith.addf %304, %182 : vector<16x32xf32>
    %306 = tpu.iota {dimensions = array<i32: 0>} : vector<16x32xi32>
    %c3_i32_143 = arith.constant 3 : i32
    %307 = vector.broadcast %c3_i32_143 : i32 to vector<16x32xi32>
    %308 = arith.andi %306, %307 : vector<16x32xi32>
    %cst_144 = arith.constant 0.000000e+00 : f32
    %309 = vector.broadcast %cst_144 : f32 to vector<5x32xf32>
    %310 = vector.extract_strided_slice %305 {offsets = [0, 0], sizes = [11, 32], strides = [1, 1]} : vector<16x32xf32> to vector<11x32xf32>
    %311 = tpu.concatenate %309, %310 in 0 : vector<5x32xf32>, vector<11x32xf32> -> vector<16x32xf32>
    %c0_i32_145 = arith.constant 0 : i32
    %312 = vector.broadcast %c0_i32_145 : i32 to vector<16x32xi32>
    %313 = arith.cmpi eq, %308, %312 : vector<16x32xi32>
    %cst_146 = arith.constant 0.000000e+00 : f32
    %314 = vector.broadcast %cst_146 : f32 to vector<16x32xf32>
    %315 = arith.select %313, %314, %311 : vector<16x32xi1>, vector<16x32xf32>
    %cst_147 = arith.constant 0.000000e+00 : f32
    %316 = vector.broadcast %cst_147 : f32 to vector<4x32xf32>
    %317 = vector.extract_strided_slice %305 {offsets = [0, 0], sizes = [12, 32], strides = [1, 1]} : vector<16x32xf32> to vector<12x32xf32>
    %318 = tpu.concatenate %316, %317 in 0 : vector<4x32xf32>, vector<12x32xf32> -> vector<16x32xf32>
    %cst_148 = arith.constant 0.000000e+00 : f32
    %319 = vector.broadcast %cst_148 : f32 to vector<3x32xf32>
    %320 = vector.extract_strided_slice %305 {offsets = [0, 0], sizes = [13, 32], strides = [1, 1]} : vector<16x32xf32> to vector<13x32xf32>
    %321 = tpu.concatenate %319, %320 in 0 : vector<3x32xf32>, vector<13x32xf32> -> vector<16x32xf32>
    %c3_i32_149 = arith.constant 3 : i32
    %322 = vector.broadcast %c3_i32_149 : i32 to vector<16x32xi32>
    %323 = arith.cmpi eq, %308, %322 : vector<16x32xi32>
    %cst_150 = arith.constant 0.000000e+00 : f32
    %324 = vector.broadcast %cst_150 : f32 to vector<16x32xf32>
    %325 = arith.select %323, %324, %321 : vector<16x32xi1>, vector<16x32xf32>
    %cst_151 = arith.constant 0.000000e+00 : f32
    %326 = vector.broadcast %cst_151 : f32 to vector<1x32xf32>
    %327 = vector.extract_strided_slice %305 {offsets = [0, 0], sizes = [15, 32], strides = [1, 1]} : vector<16x32xf32> to vector<15x32xf32>
    %328 = tpu.concatenate %326, %327 in 0 : vector<1x32xf32>, vector<15x32xf32> -> vector<16x32xf32>
    %c0_i32_152 = arith.constant 0 : i32
    %329 = vector.broadcast %c0_i32_152 : i32 to vector<16x32xi32>
    %330 = arith.cmpi eq, %308, %329 : vector<16x32xi32>
    %cst_153 = arith.constant 0.000000e+00 : f32
    %331 = vector.broadcast %cst_153 : f32 to vector<16x32xf32>
    %332 = arith.select %330, %331, %328 : vector<16x32xi1>, vector<16x32xf32>
    %333 = vector.extract_strided_slice %305 {offsets = [1, 0], sizes = [15, 32], strides = [1, 1]} : vector<16x32xf32> to vector<15x32xf32>
    %cst_154 = arith.constant 0.000000e+00 : f32
    %334 = vector.broadcast %cst_154 : f32 to vector<1x32xf32>
    %335 = tpu.concatenate %333, %334 in 0 : vector<15x32xf32>, vector<1x32xf32> -> vector<16x32xf32>
    %c3_i32_155 = arith.constant 3 : i32
    %336 = vector.broadcast %c3_i32_155 : i32 to vector<16x32xi32>
    %337 = arith.cmpi eq, %308, %336 : vector<16x32xi32>
    %cst_156 = arith.constant 0.000000e+00 : f32
    %338 = vector.broadcast %cst_156 : f32 to vector<16x32xf32>
    %339 = arith.select %337, %338, %335 : vector<16x32xi1>, vector<16x32xf32>
    %340 = vector.extract_strided_slice %305 {offsets = [3, 0], sizes = [13, 32], strides = [1, 1]} : vector<16x32xf32> to vector<13x32xf32>
    %cst_157 = arith.constant 0.000000e+00 : f32
    %341 = vector.broadcast %cst_157 : f32 to vector<3x32xf32>
    %342 = tpu.concatenate %340, %341 in 0 : vector<13x32xf32>, vector<3x32xf32> -> vector<16x32xf32>
    %c0_i32_158 = arith.constant 0 : i32
    %343 = vector.broadcast %c0_i32_158 : i32 to vector<16x32xi32>
    %344 = arith.cmpi eq, %308, %343 : vector<16x32xi32>
    %cst_159 = arith.constant 0.000000e+00 : f32
    %345 = vector.broadcast %cst_159 : f32 to vector<16x32xf32>
    %346 = arith.select %344, %345, %342 : vector<16x32xi1>, vector<16x32xf32>
    %347 = vector.extract_strided_slice %305 {offsets = [4, 0], sizes = [12, 32], strides = [1, 1]} : vector<16x32xf32> to vector<12x32xf32>
    %cst_160 = arith.constant 0.000000e+00 : f32
    %348 = vector.broadcast %cst_160 : f32 to vector<4x32xf32>
    %349 = tpu.concatenate %347, %348 in 0 : vector<12x32xf32>, vector<4x32xf32> -> vector<16x32xf32>
    %350 = vector.extract_strided_slice %305 {offsets = [5, 0], sizes = [11, 32], strides = [1, 1]} : vector<16x32xf32> to vector<11x32xf32>
    %cst_161 = arith.constant 0.000000e+00 : f32
    %351 = vector.broadcast %cst_161 : f32 to vector<5x32xf32>
    %352 = tpu.concatenate %350, %351 in 0 : vector<11x32xf32>, vector<5x32xf32> -> vector<16x32xf32>
    %c3_i32_162 = arith.constant 3 : i32
    %353 = vector.broadcast %c3_i32_162 : i32 to vector<16x32xi32>
    %354 = arith.cmpi eq, %308, %353 : vector<16x32xi32>
    %cst_163 = arith.constant 0.000000e+00 : f32
    %355 = vector.broadcast %cst_163 : f32 to vector<16x32xf32>
    %356 = arith.select %354, %355, %352 : vector<16x32xi1>, vector<16x32xf32>
    %357 = tpu.concatenate %315, %318, %325, %332, %305, %339, %346, %349, %356 in 1 : vector<16x32xf32>, vector<16x32xf32>, vector<16x32xf32>, vector<16x32xf32>, vector<16x32xf32>, vector<16x32xf32>, vector<16x32xf32>, vector<16x32xf32>, vector<16x32xf32> -> vector<16x288xf32>
    %c0_164 = arith.constant 0 : index
    %c0_165 = arith.constant 0 : index
    %358 = vector.load %arg12[%c0_164, %c0_165] : memref<288x32xf32, #tpu.memory_space<vmem>>, vector<288x32xf32>
    %c0_166 = arith.constant 0 : index
    %c0_167 = arith.constant 0 : index
    %359 = vector.load %arg13[%c0_166, %c0_167] : memref<1x32xf32, #tpu.memory_space<vmem>>, vector<1x32xf32>
    %cst_168 = arith.constant dense<0.000000e+00> : vector<16x32xf32>
    %360 = tpu.matmul %357, %358, %cst_168 {dimension_numbers = #tpu.dot_dimension_numbers<[1], [0], [0], [1], [0, 0, 1, 1], [], []>} : vector<16x288xf32>, vector<288x32xf32>, vector<16x32xf32> -> vector<16x32xf32>
    %361 = vector.broadcast %359 : vector<1x32xf32> to vector<16x32xf32>
    %362 = arith.addf %360, %361 : vector<16x32xf32>
    %cst_169 = arith.constant 0.000000e+00 : f32
    %363 = vector.broadcast %cst_169 : f32 to vector<16x32xf32>
    %364 = arith.maximumf %362, %363 : vector<16x32xf32>
    %365 = tpu.iota {dimensions = array<i32: 0>} : vector<16x32xi32>
    %c3_i32_170 = arith.constant 3 : i32
    %366 = vector.broadcast %c3_i32_170 : i32 to vector<16x32xi32>
    %367 = arith.andi %365, %366 : vector<16x32xi32>
    %cst_171 = arith.constant 0.000000e+00 : f32
    %368 = vector.broadcast %cst_171 : f32 to vector<5x32xf32>
    %369 = vector.extract_strided_slice %182 {offsets = [0, 0], sizes = [11, 32], strides = [1, 1]} : vector<16x32xf32> to vector<11x32xf32>
    %370 = tpu.concatenate %368, %369 in 0 : vector<5x32xf32>, vector<11x32xf32> -> vector<16x32xf32>
    %c0_i32_172 = arith.constant 0 : i32
    %371 = vector.broadcast %c0_i32_172 : i32 to vector<16x32xi32>
    %372 = arith.cmpi eq, %367, %371 : vector<16x32xi32>
    %cst_173 = arith.constant 0.000000e+00 : f32
    %373 = vector.broadcast %cst_173 : f32 to vector<16x32xf32>
    %374 = arith.select %372, %373, %370 : vector<16x32xi1>, vector<16x32xf32>
    %cst_174 = arith.constant 0.000000e+00 : f32
    %375 = vector.broadcast %cst_174 : f32 to vector<4x32xf32>
    %376 = vector.extract_strided_slice %182 {offsets = [0, 0], sizes = [12, 32], strides = [1, 1]} : vector<16x32xf32> to vector<12x32xf32>
    %377 = tpu.concatenate %375, %376 in 0 : vector<4x32xf32>, vector<12x32xf32> -> vector<16x32xf32>
    %cst_175 = arith.constant 0.000000e+00 : f32
    %378 = vector.broadcast %cst_175 : f32 to vector<3x32xf32>
    %379 = vector.extract_strided_slice %182 {offsets = [0, 0], sizes = [13, 32], strides = [1, 1]} : vector<16x32xf32> to vector<13x32xf32>
    %380 = tpu.concatenate %378, %379 in 0 : vector<3x32xf32>, vector<13x32xf32> -> vector<16x32xf32>
    %c3_i32_176 = arith.constant 3 : i32
    %381 = vector.broadcast %c3_i32_176 : i32 to vector<16x32xi32>
    %382 = arith.cmpi eq, %367, %381 : vector<16x32xi32>
    %cst_177 = arith.constant 0.000000e+00 : f32
    %383 = vector.broadcast %cst_177 : f32 to vector<16x32xf32>
    %384 = arith.select %382, %383, %380 : vector<16x32xi1>, vector<16x32xf32>
    %cst_178 = arith.constant 0.000000e+00 : f32
    %385 = vector.broadcast %cst_178 : f32 to vector<1x32xf32>
    %386 = vector.extract_strided_slice %182 {offsets = [0, 0], sizes = [15, 32], strides = [1, 1]} : vector<16x32xf32> to vector<15x32xf32>
    %387 = tpu.concatenate %385, %386 in 0 : vector<1x32xf32>, vector<15x32xf32> -> vector<16x32xf32>
    %c0_i32_179 = arith.constant 0 : i32
    %388 = vector.broadcast %c0_i32_179 : i32 to vector<16x32xi32>
    %389 = arith.cmpi eq, %367, %388 : vector<16x32xi32>
    %cst_180 = arith.constant 0.000000e+00 : f32
    %390 = vector.broadcast %cst_180 : f32 to vector<16x32xf32>
    %391 = arith.select %389, %390, %387 : vector<16x32xi1>, vector<16x32xf32>
    %392 = vector.extract_strided_slice %182 {offsets = [1, 0], sizes = [15, 32], strides = [1, 1]} : vector<16x32xf32> to vector<15x32xf32>
    %cst_181 = arith.constant 0.000000e+00 : f32
    %393 = vector.broadcast %cst_181 : f32 to vector<1x32xf32>
    %394 = tpu.concatenate %392, %393 in 0 : vector<15x32xf32>, vector<1x32xf32> -> vector<16x32xf32>
    %c3_i32_182 = arith.constant 3 : i32
    %395 = vector.broadcast %c3_i32_182 : i32 to vector<16x32xi32>
    %396 = arith.cmpi eq, %367, %395 : vector<16x32xi32>
    %cst_183 = arith.constant 0.000000e+00 : f32
    %397 = vector.broadcast %cst_183 : f32 to vector<16x32xf32>
    %398 = arith.select %396, %397, %394 : vector<16x32xi1>, vector<16x32xf32>
    %399 = vector.extract_strided_slice %182 {offsets = [3, 0], sizes = [13, 32], strides = [1, 1]} : vector<16x32xf32> to vector<13x32xf32>
    %cst_184 = arith.constant 0.000000e+00 : f32
    %400 = vector.broadcast %cst_184 : f32 to vector<3x32xf32>
    %401 = tpu.concatenate %399, %400 in 0 : vector<13x32xf32>, vector<3x32xf32> -> vector<16x32xf32>
    %c0_i32_185 = arith.constant 0 : i32
    %402 = vector.broadcast %c0_i32_185 : i32 to vector<16x32xi32>
    %403 = arith.cmpi eq, %367, %402 : vector<16x32xi32>
    %cst_186 = arith.constant 0.000000e+00 : f32
    %404 = vector.broadcast %cst_186 : f32 to vector<16x32xf32>
    %405 = arith.select %403, %404, %401 : vector<16x32xi1>, vector<16x32xf32>
    %406 = vector.extract_strided_slice %182 {offsets = [4, 0], sizes = [12, 32], strides = [1, 1]} : vector<16x32xf32> to vector<12x32xf32>
    %cst_187 = arith.constant 0.000000e+00 : f32
    %407 = vector.broadcast %cst_187 : f32 to vector<4x32xf32>
    %408 = tpu.concatenate %406, %407 in 0 : vector<12x32xf32>, vector<4x32xf32> -> vector<16x32xf32>
    %409 = vector.extract_strided_slice %182 {offsets = [5, 0], sizes = [11, 32], strides = [1, 1]} : vector<16x32xf32> to vector<11x32xf32>
    %cst_188 = arith.constant 0.000000e+00 : f32
    %410 = vector.broadcast %cst_188 : f32 to vector<5x32xf32>
    %411 = tpu.concatenate %409, %410 in 0 : vector<11x32xf32>, vector<5x32xf32> -> vector<16x32xf32>
    %c3_i32_189 = arith.constant 3 : i32
    %412 = vector.broadcast %c3_i32_189 : i32 to vector<16x32xi32>
    %413 = arith.cmpi eq, %367, %412 : vector<16x32xi32>
    %cst_190 = arith.constant 0.000000e+00 : f32
    %414 = vector.broadcast %cst_190 : f32 to vector<16x32xf32>
    %415 = arith.select %413, %414, %411 : vector<16x32xi1>, vector<16x32xf32>
    %416 = tpu.concatenate %374, %377, %384, %391, %182, %398, %405, %408, %415 in 1 : vector<16x32xf32>, vector<16x32xf32>, vector<16x32xf32>, vector<16x32xf32>, vector<16x32xf32>, vector<16x32xf32>, vector<16x32xf32>, vector<16x32xf32>, vector<16x32xf32> -> vector<16x288xf32>
    %c0_191 = arith.constant 0 : index
    %c0_192 = arith.constant 0 : index
    %417 = vector.load %arg14[%c0_191, %c0_192] : memref<288x16xf32, #tpu.memory_space<vmem>>, vector<288x16xf32>
    %c0_193 = arith.constant 0 : index
    %c0_194 = arith.constant 0 : index
    %418 = vector.load %arg15[%c0_193, %c0_194] : memref<1x16xf32, #tpu.memory_space<vmem>>, vector<1x16xf32>
    %cst_195 = arith.constant dense<0.000000e+00> : vector<16x16xf32>
    %419 = tpu.matmul %416, %417, %cst_195 {dimension_numbers = #tpu.dot_dimension_numbers<[1], [0], [0], [1], [0, 0, 1, 1], [], []>} : vector<16x288xf32>, vector<288x16xf32>, vector<16x16xf32> -> vector<16x16xf32>
    %420 = vector.broadcast %418 : vector<1x16xf32> to vector<16x16xf32>
    %421 = arith.addf %419, %420 : vector<16x16xf32>
    %cst_196 = arith.constant 0.000000e+00 : f32
    %422 = vector.broadcast %cst_196 : f32 to vector<16x16xf32>
    %423 = arith.maximumf %421, %422 : vector<16x16xf32>
    %c0_197 = arith.constant 0 : index
    %c0_198 = arith.constant 0 : index
    %424 = vector.load %arg30[%c0_197, %c0_198] : memref<64x16xf32, #tpu.memory_space<vmem>>, vector<64x16xf32>
    %cst_199 = arith.constant dense<0.000000e+00> : vector<64x16xf32>
    %425 = tpu.matmul %424, %423, %cst_199 {dimension_numbers = #tpu.dot_dimension_numbers<[1], [0], [0], [1], [0, 0, 1, 1], [], []>} : vector<64x16xf32>, vector<16x16xf32>, vector<64x16xf32> -> vector<64x16xf32>
    %426 = arith.addf %425, %121 : vector<64x16xf32>
    %427 = tpu.iota {dimensions = array<i32: 0>} : vector<64x16xi32>
    %c7_i32_200 = arith.constant 7 : i32
    %428 = vector.broadcast %c7_i32_200 : i32 to vector<64x16xi32>
    %429 = arith.andi %427, %428 : vector<64x16xi32>
    %cst_201 = arith.constant 0.000000e+00 : f32
    %430 = vector.broadcast %cst_201 : f32 to vector<9x16xf32>
    %431 = vector.extract_strided_slice %426 {offsets = [0, 0], sizes = [55, 16], strides = [1, 1]} : vector<64x16xf32> to vector<55x16xf32>
    %432 = tpu.concatenate %430, %431 in 0 : vector<9x16xf32>, vector<55x16xf32> -> vector<64x16xf32>
    %c0_i32_202 = arith.constant 0 : i32
    %433 = vector.broadcast %c0_i32_202 : i32 to vector<64x16xi32>
    %434 = arith.cmpi eq, %429, %433 : vector<64x16xi32>
    %cst_203 = arith.constant 0.000000e+00 : f32
    %435 = vector.broadcast %cst_203 : f32 to vector<64x16xf32>
    %436 = arith.select %434, %435, %432 : vector<64x16xi1>, vector<64x16xf32>
    %cst_204 = arith.constant 0.000000e+00 : f32
    %437 = vector.broadcast %cst_204 : f32 to vector<8x16xf32>
    %438 = vector.extract_strided_slice %426 {offsets = [0, 0], sizes = [56, 16], strides = [1, 1]} : vector<64x16xf32> to vector<56x16xf32>
    %439 = tpu.concatenate %437, %438 in 0 : vector<8x16xf32>, vector<56x16xf32> -> vector<64x16xf32>
    %cst_205 = arith.constant 0.000000e+00 : f32
    %440 = vector.broadcast %cst_205 : f32 to vector<7x16xf32>
    %441 = vector.extract_strided_slice %426 {offsets = [0, 0], sizes = [57, 16], strides = [1, 1]} : vector<64x16xf32> to vector<57x16xf32>
    %442 = tpu.concatenate %440, %441 in 0 : vector<7x16xf32>, vector<57x16xf32> -> vector<64x16xf32>
    %c7_i32_206 = arith.constant 7 : i32
    %443 = vector.broadcast %c7_i32_206 : i32 to vector<64x16xi32>
    %444 = arith.cmpi eq, %429, %443 : vector<64x16xi32>
    %cst_207 = arith.constant 0.000000e+00 : f32
    %445 = vector.broadcast %cst_207 : f32 to vector<64x16xf32>
    %446 = arith.select %444, %445, %442 : vector<64x16xi1>, vector<64x16xf32>
    %cst_208 = arith.constant 0.000000e+00 : f32
    %447 = vector.broadcast %cst_208 : f32 to vector<1x16xf32>
    %448 = vector.extract_strided_slice %426 {offsets = [0, 0], sizes = [63, 16], strides = [1, 1]} : vector<64x16xf32> to vector<63x16xf32>
    %449 = tpu.concatenate %447, %448 in 0 : vector<1x16xf32>, vector<63x16xf32> -> vector<64x16xf32>
    %c0_i32_209 = arith.constant 0 : i32
    %450 = vector.broadcast %c0_i32_209 : i32 to vector<64x16xi32>
    %451 = arith.cmpi eq, %429, %450 : vector<64x16xi32>
    %cst_210 = arith.constant 0.000000e+00 : f32
    %452 = vector.broadcast %cst_210 : f32 to vector<64x16xf32>
    %453 = arith.select %451, %452, %449 : vector<64x16xi1>, vector<64x16xf32>
    %454 = vector.extract_strided_slice %426 {offsets = [1, 0], sizes = [63, 16], strides = [1, 1]} : vector<64x16xf32> to vector<63x16xf32>
    %cst_211 = arith.constant 0.000000e+00 : f32
    %455 = vector.broadcast %cst_211 : f32 to vector<1x16xf32>
    %456 = tpu.concatenate %454, %455 in 0 : vector<63x16xf32>, vector<1x16xf32> -> vector<64x16xf32>
    %c7_i32_212 = arith.constant 7 : i32
    %457 = vector.broadcast %c7_i32_212 : i32 to vector<64x16xi32>
    %458 = arith.cmpi eq, %429, %457 : vector<64x16xi32>
    %cst_213 = arith.constant 0.000000e+00 : f32
    %459 = vector.broadcast %cst_213 : f32 to vector<64x16xf32>
    %460 = arith.select %458, %459, %456 : vector<64x16xi1>, vector<64x16xf32>
    %461 = vector.extract_strided_slice %426 {offsets = [7, 0], sizes = [57, 16], strides = [1, 1]} : vector<64x16xf32> to vector<57x16xf32>
    %cst_214 = arith.constant 0.000000e+00 : f32
    %462 = vector.broadcast %cst_214 : f32 to vector<7x16xf32>
    %463 = tpu.concatenate %461, %462 in 0 : vector<57x16xf32>, vector<7x16xf32> -> vector<64x16xf32>
    %c0_i32_215 = arith.constant 0 : i32
    %464 = vector.broadcast %c0_i32_215 : i32 to vector<64x16xi32>
    %465 = arith.cmpi eq, %429, %464 : vector<64x16xi32>
    %cst_216 = arith.constant 0.000000e+00 : f32
    %466 = vector.broadcast %cst_216 : f32 to vector<64x16xf32>
    %467 = arith.select %465, %466, %463 : vector<64x16xi1>, vector<64x16xf32>
    %468 = vector.extract_strided_slice %426 {offsets = [8, 0], sizes = [56, 16], strides = [1, 1]} : vector<64x16xf32> to vector<56x16xf32>
    %cst_217 = arith.constant 0.000000e+00 : f32
    %469 = vector.broadcast %cst_217 : f32 to vector<8x16xf32>
    %470 = tpu.concatenate %468, %469 in 0 : vector<56x16xf32>, vector<8x16xf32> -> vector<64x16xf32>
    %471 = vector.extract_strided_slice %426 {offsets = [9, 0], sizes = [55, 16], strides = [1, 1]} : vector<64x16xf32> to vector<55x16xf32>
    %cst_218 = arith.constant 0.000000e+00 : f32
    %472 = vector.broadcast %cst_218 : f32 to vector<9x16xf32>
    %473 = tpu.concatenate %471, %472 in 0 : vector<55x16xf32>, vector<9x16xf32> -> vector<64x16xf32>
    %c7_i32_219 = arith.constant 7 : i32
    %474 = vector.broadcast %c7_i32_219 : i32 to vector<64x16xi32>
    %475 = arith.cmpi eq, %429, %474 : vector<64x16xi32>
    %cst_220 = arith.constant 0.000000e+00 : f32
    %476 = vector.broadcast %cst_220 : f32 to vector<64x16xf32>
    %477 = arith.select %475, %476, %473 : vector<64x16xi1>, vector<64x16xf32>
    %478 = tpu.concatenate %436, %439, %446, %453, %426, %460, %467, %470, %477 in 1 : vector<64x16xf32>, vector<64x16xf32>, vector<64x16xf32>, vector<64x16xf32>, vector<64x16xf32>, vector<64x16xf32>, vector<64x16xf32>, vector<64x16xf32>, vector<64x16xf32> -> vector<64x144xf32>
    %c0_221 = arith.constant 0 : index
    %c0_222 = arith.constant 0 : index
    %479 = vector.load %arg16[%c0_221, %c0_222] : memref<144x16xf32, #tpu.memory_space<vmem>>, vector<144x16xf32>
    %c0_223 = arith.constant 0 : index
    %c0_224 = arith.constant 0 : index
    %480 = vector.load %arg17[%c0_223, %c0_224] : memref<1x16xf32, #tpu.memory_space<vmem>>, vector<1x16xf32>
    %cst_225 = arith.constant dense<0.000000e+00> : vector<64x16xf32>
    %481 = tpu.matmul %478, %479, %cst_225 {dimension_numbers = #tpu.dot_dimension_numbers<[1], [0], [0], [1], [0, 0, 1, 1], [], []>} : vector<64x144xf32>, vector<144x16xf32>, vector<64x16xf32> -> vector<64x16xf32>
    %482 = vector.broadcast %480 : vector<1x16xf32> to vector<64x16xf32>
    %483 = arith.addf %481, %482 : vector<64x16xf32>
    %cst_226 = arith.constant 0.000000e+00 : f32
    %484 = vector.broadcast %cst_226 : f32 to vector<64x16xf32>
    %485 = arith.maximumf %483, %484 : vector<64x16xf32>
    %486 = tpu.iota {dimensions = array<i32: 0>} : vector<16x32xi32>
    %c3_i32_227 = arith.constant 3 : i32
    %487 = vector.broadcast %c3_i32_227 : i32 to vector<16x32xi32>
    %488 = arith.andi %486, %487 : vector<16x32xi32>
    %cst_228 = arith.constant 0.000000e+00 : f32
    %489 = vector.broadcast %cst_228 : f32 to vector<5x32xf32>
    %490 = vector.extract_strided_slice %364 {offsets = [0, 0], sizes = [11, 32], strides = [1, 1]} : vector<16x32xf32> to vector<11x32xf32>
    %491 = tpu.concatenate %489, %490 in 0 : vector<5x32xf32>, vector<11x32xf32> -> vector<16x32xf32>
    %c0_i32_229 = arith.constant 0 : i32
    %492 = vector.broadcast %c0_i32_229 : i32 to vector<16x32xi32>
    %493 = arith.cmpi eq, %488, %492 : vector<16x32xi32>
    %cst_230 = arith.constant 0.000000e+00 : f32
    %494 = vector.broadcast %cst_230 : f32 to vector<16x32xf32>
    %495 = arith.select %493, %494, %491 : vector<16x32xi1>, vector<16x32xf32>
    %cst_231 = arith.constant 0.000000e+00 : f32
    %496 = vector.broadcast %cst_231 : f32 to vector<4x32xf32>
    %497 = vector.extract_strided_slice %364 {offsets = [0, 0], sizes = [12, 32], strides = [1, 1]} : vector<16x32xf32> to vector<12x32xf32>
    %498 = tpu.concatenate %496, %497 in 0 : vector<4x32xf32>, vector<12x32xf32> -> vector<16x32xf32>
    %cst_232 = arith.constant 0.000000e+00 : f32
    %499 = vector.broadcast %cst_232 : f32 to vector<3x32xf32>
    %500 = vector.extract_strided_slice %364 {offsets = [0, 0], sizes = [13, 32], strides = [1, 1]} : vector<16x32xf32> to vector<13x32xf32>
    %501 = tpu.concatenate %499, %500 in 0 : vector<3x32xf32>, vector<13x32xf32> -> vector<16x32xf32>
    %c3_i32_233 = arith.constant 3 : i32
    %502 = vector.broadcast %c3_i32_233 : i32 to vector<16x32xi32>
    %503 = arith.cmpi eq, %488, %502 : vector<16x32xi32>
    %cst_234 = arith.constant 0.000000e+00 : f32
    %504 = vector.broadcast %cst_234 : f32 to vector<16x32xf32>
    %505 = arith.select %503, %504, %501 : vector<16x32xi1>, vector<16x32xf32>
    %cst_235 = arith.constant 0.000000e+00 : f32
    %506 = vector.broadcast %cst_235 : f32 to vector<1x32xf32>
    %507 = vector.extract_strided_slice %364 {offsets = [0, 0], sizes = [15, 32], strides = [1, 1]} : vector<16x32xf32> to vector<15x32xf32>
    %508 = tpu.concatenate %506, %507 in 0 : vector<1x32xf32>, vector<15x32xf32> -> vector<16x32xf32>
    %c0_i32_236 = arith.constant 0 : i32
    %509 = vector.broadcast %c0_i32_236 : i32 to vector<16x32xi32>
    %510 = arith.cmpi eq, %488, %509 : vector<16x32xi32>
    %cst_237 = arith.constant 0.000000e+00 : f32
    %511 = vector.broadcast %cst_237 : f32 to vector<16x32xf32>
    %512 = arith.select %510, %511, %508 : vector<16x32xi1>, vector<16x32xf32>
    %513 = vector.extract_strided_slice %364 {offsets = [1, 0], sizes = [15, 32], strides = [1, 1]} : vector<16x32xf32> to vector<15x32xf32>
    %cst_238 = arith.constant 0.000000e+00 : f32
    %514 = vector.broadcast %cst_238 : f32 to vector<1x32xf32>
    %515 = tpu.concatenate %513, %514 in 0 : vector<15x32xf32>, vector<1x32xf32> -> vector<16x32xf32>
    %c3_i32_239 = arith.constant 3 : i32
    %516 = vector.broadcast %c3_i32_239 : i32 to vector<16x32xi32>
    %517 = arith.cmpi eq, %488, %516 : vector<16x32xi32>
    %cst_240 = arith.constant 0.000000e+00 : f32
    %518 = vector.broadcast %cst_240 : f32 to vector<16x32xf32>
    %519 = arith.select %517, %518, %515 : vector<16x32xi1>, vector<16x32xf32>
    %520 = vector.extract_strided_slice %364 {offsets = [3, 0], sizes = [13, 32], strides = [1, 1]} : vector<16x32xf32> to vector<13x32xf32>
    %cst_241 = arith.constant 0.000000e+00 : f32
    %521 = vector.broadcast %cst_241 : f32 to vector<3x32xf32>
    %522 = tpu.concatenate %520, %521 in 0 : vector<13x32xf32>, vector<3x32xf32> -> vector<16x32xf32>
    %c0_i32_242 = arith.constant 0 : i32
    %523 = vector.broadcast %c0_i32_242 : i32 to vector<16x32xi32>
    %524 = arith.cmpi eq, %488, %523 : vector<16x32xi32>
    %cst_243 = arith.constant 0.000000e+00 : f32
    %525 = vector.broadcast %cst_243 : f32 to vector<16x32xf32>
    %526 = arith.select %524, %525, %522 : vector<16x32xi1>, vector<16x32xf32>
    %527 = vector.extract_strided_slice %364 {offsets = [4, 0], sizes = [12, 32], strides = [1, 1]} : vector<16x32xf32> to vector<12x32xf32>
    %cst_244 = arith.constant 0.000000e+00 : f32
    %528 = vector.broadcast %cst_244 : f32 to vector<4x32xf32>
    %529 = tpu.concatenate %527, %528 in 0 : vector<12x32xf32>, vector<4x32xf32> -> vector<16x32xf32>
    %530 = vector.extract_strided_slice %364 {offsets = [5, 0], sizes = [11, 32], strides = [1, 1]} : vector<16x32xf32> to vector<11x32xf32>
    %cst_245 = arith.constant 0.000000e+00 : f32
    %531 = vector.broadcast %cst_245 : f32 to vector<5x32xf32>
    %532 = tpu.concatenate %530, %531 in 0 : vector<11x32xf32>, vector<5x32xf32> -> vector<16x32xf32>
    %c3_i32_246 = arith.constant 3 : i32
    %533 = vector.broadcast %c3_i32_246 : i32 to vector<16x32xi32>
    %534 = arith.cmpi eq, %488, %533 : vector<16x32xi32>
    %cst_247 = arith.constant 0.000000e+00 : f32
    %535 = vector.broadcast %cst_247 : f32 to vector<16x32xf32>
    %536 = arith.select %534, %535, %532 : vector<16x32xi1>, vector<16x32xf32>
    %537 = tpu.concatenate %495, %498, %505, %512, %364, %519, %526, %529, %536 in 1 : vector<16x32xf32>, vector<16x32xf32>, vector<16x32xf32>, vector<16x32xf32>, vector<16x32xf32>, vector<16x32xf32>, vector<16x32xf32>, vector<16x32xf32>, vector<16x32xf32> -> vector<16x288xf32>
    %c0_248 = arith.constant 0 : index
    %c0_249 = arith.constant 0 : index
    %538 = vector.load %arg18[%c0_248, %c0_249] : memref<288x16xf32, #tpu.memory_space<vmem>>, vector<288x16xf32>
    %c0_250 = arith.constant 0 : index
    %c0_251 = arith.constant 0 : index
    %539 = vector.load %arg19[%c0_250, %c0_251] : memref<1x16xf32, #tpu.memory_space<vmem>>, vector<1x16xf32>
    %cst_252 = arith.constant dense<0.000000e+00> : vector<16x16xf32>
    %540 = tpu.matmul %537, %538, %cst_252 {dimension_numbers = #tpu.dot_dimension_numbers<[1], [0], [0], [1], [0, 0, 1, 1], [], []>} : vector<16x288xf32>, vector<288x16xf32>, vector<16x16xf32> -> vector<16x16xf32>
    %541 = vector.broadcast %539 : vector<1x16xf32> to vector<16x16xf32>
    %542 = arith.addf %540, %541 : vector<16x16xf32>
    %cst_253 = arith.constant 0.000000e+00 : f32
    %543 = vector.broadcast %cst_253 : f32 to vector<16x16xf32>
    %544 = arith.maximumf %542, %543 : vector<16x16xf32>
    %c0_254 = arith.constant 0 : index
    %c0_255 = arith.constant 0 : index
    %545 = vector.load %arg30[%c0_254, %c0_255] : memref<64x16xf32, #tpu.memory_space<vmem>>, vector<64x16xf32>
    %cst_256 = arith.constant dense<0.000000e+00> : vector<64x16xf32>
    %546 = tpu.matmul %545, %544, %cst_256 {dimension_numbers = #tpu.dot_dimension_numbers<[1], [0], [0], [1], [0, 0, 1, 1], [], []>} : vector<64x16xf32>, vector<16x16xf32>, vector<64x16xf32> -> vector<64x16xf32>
    %547 = arith.addf %546, %485 : vector<64x16xf32>
    %548 = tpu.iota {dimensions = array<i32: 0>} : vector<64x16xi32>
    %c7_i32_257 = arith.constant 7 : i32
    %549 = vector.broadcast %c7_i32_257 : i32 to vector<64x16xi32>
    %550 = arith.andi %548, %549 : vector<64x16xi32>
    %cst_258 = arith.constant 0.000000e+00 : f32
    %551 = vector.broadcast %cst_258 : f32 to vector<9x16xf32>
    %552 = vector.extract_strided_slice %547 {offsets = [0, 0], sizes = [55, 16], strides = [1, 1]} : vector<64x16xf32> to vector<55x16xf32>
    %553 = tpu.concatenate %551, %552 in 0 : vector<9x16xf32>, vector<55x16xf32> -> vector<64x16xf32>
    %c0_i32_259 = arith.constant 0 : i32
    %554 = vector.broadcast %c0_i32_259 : i32 to vector<64x16xi32>
    %555 = arith.cmpi eq, %550, %554 : vector<64x16xi32>
    %cst_260 = arith.constant 0.000000e+00 : f32
    %556 = vector.broadcast %cst_260 : f32 to vector<64x16xf32>
    %557 = arith.select %555, %556, %553 : vector<64x16xi1>, vector<64x16xf32>
    %cst_261 = arith.constant 0.000000e+00 : f32
    %558 = vector.broadcast %cst_261 : f32 to vector<8x16xf32>
    %559 = vector.extract_strided_slice %547 {offsets = [0, 0], sizes = [56, 16], strides = [1, 1]} : vector<64x16xf32> to vector<56x16xf32>
    %560 = tpu.concatenate %558, %559 in 0 : vector<8x16xf32>, vector<56x16xf32> -> vector<64x16xf32>
    %cst_262 = arith.constant 0.000000e+00 : f32
    %561 = vector.broadcast %cst_262 : f32 to vector<7x16xf32>
    %562 = vector.extract_strided_slice %547 {offsets = [0, 0], sizes = [57, 16], strides = [1, 1]} : vector<64x16xf32> to vector<57x16xf32>
    %563 = tpu.concatenate %561, %562 in 0 : vector<7x16xf32>, vector<57x16xf32> -> vector<64x16xf32>
    %c7_i32_263 = arith.constant 7 : i32
    %564 = vector.broadcast %c7_i32_263 : i32 to vector<64x16xi32>
    %565 = arith.cmpi eq, %550, %564 : vector<64x16xi32>
    %cst_264 = arith.constant 0.000000e+00 : f32
    %566 = vector.broadcast %cst_264 : f32 to vector<64x16xf32>
    %567 = arith.select %565, %566, %563 : vector<64x16xi1>, vector<64x16xf32>
    %cst_265 = arith.constant 0.000000e+00 : f32
    %568 = vector.broadcast %cst_265 : f32 to vector<1x16xf32>
    %569 = vector.extract_strided_slice %547 {offsets = [0, 0], sizes = [63, 16], strides = [1, 1]} : vector<64x16xf32> to vector<63x16xf32>
    %570 = tpu.concatenate %568, %569 in 0 : vector<1x16xf32>, vector<63x16xf32> -> vector<64x16xf32>
    %c0_i32_266 = arith.constant 0 : i32
    %571 = vector.broadcast %c0_i32_266 : i32 to vector<64x16xi32>
    %572 = arith.cmpi eq, %550, %571 : vector<64x16xi32>
    %cst_267 = arith.constant 0.000000e+00 : f32
    %573 = vector.broadcast %cst_267 : f32 to vector<64x16xf32>
    %574 = arith.select %572, %573, %570 : vector<64x16xi1>, vector<64x16xf32>
    %575 = vector.extract_strided_slice %547 {offsets = [1, 0], sizes = [63, 16], strides = [1, 1]} : vector<64x16xf32> to vector<63x16xf32>
    %cst_268 = arith.constant 0.000000e+00 : f32
    %576 = vector.broadcast %cst_268 : f32 to vector<1x16xf32>
    %577 = tpu.concatenate %575, %576 in 0 : vector<63x16xf32>, vector<1x16xf32> -> vector<64x16xf32>
    %c7_i32_269 = arith.constant 7 : i32
    %578 = vector.broadcast %c7_i32_269 : i32 to vector<64x16xi32>
    %579 = arith.cmpi eq, %550, %578 : vector<64x16xi32>
    %cst_270 = arith.constant 0.000000e+00 : f32
    %580 = vector.broadcast %cst_270 : f32 to vector<64x16xf32>
    %581 = arith.select %579, %580, %577 : vector<64x16xi1>, vector<64x16xf32>
    %582 = vector.extract_strided_slice %547 {offsets = [7, 0], sizes = [57, 16], strides = [1, 1]} : vector<64x16xf32> to vector<57x16xf32>
    %cst_271 = arith.constant 0.000000e+00 : f32
    %583 = vector.broadcast %cst_271 : f32 to vector<7x16xf32>
    %584 = tpu.concatenate %582, %583 in 0 : vector<57x16xf32>, vector<7x16xf32> -> vector<64x16xf32>
    %c0_i32_272 = arith.constant 0 : i32
    %585 = vector.broadcast %c0_i32_272 : i32 to vector<64x16xi32>
    %586 = arith.cmpi eq, %550, %585 : vector<64x16xi32>
    %cst_273 = arith.constant 0.000000e+00 : f32
    %587 = vector.broadcast %cst_273 : f32 to vector<64x16xf32>
    %588 = arith.select %586, %587, %584 : vector<64x16xi1>, vector<64x16xf32>
    %589 = vector.extract_strided_slice %547 {offsets = [8, 0], sizes = [56, 16], strides = [1, 1]} : vector<64x16xf32> to vector<56x16xf32>
    %cst_274 = arith.constant 0.000000e+00 : f32
    %590 = vector.broadcast %cst_274 : f32 to vector<8x16xf32>
    %591 = tpu.concatenate %589, %590 in 0 : vector<56x16xf32>, vector<8x16xf32> -> vector<64x16xf32>
    %592 = vector.extract_strided_slice %547 {offsets = [9, 0], sizes = [55, 16], strides = [1, 1]} : vector<64x16xf32> to vector<55x16xf32>
    %cst_275 = arith.constant 0.000000e+00 : f32
    %593 = vector.broadcast %cst_275 : f32 to vector<9x16xf32>
    %594 = tpu.concatenate %592, %593 in 0 : vector<55x16xf32>, vector<9x16xf32> -> vector<64x16xf32>
    %c7_i32_276 = arith.constant 7 : i32
    %595 = vector.broadcast %c7_i32_276 : i32 to vector<64x16xi32>
    %596 = arith.cmpi eq, %550, %595 : vector<64x16xi32>
    %cst_277 = arith.constant 0.000000e+00 : f32
    %597 = vector.broadcast %cst_277 : f32 to vector<64x16xf32>
    %598 = arith.select %596, %597, %594 : vector<64x16xi1>, vector<64x16xf32>
    %599 = tpu.concatenate %557, %560, %567, %574, %547, %581, %588, %591, %598 in 1 : vector<64x16xf32>, vector<64x16xf32>, vector<64x16xf32>, vector<64x16xf32>, vector<64x16xf32>, vector<64x16xf32>, vector<64x16xf32>, vector<64x16xf32>, vector<64x16xf32> -> vector<64x144xf32>
    %c0_278 = arith.constant 0 : index
    %c0_279 = arith.constant 0 : index
    %600 = vector.load %arg20[%c0_278, %c0_279] : memref<144x16xf32, #tpu.memory_space<vmem>>, vector<144x16xf32>
    %c0_280 = arith.constant 0 : index
    %c0_281 = arith.constant 0 : index
    %601 = vector.load %arg21[%c0_280, %c0_281] : memref<1x16xf32, #tpu.memory_space<vmem>>, vector<1x16xf32>
    %cst_282 = arith.constant dense<0.000000e+00> : vector<64x16xf32>
    %602 = tpu.matmul %599, %600, %cst_282 {dimension_numbers = #tpu.dot_dimension_numbers<[1], [0], [0], [1], [0, 0, 1, 1], [], []>} : vector<64x144xf32>, vector<144x16xf32>, vector<64x16xf32> -> vector<64x16xf32>
    %603 = vector.broadcast %601 : vector<1x16xf32> to vector<64x16xf32>
    %604 = arith.addf %602, %603 : vector<64x16xf32>
    %cst_283 = arith.constant 0.000000e+00 : f32
    %605 = vector.broadcast %cst_283 : f32 to vector<64x16xf32>
    %606 = arith.maximumf %604, %605 : vector<64x16xf32>
    %607 = tpu.iota {dimensions = array<i32: 0>} : vector<16x32xi32>
    %c3_i32_284 = arith.constant 3 : i32
    %608 = vector.broadcast %c3_i32_284 : i32 to vector<16x32xi32>
    %609 = arith.andi %607, %608 : vector<16x32xi32>
    %cst_285 = arith.constant 0.000000e+00 : f32
    %610 = vector.broadcast %cst_285 : f32 to vector<5x32xf32>
    %611 = vector.extract_strided_slice %364 {offsets = [0, 0], sizes = [11, 32], strides = [1, 1]} : vector<16x32xf32> to vector<11x32xf32>
    %612 = tpu.concatenate %610, %611 in 0 : vector<5x32xf32>, vector<11x32xf32> -> vector<16x32xf32>
    %c0_i32_286 = arith.constant 0 : i32
    %613 = vector.broadcast %c0_i32_286 : i32 to vector<16x32xi32>
    %614 = arith.cmpi eq, %609, %613 : vector<16x32xi32>
    %cst_287 = arith.constant 0.000000e+00 : f32
    %615 = vector.broadcast %cst_287 : f32 to vector<16x32xf32>
    %616 = arith.select %614, %615, %612 : vector<16x32xi1>, vector<16x32xf32>
    %cst_288 = arith.constant 0.000000e+00 : f32
    %617 = vector.broadcast %cst_288 : f32 to vector<4x32xf32>
    %618 = vector.extract_strided_slice %364 {offsets = [0, 0], sizes = [12, 32], strides = [1, 1]} : vector<16x32xf32> to vector<12x32xf32>
    %619 = tpu.concatenate %617, %618 in 0 : vector<4x32xf32>, vector<12x32xf32> -> vector<16x32xf32>
    %cst_289 = arith.constant 0.000000e+00 : f32
    %620 = vector.broadcast %cst_289 : f32 to vector<3x32xf32>
    %621 = vector.extract_strided_slice %364 {offsets = [0, 0], sizes = [13, 32], strides = [1, 1]} : vector<16x32xf32> to vector<13x32xf32>
    %622 = tpu.concatenate %620, %621 in 0 : vector<3x32xf32>, vector<13x32xf32> -> vector<16x32xf32>
    %c3_i32_290 = arith.constant 3 : i32
    %623 = vector.broadcast %c3_i32_290 : i32 to vector<16x32xi32>
    %624 = arith.cmpi eq, %609, %623 : vector<16x32xi32>
    %cst_291 = arith.constant 0.000000e+00 : f32
    %625 = vector.broadcast %cst_291 : f32 to vector<16x32xf32>
    %626 = arith.select %624, %625, %622 : vector<16x32xi1>, vector<16x32xf32>
    %cst_292 = arith.constant 0.000000e+00 : f32
    %627 = vector.broadcast %cst_292 : f32 to vector<1x32xf32>
    %628 = vector.extract_strided_slice %364 {offsets = [0, 0], sizes = [15, 32], strides = [1, 1]} : vector<16x32xf32> to vector<15x32xf32>
    %629 = tpu.concatenate %627, %628 in 0 : vector<1x32xf32>, vector<15x32xf32> -> vector<16x32xf32>
    %c0_i32_293 = arith.constant 0 : i32
    %630 = vector.broadcast %c0_i32_293 : i32 to vector<16x32xi32>
    %631 = arith.cmpi eq, %609, %630 : vector<16x32xi32>
    %cst_294 = arith.constant 0.000000e+00 : f32
    %632 = vector.broadcast %cst_294 : f32 to vector<16x32xf32>
    %633 = arith.select %631, %632, %629 : vector<16x32xi1>, vector<16x32xf32>
    %634 = vector.extract_strided_slice %364 {offsets = [1, 0], sizes = [15, 32], strides = [1, 1]} : vector<16x32xf32> to vector<15x32xf32>
    %cst_295 = arith.constant 0.000000e+00 : f32
    %635 = vector.broadcast %cst_295 : f32 to vector<1x32xf32>
    %636 = tpu.concatenate %634, %635 in 0 : vector<15x32xf32>, vector<1x32xf32> -> vector<16x32xf32>
    %c3_i32_296 = arith.constant 3 : i32
    %637 = vector.broadcast %c3_i32_296 : i32 to vector<16x32xi32>
    %638 = arith.cmpi eq, %609, %637 : vector<16x32xi32>
    %cst_297 = arith.constant 0.000000e+00 : f32
    %639 = vector.broadcast %cst_297 : f32 to vector<16x32xf32>
    %640 = arith.select %638, %639, %636 : vector<16x32xi1>, vector<16x32xf32>
    %641 = vector.extract_strided_slice %364 {offsets = [3, 0], sizes = [13, 32], strides = [1, 1]} : vector<16x32xf32> to vector<13x32xf32>
    %cst_298 = arith.constant 0.000000e+00 : f32
    %642 = vector.broadcast %cst_298 : f32 to vector<3x32xf32>
    %643 = tpu.concatenate %641, %642 in 0 : vector<13x32xf32>, vector<3x32xf32> -> vector<16x32xf32>
    %c0_i32_299 = arith.constant 0 : i32
    %644 = vector.broadcast %c0_i32_299 : i32 to vector<16x32xi32>
    %645 = arith.cmpi eq, %609, %644 : vector<16x32xi32>
    %cst_300 = arith.constant 0.000000e+00 : f32
    %646 = vector.broadcast %cst_300 : f32 to vector<16x32xf32>
    %647 = arith.select %645, %646, %643 : vector<16x32xi1>, vector<16x32xf32>
    %648 = vector.extract_strided_slice %364 {offsets = [4, 0], sizes = [12, 32], strides = [1, 1]} : vector<16x32xf32> to vector<12x32xf32>
    %cst_301 = arith.constant 0.000000e+00 : f32
    %649 = vector.broadcast %cst_301 : f32 to vector<4x32xf32>
    %650 = tpu.concatenate %648, %649 in 0 : vector<12x32xf32>, vector<4x32xf32> -> vector<16x32xf32>
    %651 = vector.extract_strided_slice %364 {offsets = [5, 0], sizes = [11, 32], strides = [1, 1]} : vector<16x32xf32> to vector<11x32xf32>
    %cst_302 = arith.constant 0.000000e+00 : f32
    %652 = vector.broadcast %cst_302 : f32 to vector<5x32xf32>
    %653 = tpu.concatenate %651, %652 in 0 : vector<11x32xf32>, vector<5x32xf32> -> vector<16x32xf32>
    %c3_i32_303 = arith.constant 3 : i32
    %654 = vector.broadcast %c3_i32_303 : i32 to vector<16x32xi32>
    %655 = arith.cmpi eq, %609, %654 : vector<16x32xi32>
    %cst_304 = arith.constant 0.000000e+00 : f32
    %656 = vector.broadcast %cst_304 : f32 to vector<16x32xf32>
    %657 = arith.select %655, %656, %653 : vector<16x32xi1>, vector<16x32xf32>
    %658 = tpu.concatenate %616, %619, %626, %633, %364, %640, %647, %650, %657 in 1 : vector<16x32xf32>, vector<16x32xf32>, vector<16x32xf32>, vector<16x32xf32>, vector<16x32xf32>, vector<16x32xf32>, vector<16x32xf32>, vector<16x32xf32>, vector<16x32xf32> -> vector<16x288xf32>
    %c0_305 = arith.constant 0 : index
    %c0_306 = arith.constant 0 : index
    %659 = vector.load %arg22[%c0_305, %c0_306] : memref<288x16xf32, #tpu.memory_space<vmem>>, vector<288x16xf32>
    %c0_307 = arith.constant 0 : index
    %c0_308 = arith.constant 0 : index
    %660 = vector.load %arg23[%c0_307, %c0_308] : memref<1x16xf32, #tpu.memory_space<vmem>>, vector<1x16xf32>
    %cst_309 = arith.constant dense<0.000000e+00> : vector<16x16xf32>
    %661 = tpu.matmul %658, %659, %cst_309 {dimension_numbers = #tpu.dot_dimension_numbers<[1], [0], [0], [1], [0, 0, 1, 1], [], []>} : vector<16x288xf32>, vector<288x16xf32>, vector<16x16xf32> -> vector<16x16xf32>
    %662 = vector.broadcast %660 : vector<1x16xf32> to vector<16x16xf32>
    %663 = arith.addf %661, %662 : vector<16x16xf32>
    %cst_310 = arith.constant 0.000000e+00 : f32
    %664 = vector.broadcast %cst_310 : f32 to vector<16x16xf32>
    %665 = arith.maximumf %663, %664 : vector<16x16xf32>
    %c0_311 = arith.constant 0 : index
    %c0_312 = arith.constant 0 : index
    %666 = vector.load %arg30[%c0_311, %c0_312] : memref<64x16xf32, #tpu.memory_space<vmem>>, vector<64x16xf32>
    %cst_313 = arith.constant dense<0.000000e+00> : vector<64x16xf32>
    %667 = tpu.matmul %666, %665, %cst_313 {dimension_numbers = #tpu.dot_dimension_numbers<[1], [0], [0], [1], [0, 0, 1, 1], [], []>} : vector<64x16xf32>, vector<16x16xf32>, vector<64x16xf32> -> vector<64x16xf32>
    %668 = arith.addf %667, %606 : vector<64x16xf32>
    %669 = tpu.iota {dimensions = array<i32: 0>} : vector<64x16xi32>
    %c7_i32_314 = arith.constant 7 : i32
    %670 = vector.broadcast %c7_i32_314 : i32 to vector<64x16xi32>
    %671 = arith.andi %669, %670 : vector<64x16xi32>
    %cst_315 = arith.constant 0.000000e+00 : f32
    %672 = vector.broadcast %cst_315 : f32 to vector<9x16xf32>
    %673 = vector.extract_strided_slice %668 {offsets = [0, 0], sizes = [55, 16], strides = [1, 1]} : vector<64x16xf32> to vector<55x16xf32>
    %674 = tpu.concatenate %672, %673 in 0 : vector<9x16xf32>, vector<55x16xf32> -> vector<64x16xf32>
    %c0_i32_316 = arith.constant 0 : i32
    %675 = vector.broadcast %c0_i32_316 : i32 to vector<64x16xi32>
    %676 = arith.cmpi eq, %671, %675 : vector<64x16xi32>
    %cst_317 = arith.constant 0.000000e+00 : f32
    %677 = vector.broadcast %cst_317 : f32 to vector<64x16xf32>
    %678 = arith.select %676, %677, %674 : vector<64x16xi1>, vector<64x16xf32>
    %cst_318 = arith.constant 0.000000e+00 : f32
    %679 = vector.broadcast %cst_318 : f32 to vector<8x16xf32>
    %680 = vector.extract_strided_slice %668 {offsets = [0, 0], sizes = [56, 16], strides = [1, 1]} : vector<64x16xf32> to vector<56x16xf32>
    %681 = tpu.concatenate %679, %680 in 0 : vector<8x16xf32>, vector<56x16xf32> -> vector<64x16xf32>
    %cst_319 = arith.constant 0.000000e+00 : f32
    %682 = vector.broadcast %cst_319 : f32 to vector<7x16xf32>
    %683 = vector.extract_strided_slice %668 {offsets = [0, 0], sizes = [57, 16], strides = [1, 1]} : vector<64x16xf32> to vector<57x16xf32>
    %684 = tpu.concatenate %682, %683 in 0 : vector<7x16xf32>, vector<57x16xf32> -> vector<64x16xf32>
    %c7_i32_320 = arith.constant 7 : i32
    %685 = vector.broadcast %c7_i32_320 : i32 to vector<64x16xi32>
    %686 = arith.cmpi eq, %671, %685 : vector<64x16xi32>
    %cst_321 = arith.constant 0.000000e+00 : f32
    %687 = vector.broadcast %cst_321 : f32 to vector<64x16xf32>
    %688 = arith.select %686, %687, %684 : vector<64x16xi1>, vector<64x16xf32>
    %cst_322 = arith.constant 0.000000e+00 : f32
    %689 = vector.broadcast %cst_322 : f32 to vector<1x16xf32>
    %690 = vector.extract_strided_slice %668 {offsets = [0, 0], sizes = [63, 16], strides = [1, 1]} : vector<64x16xf32> to vector<63x16xf32>
    %691 = tpu.concatenate %689, %690 in 0 : vector<1x16xf32>, vector<63x16xf32> -> vector<64x16xf32>
    %c0_i32_323 = arith.constant 0 : i32
    %692 = vector.broadcast %c0_i32_323 : i32 to vector<64x16xi32>
    %693 = arith.cmpi eq, %671, %692 : vector<64x16xi32>
    %cst_324 = arith.constant 0.000000e+00 : f32
    %694 = vector.broadcast %cst_324 : f32 to vector<64x16xf32>
    %695 = arith.select %693, %694, %691 : vector<64x16xi1>, vector<64x16xf32>
    %696 = vector.extract_strided_slice %668 {offsets = [1, 0], sizes = [63, 16], strides = [1, 1]} : vector<64x16xf32> to vector<63x16xf32>
    %cst_325 = arith.constant 0.000000e+00 : f32
    %697 = vector.broadcast %cst_325 : f32 to vector<1x16xf32>
    %698 = tpu.concatenate %696, %697 in 0 : vector<63x16xf32>, vector<1x16xf32> -> vector<64x16xf32>
    %c7_i32_326 = arith.constant 7 : i32
    %699 = vector.broadcast %c7_i32_326 : i32 to vector<64x16xi32>
    %700 = arith.cmpi eq, %671, %699 : vector<64x16xi32>
    %cst_327 = arith.constant 0.000000e+00 : f32
    %701 = vector.broadcast %cst_327 : f32 to vector<64x16xf32>
    %702 = arith.select %700, %701, %698 : vector<64x16xi1>, vector<64x16xf32>
    %703 = vector.extract_strided_slice %668 {offsets = [7, 0], sizes = [57, 16], strides = [1, 1]} : vector<64x16xf32> to vector<57x16xf32>
    %cst_328 = arith.constant 0.000000e+00 : f32
    %704 = vector.broadcast %cst_328 : f32 to vector<7x16xf32>
    %705 = tpu.concatenate %703, %704 in 0 : vector<57x16xf32>, vector<7x16xf32> -> vector<64x16xf32>
    %c0_i32_329 = arith.constant 0 : i32
    %706 = vector.broadcast %c0_i32_329 : i32 to vector<64x16xi32>
    %707 = arith.cmpi eq, %671, %706 : vector<64x16xi32>
    %cst_330 = arith.constant 0.000000e+00 : f32
    %708 = vector.broadcast %cst_330 : f32 to vector<64x16xf32>
    %709 = arith.select %707, %708, %705 : vector<64x16xi1>, vector<64x16xf32>
    %710 = vector.extract_strided_slice %668 {offsets = [8, 0], sizes = [56, 16], strides = [1, 1]} : vector<64x16xf32> to vector<56x16xf32>
    %cst_331 = arith.constant 0.000000e+00 : f32
    %711 = vector.broadcast %cst_331 : f32 to vector<8x16xf32>
    %712 = tpu.concatenate %710, %711 in 0 : vector<56x16xf32>, vector<8x16xf32> -> vector<64x16xf32>
    %713 = vector.extract_strided_slice %668 {offsets = [9, 0], sizes = [55, 16], strides = [1, 1]} : vector<64x16xf32> to vector<55x16xf32>
    %cst_332 = arith.constant 0.000000e+00 : f32
    %714 = vector.broadcast %cst_332 : f32 to vector<9x16xf32>
    %715 = tpu.concatenate %713, %714 in 0 : vector<55x16xf32>, vector<9x16xf32> -> vector<64x16xf32>
    %c7_i32_333 = arith.constant 7 : i32
    %716 = vector.broadcast %c7_i32_333 : i32 to vector<64x16xi32>
    %717 = arith.cmpi eq, %671, %716 : vector<64x16xi32>
    %cst_334 = arith.constant 0.000000e+00 : f32
    %718 = vector.broadcast %cst_334 : f32 to vector<64x16xf32>
    %719 = arith.select %717, %718, %715 : vector<64x16xi1>, vector<64x16xf32>
    %720 = tpu.concatenate %678, %681, %688, %695, %668, %702, %709, %712, %719 in 1 : vector<64x16xf32>, vector<64x16xf32>, vector<64x16xf32>, vector<64x16xf32>, vector<64x16xf32>, vector<64x16xf32>, vector<64x16xf32>, vector<64x16xf32>, vector<64x16xf32> -> vector<64x144xf32>
    %c0_335 = arith.constant 0 : index
    %c0_336 = arith.constant 0 : index
    %721 = vector.load %arg24[%c0_335, %c0_336] : memref<144x16xf32, #tpu.memory_space<vmem>>, vector<144x16xf32>
    %c0_337 = arith.constant 0 : index
    %c0_338 = arith.constant 0 : index
    %722 = vector.load %arg25[%c0_337, %c0_338] : memref<1x16xf32, #tpu.memory_space<vmem>>, vector<1x16xf32>
    %cst_339 = arith.constant dense<0.000000e+00> : vector<64x16xf32>
    %723 = tpu.matmul %720, %721, %cst_339 {dimension_numbers = #tpu.dot_dimension_numbers<[1], [0], [0], [1], [0, 0, 1, 1], [], []>} : vector<64x144xf32>, vector<144x16xf32>, vector<64x16xf32> -> vector<64x16xf32>
    %724 = vector.broadcast %722 : vector<1x16xf32> to vector<64x16xf32>
    %725 = arith.addf %723, %724 : vector<64x16xf32>
    %cst_340 = arith.constant 0.000000e+00 : f32
    %726 = vector.broadcast %cst_340 : f32 to vector<64x16xf32>
    %727 = arith.maximumf %725, %726 : vector<64x16xf32>
    %c0_341 = arith.constant 0 : index
    %c0_342 = arith.constant 0 : index
    %c0_343 = arith.constant 0 : index
    %728 = vector.load %arg31[%c0_341, %c0_342, %c0_343] : memref<1x64x16xf32, #tpu.memory_space<vmem>>, vector<1x64x16xf32>
    %729 = vector.shape_cast %728 : vector<1x64x16xf32> to vector<64x16xf32>
    %730 = vector.shape_cast %727 : vector<64x16xf32> to vector<1x64x16xf32>
    tpu.vector_store %arg31[%c0_341, %c0_342, %c0_343], %730 {strides = array<i32>} : memref<1x64x16xf32, #tpu.memory_space<vmem>>, vector<1x64x16xf32>,
    return
  }
  func.func @transform_0(%arg0: i32) -> (i32, i32, i32) {
    %c0_i32 = arith.constant 0 : i32
    %c0_i32_0 = arith.constant 0 : i32
    %c0_i32_1 = arith.constant 0 : i32
    return %arg0, %c0_i32, %c0_i32_0 : i32, i32, i32
  }
  func.func @transform_1(%arg0: i32) -> (i32, i32) {
    %c0_i32 = arith.constant 0 : i32
    %c0_i32_0 = arith.constant 0 : i32
    %c0_i32_1 = arith.constant 0 : i32
    return %c0_i32, %c0_i32_0 : i32, i32
  }
  func.func @transform_2(%arg0: i32) -> (i32, i32) {
    %c0_i32 = arith.constant 0 : i32
    %c0_i32_0 = arith.constant 0 : i32
    %c0_i32_1 = arith.constant 0 : i32
    return %c0_i32, %c0_i32_0 : i32, i32
  }
  func.func @transform_3(%arg0: i32) -> (i32, i32) {
    %c0_i32 = arith.constant 0 : i32
    %c0_i32_0 = arith.constant 0 : i32
    %c0_i32_1 = arith.constant 0 : i32
    return %c0_i32, %c0_i32_0 : i32, i32
  }
  func.func @transform_4(%arg0: i32) -> (i32, i32) {
    %c0_i32 = arith.constant 0 : i32
    %c0_i32_0 = arith.constant 0 : i32
    %c0_i32_1 = arith.constant 0 : i32
    return %c0_i32, %c0_i32_0 : i32, i32
  }
  func.func @transform_5(%arg0: i32) -> (i32, i32) {
    %c0_i32 = arith.constant 0 : i32
    %c0_i32_0 = arith.constant 0 : i32
    %c0_i32_1 = arith.constant 0 : i32
    return %c0_i32, %c0_i32_0 : i32, i32
  }
  func.func @transform_6(%arg0: i32) -> (i32, i32) {
    %c0_i32 = arith.constant 0 : i32
    %c0_i32_0 = arith.constant 0 : i32
    %c0_i32_1 = arith.constant 0 : i32
    return %c0_i32, %c0_i32_0 : i32, i32
  }
  func.func @transform_7(%arg0: i32) -> (i32, i32) {
    %c0_i32 = arith.constant 0 : i32
    %c0_i32_0 = arith.constant 0 : i32
    %c0_i32_1 = arith.constant 0 : i32
    return %c0_i32, %c0_i32_0 : i32, i32
  }
  func.func @transform_8(%arg0: i32) -> (i32, i32) {
    %c0_i32 = arith.constant 0 : i32
    %c0_i32_0 = arith.constant 0 : i32
    %c0_i32_1 = arith.constant 0 : i32
    return %c0_i32, %c0_i32_0 : i32, i32
  }
  func.func @transform_9(%arg0: i32) -> (i32, i32) {
    %c0_i32 = arith.constant 0 : i32
    %c0_i32_0 = arith.constant 0 : i32
    %c0_i32_1 = arith.constant 0 : i32
    return %c0_i32, %c0_i32_0 : i32, i32
  }
  func.func @transform_10(%arg0: i32) -> (i32, i32) {
    %c0_i32 = arith.constant 0 : i32
    %c0_i32_0 = arith.constant 0 : i32
    %c0_i32_1 = arith.constant 0 : i32
    return %c0_i32, %c0_i32_0 : i32, i32
  }
  func.func @transform_11(%arg0: i32) -> (i32, i32) {
    %c0_i32 = arith.constant 0 : i32
    %c0_i32_0 = arith.constant 0 : i32
    %c0_i32_1 = arith.constant 0 : i32
    return %c0_i32, %c0_i32_0 : i32, i32
  }
  func.func @transform_12(%arg0: i32) -> (i32, i32) {
    %c0_i32 = arith.constant 0 : i32
    %c0_i32_0 = arith.constant 0 : i32
    %c0_i32_1 = arith.constant 0 : i32
    return %c0_i32, %c0_i32_0 : i32, i32
  }
  func.func @transform_13(%arg0: i32) -> (i32, i32) {
    %c0_i32 = arith.constant 0 : i32
    %c0_i32_0 = arith.constant 0 : i32
    %c0_i32_1 = arith.constant 0 : i32
    return %c0_i32, %c0_i32_0 : i32, i32
  }
  func.func @transform_14(%arg0: i32) -> (i32, i32) {
    %c0_i32 = arith.constant 0 : i32
    %c0_i32_0 = arith.constant 0 : i32
    %c0_i32_1 = arith.constant 0 : i32
    return %c0_i32, %c0_i32_0 : i32, i32
  }
  func.func @transform_15(%arg0: i32) -> (i32, i32) {
    %c0_i32 = arith.constant 0 : i32
    %c0_i32_0 = arith.constant 0 : i32
    %c0_i32_1 = arith.constant 0 : i32
    return %c0_i32, %c0_i32_0 : i32, i32
  }
  func.func @transform_16(%arg0: i32) -> (i32, i32) {
    %c0_i32 = arith.constant 0 : i32
    %c0_i32_0 = arith.constant 0 : i32
    %c0_i32_1 = arith.constant 0 : i32
    return %c0_i32, %c0_i32_0 : i32, i32
  }
  func.func @transform_17(%arg0: i32) -> (i32, i32) {
    %c0_i32 = arith.constant 0 : i32
    %c0_i32_0 = arith.constant 0 : i32
    %c0_i32_1 = arith.constant 0 : i32
    return %c0_i32, %c0_i32_0 : i32, i32
  }
  func.func @transform_18(%arg0: i32) -> (i32, i32) {
    %c0_i32 = arith.constant 0 : i32
    %c0_i32_0 = arith.constant 0 : i32
    %c0_i32_1 = arith.constant 0 : i32
    return %c0_i32, %c0_i32_0 : i32, i32
  }
  func.func @transform_19(%arg0: i32) -> (i32, i32) {
    %c0_i32 = arith.constant 0 : i32
    %c0_i32_0 = arith.constant 0 : i32
    %c0_i32_1 = arith.constant 0 : i32
    return %c0_i32, %c0_i32_0 : i32, i32
  }
  func.func @transform_20(%arg0: i32) -> (i32, i32) {
    %c0_i32 = arith.constant 0 : i32
    %c0_i32_0 = arith.constant 0 : i32
    %c0_i32_1 = arith.constant 0 : i32
    return %c0_i32, %c0_i32_0 : i32, i32
  }
  func.func @transform_21(%arg0: i32) -> (i32, i32) {
    %c0_i32 = arith.constant 0 : i32
    %c0_i32_0 = arith.constant 0 : i32
    %c0_i32_1 = arith.constant 0 : i32
    return %c0_i32, %c0_i32_0 : i32, i32
  }
  func.func @transform_22(%arg0: i32) -> (i32, i32) {
    %c0_i32 = arith.constant 0 : i32
    %c0_i32_0 = arith.constant 0 : i32
    %c0_i32_1 = arith.constant 0 : i32
    return %c0_i32, %c0_i32_0 : i32, i32
  }
  func.func @transform_23(%arg0: i32) -> (i32, i32) {
    %c0_i32 = arith.constant 0 : i32
    %c0_i32_0 = arith.constant 0 : i32
    %c0_i32_1 = arith.constant 0 : i32
    return %c0_i32, %c0_i32_0 : i32, i32
  }
  func.func @transform_24(%arg0: i32) -> (i32, i32) {
    %c0_i32 = arith.constant 0 : i32
    %c0_i32_0 = arith.constant 0 : i32
    %c0_i32_1 = arith.constant 0 : i32
    return %c0_i32, %c0_i32_0 : i32, i32
  }
  func.func @transform_25(%arg0: i32) -> (i32, i32) {
    %c0_i32 = arith.constant 0 : i32
    %c0_i32_0 = arith.constant 0 : i32
    %c0_i32_1 = arith.constant 0 : i32
    return %c0_i32, %c0_i32_0 : i32, i32
  }
  func.func @transform_26(%arg0: i32) -> (i32, i32) {
    %c0_i32 = arith.constant 0 : i32
    %c0_i32_0 = arith.constant 0 : i32
    %c0_i32_1 = arith.constant 0 : i32
    return %c0_i32, %c0_i32_0 : i32, i32
  }
  func.func @transform_27(%arg0: i32) -> (i32, i32) {
    %c0_i32 = arith.constant 0 : i32
    %c0_i32_0 = arith.constant 0 : i32
    %c0_i32_1 = arith.constant 0 : i32
    return %c0_i32, %c0_i32_0 : i32, i32
  }
  func.func @transform_28(%arg0: i32) -> (i32, i32) {
    %c0_i32 = arith.constant 0 : i32
    %c0_i32_0 = arith.constant 0 : i32
    %c0_i32_1 = arith.constant 0 : i32
    return %c0_i32, %c0_i32_0 : i32, i32
  }
  func.func @transform_29(%arg0: i32) -> (i32, i32) {
    %c0_i32 = arith.constant 0 : i32
    %c0_i32_0 = arith.constant 0 : i32
    %c0_i32_1 = arith.constant 0 : i32
    return %c0_i32, %c0_i32_0 : i32, i32
  }
  func.func @transform_30(%arg0: i32) -> (i32, i32, i32) {
    %c0_i32 = arith.constant 0 : i32
    %c0_i32_0 = arith.constant 0 : i32
    %c0_i32_1 = arith.constant 0 : i32
    return %arg0, %c0_i32, %c0_i32_0 : i32, i32, i32
  }
}

</mosaic_0001>

<llo_original>
// kernel: dla_compose_forward.1
$region0: #{dla_compose_forward.1}
  #allocation0 [shape = 'u32[]', space=smem, size = 0x4, offset = 0x4, fixed_abs, tag = 'smem constant byte address 0x4 - core index']
  #allocation1 [shape = 'u32[144,128]{1,0:T(1,128)}', space=vmem, size = 0x12000, scoped, tag = 'internal scratch']
  %s0 = inlined_call_operand.smem [shape: u32[31], index: -1, kind: input, shape index: {}]
  %s1 = sld [smem:[%s0]]
  %s2 = scalar_lea.smem %s0, 1
  %s3 = sld [smem:[%s2]]
  %s4 = scalar_lea.smem %s0, 2
  %s5 = sld [smem:[%s4]]
  %s6 = scalar_lea.smem %s0, 3
  %s7 = sld [smem:[%s6]]
  %s8 = scalar_lea.smem %s0, 4
  %s9 = sld [smem:[%s8]]
  %s10 = scalar_lea.smem %s0, 5
  %s11 = sld [smem:[%s10]]
  %s12 = scalar_lea.smem %s0, 6
  %s13 = sld [smem:[%s12]]
  %s14 = scalar_lea.smem %s0, 7
  %s15 = sld [smem:[%s14]]
  %s16 = scalar_lea.smem %s0, 8
  %s17 = sld [smem:[%s16]]
  %s18 = scalar_lea.smem %s0, 9
  %s19 = sld [smem:[%s18]]
  %s20 = scalar_lea.smem %s0, 10
  %s21 = sld [smem:[%s20]]
  %s22 = scalar_lea.smem %s0, 11
  %s23 = sld [smem:[%s22]]
  %s24 = scalar_lea.smem %s0, 12
  %s25 = sld [smem:[%s24]]
  %s26 = scalar_lea.smem %s0, 13
  %s27 = sld [smem:[%s26]]
  %s28 = scalar_lea.smem %s0, 14
  %s29 = sld [smem:[%s28]]
  %s30 = scalar_lea.smem %s0, 15
  %s31 = sld [smem:[%s30]]
  %s32 = scalar_lea.smem %s0, 16
  %s33 = sld [smem:[%s32]]
  %s34 = scalar_lea.smem %s0, 17
  %s35 = sld [smem:[%s34]]
  %s36 = scalar_lea.smem %s0, 18
  %s37 = sld [smem:[%s36]]
  %s38 = scalar_lea.smem %s0, 19
  %s39 = sld [smem:[%s38]]
  %s40 = scalar_lea.smem %s0, 20
  %s41 = sld [smem:[%s40]]
  %s42 = scalar_lea.smem %s0, 21
  %s43 = sld [smem:[%s42]]
  %s44 = scalar_lea.smem %s0, 22
  %s45 = sld [smem:[%s44]]
  %s46 = scalar_lea.smem %s0, 23
  %s47 = sld [smem:[%s46]]
  %s48 = scalar_lea.smem %s0, 24
  %s49 = sld [smem:[%s48]]
  %s50 = scalar_lea.smem %s0, 25
  %s51 = sld [smem:[%s50]]
  %s52 = scalar_lea.smem %s0, 26
  %s53 = sld [smem:[%s52]]
  %s54 = scalar_lea.smem %s0, 27
  %s55 = sld [smem:[%s54]]
  %s56 = scalar_lea.smem %s0, 28
  %s57 = sld [smem:[%s56]]
  %s58 = scalar_lea.smem %s0, 29
  %s59 = sld [smem:[%s58]]
  %s60 = scalar_lea.smem %s0, 30
  %s61 = sld [smem:[%s60]]
  %s62 = sld [smem:[#allocation0]]
  $region153: #{dla_compose_forward.1} parent=0
    _
  %s64 = ssub.s32 1, %s62
  %s65 = scalar_select 0, %s64, %s62
  $region1: #{dla_compose_forward.1} parent=0
    #allocation2 [shape = 'u8[65536]{0}', space=vmem, size = 0x10000, scoped, tag = 'output window, operand 0']
    #allocation3 [shape = 's32[2]{0}', space=sflag, size = 0x8, scoped, tag = 'scoped memory for dla_compose_forward.1']
    %66 = vsyncpa [#allocation3], 0
    %s67 = scalar_lea.sflag [#allocation3], 1
    %68 = vsyncpa %s67, 0
    loop: start=0, step=1, limit=4
    $region2: #{dla_compose_forward.1} parent=1 // loop_pre_header
      _
    $region3: #{dla_compose_forward.1} parent=1 // loop_header
      %s70 = sphi 0, %s74
      %p71 = scmp.ge.s32.totalorder %s70, 4
      %s80 = sphi 0, %s82
      %s83 = sphi 0, %s80
      %s84 = sphi 0, %s83
      %s100 = sphi 0, %s84
      %s104 = sphi 0, %s104
      %s106 = sphi 0, %s104
      %s107 = sphi 0, %s106
      %s121 = sphi 0, %s107
      %s125 = sphi 0, %s125
      %s127 = sphi 0, %s125
      %s128 = sphi 0, %s127
      %s142 = sphi 0, %s128
      %s146 = sphi 0, %s146
      %s148 = sphi 0, %s146
      %s149 = sphi 0, %s148
      %s163 = sphi 0, %s149
      %s167 = sphi 0, %s167
      %s169 = sphi 0, %s167
      %s170 = sphi 0, %s169
      %s184 = sphi 0, %s170
      %s188 = sphi 0, %s188
      %s190 = sphi 0, %s188
      %s191 = sphi 0, %s190
      %s205 = sphi 0, %s191
      %s209 = sphi 0, %s209
      %s211 = sphi 0, %s209
      %s212 = sphi 0, %s211
      %s226 = sphi 0, %s212
      %s230 = sphi 0, %s230
      %s232 = sphi 0, %s230
      %s233 = sphi 0, %s232
      %s247 = sphi 0, %s233
      %s251 = sphi 0, %s251
      %s253 = sphi 0, %s251
      %s254 = sphi 0, %s253
      %s268 = sphi 0, %s254
      %s272 = sphi 0, %s272
      %s274 = sphi 0, %s272
      %s275 = sphi 0, %s274
      %s289 = sphi 0, %s275
      %s293 = sphi 0, %s293
      %s295 = sphi 0, %s293
      %s296 = sphi 0, %s295
      %s310 = sphi 0, %s296
      %s314 = sphi 0, %s314
      %s316 = sphi 0, %s314
      %s317 = sphi 0, %s316
      %s331 = sphi 0, %s317
      %s335 = sphi 0, %s335
      %s337 = sphi 0, %s335
      %s338 = sphi 0, %s337
      %s352 = sphi 0, %s338
      %s356 = sphi 0, %s356
      %s358 = sphi 0, %s356
      %s359 = sphi 0, %s358
      %s373 = sphi 0, %s359
      %s377 = sphi 0, %s377
      %s379 = sphi 0, %s377
      %s380 = sphi 0, %s379
      %s394 = sphi 0, %s380
      %s398 = sphi 0, %s398
      %s400 = sphi 0, %s398
      %s401 = sphi 0, %s400
      %s415 = sphi 0, %s401
      %s419 = sphi 0, %s419
      %s421 = sphi 0, %s419
      %s422 = sphi 0, %s421
      %s436 = sphi 0, %s422
      %s440 = sphi 0, %s440
      %s442 = sphi 0, %s440
      %s443 = sphi 0, %s442
      %s457 = sphi 0, %s443
      %s461 = sphi 0, %s461
      %s463 = sphi 0, %s461
      %s464 = sphi 0, %s463
      %s478 = sphi 0, %s464
      %s482 = sphi 0, %s482
      %s484 = sphi 0, %s482
      %s485 = sphi 0, %s484
      %s499 = sphi 0, %s485
      %s503 = sphi 0, %s503
      %s505 = sphi 0, %s503
      %s506 = sphi 0, %s505
      %s520 = sphi 0, %s506
      %s524 = sphi 0, %s524
      %s526 = sphi 0, %s524
      %s527 = sphi 0, %s526
      %s541 = sphi 0, %s527
      %s545 = sphi 0, %s545
      %s547 = sphi 0, %s545
      %s548 = sphi 0, %s547
      %s562 = sphi 0, %s548
      %s566 = sphi 0, %s566
      %s568 = sphi 0, %s566
      %s569 = sphi 0, %s568
      %s583 = sphi 0, %s569
      %s587 = sphi 0, %s587
      %s589 = sphi 0, %s587
      %s590 = sphi 0, %s589
      %s604 = sphi 0, %s590
      %s608 = sphi 0, %s608
      %s610 = sphi 0, %s608
      %s611 = sphi 0, %s610
      %s625 = sphi 0, %s611
      %s629 = sphi 0, %s629
      %s631 = sphi 0, %s629
      %s632 = sphi 0, %s631
      %s646 = sphi 0, %s632
      %s650 = sphi 0, %s650
      %s652 = sphi 0, %s650
      %s653 = sphi 0, %s652
      %s667 = sphi 0, %s653
      %s671 = sphi 0, %s671
      %s673 = sphi 0, %s671
      %s674 = sphi 0, %s673
      %s688 = sphi 0, %s674
      %s692 = sphi 0, %s692
      %s694 = sphi 0, %s692
      %s695 = sphi 0, %s694
      %s709 = sphi 0, %s695
      %s715 = sphi 0, %s717
      %s718 = sphi 0, %s715
      %s719 = sphi 0, %s718
      %s735 = sphi 0, %s719
    $region4: #{dla_compose_forward.1} parent=1 // loop_header_branch
      %73 = sbr.rel (%p71) target = $region8
    $region5: #{dla_compose_forward.1} parent=1 // loop_body
      %s75 = ssub.s32 %s70, 1
      %s76 = ssub.s32 %s70, 2
      %s77 = sadd.s32 %s70, 1
      %s78 = ssub.s32 %s70, %s77
      %p79 = scmp.eq.s32.totalorder %s78, 0
      %s81 = sadd.s32 %s80, 1
      %s82 = scalar_select %p79, %s80, %s81
      %p85 = pneg %p79
      %p86 = scmp.eq.s32.totalorder %s70, 1
      %p87 = por %p85, %p86
      %p88 = scmp.ne.s32.totalorder %s80, %s83
      %p89 = scmp.eq.s32.totalorder %s70, 0
      %p90 = por %p88, %p89
      %p91 = scmp.ne.s32.totalorder %s80, %s83
      %p92 = scmp.eq.s32.totalorder %s75, 1
      %p93 = por %p91, %p92
      %p94 = scmp.ne.s32.totalorder %s83, %s84
      %p95 = scmp.eq.s32.totalorder %s75, 0
      %p96 = por %p94, %p95
      %p97 = scmp.ne.s32.totalorder %s83, %s84
      %p98 = scmp.eq.s32.totalorder %s76, 1
      %p99 = por %p97, %p98
      %p101 = scmp.ne.s32.totalorder %s84, %s100
      %p102 = scmp.eq.s32.totalorder %s76, 0
      %p103 = por %p101, %p102
      %s105 = sadd.s32 %s104, 1
      %p108 = scmp.eq.s32.totalorder %s70, 1
      %p109 = scmp.ne.s32.totalorder %s104, %s106
      %p110 = scmp.eq.s32.totalorder %s70, 0
      %p111 = por %p109, %p110
      %p112 = scmp.ne.s32.totalorder %s104, %s106
      %p113 = scmp.eq.s32.totalorder %s75, 1
      %p114 = por %p112, %p113
      %p115 = scmp.ne.s32.totalorder %s106, %s107
      %p116 = scmp.eq.s32.totalorder %s75, 0
      %p117 = por %p115, %p116
      %p118 = scmp.ne.s32.totalorder %s106, %s107
      %p119 = scmp.eq.s32.totalorder %s76, 1
      %p120 = por %p118, %p119
      %p122 = scmp.ne.s32.totalorder %s107, %s121
      %p123 = scmp.eq.s32.totalorder %s76, 0
      %p124 = por %p122, %p123
      %s126 = sadd.s32 %s125, 1
      %p129 = scmp.eq.s32.totalorder %s70, 1
      %p130 = scmp.ne.s32.totalorder %s125, %s127
      %p131 = scmp.eq.s32.totalorder %s70, 0
      %p132 = por %p130, %p131
      %p133 = scmp.ne.s32.totalorder %s125, %s127
      %p134 = scmp.eq.s32.totalorder %s75, 1
      %p135 = por %p133, %p134
      %p136 = scmp.ne.s32.totalorder %s127, %s128
      %p137 = scmp.eq.s32.totalorder %s75, 0
      %p138 = por %p136, %p137
      %p139 = scmp.ne.s32.totalorder %s127, %s128
      %p140 = scmp.eq.s32.totalorder %s76, 1
      %p141 = por %p139, %p140
      %p143 = scmp.ne.s32.totalorder %s128, %s142
      %p144 = scmp.eq.s32.totalorder %s76, 0
      %p145 = por %p143, %p144
      %s147 = sadd.s32 %s146, 1
      %p150 = scmp.eq.s32.totalorder %s70, 1
      %p151 = scmp.ne.s32.totalorder %s146, %s148
      %p152 = scmp.eq.s32.totalorder %s70, 0
      %p153 = por %p151, %p152
      %p154 = scmp.ne.s32.totalorder %s146, %s148
      %p155 = scmp.eq.s32.totalorder %s75, 1
      %p156 = por %p154, %p155
      %p157 = scmp.ne.s32.totalorder %s148, %s149
      %p158 = scmp.eq.s32.totalorder %s75, 0
      %p159 = por %p157, %p158
      %p160 = scmp.ne.s32.totalorder %s148, %s149
      %p161 = scmp.eq.s32.totalorder %s76, 1
      %p162 = por %p160, %p161
      %p164 = scmp.ne.s32.totalorder %s149, %s163
      %p165 = scmp.eq.s32.totalorder %s76, 0
      %p166 = por %p164, %p165
      %s168 = sadd.s32 %s167, 1
      %p171 = scmp.eq.s32.totalorder %s70, 1
      %p172 = scmp.ne.s32.totalorder %s167, %s169
      %p173 = scmp.eq.s32.totalorder %s70, 0
      %p174 = por %p172, %p173
      %p175 = scmp.ne.s32.totalorder %s167, %s169
      %p176 = scmp.eq.s32.totalorder %s75, 1
      %p177 = por %p175, %p176
      %p178 = scmp.ne.s32.totalorder %s169, %s170
      %p179 = scmp.eq.s32.totalorder %s75, 0
      %p180 = por %p178, %p179
      %p181 = scmp.ne.s32.totalorder %s169, %s170
      %p182 = scmp.eq.s32.totalorder %s76, 1
      %p183 = por %p181, %p182
      %p185 = scmp.ne.s32.totalorder %s170, %s184
      %p186 = scmp.eq.s32.totalorder %s76, 0
      %p187 = por %p185, %p186
      %s189 = sadd.s32 %s188, 1
      %p192 = scmp.eq.s32.totalorder %s70, 1
      %p193 = scmp.ne.s32.totalorder %s188, %s190
      %p194 = scmp.eq.s32.totalorder %s70, 0
      %p195 = por %p193, %p194
      %p196 = scmp.ne.s32.totalorder %s188, %s190
      %p197 = scmp.eq.s32.totalorder %s75, 1
      %p198 = por %p196, %p197
      %p199 = scmp.ne.s32.totalorder %s190, %s191
      %p200 = scmp.eq.s32.totalorder %s75, 0
      %p201 = por %p199, %p200
      %p202 = scmp.ne.s32.totalorder %s190, %s191
      %p203 = scmp.eq.s32.totalorder %s76, 1
      %p204 = por %p202, %p203
      %p206 = scmp.ne.s32.totalorder %s191, %s205
      %p207 = scmp.eq.s32.totalorder %s76, 0
      %p208 = por %p206, %p207
      %s210 = sadd.s32 %s209, 1
      %p213 = scmp.eq.s32.totalorder %s70, 1
      %p214 = scmp.ne.s32.totalorder %s209, %s211
      %p215 = scmp.eq.s32.totalorder %s70, 0
      %p216 = por %p214, %p215
      %p217 = scmp.ne.s32.totalorder %s209, %s211
      %p218 = scmp.eq.s32.totalorder %s75, 1
      %p219 = por %p217, %p218
      %p220 = scmp.ne.s32.totalorder %s211, %s212
      %p221 = scmp.eq.s32.totalorder %s75, 0
      %p222 = por %p220, %p221
      %p223 = scmp.ne.s32.totalorder %s211, %s212
      %p224 = scmp.eq.s32.totalorder %s76, 1
      %p225 = por %p223, %p224
      %p227 = scmp.ne.s32.totalorder %s212, %s226
      %p228 = scmp.eq.s32.totalorder %s76, 0
      %p229 = por %p227, %p228
      %s231 = sadd.s32 %s230, 1
      %p234 = scmp.eq.s32.totalorder %s70, 1
      %p235 = scmp.ne.s32.totalorder %s230, %s232
      %p236 = scmp.eq.s32.totalorder %s70, 0
      %p237 = por %p235, %p236
      %p238 = scmp.ne.s32.totalorder %s230, %s232
      %p239 = scmp.eq.s32.totalorder %s75, 1
      %p240 = por %p238, %p239
      %p241 = scmp.ne.s32.totalorder %s232, %s233
      %p242 = scmp.eq.s32.totalorder %s75, 0
      %p243 = por %p241, %p242
      %p244 = scmp.ne.s32.totalorder %s232, %s233
      %p245 = scmp.eq.s32.totalorder %s76, 1
      %p246 = por %p244, %p245
      %p248 = scmp.ne.s32.totalorder %s233, %s247
      %p249 = scmp.eq.s32.totalorder %s76, 0
      %p250 = por %p248, %p249
      %s252 = sadd.s32 %s251, 1
      %p255 = scmp.eq.s32.totalorder %s70, 1
      %p256 = scmp.ne.s32.totalorder %s251, %s253
      %p257 = scmp.eq.s32.totalorder %s70, 0
      %p258 = por %p256, %p257
      %p259 = scmp.ne.s32.totalorder %s251, %s253
      %p260 = scmp.eq.s32.totalorder %s75, 1
      %p261 = por %p259, %p260
      %p262 = scmp.ne.s32.totalorder %s253, %s254
      %p263 = scmp.eq.s32.totalorder %s75, 0
      %p264 = por %p262, %p263
      %p265 = scmp.ne.s32.totalorder %s253, %s254
      %p266 = scmp.eq.s32.totalorder %s76, 1
      %p267 = por %p265, %p266
      %p269 = scmp.ne.s32.totalorder %s254, %s268
      %p270 = scmp.eq.s32.totalorder %s76, 0
      %p271 = por %p269, %p270
      %s273 = sadd.s32 %s272, 1
      %p276 = scmp.eq.s32.totalorder %s70, 1
      %p277 = scmp.ne.s32.totalorder %s272, %s274
      %p278 = scmp.eq.s32.totalorder %s70, 0
      %p279 = por %p277, %p278
      %p280 = scmp.ne.s32.totalorder %s272, %s274
      %p281 = scmp.eq.s32.totalorder %s75, 1
      %p282 = por %p280, %p281
      %p283 = scmp.ne.s32.totalorder %s274, %s275
      %p284 = scmp.eq.s32.totalorder %s75, 0
      %p285 = por %p283, %p284
      %p286 = scmp.ne.s32.totalorder %s274, %s275
      %p287 = scmp.eq.s32.totalorder %s76, 1
      %p288 = por %p286, %p287
      %p290 = scmp.ne.s32.totalorder %s275, %s289
      %p291 = scmp.eq.s32.totalorder %s76, 0
      %p292 = por %p290, %p291
      %s294 = sadd.s32 %s293, 1
      %p297 = scmp.eq.s32.totalorder %s70, 1
      %p298 = scmp.ne.s32.totalorder %s293, %s295
      %p299 = scmp.eq.s32.totalorder %s70, 0
      %p300 = por %p298, %p299
      %p301 = scmp.ne.s32.totalorder %s293, %s295
      %p302 = scmp.eq.s32.totalorder %s75, 1
      %p303 = por %p301, %p302
      %p304 = scmp.ne.s32.totalorder %s295, %s296
      %p305 = scmp.eq.s32.totalorder %s75, 0
      %p306 = por %p304, %p305
      %p307 = scmp.ne.s32.totalorder %s295, %s296
      %p308 = scmp.eq.s32.totalorder %s76, 1
      %p309 = por %p307, %p308
      %p311 = scmp.ne.s32.totalorder %s296, %s310
      %p312 = scmp.eq.s32.totalorder %s76, 0
      %p313 = por %p311, %p312
      %s315 = sadd.s32 %s314, 1
      %p318 = scmp.eq.s32.totalorder %s70, 1
      %p319 = scmp.ne.s32.totalorder %s314, %s316
      %p320 = scmp.eq.s32.totalorder %s70, 0
      %p321 = por %p319, %p320
      %p322 = scmp.ne.s32.totalorder %s314, %s316
      %p323 = scmp.eq.s32.totalorder %s75, 1
      %p324 = por %p322, %p323
      %p325 = scmp.ne.s32.totalorder %s316, %s317
      %p326 = scmp.eq.s32.totalorder %s75, 0
      %p327 = por %p325, %p326
      %p328 = scmp.ne.s32.totalorder %s316, %s317
      %p329 = scmp.eq.s32.totalorder %s76, 1
      %p330 = por %p328, %p329
      %p332 = scmp.ne.s32.totalorder %s317, %s331
      %p333 = scmp.eq.s32.totalorder %s76, 0
      %p334 = por %p332, %p333
      %s336 = sadd.s32 %s335, 1
      %p339 = scmp.eq.s32.totalorder %s70, 1
      %p340 = scmp.ne.s32.totalorder %s335, %s337
      %p341 = scmp.eq.s32.totalorder %s70, 0
      %p342 = por %p340, %p341
      %p343 = scmp.ne.s32.totalorder %s335, %s337
      %p344 = scmp.eq.s32.totalorder %s75, 1
      %p345 = por %p343, %p344
      %p346 = scmp.ne.s32.totalorder %s337, %s338
      %p347 = scmp.eq.s32.totalorder %s75, 0
      %p348 = por %p346, %p347
      %p349 = scmp.ne.s32.totalorder %s337, %s338
      %p350 = scmp.eq.s32.totalorder %s76, 1
      %p351 = por %p349, %p350
      %p353 = scmp.ne.s32.totalorder %s338, %s352
      %p354 = scmp.eq.s32.totalorder %s76, 0
      %p355 = por %p353, %p354
      %s357 = sadd.s32 %s356, 1
      %p360 = scmp.eq.s32.totalorder %s70, 1
      %p361 = scmp.ne.s32.totalorder %s356, %s358
      %p362 = scmp.eq.s32.totalorder %s70, 0
      %p363 = por %p361, %p362
      %p364 = scmp.ne.s32.totalorder %s356, %s358
      %p365 = scmp.eq.s32.totalorder %s75, 1
      %p366 = por %p364, %p365
      %p367 = scmp.ne.s32.totalorder %s358, %s359
      %p368 = scmp.eq.s32.totalorder %s75, 0
      %p369 = por %p367, %p368
      %p370 = scmp.ne.s32.totalorder %s358, %s359
      %p371 = scmp.eq.s32.totalorder %s76, 1
      %p372 = por %p370, %p371
      %p374 = scmp.ne.s32.totalorder %s359, %s373
      %p375 = scmp.eq.s32.totalorder %s76, 0
      %p376 = por %p374, %p375
      %s378 = sadd.s32 %s377, 1
      %p381 = scmp.eq.s32.totalorder %s70, 1
      %p382 = scmp.ne.s32.totalorder %s377, %s379
      %p383 = scmp.eq.s32.totalorder %s70, 0
      %p384 = por %p382, %p383
      %p385 = scmp.ne.s32.totalorder %s377, %s379
      %p386 = scmp.eq.s32.totalorder %s75, 1
      %p387 = por %p385, %p386
      %p388 = scmp.ne.s32.totalorder %s379, %s380
      %p389 = scmp.eq.s32.totalorder %s75, 0
      %p390 = por %p388, %p389
      %p391 = scmp.ne.s32.totalorder %s379, %s380
      %p392 = scmp.eq.s32.totalorder %s76, 1
      %p393 = por %p391, %p392
      %p395 = scmp.ne.s32.totalorder %s380, %s394
      %p396 = scmp.eq.s32.totalorder %s76, 0
      %p397 = por %p395, %p396
      %s399 = sadd.s32 %s398, 1
      %p402 = scmp.eq.s32.totalorder %s70, 1
      %p403 = scmp.ne.s32.totalorder %s398, %s400
      %p404 = scmp.eq.s32.totalorder %s70, 0
      %p405 = por %p403, %p404
      %p406 = scmp.ne.s32.totalorder %s398, %s400
      %p407 = scmp.eq.s32.totalorder %s75, 1
      %p408 = por %p406, %p407
      %p409 = scmp.ne.s32.totalorder %s400, %s401
      %p410 = scmp.eq.s32.totalorder %s75, 0
      %p411 = por %p409, %p410
      %p412 = scmp.ne.s32.totalorder %s400, %s401
      %p413 = scmp.eq.s32.totalorder %s76, 1
      %p414 = por %p412, %p413
      %p416 = scmp.ne.s32.totalorder %s401, %s415
      %p417 = scmp.eq.s32.totalorder %s76, 0
      %p418 = por %p416, %p417
      %s420 = sadd.s32 %s419, 1
      %p423 = scmp.eq.s32.totalorder %s70, 1
      %p424 = scmp.ne.s32.totalorder %s419, %s421
      %p425 = scmp.eq.s32.totalorder %s70, 0
      %p426 = por %p424, %p425
      %p427 = scmp.ne.s32.totalorder %s419, %s421
      %p428 = scmp.eq.s32.totalorder %s75, 1
      %p429 = por %p427, %p428
      %p430 = scmp.ne.s32.totalorder %s421, %s422
      %p431 = scmp.eq.s32.totalorder %s75, 0
      %p432 = por %p430, %p431
      %p433 = scmp.ne.s32.totalorder %s421, %s422
      %p434 = scmp.eq.s32.totalorder %s76, 1
      %p435 = por %p433, %p434
      %p437 = scmp.ne.s32.totalorder %s422, %s436
      %p438 = scmp.eq.s32.totalorder %s76, 0
      %p439 = por %p437, %p438
      %s441 = sadd.s32 %s440, 1
      %p444 = scmp.eq.s32.totalorder %s70, 1
      %p445 = scmp.ne.s32.totalorder %s440, %s442
      %p446 = scmp.eq.s32.totalorder %s70, 0
      %p447 = por %p445, %p446
      %p448 = scmp.ne.s32.totalorder %s440, %s442
      %p449 = scmp.eq.s32.totalorder %s75, 1
      %p450 = por %p448, %p449
      %p451 = scmp.ne.s32.totalorder %s442, %s443
      %p452 = scmp.eq.s32.totalorder %s75, 0
      %p453 = por %p451, %p452
      %p454 = scmp.ne.s32.totalorder %s442, %s443
      %p455 = scmp.eq.s32.totalorder %s76, 1
      %p456 = por %p454, %p455
      %p458 = scmp.ne.s32.totalorder %s443, %s457
      %p459 = scmp.eq.s32.totalorder %s76, 0
      %p460 = por %p458, %p459
      %s462 = sadd.s32 %s461, 1
      %p465 = scmp.eq.s32.totalorder %s70, 1
      %p466 = scmp.ne.s32.totalorder %s461, %s463
      %p467 = scmp.eq.s32.totalorder %s70, 0
      %p468 = por %p466, %p467
      %p469 = scmp.ne.s32.totalorder %s461, %s463
      %p470 = scmp.eq.s32.totalorder %s75, 1
      %p471 = por %p469, %p470
      %p472 = scmp.ne.s32.totalorder %s463, %s464
      %p473 = scmp.eq.s32.totalorder %s75, 0
      %p474 = por %p472, %p473
      %p475 = scmp.ne.s32.totalorder %s463, %s464
      %p476 = scmp.eq.s32.totalorder %s76, 1
      %p477 = por %p475, %p476
      %p479 = scmp.ne.s32.totalorder %s464, %s478
      %p480 = scmp.eq.s32.totalorder %s76, 0
      %p481 = por %p479, %p480
      %s483 = sadd.s32 %s482, 1
      %p486 = scmp.eq.s32.totalorder %s70, 1
      %p487 = scmp.ne.s32.totalorder %s482, %s484
      %p488 = scmp.eq.s32.totalorder %s70, 0
      %p489 = por %p487, %p488
      %p490 = scmp.ne.s32.totalorder %s482, %s484
      %p491 = scmp.eq.s32.totalorder %s75, 1
      %p492 = por %p490, %p491
      %p493 = scmp.ne.s32.totalorder %s484, %s485
      %p494 = scmp.eq.s32.totalorder %s75, 0
      %p495 = por %p493, %p494
      %p496 = scmp.ne.s32.totalorder %s484, %s485
      %p497 = scmp.eq.s32.totalorder %s76, 1
      %p498 = por %p496, %p497
      %p500 = scmp.ne.s32.totalorder %s485, %s499
      %p501 = scmp.eq.s32.totalorder %s76, 0
      %p502 = por %p500, %p501
      %s504 = sadd.s32 %s503, 1
      %p507 = scmp.eq.s32.totalorder %s70, 1
      %p508 = scmp.ne.s32.totalorder %s503, %s505
      %p509 = scmp.eq.s32.totalorder %s70, 0
      %p510 = por %p508, %p509
      %p511 = scmp.ne.s32.totalorder %s503, %s505
      %p512 = scmp.eq.s32.totalorder %s75, 1
      %p513 = por %p511, %p512
      %p514 = scmp.ne.s32.totalorder %s505, %s506
      %p515 = scmp.eq.s32.totalorder %s75, 0
      %p516 = por %p514, %p515
      %p517 = scmp.ne.s32.totalorder %s505, %s506
      %p518 = scmp.eq.s32.totalorder %s76, 1
      %p519 = por %p517, %p518
      %p521 = scmp.ne.s32.totalorder %s506, %s520
      %p522 = scmp.eq.s32.totalorder %s76, 0
      %p523 = por %p521, %p522
      %s525 = sadd.s32 %s524, 1
      %p528 = scmp.eq.s32.totalorder %s70, 1
      %p529 = scmp.ne.s32.totalorder %s524, %s526
      %p530 = scmp.eq.s32.totalorder %s70, 0
      %p531 = por %p529, %p530
      %p532 = scmp.ne.s32.totalorder %s524, %s526
      %p533 = scmp.eq.s32.totalorder %s75, 1
      %p534 = por %p532, %p533
      %p535 = scmp.ne.s32.totalorder %s526, %s527
      %p536 = scmp.eq.s32.totalorder %s75, 0
      %p537 = por %p535, %p536
      %p538 = scmp.ne.s32.totalorder %s526, %s527
      %p539 = scmp.eq.s32.totalorder %s76, 1
      %p540 = por %p538, %p539
      %p542 = scmp.ne.s32.totalorder %s527, %s541
      %p543 = scmp.eq.s32.totalorder %s76, 0
      %p544 = por %p542, %p543
      %s546 = sadd.s32 %s545, 1
      %p549 = scmp.eq.s32.totalorder %s70, 1
      %p550 = scmp.ne.s32.totalorder %s545, %s547
      %p551 = scmp.eq.s32.totalorder %s70, 0
      %p552 = por %p550, %p551
      %p553 = scmp.ne.s32.totalorder %s545, %s547
      %p554 = scmp.eq.s32.totalorder %s75, 1
      %p555 = por %p553, %p554
      %p556 = scmp.ne.s32.totalorder %s547, %s548
      %p557 = scmp.eq.s32.totalorder %s75, 0
      %p558 = por %p556, %p557
      %p559 = scmp.ne.s32.totalorder %s547, %s548
      %p560 = scmp.eq.s32.totalorder %s76, 1
      %p561 = por %p559, %p560
      %p563 = scmp.ne.s32.totalorder %s548, %s562
      %p564 = scmp.eq.s32.totalorder %s76, 0
      %p565 = por %p563, %p564
      %s567 = sadd.s32 %s566, 1
      %p570 = scmp.eq.s32.totalorder %s70, 1
      %p571 = scmp.ne.s32.totalorder %s566, %s568
      %p572 = scmp.eq.s32.totalorder %s70, 0
      %p573 = por %p571, %p572
      %p574 = scmp.ne.s32.totalorder %s566, %s568
      %p575 = scmp.eq.s32.totalorder %s75, 1
      %p576 = por %p574, %p575
      %p577 = scmp.ne.s32.totalorder %s568, %s569
      %p578 = scmp.eq.s32.totalorder %s75, 0
      %p579 = por %p577, %p578
      %p580 = scmp.ne.s32.totalorder %s568, %s569
      %p581 = scmp.eq.s32.totalorder %s76, 1
      %p582 = por %p580, %p581
      %p584 = scmp.ne.s32.totalorder %s569, %s583
      %p585 = scmp.eq.s32.totalorder %s76, 0
      %p586 = por %p584, %p585
      %s588 = sadd.s32 %s587, 1
      %p591 = scmp.eq.s32.totalorder %s70, 1
      %p592 = scmp.ne.s32.totalorder %s587, %s589
      %p593 = scmp.eq.s32.totalorder %s70, 0
      %p594 = por %p592, %p593
      %p595 = scmp.ne.s32.totalorder %s587, %s589
      %p596 = scmp.eq.s32.totalorder %s75, 1
      %p597 = por %p595, %p596
      %p598 = scmp.ne.s32.totalorder %s589, %s590
      %p599 = scmp.eq.s32.totalorder %s75, 0
      %p600 = por %p598, %p599
      %p601 = scmp.ne.s32.totalorder %s589, %s590
      %p602 = scmp.eq.s32.totalorder %s76, 1
      %p603 = por %p601, %p602
      %p605 = scmp.ne.s32.totalorder %s590, %s604
      %p606 = scmp.eq.s32.totalorder %s76, 0
      %p607 = por %p605, %p606
      %s609 = sadd.s32 %s608, 1
      %p612 = scmp.eq.s32.totalorder %s70, 1
      %p613 = scmp.ne.s32.totalorder %s608, %s610
      %p614 = scmp.eq.s32.totalorder %s70, 0
      %p615 = por %p613, %p614
      %p616 = scmp.ne.s32.totalorder %s608, %s610
      %p617 = scmp.eq.s32.totalorder %s75, 1
      %p618 = por %p616, %p617
      %p619 = scmp.ne.s32.totalorder %s610, %s611
      %p620 = scmp.eq.s32.totalorder %s75, 0
      %p621 = por %p619, %p620
      %p622 = scmp.ne.s32.totalorder %s610, %s611
      %p623 = scmp.eq.s32.totalorder %s76, 1
      %p624 = por %p622, %p623
      %p626 = scmp.ne.s32.totalorder %s611, %s625
      %p627 = scmp.eq.s32.totalorder %s76, 0
      %p628 = por %p626, %p627
      %s630 = sadd.s32 %s629, 1
      %p633 = scmp.eq.s32.totalorder %s70, 1
      %p634 = scmp.ne.s32.totalorder %s629, %s631
      %p635 = scmp.eq.s32.totalorder %s70, 0
      %p636 = por %p634, %p635
      %p637 = scmp.ne.s32.totalorder %s629, %s631
      %p638 = scmp.eq.s32.totalorder %s75, 1
      %p639 = por %p637, %p638
      %p640 = scmp.ne.s32.totalorder %s631, %s632
      %p641 = scmp.eq.s32.totalorder %s75, 0
      %p642 = por %p640, %p641
      %p643 = scmp.ne.s32.totalorder %s631, %s632
      %p644 = scmp.eq.s32.totalorder %s76, 1
      %p645 = por %p643, %p644
      %p647 = scmp.ne.s32.totalorder %s632, %s646
      %p648 = scmp.eq.s32.totalorder %s76, 0
      %p649 = por %p647, %p648
      %s651 = sadd.s32 %s650, 1
      %p654 = scmp.eq.s32.totalorder %s70, 1
      %p655 = scmp.ne.s32.totalorder %s650, %s652
      %p656 = scmp.eq.s32.totalorder %s70, 0
      %p657 = por %p655, %p656
      %p658 = scmp.ne.s32.totalorder %s650, %s652
      %p659 = scmp.eq.s32.totalorder %s75, 1
      %p660 = por %p658, %p659
      %p661 = scmp.ne.s32.totalorder %s652, %s653
      %p662 = scmp.eq.s32.totalorder %s75, 0
      %p663 = por %p661, %p662
      %p664 = scmp.ne.s32.totalorder %s652, %s653
      %p665 = scmp.eq.s32.totalorder %s76, 1
      %p666 = por %p664, %p665
      %p668 = scmp.ne.s32.totalorder %s653, %s667
      %p669 = scmp.eq.s32.totalorder %s76, 0
      %p670 = por %p668, %p669
      %s672 = sadd.s32 %s671, 1
      %p675 = scmp.eq.s32.totalorder %s70, 1
      %p676 = scmp.ne.s32.totalorder %s671, %s673
      %p677 = scmp.eq.s32.totalorder %s70, 0
      %p678 = por %p676, %p677
      %p679 = scmp.ne.s32.totalorder %s671, %s673
      %p680 = scmp.eq.s32.totalorder %s75, 1
      %p681 = por %p679, %p680
      %p682 = scmp.ne.s32.totalorder %s673, %s674
      %p683 = scmp.eq.s32.totalorder %s75, 0
      %p684 = por %p682, %p683
      %p685 = scmp.ne.s32.totalorder %s673, %s674
      %p686 = scmp.eq.s32.totalorder %s76, 1
      %p687 = por %p685, %p686
      %p689 = scmp.ne.s32.totalorder %s674, %s688
      %p690 = scmp.eq.s32.totalorder %s76, 0
      %p691 = por %p689, %p690
      %s693 = sadd.s32 %s692, 1
      %p696 = scmp.eq.s32.totalorder %s70, 1
      %p697 = scmp.ne.s32.totalorder %s692, %s694
      %p698 = scmp.eq.s32.totalorder %s70, 0
      %p699 = por %p697, %p698
      %p700 = scmp.ne.s32.totalorder %s692, %s694
      %p701 = scmp.eq.s32.totalorder %s75, 1
      %p702 = por %p700, %p701
      %p703 = scmp.ne.s32.totalorder %s694, %s695
      %p704 = scmp.eq.s32.totalorder %s75, 0
      %p705 = por %p703, %p704
      %p706 = scmp.ne.s32.totalorder %s694, %s695
      %p707 = scmp.eq.s32.totalorder %s76, 1
      %p708 = por %p706, %p707
      %p710 = scmp.ne.s32.totalorder %s695, %s709
      %p711 = scmp.eq.s32.totalorder %s76, 0
      %p712 = por %p710, %p711
      %s713 = ssub.s32 %s70, %s77
      %p714 = scmp.eq.s32.totalorder %s713, 0
      %s716 = sadd.s32 %s715, 1
      %s717 = scalar_select %p714, %s715, %s716
      %p720 = pneg %p714
      %p721 = scmp.eq.s32.totalorder %s70, 1
      %p722 = por %p720, %p721
      %p723 = scmp.ne.s32.totalorder %s715, %s718
      %p724 = scmp.eq.s32.totalorder %s70, 0
      %p725 = por %p723, %p724
      %p726 = scmp.ne.s32.totalorder %s715, %s718
      %p727 = scmp.eq.s32.totalorder %s75, 1
      %p728 = por %p726, %p727
      %p729 = scmp.ne.s32.totalorder %s718, %s719
      %p730 = scmp.eq.s32.totalorder %s75, 0
      %p731 = por %p729, %p730
      %p732 = scmp.ne.s32.totalorder %s718, %s719
      %p733 = scmp.eq.s32.totalorder %s76, 1
      %p734 = por %p732, %p733
      %p736 = scmp.ne.s32.totalorder %s719, %s735
      %p737 = scmp.eq.s32.totalorder %s76, 0
      %p738 = por %p736, %p737
      %p739 = scmp.le.s32.totalorder 1, %s70
      %p740 = scmp.lt.s32.totalorder %s70, 3
      %p741 = pnand %p739, %p740
      %p742 = pneg %p741
      // Predicated region
      $region9: #{dla_compose_forward.1} parent=5 // pred_check
        _
      $region10: #{dla_compose_forward.1} parent=5 // pred_check_branch
        %744 = sbr.rel (%p741) target = $region12
      $region11: #{dla_compose_forward.1} parent=5 // pred_region
        %s745 = ssub.s32 %s70, 1
        // Predicated region
        $region13: #{dla_compose_forward.1} parent=11 // pred_check
          %p746 = pneg %p117
        $region14: #{dla_compose_forward.1} parent=11 // pred_check_branch
          %748 = sbr.rel (%p746) target = $region16
        $region15: #{dla_compose_forward.1} parent=11 // pred_region
          _
        $region16: #{dla_compose_forward.1} parent=11 // pred_fallthru
          _
        // Predicated region
        $region17: #{dla_compose_forward.1} parent=11 // pred_check
          %p749 = pneg %p138
        $region18: #{dla_compose_forward.1} parent=11 // pred_check_branch
          %751 = sbr.rel (%p749) target = $region20
        $region19: #{dla_compose_forward.1} parent=11 // pred_region
          _
        $region20: #{dla_compose_forward.1} parent=11 // pred_fallthru
          _
        // Predicated region
        $region21: #{dla_compose_forward.1} parent=11 // pred_check
          %p752 = pneg %p159
        $region22: #{dla_compose_forward.1} parent=11 // pred_check_branch
          %754 = sbr.rel (%p752) target = $region24
        $region23: #{dla_compose_forward.1} parent=11 // pred_region
          _
        $region24: #{dla_compose_forward.1} parent=11 // pred_fallthru
          _
        // Predicated region
        $region25: #{dla_compose_forward.1} parent=11 // pred_check
          %p755 = pneg %p180
        $region26: #{dla_compose_forward.1} parent=11 // pred_check_branch
          %757 = sbr.rel (%p755) target = $region28
        $region27: #{dla_compose_forward.1} parent=11 // pred_region
          _
        $region28: #{dla_compose_forward.1} parent=11 // pred_fallthru
          _
        // Predicated region
        $region29: #{dla_compose_forward.1} parent=11 // pred_check
          %p758 = pneg %p201
        $region30: #{dla_compose_forward.1} parent=11 // pred_check_branch
          %760 = sbr.rel (%p758) target = $region32
        $region31: #{dla_compose_forward.1} parent=11 // pred_region
          _
        $region32: #{dla_compose_forward.1} parent=11 // pred_fallthru
          _
        // Predicated region
        $region33: #{dla_compose_forward.1} parent=11 // pred_check
          %p761 = pneg %p222
        $region34: #{dla_compose_forward.1} parent=11 // pred_check_branch
          %763 = sbr.rel (%p761) target = $region36
        $region35: #{dla_compose_forward.1} parent=11 // pred_region
          _
        $region36: #{dla_compose_forward.1} parent=11 // pred_fallthru
          _
        // Predicated region
        $region37: #{dla_compose_forward.1} parent=11 // pred_check
          %p764 = pneg %p243
        $region38: #{dla_compose_forward.1} parent=11 // pred_check_branch
          %766 = sbr.rel (%p764) target = $region40
        $region39: #{dla_compose_forward.1} parent=11 // pred_region
          _
        $region40: #{dla_compose_forward.1} parent=11 // pred_fallthru
          _
        // Predicated region
        $region41: #{dla_compose_forward.1} parent=11 // pred_check
          %p767 = pneg %p264
        $region42: #{dla_compose_forward.1} parent=11 // pred_check_branch
          %769 = sbr.rel (%p767) target = $region44
        $region43: #{dla_compose_forward.1} parent=11 // pred_region
          _
        $region44: #{dla_compose_forward.1} parent=11 // pred_fallthru
          _
        // Predicated region
        $region45: #{dla_compose_forward.1} parent=11 // pred_check
          %p770 = pneg %p285
        $region46: #{dla_compose_forward.1} parent=11 // pred_check_branch
          %772 = sbr.rel (%p770) target = $region48
        $region47: #{dla_compose_forward.1} parent=11 // pred_region
          _
        $region48: #{dla_compose_forward.1} parent=11 // pred_fallthru
          _
        // Predicated region
        $region49: #{dla_compose_forward.1} parent=11 // pred_check
          %p773 = pneg %p306
        $region50: #{dla_compose_forward.1} parent=11 // pred_check_branch
          %775 = sbr.rel (%p773) target = $region52
        $region51: #{dla_compose_forward.1} parent=11 // pred_region
          _
        $region52: #{dla_compose_forward.1} parent=11 // pred_fallthru
          _
        // Predicated region
        $region53: #{dla_compose_forward.1} parent=11 // pred_check
          %p776 = pneg %p327
        $region54: #{dla_compose_forward.1} parent=11 // pred_check_branch
          %778 = sbr.rel (%p776) target = $region56
        $region55: #{dla_compose_forward.1} parent=11 // pred_region
          _
        $region56: #{dla_compose_forward.1} parent=11 // pred_fallthru
          _
        // Predicated region
        $region57: #{dla_compose_forward.1} parent=11 // pred_check
          %p779 = pneg %p348
        $region58: #{dla_compose_forward.1} parent=11 // pred_check_branch
          %781 = sbr.rel (%p779) target = $region60
        $region59: #{dla_compose_forward.1} parent=11 // pred_region
          _
        $region60: #{dla_compose_forward.1} parent=11 // pred_fallthru
          _
        // Predicated region
        $region61: #{dla_compose_forward.1} parent=11 // pred_check
          %p782 = pneg %p369
        $region62: #{dla_compose_forward.1} parent=11 // pred_check_branch
          %784 = sbr.rel (%p782) target = $region64
        $region63: #{dla_compose_forward.1} parent=11 // pred_region
          _
        $region64: #{dla_compose_forward.1} parent=11 // pred_fallthru
          _
        // Predicated region
        $region65: #{dla_compose_forward.1} parent=11 // pred_check
          %p785 = pneg %p390
        $region66: #{dla_compose_forward.1} parent=11 // pred_check_branch
          %787 = sbr.rel (%p785) target = $region68
        $region67: #{dla_compose_forward.1} parent=11 // pred_region
          _
        $region68: #{dla_compose_forward.1} parent=11 // pred_fallthru
          _
        // Predicated region
        $region69: #{dla_compose_forward.1} parent=11 // pred_check
          %p788 = pneg %p411
        $region70: #{dla_compose_forward.1} parent=11 // pred_check_branch
          %790 = sbr.rel (%p788) target = $region72
        $region71: #{dla_compose_forward.1} parent=11 // pred_region
          _
        $region72: #{dla_compose_forward.1} parent=11 // pred_fallthru
          _
        // Predicated region
        $region73: #{dla_compose_forward.1} parent=11 // pred_check
          %p791 = pneg %p432
        $region74: #{dla_compose_forward.1} parent=11 // pred_check_branch
          %793 = sbr.rel (%p791) target = $region76
        $region75: #{dla_compose_forward.1} parent=11 // pred_region
          _
        $region76: #{dla_compose_forward.1} parent=11 // pred_fallthru
          _
        // Predicated region
        $region77: #{dla_compose_forward.1} parent=11 // pred_check
          %p794 = pneg %p453
        $region78: #{dla_compose_forward.1} parent=11 // pred_check_branch
          %796 = sbr.rel (%p794) target = $region80
        $region79: #{dla_compose_forward.1} parent=11 // pred_region
          _
        $region80: #{dla_compose_forward.1} parent=11 // pred_fallthru
          _
        // Predicated region
        $region81: #{dla_compose_forward.1} parent=11 // pred_check
          %p797 = pneg %p474
        $region82: #{dla_compose_forward.1} parent=11 // pred_check_branch
          %799 = sbr.rel (%p797) target = $region84
        $region83: #{dla_compose_forward.1} parent=11 // pred_region
          _
        $region84: #{dla_compose_forward.1} parent=11 // pred_fallthru
          _
        // Predicated region
        $region85: #{dla_compose_forward.1} parent=11 // pred_check
          %p800 = pneg %p495
        $region86: #{dla_compose_forward.1} parent=11 // pred_check_branch
          %802 = sbr.rel (%p800) target = $region88
        $region87: #{dla_compose_forward.1} parent=11 // pred_region
          _
        $region88: #{dla_compose_forward.1} parent=11 // pred_fallthru
          _
        // Predicated region
        $region89: #{dla_compose_forward.1} parent=11 // pred_check
          %p803 = pneg %p516
        $region90: #{dla_compose_forward.1} parent=11 // pred_check_branch
          %805 = sbr.rel (%p803) target = $region92
        $region91: #{dla_compose_forward.1} parent=11 // pred_region
          _
        $region92: #{dla_compose_forward.1} parent=11 // pred_fallthru
          _
        // Predicated region
        $region93: #{dla_compose_forward.1} parent=11 // pred_check
          %p806 = pneg %p537
        $region94: #{dla_compose_forward.1} parent=11 // pred_check_branch
          %808 = sbr.rel (%p806) target = $region96
        $region95: #{dla_compose_forward.1} parent=11 // pred_region
          _
        $region96: #{dla_compose_forward.1} parent=11 // pred_fallthru
          _
        // Predicated region
        $region97: #{dla_compose_forward.1} parent=11 // pred_check
          %p809 = pneg %p558
        $region98: #{dla_compose_forward.1} parent=11 // pred_check_branch
          %811 = sbr.rel (%p809) target = $region100
        $region99: #{dla_compose_forward.1} parent=11 // pred_region
          _
        $region100: #{dla_compose_forward.1} parent=11 // pred_fallthru
          _
        // Predicated region
        $region101: #{dla_compose_forward.1} parent=11 // pred_check
          %p812 = pneg %p579
        $region102: #{dla_compose_forward.1} parent=11 // pred_check_branch
          %814 = sbr.rel (%p812) target = $region104
        $region103: #{dla_compose_forward.1} parent=11 // pred_region
          _
        $region104: #{dla_compose_forward.1} parent=11 // pred_fallthru
          _
        // Predicated region
        $region105: #{dla_compose_forward.1} parent=11 // pred_check
          %p815 = pneg %p600
        $region106: #{dla_compose_forward.1} parent=11 // pred_check_branch
          %817 = sbr.rel (%p815) target = $region108
        $region107: #{dla_compose_forward.1} parent=11 // pred_region
          _
        $region108: #{dla_compose_forward.1} parent=11 // pred_fallthru
          _
        // Predicated region
        $region109: #{dla_compose_forward.1} parent=11 // pred_check
          %p818 = pneg %p621
        $region110: #{dla_compose_forward.1} parent=11 // pred_check_branch
          %820 = sbr.rel (%p818) target = $region112
        $region111: #{dla_compose_forward.1} parent=11 // pred_region
          _
        $region112: #{dla_compose_forward.1} parent=11 // pred_fallthru
          _
        // Predicated region
        $region113: #{dla_compose_forward.1} parent=11 // pred_check
          %p821 = pneg %p642
        $region114: #{dla_compose_forward.1} parent=11 // pred_check_branch
          %823 = sbr.rel (%p821) target = $region116
        $region115: #{dla_compose_forward.1} parent=11 // pred_region
          _
        $region116: #{dla_compose_forward.1} parent=11 // pred_fallthru
          _
        // Predicated region
        $region117: #{dla_compose_forward.1} parent=11 // pred_check
          %p824 = pneg %p663
        $region118: #{dla_compose_forward.1} parent=11 // pred_check_branch
          %826 = sbr.rel (%p824) target = $region120
        $region119: #{dla_compose_forward.1} parent=11 // pred_region
          _
        $region120: #{dla_compose_forward.1} parent=11 // pred_fallthru
          _
        // Predicated region
        $region121: #{dla_compose_forward.1} parent=11 // pred_check
          %p827 = pneg %p684
        $region122: #{dla_compose_forward.1} parent=11 // pred_check_branch
          %829 = sbr.rel (%p827) target = $region124
        $region123: #{dla_compose_forward.1} parent=11 // pred_region
          _
        $region124: #{dla_compose_forward.1} parent=11 // pred_fallthru
          _
        // Predicated region
        $region125: #{dla_compose_forward.1} parent=11 // pred_check
          %p830 = pneg %p705
        $region126: #{dla_compose_forward.1} parent=11 // pred_check_branch
          %832 = sbr.rel (%p830) target = $region128
        $region127: #{dla_compose_forward.1} parent=11 // pred_region
          _
        $region128: #{dla_compose_forward.1} parent=11 // pred_fallthru
          _
      $region12: #{dla_compose_forward.1} parent=5 // pred_fallthru
        _
      %p833 = scmp.lt.s32.totalorder %s70, 2
      // Predicated region
      $region129: #{dla_compose_forward.1} parent=5 // pred_check
        %p834 = pneg %p833
      $region130: #{dla_compose_forward.1} parent=5 // pred_check_branch
        %836 = sbr.rel (%p834) target = $region132
      $region131: #{dla_compose_forward.1} parent=5 // pred_region
        // Predicated region
        $region133: #{dla_compose_forward.1} parent=131 // pred_check
          %p837 = pneg %p90
        $region134: #{dla_compose_forward.1} parent=131 // pred_check_branch
          %839 = sbr.rel (%p837) target = $region136
        $region135: #{dla_compose_forward.1} parent=131 // pred_region
          %p840 = scmp.lt.s32.totalorder %s70, 1
          %s841 = scalar_select %p840, %s70, 1
          %s842 = smul.addr %s841, 32
          %s843 = smul.addr %s842, 8
          %s844 = scalar_lea.vmem %s1, %s843
        $region136: #{dla_compose_forward.1} parent=131 // pred_fallthru
          _
      $region132: #{dla_compose_forward.1} parent=5 // pred_fallthru
        _
      %p845 = scmp.le.s32.totalorder 1, %s70
      %p846 = scmp.lt.s32.totalorder %s70, 3
      %p847 = pnand %p845, %p846
      %p848 = pneg %p847
      // Predicated region
      $region137: #{dla_compose_forward.1} parent=5 // pred_check
        _
      $region138: #{dla_compose_forward.1} parent=5 // pred_check_branch
        %850 = sbr.rel (%p847) target = $region140
      $region139: #{dla_compose_forward.1} parent=5 // pred_region
        %s851 = ssub.s32 %s70, 1
        %p852 = scmp.lt.s32.totalorder %s75, 1
        %s853 = scalar_select %p852, %s75, 1
        %s854 = smul.addr %s853, 32
        %s855 = smul.addr %s854, 8
        %s856 = scalar_lea.vmem %s1, %s855
        %p857 = pneg %p96
        %p858 = pneg %p93
        %p859 = pneg %p117
        %p860 = pneg %p114
        %p861 = pneg %p138
        %p862 = pneg %p135
        %p863 = pneg %p159
        %p864 = pneg %p156
        %p865 = pneg %p180
        %p866 = pneg %p177
        %p867 = pneg %p201
        %p868 = pneg %p198
        %p869 = pneg %p222
        %p870 = pneg %p219
        %p871 = pneg %p243
        %p872 = pneg %p240
        %p873 = pneg %p264
        %p874 = pneg %p261
        %p875 = pneg %p285
        %p876 = pneg %p282
        %p877 = pneg %p306
        %p878 = pneg %p303
        %p879 = pneg %p327
        %p880 = pneg %p324
        %p881 = pneg %p348
        %p882 = pneg %p345
        %p883 = pneg %p369
        %p884 = pneg %p366
        %p885 = pneg %p390
        %p886 = pneg %p387
        %p887 = pneg %p411
        %p888 = pneg %p408
        %p889 = pneg %p432
        %p890 = pneg %p429
        %p891 = pneg %p453
        %p892 = pneg %p450
        %p893 = pneg %p474
        %p894 = pneg %p471
        %p895 = pneg %p495
        %p896 = pneg %p492
        %p897 = pneg %p516
        %p898 = pneg %p513
        %p899 = pneg %p537
        %p900 = pneg %p534
        %p901 = pneg %p558
        %p902 = pneg %p555
        %p903 = pneg %p579
        %p904 = pneg %p576
        %p905 = pneg %p600
        %p906 = pneg %p597
        %p907 = pneg %p621
        %p908 = pneg %p618
        %p909 = pneg %p642
        %p910 = pneg %p639
        %p911 = pneg %p663
        %p912 = pneg %p660
        %p913 = pneg %p684
        %p914 = pneg %p681
        %p915 = pneg %p705
        %p916 = pneg %p702
        %p917 = pneg %p731
        %p918 = pneg %p728
        %s919 = sand.u32 %s718, 1
        %s920 = scalar_lea.sflag [#allocation3], %s919
        %s921 = sand.u32 %s718, 1
        %s922 = smul.addr %s921, 64
        %s923 = scalar_lea.vmem [#allocation2], %s922
        %p924 = scmp.lt.s32.totalorder %s75, 1
        %s925 = scalar_select %p924, %s75, 1
        %s926 = smul.addr %s925, 32
        %s927 = smul.addr %s926, 8
        %s928 = scalar_lea.vmem %s1, %s927
        %v929 = vld [vmem:[%s928] sm:$0xff]
        %v930 = vld [vmem:[%s928 + $0x8] sm:$0xff]
        %v931 = vld [vmem:[%s928 + $0x10] sm:$0xff]
        %v932 = vld [vmem:[%s928 + $0x18] sm:$0xff]
        %v933 = vld [vmem:[%s928 + $0x20] sm:$0xff]
        %v934 = vld [vmem:[%s928 + $0x28] sm:$0xff]
        %v935 = vld [vmem:[%s928 + $0x30] sm:$0xff]
        %v936 = vld [vmem:[%s928 + $0x38] sm:$0xff]
        %v937 = vld [vmem:[%s928 + $0x40] sm:$0xff]
        %v938 = vld [vmem:[%s928 + $0x48] sm:$0xff]
        %v939 = vld [vmem:[%s928 + $0x50] sm:$0xff]
        %v940 = vld [vmem:[%s928 + $0x58] sm:$0xff]
        %v941 = vld [vmem:[%s928 + $0x60] sm:$0xff]
        %v942 = vld [vmem:[%s928 + $0x68] sm:$0xff]
        %v943 = vld [vmem:[%s928 + $0x70] sm:$0xff]
        %v944 = vld [vmem:[%s928 + $0x78] sm:$0xff]
        %v945 = vld [vmem:[%s928 + $0x80] sm:$0xff]
        %v946 = vld [vmem:[%s928 + $0x88] sm:$0xff]
        %v947 = vld [vmem:[%s928 + $0x90] sm:$0xff]
        %v948 = vld [vmem:[%s928 + $0x98] sm:$0xff]
        %v949 = vld [vmem:[%s928 + $0xa0] sm:$0xff]
        %v950 = vld [vmem:[%s928 + $0xa8] sm:$0xff]
        %v951 = vld [vmem:[%s928 + $0xb0] sm:$0xff]
        %v952 = vld [vmem:[%s928 + $0xb8] sm:$0xff]
        %v953 = vld [vmem:[%s928 + $0xc0] sm:$0xff]
        %v954 = vld [vmem:[%s928 + $0xc8] sm:$0xff]
        %v955 = vld [vmem:[%s928 + $0xd0] sm:$0xff]
        %v956 = vld [vmem:[%s928 + $0xd8] sm:$0xff]
        %v957 = vld [vmem:[%s928 + $0xe0] sm:$0xff]
        %v958 = vld [vmem:[%s928 + $0xe8] sm:$0xff]
        %v959 = vld [vmem:[%s928 + $0xf0] sm:$0xff]
        %v960 = vld [vmem:[%s928 + $0xf8] sm:$0xff]
        %v961 = vlaneseq
        %v962 = vshrl.u32 %v961, 7
        %v963 = vadd.s32 %v962, 8
        %v964 = vadd.s32 %v962, 16
        %v965 = vadd.s32 %v962, 24
        %v966 = vadd.s32 %v962, 32
        %v967 = vadd.s32 %v962, 40
        %v968 = vadd.s32 %v962, 48
        %v969 = vadd.s32 %v962, 56
        %v970 = vadd.s32 %v962, 64
        %v971 = vadd.s32 %v962, 72
        %v972 = vadd.s32 %v962, 80
        %v973 = vadd.s32 %v962, 88
        %v974 = vadd.s32 %v962, 96
        %v975 = vadd.s32 %v962, 104
        %v976 = vadd.s32 %v962, 112
        %v977 = vadd.s32 %v962, 120
        %v978 = vadd.s32 %v962, 128
        %v979 = vadd.s32 %v962, 136
        %v980 = vadd.s32 %v962, 144
        %v981 = vadd.s32 %v962, 152
        %v982 = vadd.s32 %v962, 160
        %v983 = vadd.s32 %v962, 168
        %v984 = vadd.s32 %v962, 176
        %v985 = vadd.s32 %v962, 184
        %v986 = vadd.s32 %v962, 192
        %v987 = vadd.s32 %v962, 200
        %v988 = vadd.s32 %v962, 208
        %v989 = vadd.s32 %v962, 216
        %v990 = vadd.s32 %v962, 224
        %v991 = vadd.s32 %v962, 232
        %v992 = vadd.s32 %v962, 240
        %v993 = vadd.s32 %v962, 248
        %v994 = vand.u32 %v962, 15
        %v995 = vand.u32 %v963, 15
        %v996 = vand.u32 %v964, 15
        %v997 = vand.u32 %v965, 15
        %v998 = vand.u32 %v966, 15
        %v999 = vand.u32 %v967, 15
        %v1000 = vand.u32 %v968, 15
        %v1001 = vand.u32 %v969, 15
        %v1002 = vand.u32 %v970, 15
        %v1003 = vand.u32 %v971, 15
        %v1004 = vand.u32 %v972, 15
        %v1005 = vand.u32 %v973, 15
        %v1006 = vand.u32 %v974, 15
        %v1007 = vand.u32 %v975, 15
        %v1008 = vand.u32 %v976, 15
        %v1009 = vand.u32 %v977, 15
        %v1010 = vand.u32 %v978, 15
        %v1011 = vand.u32 %v979, 15
        %v1012 = vand.u32 %v980, 15
        %v1013 = vand.u32 %v981, 15
        %v1014 = vand.u32 %v982, 15
        %v1015 = vand.u32 %v983, 15
        %v1016 = vand.u32 %v984, 15
        %v1017 = vand.u32 %v985, 15
        %v1018 = vand.u32 %v986, 15
        %v1019 = vand.u32 %v987, 15
        %v1020 = vand.u32 %v988, 15
        %v1021 = vand.u32 %v989, 15
        %v1022 = vand.u32 %v990, 15
        %v1023 = vand.u32 %v991, 15
        %v1024 = vand.u32 %v992, 15
        %v1025 = vand.u32 %v993, 15
        %vm1056 = vcmask 1040384
        %v1057 = vrot.slane %v929, 7
        %v1058 = vrot.slane %v930, 7
        %v1059 = vsel %vm1056, %v1057, %v1058
        %v1060 = vrot.slane %v931, 7
        %v1061 = vsel %vm1056, %v1058, %v1060
        %v1062 = vrot.slane %v932, 7
        %v1063 = vsel %vm1056, %v1060, %v1062
        %v1064 = vrot.slane %v933, 7
        %v1065 = vsel %vm1056, %v1062, %v1064
        %v1066 = vrot.slane %v934, 7
        %v1067 = vsel %vm1056, %v1064, %v1066
        %v1068 = vrot.slane %v935, 7
        %v1069 = vsel %vm1056, %v1066, %v1068
        %v1070 = vrot.slane %v936, 7
        %v1071 = vsel %vm1056, %v1068, %v1070
        %v1072 = vrot.slane %v937, 7
        %v1073 = vsel %vm1056, %v1070, %v1072
        %v1074 = vrot.slane %v938, 7
        %v1075 = vsel %vm1056, %v1072, %v1074
        %v1076 = vrot.slane %v939, 7
        %v1077 = vsel %vm1056, %v1074, %v1076
        %v1078 = vrot.slane %v940, 7
        %v1079 = vsel %vm1056, %v1076, %v1078
        %v1080 = vrot.slane %v941, 7
        %v1081 = vsel %vm1056, %v1078, %v1080
        %v1082 = vrot.slane %v942, 7
        %v1083 = vsel %vm1056, %v1080, %v1082
        %v1084 = vrot.slane %v943, 7
        %v1085 = vsel %vm1056, %v1082, %v1084
        %v1086 = vrot.slane %v944, 7
        %v1087 = vsel %vm1056, %v1084, %v1086
        %v1088 = vrot.slane %v945, 7
        %v1089 = vsel %vm1056, %v1086, %v1088
        %v1090 = vrot.slane %v946, 7
        %v1091 = vsel %vm1056, %v1088, %v1090
        %v1092 = vrot.slane %v947, 7
        %v1093 = vsel %vm1056, %v1090, %v1092
        %v1094 = vrot.slane %v948, 7
        %v1095 = vsel %vm1056, %v1092, %v1094
        %v1096 = vrot.slane %v949, 7
        %v1097 = vsel %vm1056, %v1094, %v1096
        %v1098 = vrot.slane %v950, 7
        %v1099 = vsel %vm1056, %v1096, %v1098
        %v1100 = vrot.slane %v951, 7
        %v1101 = vsel %vm1056, %v1098, %v1100
        %v1102 = vrot.slane %v952, 7
        %v1103 = vsel %vm1056, %v1100, %v1102
        %v1104 = vrot.slane %v953, 7
        %v1105 = vsel %vm1056, %v1102, %v1104
        %v1106 = vrot.slane %v954, 7
        %v1107 = vsel %vm1056, %v1104, %v1106
        %v1108 = vrot.slane %v955, 7
        %v1109 = vsel %vm1056, %v1106, %v1108
        %v1110 = vrot.slane %v956, 7
        %v1111 = vsel %vm1056, %v1108, %v1110
        %v1112 = vrot.slane %v957, 7
        %v1113 = vsel %vm1056, %v1110, %v1112
        %v1114 = vrot.slane %v958, 7
        %v1115 = vsel %vm1056, %v1112, %v1114
        %v1146 = vsel %vm1056, 0.0, %v1057
        %vm1147 = vcmp.eq.s32.totalorder %v994, 0
        %vm1148 = vcmp.eq.s32.totalorder %v995, 0
        %vm1149 = vcmp.eq.s32.totalorder %v996, 0
        %vm1150 = vcmp.eq.s32.totalorder %v997, 0
        %vm1151 = vcmp.eq.s32.totalorder %v998, 0
        %vm1152 = vcmp.eq.s32.totalorder %v999, 0
        %vm1153 = vcmp.eq.s32.totalorder %v1000, 0
        %vm1154 = vcmp.eq.s32.totalorder %v1001, 0
        %vm1155 = vcmp.eq.s32.totalorder %v1002, 0
        %vm1156 = vcmp.eq.s32.totalorder %v1003, 0
        %vm1157 = vcmp.eq.s32.totalorder %v1004, 0
        %vm1158 = vcmp.eq.s32.totalorder %v1005, 0
        %vm1159 = vcmp.eq.s32.totalorder %v1006, 0
        %vm1160 = vcmp.eq.s32.totalorder %v1007, 0
        %vm1161 = vcmp.eq.s32.totalorder %v1008, 0
        %vm1162 = vcmp.eq.s32.totalorder %v1009, 0
        %vm1163 = vcmp.eq.s32.totalorder %v1010, 0
        %vm1164 = vcmp.eq.s32.totalorder %v1011, 0
        %vm1165 = vcmp.eq.s32.totalorder %v1012, 0
        %vm1166 = vcmp.eq.s32.totalorder %v1013, 0
        %vm1167 = vcmp.eq.s32.totalorder %v1014, 0
        %vm1168 = vcmp.eq.s32.totalorder %v1015, 0
        %vm1169 = vcmp.eq.s32.totalorder %v1016, 0
        %vm1170 = vcmp.eq.s32.totalorder %v1017, 0
        %vm1171 = vcmp.eq.s32.totalorder %v1018, 0
        %vm1172 = vcmp.eq.s32.totalorder %v1019, 0
        %vm1173 = vcmp.eq.s32.totalorder %v1020, 0
        %vm1174 = vcmp.eq.s32.totalorder %v1021, 0
        %vm1175 = vcmp.eq.s32.totalorder %v1022, 0
        %vm1176 = vcmp.eq.s32.totalorder %v1023, 0
        %vm1177 = vcmp.eq.s32.totalorder %v1024, 0
        %vm1178 = vcmp.eq.s32.totalorder %v1025, 0
        %v1179 = vsel %vm1149, 0.0, %v1146
        %v1180 = vsel %vm1150, 0.0, %v1059
        %v1181 = vsel %vm1151, 0.0, %v1061
        %v1182 = vsel %vm1152, 0.0, %v1063
        %v1183 = vsel %vm1153, 0.0, %v1065
        %v1184 = vsel %vm1154, 0.0, %v1067
        %v1185 = vsel %vm1155, 0.0, %v1069
        %v1186 = vsel %vm1156, 0.0, %v1071
        %v1187 = vsel %vm1157, 0.0, %v1073
        %v1188 = vsel %vm1158, 0.0, %v1075
        %v1189 = vsel %vm1159, 0.0, %v1077
        %v1190 = vsel %vm1160, 0.0, %v1079
        %v1191 = vsel %vm1161, 0.0, %v1081
        %v1192 = vsel %vm1162, 0.0, %v1083
        %v1193 = vsel %vm1163, 0.0, %v1085
        %v1194 = vsel %vm1164, 0.0, %v1087
        %v1195 = vsel %vm1165, 0.0, %v1089
        %v1196 = vsel %vm1166, 0.0, %v1091
        %v1197 = vsel %vm1167, 0.0, %v1093
        %v1198 = vsel %vm1168, 0.0, %v1095
        %v1199 = vsel %vm1169, 0.0, %v1097
        %v1200 = vsel %vm1170, 0.0, %v1099
        %v1201 = vsel %vm1171, 0.0, %v1101
        %v1202 = vsel %vm1172, 0.0, %v1103
        %v1203 = vsel %vm1173, 0.0, %v1105
        %v1204 = vsel %vm1174, 0.0, %v1107
        %v1205 = vsel %vm1175, 0.0, %v1109
        %v1206 = vsel %vm1176, 0.0, %v1111
        %v1207 = vsel %vm1177, 0.0, %v1113
        %v1208 = vsel %vm1178, 0.0, %v1115
        %vm1210 = vcmask 1046528
        %v1211 = vrot.slane %v929, 1
        %v1212 = vrot.slane %v930, 1
        %v1213 = vsel %vm1210, %v1211, %v1212
        %v1214 = vrot.slane %v931, 1
        %v1215 = vsel %vm1210, %v1212, %v1214
        %v1216 = vrot.slane %v932, 1
        %v1217 = vsel %vm1210, %v1214, %v1216
        %v1218 = vrot.slane %v933, 1
        %v1219 = vsel %vm1210, %v1216, %v1218
        %v1220 = vrot.slane %v934, 1
        %v1221 = vsel %vm1210, %v1218, %v1220
        %v1222 = vrot.slane %v935, 1
        %v1223 = vsel %vm1210, %v1220, %v1222
        %v1224 = vrot.slane %v936, 1
        %v1225 = vsel %vm1210, %v1222, %v1224
        %v1226 = vrot.slane %v937, 1
        %v1227 = vsel %vm1210, %v1224, %v1226
        %v1228 = vrot.slane %v938, 1
        %v1229 = vsel %vm1210, %v1226, %v1228
        %v1230 = vrot.slane %v939, 1
        %v1231 = vsel %vm1210, %v1228, %v1230
        %v1232 = vrot.slane %v940, 1
        %v1233 = vsel %vm1210, %v1230, %v1232
        %v1234 = vrot.slane %v941, 1
        %v1235 = vsel %vm1210, %v1232, %v1234
        %v1236 = vrot.slane %v942, 1
        %v1237 = vsel %vm1210, %v1234, %v1236
        %v1238 = vrot.slane %v943, 1
        %v1239 = vsel %vm1210, %v1236, %v1238
        %v1240 = vrot.slane %v944, 1
        %v1241 = vsel %vm1210, %v1238, %v1240
        %v1242 = vrot.slane %v945, 1
        %v1243 = vsel %vm1210, %v1240, %v1242
        %v1244 = vrot.slane %v946, 1
        %v1245 = vsel %vm1210, %v1242, %v1244
        %v1246 = vrot.slane %v947, 1
        %v1247 = vsel %vm1210, %v1244, %v1246
        %v1248 = vrot.slane %v948, 1
        %v1249 = vsel %vm1210, %v1246, %v1248
        %v1250 = vrot.slane %v949, 1
        %v1251 = vsel %vm1210, %v1248, %v1250
        %v1252 = vrot.slane %v950, 1
        %v1253 = vsel %vm1210, %v1250, %v1252
        %v1254 = vrot.slane %v951, 1
        %v1255 = vsel %vm1210, %v1252, %v1254
        %v1256 = vrot.slane %v952, 1
        %v1257 = vsel %vm1210, %v1254, %v1256
        %v1258 = vrot.slane %v953, 1
        %v1259 = vsel %vm1210, %v1256, %v1258
        %v1260 = vrot.slane %v954, 1
        %v1261 = vsel %vm1210, %v1258, %v1260
        %v1262 = vrot.slane %v955, 1
        %v1263 = vsel %vm1210, %v1260, %v1262
        %v1264 = vrot.slane %v956, 1
        %v1265 = vsel %vm1210, %v1262, %v1264
        %v1266 = vrot.slane %v957, 1
        %v1267 = vsel %vm1210, %v1264, %v1266
        %v1268 = vrot.slane %v958, 1
        %v1269 = vsel %vm1210, %v1266, %v1268
        %v1270 = vrot.slane %v959, 1
        %v1271 = vsel %vm1210, %v1268, %v1270
        %v1303 = vsel %vm1210, 0.0, %v1211
        %vm1304 = vcmp.eq.s32.totalorder %v994, 15
        %vm1305 = vcmp.eq.s32.totalorder %v995, 15
        %vm1306 = vcmp.eq.s32.totalorder %v996, 15
        %vm1307 = vcmp.eq.s32.totalorder %v997, 15
        %vm1308 = vcmp.eq.s32.totalorder %v998, 15
        %vm1309 = vcmp.eq.s32.totalorder %v999, 15
        %vm1310 = vcmp.eq.s32.totalorder %v1000, 15
        %vm1311 = vcmp.eq.s32.totalorder %v1001, 15
        %vm1312 = vcmp.eq.s32.totalorder %v1002, 15
        %vm1313 = vcmp.eq.s32.totalorder %v1003, 15
        %vm1314 = vcmp.eq.s32.totalorder %v1004, 15
        %vm1315 = vcmp.eq.s32.totalorder %v1005, 15
        %vm1316 = vcmp.eq.s32.totalorder %v1006, 15
        %vm1317 = vcmp.eq.s32.totalorder %v1007, 15
        %vm1318 = vcmp.eq.s32.totalorder %v1008, 15
        %vm1319 = vcmp.eq.s32.totalorder %v1009, 15
        %vm1320 = vcmp.eq.s32.totalorder %v1010, 15
        %vm1321 = vcmp.eq.s32.totalorder %v1011, 15
        %vm1322 = vcmp.eq.s32.totalorder %v1012, 15
        %vm1323 = vcmp.eq.s32.totalorder %v1013, 15
        %vm1324 = vcmp.eq.s32.totalorder %v1014, 15
        %vm1325 = vcmp.eq.s32.totalorder %v1015, 15
        %vm1326 = vcmp.eq.s32.totalorder %v1016, 15
        %vm1327 = vcmp.eq.s32.totalorder %v1017, 15
        %vm1328 = vcmp.eq.s32.totalorder %v1018, 15
        %vm1329 = vcmp.eq.s32.totalorder %v1019, 15
        %vm1330 = vcmp.eq.s32.totalorder %v1020, 15
        %vm1331 = vcmp.eq.s32.totalorder %v1021, 15
        %vm1332 = vcmp.eq.s32.totalorder %v1022, 15
        %vm1333 = vcmp.eq.s32.totalorder %v1023, 15
        %vm1334 = vcmp.eq.s32.totalorder %v1024, 15
        %vm1335 = vcmp.eq.s32.totalorder %v1025, 15
        %v1336 = vsel %vm1305, 0.0, %v1303
        %v1337 = vsel %vm1306, 0.0, %v1213
        %v1338 = vsel %vm1307, 0.0, %v1215
        %v1339 = vsel %vm1308, 0.0, %v1217
        %v1340 = vsel %vm1309, 0.0, %v1219
        %v1341 = vsel %vm1310, 0.0, %v1221
        %v1342 = vsel %vm1311, 0.0, %v1223
        %v1343 = vsel %vm1312, 0.0, %v1225
        %v1344 = vsel %vm1313, 0.0, %v1227
        %v1345 = vsel %vm1314, 0.0, %v1229
        %v1346 = vsel %vm1315, 0.0, %v1231
        %v1347 = vsel %vm1316, 0.0, %v1233
        %v1348 = vsel %vm1317, 0.0, %v1235
        %v1349 = vsel %vm1318, 0.0, %v1237
        %v1350 = vsel %vm1319, 0.0, %v1239
        %v1351 = vsel %vm1320, 0.0, %v1241
        %v1352 = vsel %vm1321, 0.0, %v1243
        %v1353 = vsel %vm1322, 0.0, %v1245
        %v1354 = vsel %vm1323, 0.0, %v1247
        %v1355 = vsel %vm1324, 0.0, %v1249
        %v1356 = vsel %vm1325, 0.0, %v1251
        %v1357 = vsel %vm1326, 0.0, %v1253
        %v1358 = vsel %vm1327, 0.0, %v1255
        %v1359 = vsel %vm1328, 0.0, %v1257
        %v1360 = vsel %vm1329, 0.0, %v1259
        %v1361 = vsel %vm1330, 0.0, %v1261
        %v1362 = vsel %vm1331, 0.0, %v1263
        %v1363 = vsel %vm1332, 0.0, %v1265
        %v1364 = vsel %vm1333, 0.0, %v1267
        %v1365 = vsel %vm1334, 0.0, %v1269
        %v1366 = vsel %vm1335, 0.0, %v1271
        %v1368 = vrot.slane %v959, 7
        %v1369 = vsel %vm1056, %v1114, %v1368
        %v1370 = vrot.slane %v960, 7
        %v1371 = vsel %vm1056, %v1368, %v1370
        %v1374 = vsel %vm1147, 0.0, %v1146
        %v1375 = vsel %vm1148, 0.0, %v1059
        %v1376 = vsel %vm1149, 0.0, %v1061
        %v1377 = vsel %vm1150, 0.0, %v1063
        %v1378 = vsel %vm1151, 0.0, %v1065
        %v1379 = vsel %vm1152, 0.0, %v1067
        %v1380 = vsel %vm1153, 0.0, %v1069
        %v1381 = vsel %vm1154, 0.0, %v1071
        %v1382 = vsel %vm1155, 0.0, %v1073
        %v1383 = vsel %vm1156, 0.0, %v1075
        %v1384 = vsel %vm1157, 0.0, %v1077
        %v1385 = vsel %vm1158, 0.0, %v1079
        %v1386 = vsel %vm1159, 0.0, %v1081
        %v1387 = vsel %vm1160, 0.0, %v1083
        %v1388 = vsel %vm1161, 0.0, %v1085
        %v1389 = vsel %vm1162, 0.0, %v1087
        %v1390 = vsel %vm1163, 0.0, %v1089
        %v1391 = vsel %vm1164, 0.0, %v1091
        %v1392 = vsel %vm1165, 0.0, %v1093
        %v1393 = vsel %vm1166, 0.0, %v1095
        %v1394 = vsel %vm1167, 0.0, %v1097
        %v1395 = vsel %vm1168, 0.0, %v1099
        %v1396 = vsel %vm1169, 0.0, %v1101
        %v1397 = vsel %vm1170, 0.0, %v1103
        %v1398 = vsel %vm1171, 0.0, %v1105
        %v1399 = vsel %vm1172, 0.0, %v1107
        %v1400 = vsel %vm1173, 0.0, %v1109
        %v1401 = vsel %vm1174, 0.0, %v1111
        %v1402 = vsel %vm1175, 0.0, %v1113
        %v1403 = vsel %vm1176, 0.0, %v1115
        %v1404 = vsel %vm1177, 0.0, %v1369
        %v1405 = vsel %vm1178, 0.0, %v1371
        %v1406 = vrot.slane %v960, 1
        %v1407 = vsel %vm1210, %v1270, %v1406
        %v1410 = vsel %vm1210, %v1406, 0.0
        %v1411 = vsel %vm1304, 0.0, %v1213
        %v1412 = vsel %vm1305, 0.0, %v1215
        %v1413 = vsel %vm1306, 0.0, %v1217
        %v1414 = vsel %vm1307, 0.0, %v1219
        %v1415 = vsel %vm1308, 0.0, %v1221
        %v1416 = vsel %vm1309, 0.0, %v1223
        %v1417 = vsel %vm1310, 0.0, %v1225
        %v1418 = vsel %vm1311, 0.0, %v1227
        %v1419 = vsel %vm1312, 0.0, %v1229
        %v1420 = vsel %vm1313, 0.0, %v1231
        %v1421 = vsel %vm1314, 0.0, %v1233
        %v1422 = vsel %vm1315, 0.0, %v1235
        %v1423 = vsel %vm1316, 0.0, %v1237
        %v1424 = vsel %vm1317, 0.0, %v1239
        %v1425 = vsel %vm1318, 0.0, %v1241
        %v1426 = vsel %vm1319, 0.0, %v1243
        %v1427 = vsel %vm1320, 0.0, %v1245
        %v1428 = vsel %vm1321, 0.0, %v1247
        %v1429 = vsel %vm1322, 0.0, %v1249
        %v1430 = vsel %vm1323, 0.0, %v1251
        %v1431 = vsel %vm1324, 0.0, %v1253
        %v1432 = vsel %vm1325, 0.0, %v1255
        %v1433 = vsel %vm1326, 0.0, %v1257
        %v1434 = vsel %vm1327, 0.0, %v1259
        %v1435 = vsel %vm1328, 0.0, %v1261
        %v1436 = vsel %vm1329, 0.0, %v1263
        %v1437 = vsel %vm1330, 0.0, %v1265
        %v1438 = vsel %vm1331, 0.0, %v1267
        %v1439 = vsel %vm1332, 0.0, %v1269
        %v1440 = vsel %vm1333, 0.0, %v1271
        %v1441 = vsel %vm1334, 0.0, %v1407
        %v1442 = vsel %vm1335, 0.0, %v1410
        %v1444 = vsel %vm1056, %v1370, 0.0
        %v1445 = vsel %vm1147, 0.0, %v1061
        %v1446 = vsel %vm1148, 0.0, %v1063
        %v1447 = vsel %vm1149, 0.0, %v1065
        %v1448 = vsel %vm1150, 0.0, %v1067
        %v1449 = vsel %vm1151, 0.0, %v1069
        %v1450 = vsel %vm1152, 0.0, %v1071
        %v1451 = vsel %vm1153, 0.0, %v1073
        %v1452 = vsel %vm1154, 0.0, %v1075
        %v1453 = vsel %vm1155, 0.0, %v1077
        %v1454 = vsel %vm1156, 0.0, %v1079
        %v1455 = vsel %vm1157, 0.0, %v1081
        %v1456 = vsel %vm1158, 0.0, %v1083
        %v1457 = vsel %vm1159, 0.0, %v1085
        %v1458 = vsel %vm1160, 0.0, %v1087
        %v1459 = vsel %vm1161, 0.0, %v1089
        %v1460 = vsel %vm1162, 0.0, %v1091
        %v1461 = vsel %vm1163, 0.0, %v1093
        %v1462 = vsel %vm1164, 0.0, %v1095
        %v1463 = vsel %vm1165, 0.0, %v1097
        %v1464 = vsel %vm1166, 0.0, %v1099
        %v1465 = vsel %vm1167, 0.0, %v1101
        %v1466 = vsel %vm1168, 0.0, %v1103
        %v1467 = vsel %vm1169, 0.0, %v1105
        %v1468 = vsel %vm1170, 0.0, %v1107
        %v1469 = vsel %vm1171, 0.0, %v1109
        %v1470 = vsel %vm1172, 0.0, %v1111
        %v1471 = vsel %vm1173, 0.0, %v1113
        %v1472 = vsel %vm1174, 0.0, %v1115
        %v1473 = vsel %vm1175, 0.0, %v1369
        %v1474 = vsel %vm1176, 0.0, %v1371
        %v1475 = vsel %vm1177, 0.0, %v1444
        %v1476 = vsel %vm1304, 0.0, %v1217
        %v1477 = vsel %vm1305, 0.0, %v1219
        %v1478 = vsel %vm1306, 0.0, %v1221
        %v1479 = vsel %vm1307, 0.0, %v1223
        %v1480 = vsel %vm1308, 0.0, %v1225
        %v1481 = vsel %vm1309, 0.0, %v1227
        %v1482 = vsel %vm1310, 0.0, %v1229
        %v1483 = vsel %vm1311, 0.0, %v1231
        %v1484 = vsel %vm1312, 0.0, %v1233
        %v1485 = vsel %vm1313, 0.0, %v1235
        %v1486 = vsel %vm1314, 0.0, %v1237
        %v1487 = vsel %vm1315, 0.0, %v1239
        %v1488 = vsel %vm1316, 0.0, %v1241
        %v1489 = vsel %vm1317, 0.0, %v1243
        %v1490 = vsel %vm1318, 0.0, %v1245
        %v1491 = vsel %vm1319, 0.0, %v1247
        %v1492 = vsel %vm1320, 0.0, %v1249
        %v1493 = vsel %vm1321, 0.0, %v1251
        %v1494 = vsel %vm1322, 0.0, %v1253
        %v1495 = vsel %vm1323, 0.0, %v1255
        %v1496 = vsel %vm1324, 0.0, %v1257
        %v1497 = vsel %vm1325, 0.0, %v1259
        %v1498 = vsel %vm1326, 0.0, %v1261
        %v1499 = vsel %vm1327, 0.0, %v1263
        %v1500 = vsel %vm1328, 0.0, %v1265
        %v1501 = vsel %vm1329, 0.0, %v1267
        %v1502 = vsel %vm1330, 0.0, %v1269
        %v1503 = vsel %vm1331, 0.0, %v1271
        %v1504 = vsel %vm1332, 0.0, %v1407
        %v1505 = vsel %vm1333, 0.0, %v1410
        %1507 = vrot.lane.b32.xlu0 0.0, 3
        %v1508 = vpop.permute.xlu0 %1507
        %1509 = vrot.lane.b32.xlu0 %v929, 3
        %v1510 = vpop.permute.xlu0 %1509
        %1511 = vrot.lane.b32.xlu0 %v930, 3
        %v1512 = vpop.permute.xlu0 %1511
        %1513 = vrot.lane.b32.xlu0 %v931, 3
        %v1514 = vpop.permute.xlu0 %1513
        %1515 = vrot.lane.b32.xlu0 %v932, 3
        %v1516 = vpop.permute.xlu0 %1515
        %1517 = vrot.lane.b32.xlu0 %v933, 3
        %v1518 = vpop.permute.xlu0 %1517
        %1519 = vrot.lane.b32.xlu0 %v934, 3
        %v1520 = vpop.permute.xlu0 %1519
        %1521 = vrot.lane.b32.xlu0 %v935, 3
        %v1522 = vpop.permute.xlu0 %1521
        %1523 = vrot.lane.b32.xlu0 %v936, 3
        %v1524 = vpop.permute.xlu0 %1523
        %1525 = vrot.lane.b32.xlu0 %v937, 3
        %v1526 = vpop.permute.xlu0 %1525
        %1527 = vrot.lane.b32.xlu0 %v938, 3
        %v1528 = vpop.permute.xlu0 %1527
        %1529 = vrot.lane.b32.xlu0 %v939, 3
        %v1530 = vpop.permute.xlu0 %1529
        %1531 = vrot.lane.b32.xlu0 %v940, 3
        %v1532 = vpop.permute.xlu0 %1531
        %1533 = vrot.lane.b32.xlu0 %v941, 3
        %v1534 = vpop.permute.xlu0 %1533
        %1535 = vrot.lane.b32.xlu0 %v942, 3
        %v1536 = vpop.permute.xlu0 %1535
        %1537 = vrot.lane.b32.xlu0 %v943, 3
        %v1538 = vpop.permute.xlu0 %1537
        %1539 = vrot.lane.b32.xlu0 %v944, 3
        %v1540 = vpop.permute.xlu0 %1539
        %1541 = vrot.lane.b32.xlu0 %v945, 3
        %v1542 = vpop.permute.xlu0 %1541
        %1543 = vrot.lane.b32.xlu0 %v946, 3
        %v1544 = vpop.permute.xlu0 %1543
        %1545 = vrot.lane.b32.xlu0 %v947, 3
        %v1546 = vpop.permute.xlu0 %1545
        %1547 = vrot.lane.b32.xlu0 %v948, 3
        %v1548 = vpop.permute.xlu0 %1547
        %1549 = vrot.lane.b32.xlu0 %v949, 3
        %v1550 = vpop.permute.xlu0 %1549
        %1551 = vrot.lane.b32.xlu0 %v950, 3
        %v1552 = vpop.permute.xlu0 %1551
        %1553 = vrot.lane.b32.xlu0 %v951, 3
        %v1554 = vpop.permute.xlu0 %1553
        %1555 = vrot.lane.b32.xlu0 %v952, 3
        %v1556 = vpop.permute.xlu0 %1555
        %1557 = vrot.lane.b32.xlu0 %v953, 3
        %v1558 = vpop.permute.xlu0 %1557
        %1559 = vrot.lane.b32.xlu0 %v954, 3
        %v1560 = vpop.permute.xlu0 %1559
        %1561 = vrot.lane.b32.xlu0 %v955, 3
        %v1562 = vpop.permute.xlu0 %1561
        %1563 = vrot.lane.b32.xlu0 %v956, 3
        %v1564 = vpop.permute.xlu0 %1563
        %1565 = vrot.lane.b32.xlu0 %v957, 3
        %v1566 = vpop.permute.xlu0 %1565
        %1567 = vrot.lane.b32.xlu0 %v958, 3
        %v1568 = vpop.permute.xlu0 %1567
        %1631 = vrot.lane.b32.xlu0 0.0, 6
        %v1632 = vpop.permute.xlu0 %1631
        %1633 = vrot.lane.b32.xlu0 %v1336, 6
        %v1634 = vpop.permute.xlu0 %1633
        %1635 = vrot.lane.b32.xlu0 %v1337, 6
        %v1636 = vpop.permute.xlu0 %1635
        %1637 = vrot.lane.b32.xlu0 %v1338, 6
        %v1638 = vpop.permute.xlu0 %1637
        %1639 = vrot.lane.b32.xlu0 %v1339, 6
        %v1640 = vpop.permute.xlu0 %1639
        %1641 = vrot.lane.b32.xlu0 %v1340, 6
        %v1642 = vpop.permute.xlu0 %1641
        %1643 = vrot.lane.b32.xlu0 %v1341, 6
        %v1644 = vpop.permute.xlu0 %1643
        %1645 = vrot.lane.b32.xlu0 %v1342, 6
        %v1646 = vpop.permute.xlu0 %1645
        %1647 = vrot.lane.b32.xlu0 %v1343, 6
        %v1648 = vpop.permute.xlu0 %1647
        %1649 = vrot.lane.b32.xlu0 %v1344, 6
        %v1650 = vpop.permute.xlu0 %1649
        %1651 = vrot.lane.b32.xlu0 %v1345, 6
        %v1652 = vpop.permute.xlu0 %1651
        %1653 = vrot.lane.b32.xlu0 %v1346, 6
        %v1654 = vpop.permute.xlu0 %1653
        %1655 = vrot.lane.b32.xlu0 %v1347, 6
        %v1656 = vpop.permute.xlu0 %1655
        %1657 = vrot.lane.b32.xlu0 %v1348, 6
        %v1658 = vpop.permute.xlu0 %1657
        %1659 = vrot.lane.b32.xlu0 %v1349, 6
        %v1660 = vpop.permute.xlu0 %1659
        %1661 = vrot.lane.b32.xlu0 %v1350, 6
        %v1662 = vpop.permute.xlu0 %1661
        %1663 = vrot.lane.b32.xlu0 %v1351, 6
        %v1664 = vpop.permute.xlu0 %1663
        %1665 = vrot.lane.b32.xlu0 %v1352, 6
        %v1666 = vpop.permute.xlu0 %1665
        %1667 = vrot.lane.b32.xlu0 %v1353, 6
        %v1668 = vpop.permute.xlu0 %1667
        %1669 = vrot.lane.b32.xlu0 %v1354, 6
        %v1670 = vpop.permute.xlu0 %1669
        %1671 = vrot.lane.b32.xlu0 %v1355, 6
        %v1672 = vpop.permute.xlu0 %1671
        %1673 = vrot.lane.b32.xlu0 %v1356, 6
        %v1674 = vpop.permute.xlu0 %1673
        %1675 = vrot.lane.b32.xlu0 %v1357, 6
        %v1676 = vpop.permute.xlu0 %1675
        %1677 = vrot.lane.b32.xlu0 %v1358, 6
        %v1678 = vpop.permute.xlu0 %1677
        %1679 = vrot.lane.b32.xlu0 %v1359, 6
        %v1680 = vpop.permute.xlu0 %1679
        %1681 = vrot.lane.b32.xlu0 %v1360, 6
        %v1682 = vpop.permute.xlu0 %1681
        %1683 = vrot.lane.b32.xlu0 %v1361, 6
        %v1684 = vpop.permute.xlu0 %1683
        %1685 = vrot.lane.b32.xlu0 %v1362, 6
        %v1686 = vpop.permute.xlu0 %1685
        %1687 = vrot.lane.b32.xlu0 %v1363, 6
        %v1688 = vpop.permute.xlu0 %1687
        %1689 = vrot.lane.b32.xlu0 %v1364, 6
        %v1690 = vpop.permute.xlu0 %1689
        %1691 = vrot.lane.b32.xlu0 %v1365, 6
        %v1692 = vpop.permute.xlu0 %1691
        %1693 = vrot.lane.b32.xlu0 %v1366, 6
        %v1694 = vpop.permute.xlu0 %1693
        %1759 = vrot.lane.b32.xlu0 %v1374, 9
        %v1760 = vpop.permute.xlu0 %1759
        %1761 = vrot.lane.b32.xlu0 %v1375, 9
        %v1762 = vpop.permute.xlu0 %1761
        %1763 = vrot.lane.b32.xlu0 %v1376, 9
        %v1764 = vpop.permute.xlu0 %1763
        %1765 = vrot.lane.b32.xlu0 %v1377, 9
        %v1766 = vpop.permute.xlu0 %1765
        %1767 = vrot.lane.b32.xlu0 %v1378, 9
        %v1768 = vpop.permute.xlu0 %1767
        %1769 = vrot.lane.b32.xlu0 %v1379, 9
        %v1770 = vpop.permute.xlu0 %1769
        %1771 = vrot.lane.b32.xlu0 %v1380, 9
        %v1772 = vpop.permute.xlu0 %1771
        %1773 = vrot.lane.b32.xlu0 %v1381, 9
        %v1774 = vpop.permute.xlu0 %1773
        %1775 = vrot.lane.b32.xlu0 %v1382, 9
        %v1776 = vpop.permute.xlu0 %1775
        %1777 = vrot.lane.b32.xlu0 %v1383, 9
        %v1778 = vpop.permute.xlu0 %1777
        %1779 = vrot.lane.b32.xlu0 %v1384, 9
        %v1780 = vpop.permute.xlu0 %1779
        %1781 = vrot.lane.b32.xlu0 %v1385, 9
        %v1782 = vpop.permute.xlu0 %1781
        %1783 = vrot.lane.b32.xlu0 %v1386, 9
        %v1784 = vpop.permute.xlu0 %1783
        %1785 = vrot.lane.b32.xlu0 %v1387, 9
        %v1786 = vpop.permute.xlu0 %1785
        %1787 = vrot.lane.b32.xlu0 %v1388, 9
        %v1788 = vpop.permute.xlu0 %1787
        %1789 = vrot.lane.b32.xlu0 %v1389, 9
        %v1790 = vpop.permute.xlu0 %1789
        %1791 = vrot.lane.b32.xlu0 %v1390, 9
        %v1792 = vpop.permute.xlu0 %1791
        %1793 = vrot.lane.b32.xlu0 %v1391, 9
        %v1794 = vpop.permute.xlu0 %1793
        %1795 = vrot.lane.b32.xlu0 %v1392, 9
        %v1796 = vpop.permute.xlu0 %1795
        %1797 = vrot.lane.b32.xlu0 %v1393, 9
        %v1798 = vpop.permute.xlu0 %1797
        %1799 = vrot.lane.b32.xlu0 %v1394, 9
        %v1800 = vpop.permute.xlu0 %1799
        %1801 = vrot.lane.b32.xlu0 %v1395, 9
        %v1802 = vpop.permute.xlu0 %1801
        %1803 = vrot.lane.b32.xlu0 %v1396, 9
        %v1804 = vpop.permute.xlu0 %1803
        %1805 = vrot.lane.b32.xlu0 %v1397, 9
        %v1806 = vpop.permute.xlu0 %1805
        %1807 = vrot.lane.b32.xlu0 %v1398, 9
        %v1808 = vpop.permute.xlu0 %1807
        %1809 = vrot.lane.b32.xlu0 %v1399, 9
        %v1810 = vpop.permute.xlu0 %1809
        %1811 = vrot.lane.b32.xlu0 %v1400, 9
        %v1812 = vpop.permute.xlu0 %1811
        %1813 = vrot.lane.b32.xlu0 %v1401, 9
        %v1814 = vpop.permute.xlu0 %1813
        %1815 = vrot.lane.b32.xlu0 %v1402, 9
        %v1816 = vpop.permute.xlu0 %1815
        %1817 = vrot.lane.b32.xlu0 %v1403, 9
        %v1818 = vpop.permute.xlu0 %1817
        %1819 = vrot.lane.b32.xlu0 %v1404, 9
        %v1820 = vpop.permute.xlu0 %1819
        %1821 = vrot.lane.b32.xlu0 %v1405, 9
        %v1822 = vpop.permute.xlu0 %1821
        %1855 = vrot.lane.b32.xlu0 %v929, 12
        %v1856 = vpop.permute.xlu0 %1855
        %1857 = vrot.lane.b32.xlu0 %v930, 12
        %v1858 = vpop.permute.xlu0 %1857
        %1859 = vrot.lane.b32.xlu0 %v931, 12
        %v1860 = vpop.permute.xlu0 %1859
        %1861 = vrot.lane.b32.xlu0 %v932, 12
        %v1862 = vpop.permute.xlu0 %1861
        %1863 = vrot.lane.b32.xlu0 %v933, 12
        %v1864 = vpop.permute.xlu0 %1863
        %1865 = vrot.lane.b32.xlu0 %v934, 12
        %v1866 = vpop.permute.xlu0 %1865
        %1867 = vrot.lane.b32.xlu0 %v935, 12
        %v1868 = vpop.permute.xlu0 %1867
        %1869 = vrot.lane.b32.xlu0 %v936, 12
        %v1870 = vpop.permute.xlu0 %1869
        %1871 = vrot.lane.b32.xlu0 %v937, 12
        %v1872 = vpop.permute.xlu0 %1871
        %1873 = vrot.lane.b32.xlu0 %v938, 12
        %v1874 = vpop.permute.xlu0 %1873
        %1875 = vrot.lane.b32.xlu0 %v939, 12
        %v1876 = vpop.permute.xlu0 %1875
        %1877 = vrot.lane.b32.xlu0 %v940, 12
        %v1878 = vpop.permute.xlu0 %1877
        %1879 = vrot.lane.b32.xlu0 %v941, 12
        %v1880 = vpop.permute.xlu0 %1879
        %1881 = vrot.lane.b32.xlu0 %v942, 12
        %v1882 = vpop.permute.xlu0 %1881
        %1883 = vrot.lane.b32.xlu0 %v943, 12
        %v1884 = vpop.permute.xlu0 %1883
        %1885 = vrot.lane.b32.xlu0 %v944, 12
        %v1886 = vpop.permute.xlu0 %1885
        %1887 = vrot.lane.b32.xlu0 %v945, 12
        %v1888 = vpop.permute.xlu0 %1887
        %1889 = vrot.lane.b32.xlu0 %v946, 12
        %v1890 = vpop.permute.xlu0 %1889
        %1891 = vrot.lane.b32.xlu0 %v947, 12
        %v1892 = vpop.permute.xlu0 %1891
        %1893 = vrot.lane.b32.xlu0 %v948, 12
        %v1894 = vpop.permute.xlu0 %1893
        %1895 = vrot.lane.b32.xlu0 %v949, 12
        %v1896 = vpop.permute.xlu0 %1895
        %1897 = vrot.lane.b32.xlu0 %v950, 12
        %v1898 = vpop.permute.xlu0 %1897
        %1899 = vrot.lane.b32.xlu0 %v951, 12
        %v1900 = vpop.permute.xlu0 %1899
        %1901 = vrot.lane.b32.xlu0 %v952, 12
        %v1902 = vpop.permute.xlu0 %1901
        %1903 = vrot.lane.b32.xlu0 %v953, 12
        %v1904 = vpop.permute.xlu0 %1903
        %1905 = vrot.lane.b32.xlu0 %v954, 12
        %v1906 = vpop.permute.xlu0 %1905
        %1907 = vrot.lane.b32.xlu0 %v955, 12
        %v1908 = vpop.permute.xlu0 %1907
        %1909 = vrot.lane.b32.xlu0 %v956, 12
        %v1910 = vpop.permute.xlu0 %1909
        %1911 = vrot.lane.b32.xlu0 %v957, 12
        %v1912 = vpop.permute.xlu0 %1911
        %1913 = vrot.lane.b32.xlu0 %v958, 12
        %v1914 = vpop.permute.xlu0 %1913
        %1915 = vrot.lane.b32.xlu0 %v959, 12
        %v1916 = vpop.permute.xlu0 %1915
        %1917 = vrot.lane.b32.xlu0 %v960, 12
        %v1918 = vpop.permute.xlu0 %1917
        %1983 = vrot.lane.b32.xlu0 %v1411, 15
        %v1984 = vpop.permute.xlu0 %1983
        %1985 = vrot.lane.b32.xlu0 %v1412, 15
        %v1986 = vpop.permute.xlu0 %1985
        %1987 = vrot.lane.b32.xlu0 %v1413, 15
        %v1988 = vpop.permute.xlu0 %1987
        %1989 = vrot.lane.b32.xlu0 %v1414, 15
        %v1990 = vpop.permute.xlu0 %1989
        %1991 = vrot.lane.b32.xlu0 %v1415, 15
        %v1992 = vpop.permute.xlu0 %1991
        %1993 = vrot.lane.b32.xlu0 %v1416, 15
        %v1994 = vpop.permute.xlu0 %1993
        %1995 = vrot.lane.b32.xlu0 %v1417, 15
        %v1996 = vpop.permute.xlu0 %1995
        %1997 = vrot.lane.b32.xlu0 %v1418, 15
        %v1998 = vpop.permute.xlu0 %1997
        %1999 = vrot.lane.b32.xlu0 %v1419, 15
        %v2000 = vpop.permute.xlu0 %1999
        %2001 = vrot.lane.b32.xlu0 %v1420, 15
        %v2002 = vpop.permute.xlu0 %2001
        %2003 = vrot.lane.b32.xlu0 %v1421, 15
        %v2004 = vpop.permute.xlu0 %2003
        %2005 = vrot.lane.b32.xlu0 %v1422, 15
        %v2006 = vpop.permute.xlu0 %2005
        %2007 = vrot.lane.b32.xlu0 %v1423, 15
        %v2008 = vpop.permute.xlu0 %2007
        %2009 = vrot.lane.b32.xlu0 %v1424, 15
        %v2010 = vpop.permute.xlu0 %2009
        %2011 = vrot.lane.b32.xlu0 %v1425, 15
        %v2012 = vpop.permute.xlu0 %2011
        %2013 = vrot.lane.b32.xlu0 %v1426, 15
        %v2014 = vpop.permute.xlu0 %2013
        %2015 = vrot.lane.b32.xlu0 %v1427, 15
        %v2016 = vpop.permute.xlu0 %2015
        %2017 = vrot.lane.b32.xlu0 %v1428, 15
        %v2018 = vpop.permute.xlu0 %2017
        %2019 = vrot.lane.b32.xlu0 %v1429, 15
        %v2020 = vpop.permute.xlu0 %2019
        %2021 = vrot.lane.b32.xlu0 %v1430, 15
        %v2022 = vpop.permute.xlu0 %2021
        %2023 = vrot.lane.b32.xlu0 %v1431, 15
        %v2024 = vpop.permute.xlu0 %2023
        %2025 = vrot.lane.b32.xlu0 %v1432, 15
        %v2026 = vpop.permute.xlu0 %2025
        %2027 = vrot.lane.b32.xlu0 %v1433, 15
        %v2028 = vpop.permute.xlu0 %2027
        %2029 = vrot.lane.b32.xlu0 %v1434, 15
        %v2030 = vpop.permute.xlu0 %2029
        %2031 = vrot.lane.b32.xlu0 %v1435, 15
        %v2032 = vpop.permute.xlu0 %2031
        %2033 = vrot.lane.b32.xlu0 %v1436, 15
        %v2034 = vpop.permute.xlu0 %2033
        %2035 = vrot.lane.b32.xlu0 %v1437, 15
        %v2036 = vpop.permute.xlu0 %2035
        %2037 = vrot.lane.b32.xlu0 %v1438, 15
        %v2038 = vpop.permute.xlu0 %2037
        %2039 = vrot.lane.b32.xlu0 %v1439, 15
        %v2040 = vpop.permute.xlu0 %2039
        %2041 = vrot.lane.b32.xlu0 %v1440, 15
        %v2042 = vpop.permute.xlu0 %2041
        %2043 = vrot.lane.b32.xlu0 %v1441, 15
        %v2044 = vpop.permute.xlu0 %2043
        %2045 = vrot.lane.b32.xlu0 %v1442, 15
        %v2046 = vpop.permute.xlu0 %2045
        %2110 = vrot.lane.b32.xlu0 %v1445, 18
        %v2111 = vpop.permute.xlu0 %2110
        %2112 = vrot.lane.b32.xlu0 %v1446, 18
        %v2113 = vpop.permute.xlu0 %2112
        %2114 = vrot.lane.b32.xlu0 %v1447, 18
        %v2115 = vpop.permute.xlu0 %2114
        %2116 = vrot.lane.b32.xlu0 %v1448, 18
        %v2117 = vpop.permute.xlu0 %2116
        %2118 = vrot.lane.b32.xlu0 %v1449, 18
        %v2119 = vpop.permute.xlu0 %2118
        %2120 = vrot.lane.b32.xlu0 %v1450, 18
        %v2121 = vpop.permute.xlu0 %2120
        %2122 = vrot.lane.b32.xlu0 %v1451, 18
        %v2123 = vpop.permute.xlu0 %2122
        %2124 = vrot.lane.b32.xlu0 %v1452, 18
        %v2125 = vpop.permute.xlu0 %2124
        %2126 = vrot.lane.b32.xlu0 %v1453, 18
        %v2127 = vpop.permute.xlu0 %2126
        %2128 = vrot.lane.b32.xlu0 %v1454, 18
        %v2129 = vpop.permute.xlu0 %2128
        %2130 = vrot.lane.b32.xlu0 %v1455, 18
        %v2131 = vpop.permute.xlu0 %2130
        %2132 = vrot.lane.b32.xlu0 %v1456, 18
        %v2133 = vpop.permute.xlu0 %2132
        %2134 = vrot.lane.b32.xlu0 %v1457, 18
        %v2135 = vpop.permute.xlu0 %2134
        %2136 = vrot.lane.b32.xlu0 %v1458, 18
        %v2137 = vpop.permute.xlu0 %2136
        %2138 = vrot.lane.b32.xlu0 %v1459, 18
        %v2139 = vpop.permute.xlu0 %2138
        %2140 = vrot.lane.b32.xlu0 %v1460, 18
        %v2141 = vpop.permute.xlu0 %2140
        %2142 = vrot.lane.b32.xlu0 %v1461, 18
        %v2143 = vpop.permute.xlu0 %2142
        %2144 = vrot.lane.b32.xlu0 %v1462, 18
        %v2145 = vpop.permute.xlu0 %2144
        %2146 = vrot.lane.b32.xlu0 %v1463, 18
        %v2147 = vpop.permute.xlu0 %2146
        %2148 = vrot.lane.b32.xlu0 %v1464, 18
        %v2149 = vpop.permute.xlu0 %2148
        %2150 = vrot.lane.b32.xlu0 %v1465, 18
        %v2151 = vpop.permute.xlu0 %2150
        %2152 = vrot.lane.b32.xlu0 %v1466, 18
        %v2153 = vpop.permute.xlu0 %2152
        %2154 = vrot.lane.b32.xlu0 %v1467, 18
        %v2155 = vpop.permute.xlu0 %2154
        %2156 = vrot.lane.b32.xlu0 %v1468, 18
        %v2157 = vpop.permute.xlu0 %2156
        %2158 = vrot.lane.b32.xlu0 %v1469, 18
        %v2159 = vpop.permute.xlu0 %2158
        %2160 = vrot.lane.b32.xlu0 %v1470, 18
        %v2161 = vpop.permute.xlu0 %2160
        %2162 = vrot.lane.b32.xlu0 %v1471, 18
        %v2163 = vpop.permute.xlu0 %2162
        %2164 = vrot.lane.b32.xlu0 %v1472, 18
        %v2165 = vpop.permute.xlu0 %2164
        %2166 = vrot.lane.b32.xlu0 %v1473, 18
        %v2167 = vpop.permute.xlu0 %2166
        %2168 = vrot.lane.b32.xlu0 %v1474, 18
        %v2169 = vpop.permute.xlu0 %2168
        %2170 = vrot.lane.b32.xlu0 %v1475, 18
        %v2171 = vpop.permute.xlu0 %2170
        %2172 = vrot.lane.b32.xlu0 0.0, 18
        %v2173 = vpop.permute.xlu0 %2172
        %2206 = vrot.lane.b32.xlu0 %v931, 21
        %v2207 = vpop.permute.xlu0 %2206
        %2208 = vrot.lane.b32.xlu0 %v932, 21
        %v2209 = vpop.permute.xlu0 %2208
        %2210 = vrot.lane.b32.xlu0 %v933, 21
        %v2211 = vpop.permute.xlu0 %2210
        %2212 = vrot.lane.b32.xlu0 %v934, 21
        %v2213 = vpop.permute.xlu0 %2212
        %2214 = vrot.lane.b32.xlu0 %v935, 21
        %v2215 = vpop.permute.xlu0 %2214
        %2216 = vrot.lane.b32.xlu0 %v936, 21
        %v2217 = vpop.permute.xlu0 %2216
        %2218 = vrot.lane.b32.xlu0 %v937, 21
        %v2219 = vpop.permute.xlu0 %2218
        %2220 = vrot.lane.b32.xlu0 %v938, 21
        %v2221 = vpop.permute.xlu0 %2220
        %2222 = vrot.lane.b32.xlu0 %v939, 21
        %v2223 = vpop.permute.xlu0 %2222
        %2224 = vrot.lane.b32.xlu0 %v940, 21
        %v2225 = vpop.permute.xlu0 %2224
        %2226 = vrot.lane.b32.xlu0 %v941, 21
        %v2227 = vpop.permute.xlu0 %2226
        %2228 = vrot.lane.b32.xlu0 %v942, 21
        %v2229 = vpop.permute.xlu0 %2228
        %2230 = vrot.lane.b32.xlu0 %v943, 21
        %v2231 = vpop.permute.xlu0 %2230
        %2232 = vrot.lane.b32.xlu0 %v944, 21
        %v2233 = vpop.permute.xlu0 %2232
        %2234 = vrot.lane.b32.xlu0 %v945, 21
        %v2235 = vpop.permute.xlu0 %2234
        %2236 = vrot.lane.b32.xlu0 %v946, 21
        %v2237 = vpop.permute.xlu0 %2236
        %2238 = vrot.lane.b32.xlu0 %v947, 21
        %v2239 = vpop.permute.xlu0 %2238
        %2240 = vrot.lane.b32.xlu0 %v948, 21
        %v2241 = vpop.permute.xlu0 %2240
        %2242 = vrot.lane.b32.xlu0 %v949, 21
        %v2243 = vpop.permute.xlu0 %2242
        %2244 = vrot.lane.b32.xlu0 %v950, 21
        %v2245 = vpop.permute.xlu0 %2244
        %2246 = vrot.lane.b32.xlu0 %v951, 21
        %v2247 = vpop.permute.xlu0 %2246
        %2248 = vrot.lane.b32.xlu0 %v952, 21
        %v2249 = vpop.permute.xlu0 %2248
        %2250 = vrot.lane.b32.xlu0 %v953, 21
        %v2251 = vpop.permute.xlu0 %2250
        %2252 = vrot.lane.b32.xlu0 %v954, 21
        %v2253 = vpop.permute.xlu0 %2252
        %2254 = vrot.lane.b32.xlu0 %v955, 21
        %v2255 = vpop.permute.xlu0 %2254
        %2256 = vrot.lane.b32.xlu0 %v956, 21
        %v2257 = vpop.permute.xlu0 %2256
        %2258 = vrot.lane.b32.xlu0 %v957, 21
        %v2259 = vpop.permute.xlu0 %2258
        %2260 = vrot.lane.b32.xlu0 %v958, 21
        %v2261 = vpop.permute.xlu0 %2260
        %2262 = vrot.lane.b32.xlu0 %v959, 21
        %v2263 = vpop.permute.xlu0 %2262
        %2264 = vrot.lane.b32.xlu0 %v960, 21
        %v2265 = vpop.permute.xlu0 %2264
        %2266 = vrot.lane.b32.xlu0 0.0, 21
        %v2267 = vpop.permute.xlu0 %2266
        %2329 = vrot.lane.b32.xlu0 %v1476, 24
        %v2330 = vpop.permute.xlu0 %2329
        %2331 = vrot.lane.b32.xlu0 %v1477, 24
        %v2332 = vpop.permute.xlu0 %2331
        %2333 = vrot.lane.b32.xlu0 %v1478, 24
        %v2334 = vpop.permute.xlu0 %2333
        %2335 = vrot.lane.b32.xlu0 %v1479, 24
        %v2336 = vpop.permute.xlu0 %2335
        %2337 = vrot.lane.b32.xlu0 %v1480, 24
        %v2338 = vpop.permute.xlu0 %2337
        %2339 = vrot.lane.b32.xlu0 %v1481, 24
        %v2340 = vpop.permute.xlu0 %2339
        %2341 = vrot.lane.b32.xlu0 %v1482, 24
        %v2342 = vpop.permute.xlu0 %2341
        %2343 = vrot.lane.b32.xlu0 %v1483, 24
        %v2344 = vpop.permute.xlu0 %2343
        %2345 = vrot.lane.b32.xlu0 %v1484, 24
        %v2346 = vpop.permute.xlu0 %2345
        %2347 = vrot.lane.b32.xlu0 %v1485, 24
        %v2348 = vpop.permute.xlu0 %2347
        %2349 = vrot.lane.b32.xlu0 %v1486, 24
        %v2350 = vpop.permute.xlu0 %2349
        %2351 = vrot.lane.b32.xlu0 %v1487, 24
        %v2352 = vpop.permute.xlu0 %2351
        %2353 = vrot.lane.b32.xlu0 %v1488, 24
        %v2354 = vpop.permute.xlu0 %2353
        %2355 = vrot.lane.b32.xlu0 %v1489, 24
        %v2356 = vpop.permute.xlu0 %2355
        %2357 = vrot.lane.b32.xlu0 %v1490, 24
        %v2358 = vpop.permute.xlu0 %2357
        %2359 = vrot.lane.b32.xlu0 %v1491, 24
        %v2360 = vpop.permute.xlu0 %2359
        %2361 = vrot.lane.b32.xlu0 %v1492, 24
        %v2362 = vpop.permute.xlu0 %2361
        %2363 = vrot.lane.b32.xlu0 %v1493, 24
        %v2364 = vpop.permute.xlu0 %2363
        %2365 = vrot.lane.b32.xlu0 %v1494, 24
        %v2366 = vpop.permute.xlu0 %2365
        %2367 = vrot.lane.b32.xlu0 %v1495, 24
        %v2368 = vpop.permute.xlu0 %2367
        %2369 = vrot.lane.b32.xlu0 %v1496, 24
        %v2370 = vpop.permute.xlu0 %2369
        %2371 = vrot.lane.b32.xlu0 %v1497, 24
        %v2372 = vpop.permute.xlu0 %2371
        %2373 = vrot.lane.b32.xlu0 %v1498, 24
        %v2374 = vpop.permute.xlu0 %2373
        %2375 = vrot.lane.b32.xlu0 %v1499, 24
        %v2376 = vpop.permute.xlu0 %2375
        %2377 = vrot.lane.b32.xlu0 %v1500, 24
        %v2378 = vpop.permute.xlu0 %2377
        %2379 = vrot.lane.b32.xlu0 %v1501, 24
        %v2380 = vpop.permute.xlu0 %2379
        %2381 = vrot.lane.b32.xlu0 %v1502, 24
        %v2382 = vpop.permute.xlu0 %2381
        %2383 = vrot.lane.b32.xlu0 %v1503, 24
        %v2384 = vpop.permute.xlu0 %2383
        %2385 = vrot.lane.b32.xlu0 %v1504, 24
        %v2386 = vpop.permute.xlu0 %2385
        %2387 = vrot.lane.b32.xlu0 %v1505, 24
        %v2388 = vpop.permute.xlu0 %2387
        %2389 = vrot.lane.b32.xlu0 0.0, 24
        %v2390 = vpop.permute.xlu0 %2389
        %vm2422 = vcmask 23552
        %v2423 = vsel %vm2422, 0.0, %v1508
        %v2424 = vsel %vm2422, %v1179, %v1510
        %v2425 = vsel %vm2422, %v1180, %v1512
        %v2426 = vsel %vm2422, %v1181, %v1514
        %v2427 = vsel %vm2422, %v1182, %v1516
        %v2428 = vsel %vm2422, %v1183, %v1518
        %v2429 = vsel %vm2422, %v1184, %v1520
        %v2430 = vsel %vm2422, %v1185, %v1522
        %v2431 = vsel %vm2422, %v1186, %v1524
        %v2432 = vsel %vm2422, %v1187, %v1526
        %v2433 = vsel %vm2422, %v1188, %v1528
        %v2434 = vsel %vm2422, %v1189, %v1530
        %v2435 = vsel %vm2422, %v1190, %v1532
        %v2436 = vsel %vm2422, %v1191, %v1534
        %v2437 = vsel %vm2422, %v1192, %v1536
        %v2438 = vsel %vm2422, %v1193, %v1538
        %v2439 = vsel %vm2422, %v1194, %v1540
        %v2440 = vsel %vm2422, %v1195, %v1542
        %v2441 = vsel %vm2422, %v1196, %v1544
        %v2442 = vsel %vm2422, %v1197, %v1546
        %v2443 = vsel %vm2422, %v1198, %v1548
        %v2444 = vsel %vm2422, %v1199, %v1550
        %v2445 = vsel %vm2422, %v1200, %v1552
        %v2446 = vsel %vm2422, %v1201, %v1554
        %v2447 = vsel %vm2422, %v1202, %v1556
        %v2448 = vsel %vm2422, %v1203, %v1558
        %v2449 = vsel %vm2422, %v1204, %v1560
        %v2450 = vsel %vm2422, %v1205, %v1562
        %v2451 = vsel %vm2422, %v1206, %v1564
        %v2452 = vsel %vm2422, %v1207, %v1566
        %v2453 = vsel %vm2422, %v1208, %v1568
        %vm2454 = vcmask 48128
        %v2455 = vsel %vm2454, %v2423, %v1632
        %v2456 = vsel %vm2454, %v2423, %v1634
        %v2457 = vsel %vm2454, %v2424, %v1636
        %v2458 = vsel %vm2454, %v2425, %v1638
        %v2459 = vsel %vm2454, %v2426, %v1640
        %v2460 = vsel %vm2454, %v2427, %v1642
        %v2461 = vsel %vm2454, %v2428, %v1644
        %v2462 = vsel %vm2454, %v2429, %v1646
        %v2463 = vsel %vm2454, %v2430, %v1648
        %v2464 = vsel %vm2454, %v2431, %v1650
        %v2465 = vsel %vm2454, %v2432, %v1652
        %v2466 = vsel %vm2454, %v2433, %v1654
        %v2467 = vsel %vm2454, %v2434, %v1656
        %v2468 = vsel %vm2454, %v2435, %v1658
        %v2469 = vsel %vm2454, %v2436, %v1660
        %v2470 = vsel %vm2454, %v2437, %v1662
        %v2471 = vsel %vm2454, %v2438, %v1664
        %v2472 = vsel %vm2454, %v2439, %v1666
        %v2473 = vsel %vm2454, %v2440, %v1668
        %v2474 = vsel %vm2454, %v2441, %v1670
        %v2475 = vsel %vm2454, %v2442, %v1672
        %v2476 = vsel %vm2454, %v2443, %v1674
        %v2477 = vsel %vm2454, %v2444, %v1676
        %v2478 = vsel %vm2454, %v2445, %v1678
        %v2479 = vsel %vm2454, %v2446, %v1680
        %v2480 = vsel %vm2454, %v2447, %v1682
        %v2481 = vsel %vm2454, %v2448, %v1684
        %v2482 = vsel %vm2454, %v2449, %v1686
        %v2483 = vsel %vm2454, %v2450, %v1688
        %v2484 = vsel %vm2454, %v2451, %v1690
        %v2485 = vsel %vm2454, %v2452, %v1692
        %v2486 = vsel %vm2454, %v2453, %v1694
        %vm2487 = vcmask 72704
        %v2488 = vsel %vm2487, %v2455, %v1760
        %v2489 = vsel %vm2487, %v2456, %v1762
        %v2490 = vsel %vm2487, %v2457, %v1764
        %v2491 = vsel %vm2487, %v2458, %v1766
        %v2492 = vsel %vm2487, %v2459, %v1768
        %v2493 = vsel %vm2487, %v2460, %v1770
        %v2494 = vsel %vm2487, %v2461, %v1772
        %v2495 = vsel %vm2487, %v2462, %v1774
        %v2496 = vsel %vm2487, %v2463, %v1776
        %v2497 = vsel %vm2487, %v2464, %v1778
        %v2498 = vsel %vm2487, %v2465, %v1780
        %v2499 = vsel %vm2487, %v2466, %v1782
        %v2500 = vsel %vm2487, %v2467, %v1784
        %v2501 = vsel %vm2487, %v2468, %v1786
        %v2502 = vsel %vm2487, %v2469, %v1788
        %v2503 = vsel %vm2487, %v2470, %v1790
        %v2504 = vsel %vm2487, %v2471, %v1792
        %v2505 = vsel %vm2487, %v2472, %v1794
        %v2506 = vsel %vm2487, %v2473, %v1796
        %v2507 = vsel %vm2487, %v2474, %v1798
        %v2508 = vsel %vm2487, %v2475, %v1800
        %v2509 = vsel %vm2487, %v2476, %v1802
        %v2510 = vsel %vm2487, %v2477, %v1804
        %v2511 = vsel %vm2487, %v2478, %v1806
        %v2512 = vsel %vm2487, %v2479, %v1808
        %v2513 = vsel %vm2487, %v2480, %v1810
        %v2514 = vsel %vm2487, %v2481, %v1812
        %v2515 = vsel %vm2487, %v2482, %v1814
        %v2516 = vsel %vm2487, %v2483, %v1816
        %v2517 = vsel %vm2487, %v2484, %v1818
        %v2518 = vsel %vm2487, %v2485, %v1820
        %v2519 = vsel %vm2487, %v2486, %v1822
        %vm2520 = vcmask 97280
        %v2521 = vsel %vm2520, %v2488, %v1856
        %v2522 = vsel %vm2520, %v2489, %v1858
        %v2523 = vsel %vm2520, %v2490, %v1860
        %v2524 = vsel %vm2520, %v2491, %v1862
        %v2525 = vsel %vm2520, %v2492, %v1864
        %v2526 = vsel %vm2520, %v2493, %v1866
        %v2527 = vsel %vm2520, %v2494, %v1868
        %v2528 = vsel %vm2520, %v2495, %v1870
        %v2529 = vsel %vm2520, %v2496, %v1872
        %v2530 = vsel %vm2520, %v2497, %v1874
        %v2531 = vsel %vm2520, %v2498, %v1876
        %v2532 = vsel %vm2520, %v2499, %v1878
        %v2533 = vsel %vm2520, %v2500, %v1880
        %v2534 = vsel %vm2520, %v2501, %v1882
        %v2535 = vsel %vm2520, %v2502, %v1884
        %v2536 = vsel %vm2520, %v2503, %v1886
        %v2537 = vsel %vm2520, %v2504, %v1888
        %v2538 = vsel %vm2520, %v2505, %v1890
        %v2539 = vsel %vm2520, %v2506, %v1892
        %v2540 = vsel %vm2520, %v2507, %v1894
        %v2541 = vsel %vm2520, %v2508, %v1896
        %v2542 = vsel %vm2520, %v2509, %v1898
        %v2543 = vsel %vm2520, %v2510, %v1900
        %v2544 = vsel %vm2520, %v2511, %v1902
        %v2545 = vsel %vm2520, %v2512, %v1904
        %v2546 = vsel %vm2520, %v2513, %v1906
        %v2547 = vsel %vm2520, %v2514, %v1908
        %v2548 = vsel %vm2520, %v2515, %v1910
        %v2549 = vsel %vm2520, %v2516, %v1912
        %v2550 = vsel %vm2520, %v2517, %v1914
        %v2551 = vsel %vm2520, %v2518, %v1916
        %v2552 = vsel %vm2520, %v2519, %v1918
        %vm2553 = vcmask 121856
        %v2554 = vsel %vm2553, %v2521, %v1984
        %v2555 = vsel %vm2553, %v2522, %v1986
        %v2556 = vsel %vm2553, %v2523, %v1988
        %v2557 = vsel %vm2553, %v2524, %v1990
        %v2558 = vsel %vm2553, %v2525, %v1992
        %v2559 = vsel %vm2553, %v2526, %v1994
        %v2560 = vsel %vm2553, %v2527, %v1996
        %v2561 = vsel %vm2553, %v2528, %v1998
        %v2562 = vsel %vm2553, %v2529, %v2000
        %v2563 = vsel %vm2553, %v2530, %v2002
        %v2564 = vsel %vm2553, %v2531, %v2004
        %v2565 = vsel %vm2553, %v2532, %v2006
        %v2566 = vsel %vm2553, %v2533, %v2008
        %v2567 = vsel %vm2553, %v2534, %v2010
        %v2568 = vsel %vm2553, %v2535, %v2012
        %v2569 = vsel %vm2553, %v2536, %v2014
        %v2570 = vsel %vm2553, %v2537, %v2016
        %v2571 = vsel %vm2553, %v2538, %v2018
        %v2572 = vsel %vm2553, %v2539, %v2020
        %v2573 = vsel %vm2553, %v2540, %v2022
        %v2574 = vsel %vm2553, %v2541, %v2024
        %v2575 = vsel %vm2553, %v2542, %v2026
        %v2576 = vsel %vm2553, %v2543, %v2028
        %v2577 = vsel %vm2553, %v2544, %v2030
        %v2578 = vsel %vm2553, %v2545, %v2032
        %v2579 = vsel %vm2553, %v2546, %v2034
        %v2580 = vsel %vm2553, %v2547, %v2036
        %v2581 = vsel %vm2553, %v2548, %v2038
        %v2582 = vsel %vm2553, %v2549, %v2040
        %v2583 = vsel %vm2553, %v2550, %v2042
        %v2584 = vsel %vm2553, %v2551, %v2044
        %v2585 = vsel %vm2553, %v2552, %v2046
        %vm2586 = vcmask 146432
        %v2587 = vsel %vm2586, %v2554, %v2111
        %v2588 = vsel %vm2586, %v2555, %v2113
        %v2589 = vsel %vm2586, %v2556, %v2115
        %v2590 = vsel %vm2586, %v2557, %v2117
        %v2591 = vsel %vm2586, %v2558, %v2119
        %v2592 = vsel %vm2586, %v2559, %v2121
        %v2593 = vsel %vm2586, %v2560, %v2123
        %v2594 = vsel %vm2586, %v2561, %v2125
        %v2595 = vsel %vm2586, %v2562, %v2127
        %v2596 = vsel %vm2586, %v2563, %v2129
        %v2597 = vsel %vm2586, %v2564, %v2131
        %v2598 = vsel %vm2586, %v2565, %v2133
        %v2599 = vsel %vm2586, %v2566, %v2135
        %v2600 = vsel %vm2586, %v2567, %v2137
        %v2601 = vsel %vm2586, %v2568, %v2139
        %v2602 = vsel %vm2586, %v2569, %v2141
        %v2603 = vsel %vm2586, %v2570, %v2143
        %v2604 = vsel %vm2586, %v2571, %v2145
        %v2605 = vsel %vm2586, %v2572, %v2147
        %v2606 = vsel %vm2586, %v2573, %v2149
        %v2607 = vsel %vm2586, %v2574, %v2151
        %v2608 = vsel %vm2586, %v2575, %v2153
        %v2609 = vsel %vm2586, %v2576, %v2155
        %v2610 = vsel %vm2586, %v2577, %v2157
        %v2611 = vsel %vm2586, %v2578, %v2159
        %v2612 = vsel %vm2586, %v2579, %v2161
        %v2613 = vsel %vm2586, %v2580, %v2163
        %v2614 = vsel %vm2586, %v2581, %v2165
        %v2615 = vsel %vm2586, %v2582, %v2167
        %v2616 = vsel %vm2586, %v2583, %v2169
        %v2617 = vsel %vm2586, %v2584, %v2171
        %v2618 = vsel %vm2586, %v2585, %v2173
        %vm2619 = vcmask 171008
        %v2620 = vsel %vm2619, %v2587, %v2207
        %v2621 = vsel %vm2619, %v2588, %v2209
        %v2622 = vsel %vm2619, %v2589, %v2211
        %v2623 = vsel %vm2619, %v2590, %v2213
        %v2624 = vsel %vm2619, %v2591, %v2215
        %v2625 = vsel %vm2619, %v2592, %v2217
        %v2626 = vsel %vm2619, %v2593, %v2219
        %v2627 = vsel %vm2619, %v2594, %v2221
        %v2628 = vsel %vm2619, %v2595, %v2223
        %v2629 = vsel %vm2619, %v2596, %v2225
        %v2630 = vsel %vm2619, %v2597, %v2227
        %v2631 = vsel %vm2619, %v2598, %v2229
        %v2632 = vsel %vm2619, %v2599, %v2231
        %v2633 = vsel %vm2619, %v2600, %v2233
        %v2634 = vsel %vm2619, %v2601, %v2235
        %v2635 = vsel %vm2619, %v2602, %v2237
        %v2636 = vsel %vm2619, %v2603, %v2239
        %v2637 = vsel %vm2619, %v2604, %v2241
        %v2638 = vsel %vm2619, %v2605, %v2243
        %v2639 = vsel %vm2619, %v2606, %v2245
        %v2640 = vsel %vm2619, %v2607, %v2247
        %v2641 = vsel %vm2619, %v2608, %v2249
        %v2642 = vsel %vm2619, %v2609, %v2251
        %v2643 = vsel %vm2619, %v2610, %v2253
        %v2644 = vsel %vm2619, %v2611, %v2255
        %v2645 = vsel %vm2619, %v2612, %v2257
        %v2646 = vsel %vm2619, %v2613, %v2259
        %v2647 = vsel %vm2619, %v2614, %v2261
        %v2648 = vsel %vm2619, %v2615, %v2263
        %v2649 = vsel %vm2619, %v2616, %v2265
        %v2650 = vsel %vm2619, %v2617, %v2267
        %v2651 = vsel %vm2619, %v2618, %v2267
        %vm2652 = vcmask 195584
        %v2653 = vsel %vm2652, %v2620, %v2330
        %v2654 = vsel %vm2652, %v2621, %v2332
        %v2655 = vsel %vm2652, %v2622, %v2334
        %v2656 = vsel %vm2652, %v2623, %v2336
        %v2657 = vsel %vm2652, %v2624, %v2338
        %v2658 = vsel %vm2652, %v2625, %v2340
        %v2659 = vsel %vm2652, %v2626, %v2342
        %v2660 = vsel %vm2652, %v2627, %v2344
        %v2661 = vsel %vm2652, %v2628, %v2346
        %v2662 = vsel %vm2652, %v2629, %v2348
        %v2663 = vsel %vm2652, %v2630, %v2350
        %v2664 = vsel %vm2652, %v2631, %v2352
        %v2665 = vsel %vm2652, %v2632, %v2354
        %v2666 = vsel %vm2652, %v2633, %v2356
        %v2667 = vsel %vm2652, %v2634, %v2358
        %v2668 = vsel %vm2652, %v2635, %v2360
        %v2669 = vsel %vm2652, %v2636, %v2362
        %v2670 = vsel %vm2652, %v2637, %v2364
        %v2671 = vsel %vm2652, %v2638, %v2366
        %v2672 = vsel %vm2652, %v2639, %v2368
        %v2673 = vsel %vm2652, %v2640, %v2370
        %v2674 = vsel %vm2652, %v2641, %v2372
        %v2675 = vsel %vm2652, %v2642, %v2374
        %v2676 = vsel %vm2652, %v2643, %v2376
        %v2677 = vsel %vm2652, %v2644, %v2378
        %v2678 = vsel %vm2652, %v2645, %v2380
        %v2679 = vsel %vm2652, %v2646, %v2382
        %v2680 = vsel %vm2652, %v2647, %v2384
        %v2681 = vsel %vm2652, %v2648, %v2386
        %v2682 = vsel %vm2652, %v2649, %v2388
        %v2683 = vsel %vm2652, %v2650, %v2390
        %v2684 = vsel %vm2652, %v2651, %v2390
        %v2685 = vld [vmem:[%s3] sm:$0xff]
        %v2686 = vld [vmem:[%s3 + $0x8] sm:$0xff]
        %v2687 = vld [vmem:[%s3 + $0x10] sm:$0xff]
        %v2688 = vld [vmem:[%s3 + $0x18] sm:$0x7]
        %v2689 = vld [vmem:[%s5] sm:$0x1]
        %v2691 = vlaneseq
        %v2692 = vshrl.u32 %v2691, 7
        %v2693 = vsub.s32 0, %v2692
        %v2694 = vrot.slane %v2689, %v2693
        %vm2696 = vcmask 220160
        %v2698 = vsel %vm2696, %v2653, 0
        %v2701 = vsel %vm2696, %v2654, 0
        %v2704 = vsel %vm2696, %v2655, 0
        %v2707 = vsel %vm2696, %v2656, 0
        %v2710 = vsel %vm2696, %v2657, 0
        %v2713 = vsel %vm2696, %v2658, 0
        %v2716 = vsel %vm2696, %v2659, 0
        %v2719 = vsel %vm2696, %v2660, 0
        %v2722 = vsel %vm2696, %v2661, 0
        %v2725 = vsel %vm2696, %v2662, 0
        %v2728 = vsel %vm2696, %v2663, 0
        %v2731 = vsel %vm2696, %v2664, 0
        %v2734 = vsel %vm2696, %v2665, 0
        %v2737 = vsel %vm2696, %v2666, 0
        %v2740 = vsel %vm2696, %v2667, 0
        %v2743 = vsel %vm2696, %v2668, 0
        %v2746 = vsel %vm2696, %v2669, 0
        %v2749 = vsel %vm2696, %v2670, 0
        %v2752 = vsel %vm2696, %v2671, 0
        %v2755 = vsel %vm2696, %v2672, 0
        %v2758 = vsel %vm2696, %v2673, 0
        %v2761 = vsel %vm2696, %v2674, 0
        %v2764 = vsel %vm2696, %v2675, 0
        %v2767 = vsel %vm2696, %v2676, 0
        %v2770 = vsel %vm2696, %v2677, 0
        %v2773 = vsel %vm2696, %v2678, 0
        %v2776 = vsel %vm2696, %v2679, 0
        %v2779 = vsel %vm2696, %v2680, 0
        %v2782 = vsel %vm2696, %v2681, 0
        %v2785 = vsel %vm2696, %v2682, 0
        %v2788 = vsel %vm2696, %v2683, 0
        %v2791 = vsel %vm2696, %v2684, 0
        %vm2793 = vcmask 1042432
        %v2795 = vsel %vm2793, %v2688, 0
        %2797 = vmatprep.subr.mxu0 0.0
        %2798 = vmatpush1.msra.mxu0 %v2685
        %2799 = vmatprep.subr.mxu0 0.0
        %2800 = vmatpush1.msra.mxu0 %v2686
        %2801 = vmatprep.subr.mxu0 0.0
        %2802 = vmatpush1.msra.mxu0 %v2687
        %2803 = vmatprep.subr.mxu0 0.0
        %2804 = vmatpush1.msra.mxu0 %v2795
        %2805 = vmatprep.subr.mxu0 0.0
        %2806 = vmatpush1.msra.mxu0 0.0
        %2807 = vmatprep.subr.mxu0 0.0
        %2808 = vmatpush1.msra.mxu0 0.0
        %2809 = vmatprep.subr.mxu0 0.0
        %2810 = vmatpush1.msra.mxu0 0.0
        %2811 = vmatprep.subr.mxu0 0.0
        %2812 = vmatpush1.msra.mxu0 0.0
        %2813 = vmatprep.subr.mxu0 0.0
        %2814 = vmatpush1.msra.mxu0 0.0
        %2815 = vmatprep.subr.mxu0 0.0
        %2816 = vmatpush1.msra.mxu0 0.0
        %2817 = vmatprep.subr.mxu0 0.0
        %2818 = vmatpush1.msra.mxu0 0.0
        %2819 = vmatprep.subr.mxu0 0.0
        %2820 = vmatpush1.msra.mxu0 0.0
        %2821 = vmatprep.subr.mxu0 0.0
        %2822 = vmatpush1.msra.mxu0 0.0
        %2823 = vmatprep.subr.mxu0 0.0
        %2824 = vmatpush1.msra.mxu0 0.0
        %2825 = vmatprep.subr.mxu0 0.0
        %2826 = vmatpush1.msra.mxu0 0.0
        %2827 = vmatprep.subr.mxu0 0.0
        %2828 = vmatpush1.msra.mxu0 0.0
        %2829 = vmatprep.subr.mxu0 0.0
        %2830 = vmatpush1.msra.mxu0 0.0
        %2831 = vmatprep.subr.mxu0 0.0
        %2832 = vmatpush1.msra.mxu0 0.0
        %2833 = vmatprep.subr.mxu0 0.0
        %2834 = vmatpush1.msra.mxu0 0.0
        %2835 = vmatprep.subr.mxu0 0.0
        %2836 = vmatpush1.msra.mxu0 0.0
        %2837 = vmatprep.subr.mxu0 0.0
        %2838 = vmatpush1.msra.mxu0 0.0
        %2839 = vmatprep.subr.mxu0 0.0
        %2840 = vmatpush1.msra.mxu0 0.0
        %2841 = vmatprep.subr.mxu0 0.0
        %2842 = vmatpush1.msra.mxu0 0.0
        %2843 = vmatprep.subr.mxu0 0.0
        %2844 = vmatpush1.msra.mxu0 0.0
        %2845 = vmatprep.subr.mxu0 0.0
        %2846 = vmatpush1.msra.mxu0 0.0
        %2847 = vmatprep.subr.mxu0 0.0
        %2848 = vmatpush1.msra.mxu0 0.0
        %2849 = vmatprep.subr.mxu0 0.0
        %2850 = vmatpush1.msra.mxu0 0.0
        %2851 = vmatprep.subr.mxu0 0.0
        %2852 = vmatpush1.msra.mxu0 0.0
        %2853 = vmatprep.subr.mxu0 0.0
        %2854 = vmatpush1.msra.mxu0 0.0
        %2855 = vmatprep.subr.mxu0 0.0
        %2856 = vmatpush1.msra.mxu0 0.0
        %2857 = vmatprep.subr.mxu0 0.0
        %2858 = vmatpush1.msra.mxu0 0.0
        %2859 = vmatprep.subr.mxu0 0.0
        %2860 = vmatpush1.msra.mxu0 0.0
        %2861 = vmatprep.mubr.f32.mxu0 0.0
        %2862 = vmatmul.mubr.f32.gmra.mrb[0].mxu0 %v2698
        %v2863 = vpop.f32.mrb[0].mxu0
        %v2864 = vadd.f32 %v2694, %v2863
        %v2865 = vpop.f32.mrb[0].mxu0
        %2866 = vmatprep.mubr.f32.mxu0 0.0
        %2867 = vmatmul.mubr.f32.gmra.mrb[0].mxu0 %v2701
        %v2868 = vpop.f32.mrb[0].mxu0
        %v2869 = vadd.f32 %v2694, %v2868
        %v2870 = vpop.f32.mrb[0].mxu0
        %2871 = vmatprep.mubr.f32.mxu0 0.0
        %2872 = vmatmul.mubr.f32.gmra.mrb[0].mxu0 %v2704
        %v2873 = vpop.f32.mrb[0].mxu0
        %v2874 = vadd.f32 %v2694, %v2873
        %v2875 = vpop.f32.mrb[0].mxu0
        %2876 = vmatprep.mubr.f32.mxu0 0.0
        %2877 = vmatmul.mubr.f32.gmra.mrb[0].mxu0 %v2707
        %v2878 = vpop.f32.mrb[0].mxu0
        %v2879 = vadd.f32 %v2694, %v2878
        %v2880 = vpop.f32.mrb[0].mxu0
        %2881 = vmatprep.mubr.f32.mxu0 0.0
        %2882 = vmatmul.mubr.f32.gmra.mrb[0].mxu0 %v2710
        %v2883 = vpop.f32.mrb[0].mxu0
        %v2884 = vadd.f32 %v2694, %v2883
        %v2885 = vpop.f32.mrb[0].mxu0
        %2886 = vmatprep.mubr.f32.mxu0 0.0
        %2887 = vmatmul.mubr.f32.gmra.mrb[0].mxu0 %v2713
        %v2888 = vpop.f32.mrb[0].mxu0
        %v2889 = vadd.f32 %v2694, %v2888
        %v2890 = vpop.f32.mrb[0].mxu0
        %2891 = vmatprep.mubr.f32.mxu0 0.0
        %2892 = vmatmul.mubr.f32.gmra.mrb[0].mxu0 %v2716
        %v2893 = vpop.f32.mrb[0].mxu0
        %v2894 = vadd.f32 %v2694, %v2893
        %v2895 = vpop.f32.mrb[0].mxu0
        %2896 = vmatprep.mubr.f32.mxu0 0.0
        %2897 = vmatmul.mubr.f32.gmra.mrb[0].mxu0 %v2719
        %v2898 = vpop.f32.mrb[0].mxu0
        %v2899 = vadd.f32 %v2694, %v2898
        %v2900 = vpop.f32.mrb[0].mxu0
        %2901 = vmatprep.mubr.f32.mxu0 0.0
        %2902 = vmatmul.mubr.f32.gmra.mrb[0].mxu0 %v2722
        %v2903 = vpop.f32.mrb[0].mxu0
        %v2904 = vadd.f32 %v2694, %v2903
        %v2905 = vpop.f32.mrb[0].mxu0
        %2906 = vmatprep.mubr.f32.mxu0 0.0
        %2907 = vmatmul.mubr.f32.gmra.mrb[0].mxu0 %v2725
        %v2908 = vpop.f32.mrb[0].mxu0
        %v2909 = vadd.f32 %v2694, %v2908
        %v2910 = vpop.f32.mrb[0].mxu0
        %2911 = vmatprep.mubr.f32.mxu0 0.0
        %2912 = vmatmul.mubr.f32.gmra.mrb[0].mxu0 %v2728
        %v2913 = vpop.f32.mrb[0].mxu0
        %v2914 = vadd.f32 %v2694, %v2913
        %v2915 = vpop.f32.mrb[0].mxu0
        %2916 = vmatprep.mubr.f32.mxu0 0.0
        %2917 = vmatmul.mubr.f32.gmra.mrb[0].mxu0 %v2731
        %v2918 = vpop.f32.mrb[0].mxu0
        %v2919 = vadd.f32 %v2694, %v2918
        %v2920 = vpop.f32.mrb[0].mxu0
        %2921 = vmatprep.mubr.f32.mxu0 0.0
        %2922 = vmatmul.mubr.f32.gmra.mrb[0].mxu0 %v2734
        %v2923 = vpop.f32.mrb[0].mxu0
        %v2924 = vadd.f32 %v2694, %v2923
        %v2925 = vpop.f32.mrb[0].mxu0
        %2926 = vmatprep.mubr.f32.mxu0 0.0
        %2927 = vmatmul.mubr.f32.gmra.mrb[0].mxu0 %v2737
        %v2928 = vpop.f32.mrb[0].mxu0
        %v2929 = vadd.f32 %v2694, %v2928
        %v2930 = vpop.f32.mrb[0].mxu0
        %2931 = vmatprep.mubr.f32.mxu0 0.0
        %2932 = vmatmul.mubr.f32.gmra.mrb[0].mxu0 %v2740
        %v2933 = vpop.f32.mrb[0].mxu0
        %v2934 = vadd.f32 %v2694, %v2933
        %v2935 = vpop.f32.mrb[0].mxu0
        %2936 = vmatprep.mubr.f32.mxu0 0.0
        %2937 = vmatmul.mubr.f32.gmra.mrb[0].mxu0 %v2743
        %v2938 = vpop.f32.mrb[0].mxu0
        %v2939 = vadd.f32 %v2694, %v2938
        %v2940 = vpop.f32.mrb[0].mxu0
        %2941 = vmatprep.mubr.f32.mxu0 0.0
        %2942 = vmatmul.mubr.f32.gmra.mrb[0].mxu0 %v2746
        %v2943 = vpop.f32.mrb[0].mxu0
        %v2944 = vadd.f32 %v2694, %v2943
        %v2945 = vpop.f32.mrb[0].mxu0
        %2946 = vmatprep.mubr.f32.mxu0 0.0
        %2947 = vmatmul.mubr.f32.gmra.mrb[0].mxu0 %v2749
        %v2948 = vpop.f32.mrb[0].mxu0
        %v2949 = vadd.f32 %v2694, %v2948
        %v2950 = vpop.f32.mrb[0].mxu0
        %2951 = vmatprep.mubr.f32.mxu0 0.0
        %2952 = vmatmul.mubr.f32.gmra.mrb[0].mxu0 %v2752
        %v2953 = vpop.f32.mrb[0].mxu0
        %v2954 = vadd.f32 %v2694, %v2953
        %v2955 = vpop.f32.mrb[0].mxu0
        %2956 = vmatprep.mubr.f32.mxu0 0.0
        %2957 = vmatmul.mubr.f32.gmra.mrb[0].mxu0 %v2755
        %v2958 = vpop.f32.mrb[0].mxu0
        %v2959 = vadd.f32 %v2694, %v2958
        %v2960 = vpop.f32.mrb[0].mxu0
        %2961 = vmatprep.mubr.f32.mxu0 0.0
        %2962 = vmatmul.mubr.f32.gmra.mrb[0].mxu0 %v2758
        %v2963 = vpop.f32.mrb[0].mxu0
        %v2964 = vadd.f32 %v2694, %v2963
        %v2965 = vpop.f32.mrb[0].mxu0
        %2966 = vmatprep.mubr.f32.mxu0 0.0
        %2967 = vmatmul.mubr.f32.gmra.mrb[0].mxu0 %v2761
        %v2968 = vpop.f32.mrb[0].mxu0
        %v2969 = vadd.f32 %v2694, %v2968
        %v2970 = vpop.f32.mrb[0].mxu0
        %2971 = vmatprep.mubr.f32.mxu0 0.0
        %2972 = vmatmul.mubr.f32.gmra.mrb[0].mxu0 %v2764
        %v2973 = vpop.f32.mrb[0].mxu0
        %v2974 = vadd.f32 %v2694, %v2973
        %v2975 = vpop.f32.mrb[0].mxu0
        %2976 = vmatprep.mubr.f32.mxu0 0.0
        %2977 = vmatmul.mubr.f32.gmra.mrb[0].mxu0 %v2767
        %v2978 = vpop.f32.mrb[0].mxu0
        %v2979 = vadd.f32 %v2694, %v2978
        %v2980 = vpop.f32.mrb[0].mxu0
        %2981 = vmatprep.mubr.f32.mxu0 0.0
        %2982 = vmatmul.mubr.f32.gmra.mrb[0].mxu0 %v2770
        %v2983 = vpop.f32.mrb[0].mxu0
        %v2984 = vadd.f32 %v2694, %v2983
        %v2985 = vpop.f32.mrb[0].mxu0
        %2986 = vmatprep.mubr.f32.mxu0 0.0
        %2987 = vmatmul.mubr.f32.gmra.mrb[0].mxu0 %v2773
        %v2988 = vpop.f32.mrb[0].mxu0
        %v2989 = vadd.f32 %v2694, %v2988
        %v2990 = vpop.f32.mrb[0].mxu0
        %2991 = vmatprep.mubr.f32.mxu0 0.0
        %2992 = vmatmul.mubr.f32.gmra.mrb[0].mxu0 %v2776
        %v2993 = vpop.f32.mrb[0].mxu0
        %v2994 = vadd.f32 %v2694, %v2993
        %v2995 = vpop.f32.mrb[0].mxu0
        %2996 = vmatprep.mubr.f32.mxu0 0.0
        %2997 = vmatmul.mubr.f32.gmra.mrb[0].mxu0 %v2779
        %v2998 = vpop.f32.mrb[0].mxu0
        %v2999 = vadd.f32 %v2694, %v2998
        %v3000 = vpop.f32.mrb[0].mxu0
        %3001 = vmatprep.mubr.f32.mxu0 0.0
        %3002 = vmatmul.mubr.f32.gmra.mrb[0].mxu0 %v2782
        %v3003 = vpop.f32.mrb[0].mxu0
        %v3004 = vadd.f32 %v2694, %v3003
        %v3005 = vpop.f32.mrb[0].mxu0
        %3006 = vmatprep.mubr.f32.mxu0 0.0
        %3007 = vmatmul.mubr.f32.gmra.mrb[0].mxu0 %v2785
        %v3008 = vpop.f32.mrb[0].mxu0
        %v3009 = vadd.f32 %v2694, %v3008
        %v3010 = vpop.f32.mrb[0].mxu0
        %3011 = vmatprep.mubr.f32.mxu0 0.0
        %3012 = vmatmul.mubr.f32.gmra.mrb[0].mxu0 %v2788
        %v3013 = vpop.f32.mrb[0].mxu0
        %v3014 = vadd.f32 %v2694, %v3013
        %v3015 = vpop.f32.mrb[0].mxu0
        %3016 = vmatprep.mubr.f32.mxu0 0.0
        %3017 = vmatmul.mubr.f32.gmra.mrb[0].mxu0 %v2791
        %v3018 = vpop.f32.mrb[0].mxu0
        %v3019 = vadd.f32 %v2694, %v3018
        %v3020 = vpop.f32.mrb[0].mxu0
        %3021 = vdwg.mxu0
        %v3022 = vmax.f32 %v2864, 0.0
        %v3023 = vmax.f32 %v2869, 0.0
        %v3024 = vmax.f32 %v2874, 0.0
        %v3025 = vmax.f32 %v2879, 0.0
        %v3026 = vmax.f32 %v2884, 0.0
        %v3027 = vmax.f32 %v2889, 0.0
        %v3028 = vmax.f32 %v2894, 0.0
        %v3029 = vmax.f32 %v2899, 0.0
        %v3030 = vmax.f32 %v2904, 0.0
        %v3031 = vmax.f32 %v2909, 0.0
        %v3032 = vmax.f32 %v2914, 0.0
        %v3033 = vmax.f32 %v2919, 0.0
        %v3034 = vmax.f32 %v2924, 0.0
        %v3035 = vmax.f32 %v2929, 0.0
        %v3036 = vmax.f32 %v2934, 0.0
        %v3037 = vmax.f32 %v2939, 0.0
        %v3038 = vmax.f32 %v2944, 0.0
        %v3039 = vmax.f32 %v2949, 0.0
        %v3040 = vmax.f32 %v2954, 0.0
        %v3041 = vmax.f32 %v2959, 0.0
        %v3042 = vmax.f32 %v2964, 0.0
        %v3043 = vmax.f32 %v2969, 0.0
        %v3044 = vmax.f32 %v2974, 0.0
        %v3045 = vmax.f32 %v2979, 0.0
        %v3046 = vmax.f32 %v2984, 0.0
        %v3047 = vmax.f32 %v2989, 0.0
        %v3048 = vmax.f32 %v2994, 0.0
        %v3049 = vmax.f32 %v2999, 0.0
        %v3050 = vmax.f32 %v3004, 0.0
        %v3051 = vmax.f32 %v3009, 0.0
        %v3052 = vmax.f32 %v3014, 0.0
        %v3053 = vmax.f32 %v3019, 0.0
        %v3084 = vrot.slane %v3022, 7
        %v3085 = vrot.slane %v3023, 7
        %v3086 = vsel %vm1056, %v3084, %v3085
        %v3087 = vrot.slane %v3024, 7
        %v3088 = vsel %vm1056, %v3085, %v3087
        %v3089 = vrot.slane %v3025, 7
        %v3090 = vsel %vm1056, %v3087, %v3089
        %v3091 = vrot.slane %v3026, 7
        %v3092 = vsel %vm1056, %v3089, %v3091
        %v3093 = vrot.slane %v3027, 7
        %v3094 = vsel %vm1056, %v3091, %v3093
        %v3095 = vrot.slane %v3028, 7
        %v3096 = vsel %vm1056, %v3093, %v3095
        %v3097 = vrot.slane %v3029, 7
        %v3098 = vsel %vm1056, %v3095, %v3097
        %v3099 = vrot.slane %v3030, 7
        %v3100 = vsel %vm1056, %v3097, %v3099
        %v3101 = vrot.slane %v3031, 7
        %v3102 = vsel %vm1056, %v3099, %v3101
        %v3103 = vrot.slane %v3032, 7
        %v3104 = vsel %vm1056, %v3101, %v3103
        %v3105 = vrot.slane %v3033, 7
        %v3106 = vsel %vm1056, %v3103, %v3105
        %v3107 = vrot.slane %v3034, 7
        %v3108 = vsel %vm1056, %v3105, %v3107
        %v3109 = vrot.slane %v3035, 7
        %v3110 = vsel %vm1056, %v3107, %v3109
        %v3111 = vrot.slane %v3036, 7
        %v3112 = vsel %vm1056, %v3109, %v3111
        %v3113 = vrot.slane %v3037, 7
        %v3114 = vsel %vm1056, %v3111, %v3113
        %v3115 = vrot.slane %v3038, 7
        %v3116 = vsel %vm1056, %v3113, %v3115
        %v3117 = vrot.slane %v3039, 7
        %v3118 = vsel %vm1056, %v3115, %v3117
        %v3119 = vrot.slane %v3040, 7
        %v3120 = vsel %vm1056, %v3117, %v3119
        %v3121 = vrot.slane %v3041, 7
        %v3122 = vsel %vm1056, %v3119, %v3121
        %v3123 = vrot.slane %v3042, 7
        %v3124 = vsel %vm1056, %v3121, %v3123
        %v3125 = vrot.slane %v3043, 7
        %v3126 = vsel %vm1056, %v3123, %v3125
        %v3127 = vrot.slane %v3044, 7
        %v3128 = vsel %vm1056, %v3125, %v3127
        %v3129 = vrot.slane %v3045, 7
        %v3130 = vsel %vm1056, %v3127, %v3129
        %v3131 = vrot.slane %v3046, 7
        %v3132 = vsel %vm1056, %v3129, %v3131
        %v3133 = vrot.slane %v3047, 7
        %v3134 = vsel %vm1056, %v3131, %v3133
        %v3135 = vrot.slane %v3048, 7
        %v3136 = vsel %vm1056, %v3133, %v3135
        %v3137 = vrot.slane %v3049, 7
        %v3138 = vsel %vm1056, %v3135, %v3137
        %v3139 = vrot.slane %v3050, 7
        %v3140 = vsel %vm1056, %v3137, %v3139
        %v3141 = vrot.slane %v3051, 7
        %v3142 = vsel %vm1056, %v3139, %v3141
        %v3173 = vsel %vm1056, 0.0, %v3084
        %v3174 = vsel %vm1149, 0.0, %v3173
        %v3175 = vsel %vm1150, 0.0, %v3086
        %v3176 = vsel %vm1151, 0.0, %v3088
        %v3177 = vsel %vm1152, 0.0, %v3090
        %v3178 = vsel %vm1153, 0.0, %v3092
        %v3179 = vsel %vm1154, 0.0, %v3094
        %v3180 = vsel %vm1155, 0.0, %v3096
        %v3181 = vsel %vm1156, 0.0, %v3098
        %v3182 = vsel %vm1157, 0.0, %v3100
        %v3183 = vsel %vm1158, 0.0, %v3102
        %v3184 = vsel %vm1159, 0.0, %v3104
        %v3185 = vsel %vm1160, 0.0, %v3106
        %v3186 = vsel %vm1161, 0.0, %v3108
        %v3187 = vsel %vm1162, 0.0, %v3110
        %v3188 = vsel %vm1163, 0.0, %v3112
        %v3189 = vsel %vm1164, 0.0, %v3114
        %v3190 = vsel %vm1165, 0.0, %v3116
        %v3191 = vsel %vm1166, 0.0, %v3118
        %v3192 = vsel %vm1167, 0.0, %v3120
        %v3193 = vsel %vm1168, 0.0, %v3122
        %v3194 = vsel %vm1169, 0.0, %v3124
        %v3195 = vsel %vm1170, 0.0, %v3126
        %v3196 = vsel %vm1171, 0.0, %v3128
        %v3197 = vsel %vm1172, 0.0, %v3130
        %v3198 = vsel %vm1173, 0.0, %v3132
        %v3199 = vsel %vm1174, 0.0, %v3134
        %v3200 = vsel %vm1175, 0.0, %v3136
        %v3201 = vsel %vm1176, 0.0, %v3138
        %v3202 = vsel %vm1177, 0.0, %v3140
        %v3203 = vsel %vm1178, 0.0, %v3142
        %v3205 = vrot.slane %v3022, 1
        %v3206 = vrot.slane %v3023, 1
        %v3207 = vsel %vm1210, %v3205, %v3206
        %v3208 = vrot.slane %v3024, 1
        %v3209 = vsel %vm1210, %v3206, %v3208
        %v3210 = vrot.slane %v3025, 1
        %v3211 = vsel %vm1210, %v3208, %v3210
        %v3212 = vrot.slane %v3026, 1
        %v3213 = vsel %vm1210, %v3210, %v3212
        %v3214 = vrot.slane %v3027, 1
        %v3215 = vsel %vm1210, %v3212, %v3214
        %v3216 = vrot.slane %v3028, 1
        %v3217 = vsel %vm1210, %v3214, %v3216
        %v3218 = vrot.slane %v3029, 1
        %v3219 = vsel %vm1210, %v3216, %v3218
        %v3220 = vrot.slane %v3030, 1
        %v3221 = vsel %vm1210, %v3218, %v3220
        %v3222 = vrot.slane %v3031, 1
        %v3223 = vsel %vm1210, %v3220, %v3222
        %v3224 = vrot.slane %v3032, 1
        %v3225 = vsel %vm1210, %v3222, %v3224
        %v3226 = vrot.slane %v3033, 1
        %v3227 = vsel %vm1210, %v3224, %v3226
        %v3228 = vrot.slane %v3034, 1
        %v3229 = vsel %vm1210, %v3226, %v3228
        %v3230 = vrot.slane %v3035, 1
        %v3231 = vsel %vm1210, %v3228, %v3230
        %v3232 = vrot.slane %v3036, 1
        %v3233 = vsel %vm1210, %v3230, %v3232
        %v3234 = vrot.slane %v3037, 1
        %v3235 = vsel %vm1210, %v3232, %v3234
        %v3236 = vrot.slane %v3038, 1
        %v3237 = vsel %vm1210, %v3234, %v3236
        %v3238 = vrot.slane %v3039, 1
        %v3239 = vsel %vm1210, %v3236, %v3238
        %v3240 = vrot.slane %v3040, 1
        %v3241 = vsel %vm1210, %v3238, %v3240
        %v3242 = vrot.slane %v3041, 1
        %v3243 = vsel %vm1210, %v3240, %v3242
        %v3244 = vrot.slane %v3042, 1
        %v3245 = vsel %vm1210, %v3242, %v3244
        %v3246 = vrot.slane %v3043, 1
        %v3247 = vsel %vm1210, %v3244, %v3246
        %v3248 = vrot.slane %v3044, 1
        %v3249 = vsel %vm1210, %v3246, %v3248
        %v3250 = vrot.slane %v3045, 1
        %v3251 = vsel %vm1210, %v3248, %v3250
        %v3252 = vrot.slane %v3046, 1
        %v3253 = vsel %vm1210, %v3250, %v3252
        %v3254 = vrot.slane %v3047, 1
        %v3255 = vsel %vm1210, %v3252, %v3254
        %v3256 = vrot.slane %v3048, 1
        %v3257 = vsel %vm1210, %v3254, %v3256
        %v3258 = vrot.slane %v3049, 1
        %v3259 = vsel %vm1210, %v3256, %v3258
        %v3260 = vrot.slane %v3050, 1
        %v3261 = vsel %vm1210, %v3258, %v3260
        %v3262 = vrot.slane %v3051, 1
        %v3263 = vsel %vm1210, %v3260, %v3262
        %v3264 = vrot.slane %v3052, 1
        %v3265 = vsel %vm1210, %v3262, %v3264
        %v3297 = vsel %vm1210, 0.0, %v3205
        %v3298 = vsel %vm1305, 0.0, %v3297
        %v3299 = vsel %vm1306, 0.0, %v3207
        %v3300 = vsel %vm1307, 0.0, %v3209
        %v3301 = vsel %vm1308, 0.0, %v3211
        %v3302 = vsel %vm1309, 0.0, %v3213
        %v3303 = vsel %vm1310, 0.0, %v3215
        %v3304 = vsel %vm1311, 0.0, %v3217
        %v3305 = vsel %vm1312, 0.0, %v3219
        %v3306 = vsel %vm1313, 0.0, %v3221
        %v3307 = vsel %vm1314, 0.0, %v3223
        %v3308 = vsel %vm1315, 0.0, %v3225
        %v3309 = vsel %vm1316, 0.0, %v3227
        %v3310 = vsel %vm1317, 0.0, %v3229
        %v3311 = vsel %vm1318, 0.0, %v3231
        %v3312 = vsel %vm1319, 0.0, %v3233
        %v3313 = vsel %vm1320, 0.0, %v3235
        %v3314 = vsel %vm1321, 0.0, %v3237
        %v3315 = vsel %vm1322, 0.0, %v3239
        %v3316 = vsel %vm1323, 0.0, %v3241
        %v3317 = vsel %vm1324, 0.0, %v3243
        %v3318 = vsel %vm1325, 0.0, %v3245
        %v3319 = vsel %vm1326, 0.0, %v3247
        %v3320 = vsel %vm1327, 0.0, %v3249
        %v3321 = vsel %vm1328, 0.0, %v3251
        %v3322 = vsel %vm1329, 0.0, %v3253
        %v3323 = vsel %vm1330, 0.0, %v3255
        %v3324 = vsel %vm1331, 0.0, %v3257
        %v3325 = vsel %vm1332, 0.0, %v3259
        %v3326 = vsel %vm1333, 0.0, %v3261
        %v3327 = vsel %vm1334, 0.0, %v3263
        %v3328 = vsel %vm1335, 0.0, %v3265
        %v3330 = vrot.slane %v3052, 7
        %v3331 = vsel %vm1056, %v3141, %v3330
        %v3332 = vrot.slane %v3053, 7
        %v3333 = vsel %vm1056, %v3330, %v3332
        %v3336 = vsel %vm1147, 0.0, %v3173
        %v3337 = vsel %vm1148, 0.0, %v3086
        %v3338 = vsel %vm1149, 0.0, %v3088
        %v3339 = vsel %vm1150, 0.0, %v3090
        %v3340 = vsel %vm1151, 0.0, %v3092
        %v3341 = vsel %vm1152, 0.0, %v3094
        %v3342 = vsel %vm1153, 0.0, %v3096
        %v3343 = vsel %vm1154, 0.0, %v3098
        %v3344 = vsel %vm1155, 0.0, %v3100
        %v3345 = vsel %vm1156, 0.0, %v3102
        %v3346 = vsel %vm1157, 0.0, %v3104
        %v3347 = vsel %vm1158, 0.0, %v3106
        %v3348 = vsel %vm1159, 0.0, %v3108
        %v3349 = vsel %vm1160, 0.0, %v3110
        %v3350 = vsel %vm1161, 0.0, %v3112
        %v3351 = vsel %vm1162, 0.0, %v3114
        %v3352 = vsel %vm1163, 0.0, %v3116
        %v3353 = vsel %vm1164, 0.0, %v3118
        %v3354 = vsel %vm1165, 0.0, %v3120
        %v3355 = vsel %vm1166, 0.0, %v3122
        %v3356 = vsel %vm1167, 0.0, %v3124
        %v3357 = vsel %vm1168, 0.0, %v3126
        %v3358 = vsel %vm1169, 0.0, %v3128
        %v3359 = vsel %vm1170, 0.0, %v3130
        %v3360 = vsel %vm1171, 0.0, %v3132
        %v3361 = vsel %vm1172, 0.0, %v3134
        %v3362 = vsel %vm1173, 0.0, %v3136
        %v3363 = vsel %vm1174, 0.0, %v3138
        %v3364 = vsel %vm1175, 0.0, %v3140
        %v3365 = vsel %vm1176, 0.0, %v3142
        %v3366 = vsel %vm1177, 0.0, %v3331
        %v3367 = vsel %vm1178, 0.0, %v3333
        %v3368 = vrot.slane %v3053, 1
        %v3369 = vsel %vm1210, %v3264, %v3368
        %v3372 = vsel %vm1210, %v3368, 0.0
        %v3373 = vsel %vm1304, 0.0, %v3207
        %v3374 = vsel %vm1305, 0.0, %v3209
        %v3375 = vsel %vm1306, 0.0, %v3211
        %v3376 = vsel %vm1307, 0.0, %v3213
        %v3377 = vsel %vm1308, 0.0, %v3215
        %v3378 = vsel %vm1309, 0.0, %v3217
        %v3379 = vsel %vm1310, 0.0, %v3219
        %v3380 = vsel %vm1311, 0.0, %v3221
        %v3381 = vsel %vm1312, 0.0, %v3223
        %v3382 = vsel %vm1313, 0.0, %v3225
        %v3383 = vsel %vm1314, 0.0, %v3227
        %v3384 = vsel %vm1315, 0.0, %v3229
        %v3385 = vsel %vm1316, 0.0, %v3231
        %v3386 = vsel %vm1317, 0.0, %v3233
        %v3387 = vsel %vm1318, 0.0, %v3235
        %v3388 = vsel %vm1319, 0.0, %v3237
        %v3389 = vsel %vm1320, 0.0, %v3239
        %v3390 = vsel %vm1321, 0.0, %v3241
        %v3391 = vsel %vm1322, 0.0, %v3243
        %v3392 = vsel %vm1323, 0.0, %v3245
        %v3393 = vsel %vm1324, 0.0, %v3247
        %v3394 = vsel %vm1325, 0.0, %v3249
        %v3395 = vsel %vm1326, 0.0, %v3251
        %v3396 = vsel %vm1327, 0.0, %v3253
        %v3397 = vsel %vm1328, 0.0, %v3255
        %v3398 = vsel %vm1329, 0.0, %v3257
        %v3399 = vsel %vm1330, 0.0, %v3259
        %v3400 = vsel %vm1331, 0.0, %v3261
        %v3401 = vsel %vm1332, 0.0, %v3263
        %v3402 = vsel %vm1333, 0.0, %v3265
        %v3403 = vsel %vm1334, 0.0, %v3369
        %v3404 = vsel %vm1335, 0.0, %v3372
        %v3406 = vsel %vm1056, %v3332, 0.0
        %v3407 = vsel %vm1147, 0.0, %v3088
        %v3408 = vsel %vm1148, 0.0, %v3090
        %v3409 = vsel %vm1149, 0.0, %v3092
        %v3410 = vsel %vm1150, 0.0, %v3094
        %v3411 = vsel %vm1151, 0.0, %v3096
        %v3412 = vsel %vm1152, 0.0, %v3098
        %v3413 = vsel %vm1153, 0.0, %v3100
        %v3414 = vsel %vm1154, 0.0, %v3102
        %v3415 = vsel %vm1155, 0.0, %v3104
        %v3416 = vsel %vm1156, 0.0, %v3106
        %v3417 = vsel %vm1157, 0.0, %v3108
        %v3418 = vsel %vm1158, 0.0, %v3110
        %v3419 = vsel %vm1159, 0.0, %v3112
        %v3420 = vsel %vm1160, 0.0, %v3114
        %v3421 = vsel %vm1161, 0.0, %v3116
        %v3422 = vsel %vm1162, 0.0, %v3118
        %v3423 = vsel %vm1163, 0.0, %v3120
        %v3424 = vsel %vm1164, 0.0, %v3122
        %v3425 = vsel %vm1165, 0.0, %v3124
        %v3426 = vsel %vm1166, 0.0, %v3126
        %v3427 = vsel %vm1167, 0.0, %v3128
        %v3428 = vsel %vm1168, 0.0, %v3130
        %v3429 = vsel %vm1169, 0.0, %v3132
        %v3430 = vsel %vm1170, 0.0, %v3134
        %v3431 = vsel %vm1171, 0.0, %v3136
        %v3432 = vsel %vm1172, 0.0, %v3138
        %v3433 = vsel %vm1173, 0.0, %v3140
        %v3434 = vsel %vm1174, 0.0, %v3142
        %v3435 = vsel %vm1175, 0.0, %v3331
        %v3436 = vsel %vm1176, 0.0, %v3333
        %v3437 = vsel %vm1177, 0.0, %v3406
        %v3438 = vsel %vm1304, 0.0, %v3211
        %v3439 = vsel %vm1305, 0.0, %v3213
        %v3440 = vsel %vm1306, 0.0, %v3215
        %v3441 = vsel %vm1307, 0.0, %v3217
        %v3442 = vsel %vm1308, 0.0, %v3219
        %v3443 = vsel %vm1309, 0.0, %v3221
        %v3444 = vsel %vm1310, 0.0, %v3223
        %v3445 = vsel %vm1311, 0.0, %v3225
        %v3446 = vsel %vm1312, 0.0, %v3227
        %v3447 = vsel %vm1313, 0.0, %v3229
        %v3448 = vsel %vm1314, 0.0, %v3231
        %v3449 = vsel %vm1315, 0.0, %v3233
        %v3450 = vsel %vm1316, 0.0, %v3235
        %v3451 = vsel %vm1317, 0.0, %v3237
        %v3452 = vsel %vm1318, 0.0, %v3239
        %v3453 = vsel %vm1319, 0.0, %v3241
        %v3454 = vsel %vm1320, 0.0, %v3243
        %v3455 = vsel %vm1321, 0.0, %v3245
        %v3456 = vsel %vm1322, 0.0, %v3247
        %v3457 = vsel %vm1323, 0.0, %v3249
        %v3458 = vsel %vm1324, 0.0, %v3251
        %v3459 = vsel %vm1325, 0.0, %v3253
        %v3460 = vsel %vm1326, 0.0, %v3255
        %v3461 = vsel %vm1327, 0.0, %v3257
        %v3462 = vsel %vm1328, 0.0, %v3259
        %v3463 = vsel %vm1329, 0.0, %v3261
        %v3464 = vsel %vm1330, 0.0, %v3263
        %v3465 = vsel %vm1331, 0.0, %v3265
        %v3466 = vsel %vm1332, 0.0, %v3369
        %v3467 = vsel %vm1333, 0.0, %v3372
        %3468 = vrot.lane.b32.xlu0 0.0, 8
        %v3469 = vpop.permute.xlu0 %3468
        %3470 = vrot.lane.b32.xlu0 %v3022, 8
        %v3471 = vpop.permute.xlu0 %3470
        %3472 = vrot.lane.b32.xlu0 %v3023, 8
        %v3473 = vpop.permute.xlu0 %3472
        %3474 = vrot.lane.b32.xlu0 %v3024, 8
        %v3475 = vpop.permute.xlu0 %3474
        %3476 = vrot.lane.b32.xlu0 %v3025, 8
        %v3477 = vpop.permute.xlu0 %3476
        %3478 = vrot.lane.b32.xlu0 %v3026, 8
        %v3479 = vpop.permute.xlu0 %3478
        %3480 = vrot.lane.b32.xlu0 %v3027, 8
        %v3481 = vpop.permute.xlu0 %3480
        %3482 = vrot.lane.b32.xlu0 %v3028, 8
        %v3483 = vpop.permute.xlu0 %3482
        %3484 = vrot.lane.b32.xlu0 %v3029, 8
        %v3485 = vpop.permute.xlu0 %3484
        %3486 = vrot.lane.b32.xlu0 %v3030, 8
        %v3487 = vpop.permute.xlu0 %3486
        %3488 = vrot.lane.b32.xlu0 %v3031, 8
        %v3489 = vpop.permute.xlu0 %3488
        %3490 = vrot.lane.b32.xlu0 %v3032, 8
        %v3491 = vpop.permute.xlu0 %3490
        %3492 = vrot.lane.b32.xlu0 %v3033, 8
        %v3493 = vpop.permute.xlu0 %3492
        %3494 = vrot.lane.b32.xlu0 %v3034, 8
        %v3495 = vpop.permute.xlu0 %3494
        %3496 = vrot.lane.b32.xlu0 %v3035, 8
        %v3497 = vpop.permute.xlu0 %3496
        %3498 = vrot.lane.b32.xlu0 %v3036, 8
        %v3499 = vpop.permute.xlu0 %3498
        %3500 = vrot.lane.b32.xlu0 %v3037, 8
        %v3501 = vpop.permute.xlu0 %3500
        %3502 = vrot.lane.b32.xlu0 %v3038, 8
        %v3503 = vpop.permute.xlu0 %3502
        %3504 = vrot.lane.b32.xlu0 %v3039, 8
        %v3505 = vpop.permute.xlu0 %3504
        %3506 = vrot.lane.b32.xlu0 %v3040, 8
        %v3507 = vpop.permute.xlu0 %3506
        %3508 = vrot.lane.b32.xlu0 %v3041, 8
        %v3509 = vpop.permute.xlu0 %3508
        %3510 = vrot.lane.b32.xlu0 %v3042, 8
        %v3511 = vpop.permute.xlu0 %3510
        %3512 = vrot.lane.b32.xlu0 %v3043, 8
        %v3513 = vpop.permute.xlu0 %3512
        %3514 = vrot.lane.b32.xlu0 %v3044, 8
        %v3515 = vpop.permute.xlu0 %3514
        %3516 = vrot.lane.b32.xlu0 %v3045, 8
        %v3517 = vpop.permute.xlu0 %3516
        %3518 = vrot.lane.b32.xlu0 %v3046, 8
        %v3519 = vpop.permute.xlu0 %3518
        %3520 = vrot.lane.b32.xlu0 %v3047, 8
        %v3521 = vpop.permute.xlu0 %3520
        %3522 = vrot.lane.b32.xlu0 %v3048, 8
        %v3523 = vpop.permute.xlu0 %3522
        %3524 = vrot.lane.b32.xlu0 %v3049, 8
        %v3525 = vpop.permute.xlu0 %3524
        %3526 = vrot.lane.b32.xlu0 %v3050, 8
        %v3527 = vpop.permute.xlu0 %3526
        %3528 = vrot.lane.b32.xlu0 %v3051, 8
        %v3529 = vpop.permute.xlu0 %3528
        %3592 = vrot.lane.b32.xlu0 0.0, 16
        %v3593 = vpop.permute.xlu0 %3592
        %3594 = vrot.lane.b32.xlu0 %v3298, 16
        %v3595 = vpop.permute.xlu0 %3594
        %3596 = vrot.lane.b32.xlu0 %v3299, 16
        %v3597 = vpop.permute.xlu0 %3596
        %3598 = vrot.lane.b32.xlu0 %v3300, 16
        %v3599 = vpop.permute.xlu0 %3598
        %3600 = vrot.lane.b32.xlu0 %v3301, 16
        %v3601 = vpop.permute.xlu0 %3600
        %3602 = vrot.lane.b32.xlu0 %v3302, 16
        %v3603 = vpop.permute.xlu0 %3602
        %3604 = vrot.lane.b32.xlu0 %v3303, 16
        %v3605 = vpop.permute.xlu0 %3604
        %3606 = vrot.lane.b32.xlu0 %v3304, 16
        %v3607 = vpop.permute.xlu0 %3606
        %3608 = vrot.lane.b32.xlu0 %v3305, 16
        %v3609 = vpop.permute.xlu0 %3608
        %3610 = vrot.lane.b32.xlu0 %v3306, 16
        %v3611 = vpop.permute.xlu0 %3610
        %3612 = vrot.lane.b32.xlu0 %v3307, 16
        %v3613 = vpop.permute.xlu0 %3612
        %3614 = vrot.lane.b32.xlu0 %v3308, 16
        %v3615 = vpop.permute.xlu0 %3614
        %3616 = vrot.lane.b32.xlu0 %v3309, 16
        %v3617 = vpop.permute.xlu0 %3616
        %3618 = vrot.lane.b32.xlu0 %v3310, 16
        %v3619 = vpop.permute.xlu0 %3618
        %3620 = vrot.lane.b32.xlu0 %v3311, 16
        %v3621 = vpop.permute.xlu0 %3620
        %3622 = vrot.lane.b32.xlu0 %v3312, 16
        %v3623 = vpop.permute.xlu0 %3622
        %3624 = vrot.lane.b32.xlu0 %v3313, 16
        %v3625 = vpop.permute.xlu0 %3624
        %3626 = vrot.lane.b32.xlu0 %v3314, 16
        %v3627 = vpop.permute.xlu0 %3626
        %3628 = vrot.lane.b32.xlu0 %v3315, 16
        %v3629 = vpop.permute.xlu0 %3628
        %3630 = vrot.lane.b32.xlu0 %v3316, 16
        %v3631 = vpop.permute.xlu0 %3630
        %3632 = vrot.lane.b32.xlu0 %v3317, 16
        %v3633 = vpop.permute.xlu0 %3632
        %3634 = vrot.lane.b32.xlu0 %v3318, 16
        %v3635 = vpop.permute.xlu0 %3634
        %3636 = vrot.lane.b32.xlu0 %v3319, 16
        %v3637 = vpop.permute.xlu0 %3636
        %3638 = vrot.lane.b32.xlu0 %v3320, 16
        %v3639 = vpop.permute.xlu0 %3638
        %3640 = vrot.lane.b32.xlu0 %v3321, 16
        %v3641 = vpop.permute.xlu0 %3640
        %3642 = vrot.lane.b32.xlu0 %v3322, 16
        %v3643 = vpop.permute.xlu0 %3642
        %3644 = vrot.lane.b32.xlu0 %v3323, 16
        %v3645 = vpop.permute.xlu0 %3644
        %3646 = vrot.lane.b32.xlu0 %v3324, 16
        %v3647 = vpop.permute.xlu0 %3646
        %3648 = vrot.lane.b32.xlu0 %v3325, 16
        %v3649 = vpop.permute.xlu0 %3648
        %3650 = vrot.lane.b32.xlu0 %v3326, 16
        %v3651 = vpop.permute.xlu0 %3650
        %3652 = vrot.lane.b32.xlu0 %v3327, 16
        %v3653 = vpop.permute.xlu0 %3652
        %3654 = vrot.lane.b32.xlu0 %v3328, 16
        %v3655 = vpop.permute.xlu0 %3654
        %3720 = vrot.lane.b32.xlu0 %v3336, 24
        %v3721 = vpop.permute.xlu0 %3720
        %3722 = vrot.lane.b32.xlu0 %v3337, 24
        %v3723 = vpop.permute.xlu0 %3722
        %3724 = vrot.lane.b32.xlu0 %v3338, 24
        %v3725 = vpop.permute.xlu0 %3724
        %3726 = vrot.lane.b32.xlu0 %v3339, 24
        %v3727 = vpop.permute.xlu0 %3726
        %3728 = vrot.lane.b32.xlu0 %v3340, 24
        %v3729 = vpop.permute.xlu0 %3728
        %3730 = vrot.lane.b32.xlu0 %v3341, 24
        %v3731 = vpop.permute.xlu0 %3730
        %3732 = vrot.lane.b32.xlu0 %v3342, 24
        %v3733 = vpop.permute.xlu0 %3732
        %3734 = vrot.lane.b32.xlu0 %v3343, 24
        %v3735 = vpop.permute.xlu0 %3734
        %3736 = vrot.lane.b32.xlu0 %v3344, 24
        %v3737 = vpop.permute.xlu0 %3736
        %3738 = vrot.lane.b32.xlu0 %v3345, 24
        %v3739 = vpop.permute.xlu0 %3738
        %3740 = vrot.lane.b32.xlu0 %v3346, 24
        %v3741 = vpop.permute.xlu0 %3740
        %3742 = vrot.lane.b32.xlu0 %v3347, 24
        %v3743 = vpop.permute.xlu0 %3742
        %3744 = vrot.lane.b32.xlu0 %v3348, 24
        %v3745 = vpop.permute.xlu0 %3744
        %3746 = vrot.lane.b32.xlu0 %v3349, 24
        %v3747 = vpop.permute.xlu0 %3746
        %3748 = vrot.lane.b32.xlu0 %v3350, 24
        %v3749 = vpop.permute.xlu0 %3748
        %3750 = vrot.lane.b32.xlu0 %v3351, 24
        %v3751 = vpop.permute.xlu0 %3750
        %3752 = vrot.lane.b32.xlu0 %v3352, 24
        %v3753 = vpop.permute.xlu0 %3752
        %3754 = vrot.lane.b32.xlu0 %v3353, 24
        %v3755 = vpop.permute.xlu0 %3754
        %3756 = vrot.lane.b32.xlu0 %v3354, 24
        %v3757 = vpop.permute.xlu0 %3756
        %3758 = vrot.lane.b32.xlu0 %v3355, 24
        %v3759 = vpop.permute.xlu0 %3758
        %3760 = vrot.lane.b32.xlu0 %v3356, 24
        %v3761 = vpop.permute.xlu0 %3760
        %3762 = vrot.lane.b32.xlu0 %v3357, 24
        %v3763 = vpop.permute.xlu0 %3762
        %3764 = vrot.lane.b32.xlu0 %v3358, 24
        %v3765 = vpop.permute.xlu0 %3764
        %3766 = vrot.lane.b32.xlu0 %v3359, 24
        %v3767 = vpop.permute.xlu0 %3766
        %3768 = vrot.lane.b32.xlu0 %v3360, 24
        %v3769 = vpop.permute.xlu0 %3768
        %3770 = vrot.lane.b32.xlu0 %v3361, 24
        %v3771 = vpop.permute.xlu0 %3770
        %3772 = vrot.lane.b32.xlu0 %v3362, 24
        %v3773 = vpop.permute.xlu0 %3772
        %3774 = vrot.lane.b32.xlu0 %v3363, 24
        %v3775 = vpop.permute.xlu0 %3774
        %3776 = vrot.lane.b32.xlu0 %v3364, 24
        %v3777 = vpop.permute.xlu0 %3776
        %3778 = vrot.lane.b32.xlu0 %v3365, 24
        %v3779 = vpop.permute.xlu0 %3778
        %3780 = vrot.lane.b32.xlu0 %v3366, 24
        %v3781 = vpop.permute.xlu0 %3780
        %3782 = vrot.lane.b32.xlu0 %v3367, 24
        %v3783 = vpop.permute.xlu0 %3782
        %3816 = vrot.lane.b32.xlu0 %v3022, 32
        %v3817 = vpop.permute.xlu0 %3816
        %3818 = vrot.lane.b32.xlu0 %v3023, 32
        %v3819 = vpop.permute.xlu0 %3818
        %3820 = vrot.lane.b32.xlu0 %v3024, 32
        %v3821 = vpop.permute.xlu0 %3820
        %3822 = vrot.lane.b32.xlu0 %v3025, 32
        %v3823 = vpop.permute.xlu0 %3822
        %3824 = vrot.lane.b32.xlu0 %v3026, 32
        %v3825 = vpop.permute.xlu0 %3824
        %3826 = vrot.lane.b32.xlu0 %v3027, 32
        %v3827 = vpop.permute.xlu0 %3826
        %3828 = vrot.lane.b32.xlu0 %v3028, 32
        %v3829 = vpop.permute.xlu0 %3828
        %3830 = vrot.lane.b32.xlu0 %v3029, 32
        %v3831 = vpop.permute.xlu0 %3830
        %3832 = vrot.lane.b32.xlu0 %v3030, 32
        %v3833 = vpop.permute.xlu0 %3832
        %3834 = vrot.lane.b32.xlu0 %v3031, 32
        %v3835 = vpop.permute.xlu0 %3834
        %3836 = vrot.lane.b32.xlu0 %v3032, 32
        %v3837 = vpop.permute.xlu0 %3836
        %3838 = vrot.lane.b32.xlu0 %v3033, 32
        %v3839 = vpop.permute.xlu0 %3838
        %3840 = vrot.lane.b32.xlu0 %v3034, 32
        %v3841 = vpop.permute.xlu0 %3840
        %3842 = vrot.lane.b32.xlu0 %v3035, 32
        %v3843 = vpop.permute.xlu0 %3842
        %3844 = vrot.lane.b32.xlu0 %v3036, 32
        %v3845 = vpop.permute.xlu0 %3844
        %3846 = vrot.lane.b32.xlu0 %v3037, 32
        %v3847 = vpop.permute.xlu0 %3846
        %3848 = vrot.lane.b32.xlu0 %v3038, 32
        %v3849 = vpop.permute.xlu0 %3848
        %3850 = vrot.lane.b32.xlu0 %v3039, 32
        %v3851 = vpop.permute.xlu0 %3850
        %3852 = vrot.lane.b32.xlu0 %v3040, 32
        %v3853 = vpop.permute.xlu0 %3852
        %3854 = vrot.lane.b32.xlu0 %v3041, 32
        %v3855 = vpop.permute.xlu0 %3854
        %3856 = vrot.lane.b32.xlu0 %v3042, 32
        %v3857 = vpop.permute.xlu0 %3856
        %3858 = vrot.lane.b32.xlu0 %v3043, 32
        %v3859 = vpop.permute.xlu0 %3858
        %3860 = vrot.lane.b32.xlu0 %v3044, 32
        %v3861 = vpop.permute.xlu0 %3860
        %3862 = vrot.lane.b32.xlu0 %v3045, 32
        %v3863 = vpop.permute.xlu0 %3862
        %3864 = vrot.lane.b32.xlu0 %v3046, 32
        %v3865 = vpop.permute.xlu0 %3864
        %3866 = vrot.lane.b32.xlu0 %v3047, 32
        %v3867 = vpop.permute.xlu0 %3866
        %3868 = vrot.lane.b32.xlu0 %v3048, 32
        %v3869 = vpop.permute.xlu0 %3868
        %3870 = vrot.lane.b32.xlu0 %v3049, 32
        %v3871 = vpop.permute.xlu0 %3870
        %3872 = vrot.lane.b32.xlu0 %v3050, 32
        %v3873 = vpop.permute.xlu0 %3872
        %3874 = vrot.lane.b32.xlu0 %v3051, 32
        %v3875 = vpop.permute.xlu0 %3874
        %3876 = vrot.lane.b32.xlu0 %v3052, 32
        %v3877 = vpop.permute.xlu0 %3876
        %3878 = vrot.lane.b32.xlu0 %v3053, 32
        %v3879 = vpop.permute.xlu0 %3878
        %3944 = vrot.lane.b32.xlu0 %v3373, 40
        %v3945 = vpop.permute.xlu0 %3944
        %3946 = vrot.lane.b32.xlu0 %v3374, 40
        %v3947 = vpop.permute.xlu0 %3946
        %3948 = vrot.lane.b32.xlu0 %v3375, 40
        %v3949 = vpop.permute.xlu0 %3948
        %3950 = vrot.lane.b32.xlu0 %v3376, 40
        %v3951 = vpop.permute.xlu0 %3950
        %3952 = vrot.lane.b32.xlu0 %v3377, 40
        %v3953 = vpop.permute.xlu0 %3952
        %3954 = vrot.lane.b32.xlu0 %v3378, 40
        %v3955 = vpop.permute.xlu0 %3954
        %3956 = vrot.lane.b32.xlu0 %v3379, 40
        %v3957 = vpop.permute.xlu0 %3956
        %3958 = vrot.lane.b32.xlu0 %v3380, 40
        %v3959 = vpop.permute.xlu0 %3958
        %3960 = vrot.lane.b32.xlu0 %v3381, 40
        %v3961 = vpop.permute.xlu0 %3960
        %3962 = vrot.lane.b32.xlu0 %v3382, 40
        %v3963 = vpop.permute.xlu0 %3962
        %3964 = vrot.lane.b32.xlu0 %v3383, 40
        %v3965 = vpop.permute.xlu0 %3964
        %3966 = vrot.lane.b32.xlu0 %v3384, 40
        %v3967 = vpop.permute.xlu0 %3966
        %3968 = vrot.lane.b32.xlu0 %v3385, 40
        %v3969 = vpop.permute.xlu0 %3968
        %3970 = vrot.lane.b32.xlu0 %v3386, 40
        %v3971 = vpop.permute.xlu0 %3970
        %3972 = vrot.lane.b32.xlu0 %v3387, 40
        %v3973 = vpop.permute.xlu0 %3972
        %3974 = vrot.lane.b32.xlu0 %v3388, 40
        %v3975 = vpop.permute.xlu0 %3974
        %3976 = vrot.lane.b32.xlu0 %v3389, 40
        %v3977 = vpop.permute.xlu0 %3976
        %3978 = vrot.lane.b32.xlu0 %v3390, 40
        %v3979 = vpop.permute.xlu0 %3978
        %3980 = vrot.lane.b32.xlu0 %v3391, 40
        %v3981 = vpop.permute.xlu0 %3980
        %3982 = vrot.lane.b32.xlu0 %v3392, 40
        %v3983 = vpop.permute.xlu0 %3982
        %3984 = vrot.lane.b32.xlu0 %v3393, 40
        %v3985 = vpop.permute.xlu0 %3984
        %3986 = vrot.lane.b32.xlu0 %v3394, 40
        %v3987 = vpop.permute.xlu0 %3986
        %3988 = vrot.lane.b32.xlu0 %v3395, 40
        %v3989 = vpop.permute.xlu0 %3988
        %3990 = vrot.lane.b32.xlu0 %v3396, 40
        %v3991 = vpop.permute.xlu0 %3990
        %3992 = vrot.lane.b32.xlu0 %v3397, 40
        %v3993 = vpop.permute.xlu0 %3992
        %3994 = vrot.lane.b32.xlu0 %v3398, 40
        %v3995 = vpop.permute.xlu0 %3994
        %3996 = vrot.lane.b32.xlu0 %v3399, 40
        %v3997 = vpop.permute.xlu0 %3996
        %3998 = vrot.lane.b32.xlu0 %v3400, 40
        %v3999 = vpop.permute.xlu0 %3998
        %4000 = vrot.lane.b32.xlu0 %v3401, 40
        %v4001 = vpop.permute.xlu0 %4000
        %4002 = vrot.lane.b32.xlu0 %v3402, 40
        %v4003 = vpop.permute.xlu0 %4002
        %4004 = vrot.lane.b32.xlu0 %v3403, 40
        %v4005 = vpop.permute.xlu0 %4004
        %4006 = vrot.lane.b32.xlu0 %v3404, 40
        %v4007 = vpop.permute.xlu0 %4006
        %4071 = vrot.lane.b32.xlu0 %v3407, 48
        %v4072 = vpop.permute.xlu0 %4071
        %4073 = vrot.lane.b32.xlu0 %v3408, 48
        %v4074 = vpop.permute.xlu0 %4073
        %4075 = vrot.lane.b32.xlu0 %v3409, 48
        %v4076 = vpop.permute.xlu0 %4075
        %4077 = vrot.lane.b32.xlu0 %v3410, 48
        %v4078 = vpop.permute.xlu0 %4077
        %4079 = vrot.lane.b32.xlu0 %v3411, 48
        %v4080 = vpop.permute.xlu0 %4079
        %4081 = vrot.lane.b32.xlu0 %v3412, 48
        %v4082 = vpop.permute.xlu0 %4081
        %4083 = vrot.lane.b32.xlu0 %v3413, 48
        %v4084 = vpop.permute.xlu0 %4083
        %4085 = vrot.lane.b32.xlu0 %v3414, 48
        %v4086 = vpop.permute.xlu0 %4085
        %4087 = vrot.lane.b32.xlu0 %v3415, 48
        %v4088 = vpop.permute.xlu0 %4087
        %4089 = vrot.lane.b32.xlu0 %v3416, 48
        %v4090 = vpop.permute.xlu0 %4089
        %4091 = vrot.lane.b32.xlu0 %v3417, 48
        %v4092 = vpop.permute.xlu0 %4091
        %4093 = vrot.lane.b32.xlu0 %v3418, 48
        %v4094 = vpop.permute.xlu0 %4093
        %4095 = vrot.lane.b32.xlu0 %v3419, 48
        %v4096 = vpop.permute.xlu0 %4095
        %4097 = vrot.lane.b32.xlu0 %v3420, 48
        %v4098 = vpop.permute.xlu0 %4097
        %4099 = vrot.lane.b32.xlu0 %v3421, 48
        %v4100 = vpop.permute.xlu0 %4099
        %4101 = vrot.lane.b32.xlu0 %v3422, 48
        %v4102 = vpop.permute.xlu0 %4101
        %4103 = vrot.lane.b32.xlu0 %v3423, 48
        %v4104 = vpop.permute.xlu0 %4103
        %4105 = vrot.lane.b32.xlu0 %v3424, 48
        %v4106 = vpop.permute.xlu0 %4105
        %4107 = vrot.lane.b32.xlu0 %v3425, 48
        %v4108 = vpop.permute.xlu0 %4107
        %4109 = vrot.lane.b32.xlu0 %v3426, 48
        %v4110 = vpop.permute.xlu0 %4109
        %4111 = vrot.lane.b32.xlu0 %v3427, 48
        %v4112 = vpop.permute.xlu0 %4111
        %4113 = vrot.lane.b32.xlu0 %v3428, 48
        %v4114 = vpop.permute.xlu0 %4113
        %4115 = vrot.lane.b32.xlu0 %v3429, 48
        %v4116 = vpop.permute.xlu0 %4115
        %4117 = vrot.lane.b32.xlu0 %v3430, 48
        %v4118 = vpop.permute.xlu0 %4117
        %4119 = vrot.lane.b32.xlu0 %v3431, 48
        %v4120 = vpop.permute.xlu0 %4119
        %4121 = vrot.lane.b32.xlu0 %v3432, 48
        %v4122 = vpop.permute.xlu0 %4121
        %4123 = vrot.lane.b32.xlu0 %v3433, 48
        %v4124 = vpop.permute.xlu0 %4123
        %4125 = vrot.lane.b32.xlu0 %v3434, 48
        %v4126 = vpop.permute.xlu0 %4125
        %4127 = vrot.lane.b32.xlu0 %v3435, 48
        %v4128 = vpop.permute.xlu0 %4127
        %4129 = vrot.lane.b32.xlu0 %v3436, 48
        %v4130 = vpop.permute.xlu0 %4129
        %4131 = vrot.lane.b32.xlu0 %v3437, 48
        %v4132 = vpop.permute.xlu0 %4131
        %4133 = vrot.lane.b32.xlu0 0.0, 48
        %v4134 = vpop.permute.xlu0 %4133
        %4167 = vrot.lane.b32.xlu0 %v3024, 56
        %v4168 = vpop.permute.xlu0 %4167
        %4169 = vrot.lane.b32.xlu0 %v3025, 56
        %v4170 = vpop.permute.xlu0 %4169
        %4171 = vrot.lane.b32.xlu0 %v3026, 56
        %v4172 = vpop.permute.xlu0 %4171
        %4173 = vrot.lane.b32.xlu0 %v3027, 56
        %v4174 = vpop.permute.xlu0 %4173
        %4175 = vrot.lane.b32.xlu0 %v3028, 56
        %v4176 = vpop.permute.xlu0 %4175
        %4177 = vrot.lane.b32.xlu0 %v3029, 56
        %v4178 = vpop.permute.xlu0 %4177
        %4179 = vrot.lane.b32.xlu0 %v3030, 56
        %v4180 = vpop.permute.xlu0 %4179
        %4181 = vrot.lane.b32.xlu0 %v3031, 56
        %v4182 = vpop.permute.xlu0 %4181
        %4183 = vrot.lane.b32.xlu0 %v3032, 56
        %v4184 = vpop.permute.xlu0 %4183
        %4185 = vrot.lane.b32.xlu0 %v3033, 56
        %v4186 = vpop.permute.xlu0 %4185
        %4187 = vrot.lane.b32.xlu0 %v3034, 56
        %v4188 = vpop.permute.xlu0 %4187
        %4189 = vrot.lane.b32.xlu0 %v3035, 56
        %v4190 = vpop.permute.xlu0 %4189
        %4191 = vrot.lane.b32.xlu0 %v3036, 56
        %v4192 = vpop.permute.xlu0 %4191
        %4193 = vrot.lane.b32.xlu0 %v3037, 56
        %v4194 = vpop.permute.xlu0 %4193
        %4195 = vrot.lane.b32.xlu0 %v3038, 56
        %v4196 = vpop.permute.xlu0 %4195
        %4197 = vrot.lane.b32.xlu0 %v3039, 56
        %v4198 = vpop.permute.xlu0 %4197
        %4199 = vrot.lane.b32.xlu0 %v3040, 56
        %v4200 = vpop.permute.xlu0 %4199
        %4201 = vrot.lane.b32.xlu0 %v3041, 56
        %v4202 = vpop.permute.xlu0 %4201
        %4203 = vrot.lane.b32.xlu0 %v3042, 56
        %v4204 = vpop.permute.xlu0 %4203
        %4205 = vrot.lane.b32.xlu0 %v3043, 56
        %v4206 = vpop.permute.xlu0 %4205
        %4207 = vrot.lane.b32.xlu0 %v3044, 56
        %v4208 = vpop.permute.xlu0 %4207
        %4209 = vrot.lane.b32.xlu0 %v3045, 56
        %v4210 = vpop.permute.xlu0 %4209
        %4211 = vrot.lane.b32.xlu0 %v3046, 56
        %v4212 = vpop.permute.xlu0 %4211
        %4213 = vrot.lane.b32.xlu0 %v3047, 56
        %v4214 = vpop.permute.xlu0 %4213
        %4215 = vrot.lane.b32.xlu0 %v3048, 56
        %v4216 = vpop.permute.xlu0 %4215
        %4217 = vrot.lane.b32.xlu0 %v3049, 56
        %v4218 = vpop.permute.xlu0 %4217
        %4219 = vrot.lane.b32.xlu0 %v3050, 56
        %v4220 = vpop.permute.xlu0 %4219
        %4221 = vrot.lane.b32.xlu0 %v3051, 56
        %v4222 = vpop.permute.xlu0 %4221
        %4223 = vrot.lane.b32.xlu0 %v3052, 56
        %v4224 = vpop.permute.xlu0 %4223
        %4225 = vrot.lane.b32.xlu0 %v3053, 56
        %v4226 = vpop.permute.xlu0 %4225
        %4227 = vrot.lane.b32.xlu0 0.0, 56
        %v4228 = vpop.permute.xlu0 %4227
        %4290 = vrot.lane.b32.xlu0 %v3438, 64
        %v4291 = vpop.permute.xlu0 %4290
        %4292 = vrot.lane.b32.xlu0 %v3439, 64
        %v4293 = vpop.permute.xlu0 %4292
        %4294 = vrot.lane.b32.xlu0 %v3440, 64
        %v4295 = vpop.permute.xlu0 %4294
        %4296 = vrot.lane.b32.xlu0 %v3441, 64
        %v4297 = vpop.permute.xlu0 %4296
        %4298 = vrot.lane.b32.xlu0 %v3442, 64
        %v4299 = vpop.permute.xlu0 %4298
        %4300 = vrot.lane.b32.xlu0 %v3443, 64
        %v4301 = vpop.permute.xlu0 %4300
        %4302 = vrot.lane.b32.xlu0 %v3444, 64
        %v4303 = vpop.permute.xlu0 %4302
        %4304 = vrot.lane.b32.xlu0 %v3445, 64
        %v4305 = vpop.permute.xlu0 %4304
        %4306 = vrot.lane.b32.xlu0 %v3446, 64
        %v4307 = vpop.permute.xlu0 %4306
        %4308 = vrot.lane.b32.xlu0 %v3447, 64
        %v4309 = vpop.permute.xlu0 %4308
        %4310 = vrot.lane.b32.xlu0 %v3448, 64
        %v4311 = vpop.permute.xlu0 %4310
        %4312 = vrot.lane.b32.xlu0 %v3449, 64
        %v4313 = vpop.permute.xlu0 %4312
        %4314 = vrot.lane.b32.xlu0 %v3450, 64
        %v4315 = vpop.permute.xlu0 %4314
        %4316 = vrot.lane.b32.xlu0 %v3451, 64
        %v4317 = vpop.permute.xlu0 %4316
        %4318 = vrot.lane.b32.xlu0 %v3452, 64
        %v4319 = vpop.permute.xlu0 %4318
        %4320 = vrot.lane.b32.xlu0 %v3453, 64
        %v4321 = vpop.permute.xlu0 %4320
        %4322 = vrot.lane.b32.xlu0 %v3454, 64
        %v4323 = vpop.permute.xlu0 %4322
        %4324 = vrot.lane.b32.xlu0 %v3455, 64
        %v4325 = vpop.permute.xlu0 %4324
        %4326 = vrot.lane.b32.xlu0 %v3456, 64
        %v4327 = vpop.permute.xlu0 %4326
        %4328 = vrot.lane.b32.xlu0 %v3457, 64
        %v4329 = vpop.permute.xlu0 %4328
        %4330 = vrot.lane.b32.xlu0 %v3458, 64
        %v4331 = vpop.permute.xlu0 %4330
        %4332 = vrot.lane.b32.xlu0 %v3459, 64
        %v4333 = vpop.permute.xlu0 %4332
        %4334 = vrot.lane.b32.xlu0 %v3460, 64
        %v4335 = vpop.permute.xlu0 %4334
        %4336 = vrot.lane.b32.xlu0 %v3461, 64
        %v4337 = vpop.permute.xlu0 %4336
        %4338 = vrot.lane.b32.xlu0 %v3462, 64
        %v4339 = vpop.permute.xlu0 %4338
        %4340 = vrot.lane.b32.xlu0 %v3463, 64
        %v4341 = vpop.permute.xlu0 %4340
        %4342 = vrot.lane.b32.xlu0 %v3464, 64
        %v4343 = vpop.permute.xlu0 %4342
        %4344 = vrot.lane.b32.xlu0 %v3465, 64
        %v4345 = vpop.permute.xlu0 %4344
        %4346 = vrot.lane.b32.xlu0 %v3466, 64
        %v4347 = vpop.permute.xlu0 %4346
        %4348 = vrot.lane.b32.xlu0 %v3467, 64
        %v4349 = vpop.permute.xlu0 %4348
        %4350 = vrot.lane.b32.xlu0 0.0, 64
        %v4351 = vpop.permute.xlu0 %4350
        %vm4383 = vcmask 64512
        %v4384 = vsel %vm4383, 0.0, %v3469
        %v4385 = vsel %vm4383, %v3174, %v3471
        %v4386 = vsel %vm4383, %v3175, %v3473
        %v4387 = vsel %vm4383, %v3176, %v3475
        %v4388 = vsel %vm4383, %v3177, %v3477
        %v4389 = vsel %vm4383, %v3178, %v3479
        %v4390 = vsel %vm4383, %v3179, %v3481
        %v4391 = vsel %vm4383, %v3180, %v3483
        %v4392 = vsel %vm4383, %v3181, %v3485
        %v4393 = vsel %vm4383, %v3182, %v3487
        %v4394 = vsel %vm4383, %v3183, %v3489
        %v4395 = vsel %vm4383, %v3184, %v3491
        %v4396 = vsel %vm4383, %v3185, %v3493
        %v4397 = vsel %vm4383, %v3186, %v3495
        %v4398 = vsel %vm4383, %v3187, %v3497
        %v4399 = vsel %vm4383, %v3188, %v3499
        %v4400 = vsel %vm4383, %v3189, %v3501
        %v4401 = vsel %vm4383, %v3190, %v3503
        %v4402 = vsel %vm4383, %v3191, %v3505
        %v4403 = vsel %vm4383, %v3192, %v3507
        %v4404 = vsel %vm4383, %v3193, %v3509
        %v4405 = vsel %vm4383, %v3194, %v3511
        %v4406 = vsel %vm4383, %v3195, %v3513
        %v4407 = vsel %vm4383, %v3196, %v3515
        %v4408 = vsel %vm4383, %v3197, %v3517
        %v4409 = vsel %vm4383, %v3198, %v3519
        %v4410 = vsel %vm4383, %v3199, %v3521
        %v4411 = vsel %vm4383, %v3200, %v3523
        %v4412 = vsel %vm4383, %v3201, %v3525
        %v4413 = vsel %vm4383, %v3202, %v3527
        %v4414 = vsel %vm4383, %v3203, %v3529
        %vm4415 = vcmask 130048
        %v4416 = vsel %vm4415, %v4384, %v3593
        %v4417 = vsel %vm4415, %v4384, %v3595
        %v4418 = vsel %vm4415, %v4385, %v3597
        %v4419 = vsel %vm4415, %v4386, %v3599
        %v4420 = vsel %vm4415, %v4387, %v3601
        %v4421 = vsel %vm4415, %v4388, %v3603
        %v4422 = vsel %vm4415, %v4389, %v3605
        %v4423 = vsel %vm4415, %v4390, %v3607
        %v4424 = vsel %vm4415, %v4391, %v3609
        %v4425 = vsel %vm4415, %v4392, %v3611
        %v4426 = vsel %vm4415, %v4393, %v3613
        %v4427 = vsel %vm4415, %v4394, %v3615
        %v4428 = vsel %vm4415, %v4395, %v3617
        %v4429 = vsel %vm4415, %v4396, %v3619
        %v4430 = vsel %vm4415, %v4397, %v3621
        %v4431 = vsel %vm4415, %v4398, %v3623
        %v4432 = vsel %vm4415, %v4399, %v3625
        %v4433 = vsel %vm4415, %v4400, %v3627
        %v4434 = vsel %vm4415, %v4401, %v3629
        %v4435 = vsel %vm4415, %v4402, %v3631
        %v4436 = vsel %vm4415, %v4403, %v3633
        %v4437 = vsel %vm4415, %v4404, %v3635
        %v4438 = vsel %vm4415, %v4405, %v3637
        %v4439 = vsel %vm4415, %v4406, %v3639
        %v4440 = vsel %vm4415, %v4407, %v3641
        %v4441 = vsel %vm4415, %v4408, %v3643
        %v4442 = vsel %vm4415, %v4409, %v3645
        %v4443 = vsel %vm4415, %v4410, %v3647
        %v4444 = vsel %vm4415, %v4411, %v3649
        %v4445 = vsel %vm4415, %v4412, %v3651
        %v4446 = vsel %vm4415, %v4413, %v3653
        %v4447 = vsel %vm4415, %v4414, %v3655
        %v4448 = vsel %vm2652, %v4416, %v3721
        %v4449 = vsel %vm2652, %v4417, %v3723
        %v4450 = vsel %vm2652, %v4418, %v3725
        %v4451 = vsel %vm2652, %v4419, %v3727
        %v4452 = vsel %vm2652, %v4420, %v3729
        %v4453 = vsel %vm2652, %v4421, %v3731
        %v4454 = vsel %vm2652, %v4422, %v3733
        %v4455 = vsel %vm2652, %v4423, %v3735
        %v4456 = vsel %vm2652, %v4424, %v3737
        %v4457 = vsel %vm2652, %v4425, %v3739
        %v4458 = vsel %vm2652, %v4426, %v3741
        %v4459 = vsel %vm2652, %v4427, %v3743
        %v4460 = vsel %vm2652, %v4428, %v3745
        %v4461 = vsel %vm2652, %v4429, %v3747
        %v4462 = vsel %vm2652, %v4430, %v3749
        %v4463 = vsel %vm2652, %v4431, %v3751
        %v4464 = vsel %vm2652, %v4432, %v3753
        %v4465 = vsel %vm2652, %v4433, %v3755
        %v4466 = vsel %vm2652, %v4434, %v3757
        %v4467 = vsel %vm2652, %v4435, %v3759
        %v4468 = vsel %vm2652, %v4436, %v3761
        %v4469 = vsel %vm2652, %v4437, %v3763
        %v4470 = vsel %vm2652, %v4438, %v3765
        %v4471 = vsel %vm2652, %v4439, %v3767
        %v4472 = vsel %vm2652, %v4440, %v3769
        %v4473 = vsel %vm2652, %v4441, %v3771
        %v4474 = vsel %vm2652, %v4442, %v3773
        %v4475 = vsel %vm2652, %v4443, %v3775
        %v4476 = vsel %vm2652, %v4444, %v3777
        %v4477 = vsel %vm2652, %v4445, %v3779
        %v4478 = vsel %vm2652, %v4446, %v3781
        %v4479 = vsel %vm2652, %v4447, %v3783
        %vm4480 = vcmask 261120
        %v4481 = vsel %vm4480, %v4448, %v3817
        %v4482 = vsel %vm4480, %v4449, %v3819
        %v4483 = vsel %vm4480, %v4450, %v3821
        %v4484 = vsel %vm4480, %v4451, %v3823
        %v4485 = vsel %vm4480, %v4452, %v3825
        %v4486 = vsel %vm4480, %v4453, %v3827
        %v4487 = vsel %vm4480, %v4454, %v3829
        %v4488 = vsel %vm4480, %v4455, %v3831
        %v4489 = vsel %vm4480, %v4456, %v3833
        %v4490 = vsel %vm4480, %v4457, %v3835
        %v4491 = vsel %vm4480, %v4458, %v3837
        %v4492 = vsel %vm4480, %v4459, %v3839
        %v4493 = vsel %vm4480, %v4460, %v3841
        %v4494 = vsel %vm4480, %v4461, %v3843
        %v4495 = vsel %vm4480, %v4462, %v3845
        %v4496 = vsel %vm4480, %v4463, %v3847
        %v4497 = vsel %vm4480, %v4464, %v3849
        %v4498 = vsel %vm4480, %v4465, %v3851
        %v4499 = vsel %vm4480, %v4466, %v3853
        %v4500 = vsel %vm4480, %v4467, %v3855
        %v4501 = vsel %vm4480, %v4468, %v3857
        %v4502 = vsel %vm4480, %v4469, %v3859
        %v4503 = vsel %vm4480, %v4470, %v3861
        %v4504 = vsel %vm4480, %v4471, %v3863
        %v4505 = vsel %vm4480, %v4472, %v3865
        %v4506 = vsel %vm4480, %v4473, %v3867
        %v4507 = vsel %vm4480, %v4474, %v3869
        %v4508 = vsel %vm4480, %v4475, %v3871
        %v4509 = vsel %vm4480, %v4476, %v3873
        %v4510 = vsel %vm4480, %v4477, %v3875
        %v4511 = vsel %vm4480, %v4478, %v3877
        %v4512 = vsel %vm4480, %v4479, %v3879
        %vm4513 = vcmask 326656
        %v4514 = vsel %vm4513, %v4481, %v3945
        %v4515 = vsel %vm4513, %v4482, %v3947
        %v4516 = vsel %vm4513, %v4483, %v3949
        %v4517 = vsel %vm4513, %v4484, %v3951
        %v4518 = vsel %vm4513, %v4485, %v3953
        %v4519 = vsel %vm4513, %v4486, %v3955
        %v4520 = vsel %vm4513, %v4487, %v3957
        %v4521 = vsel %vm4513, %v4488, %v3959
        %v4522 = vsel %vm4513, %v4489, %v3961
        %v4523 = vsel %vm4513, %v4490, %v3963
        %v4524 = vsel %vm4513, %v4491, %v3965
        %v4525 = vsel %vm4513, %v4492, %v3967
        %v4526 = vsel %vm4513, %v4493, %v3969
        %v4527 = vsel %vm4513, %v4494, %v3971
        %v4528 = vsel %vm4513, %v4495, %v3973
        %v4529 = vsel %vm4513, %v4496, %v3975
        %v4530 = vsel %vm4513, %v4497, %v3977
        %v4531 = vsel %vm4513, %v4498, %v3979
        %v4532 = vsel %vm4513, %v4499, %v3981
        %v4533 = vsel %vm4513, %v4500, %v3983
        %v4534 = vsel %vm4513, %v4501, %v3985
        %v4535 = vsel %vm4513, %v4502, %v3987
        %v4536 = vsel %vm4513, %v4503, %v3989
        %v4537 = vsel %vm4513, %v4504, %v3991
        %v4538 = vsel %vm4513, %v4505, %v3993
        %v4539 = vsel %vm4513, %v4506, %v3995
        %v4540 = vsel %vm4513, %v4507, %v3997
        %v4541 = vsel %vm4513, %v4508, %v3999
        %v4542 = vsel %vm4513, %v4509, %v4001
        %v4543 = vsel %vm4513, %v4510, %v4003
        %v4544 = vsel %vm4513, %v4511, %v4005
        %v4545 = vsel %vm4513, %v4512, %v4007
        %vm4546 = vcmask 392192
        %v4547 = vsel %vm4546, %v4514, %v4072
        %v4548 = vsel %vm4546, %v4515, %v4074
        %v4549 = vsel %vm4546, %v4516, %v4076
        %v4550 = vsel %vm4546, %v4517, %v4078
        %v4551 = vsel %vm4546, %v4518, %v4080
        %v4552 = vsel %vm4546, %v4519, %v4082
        %v4553 = vsel %vm4546, %v4520, %v4084
        %v4554 = vsel %vm4546, %v4521, %v4086
        %v4555 = vsel %vm4546, %v4522, %v4088
        %v4556 = vsel %vm4546, %v4523, %v4090
        %v4557 = vsel %vm4546, %v4524, %v4092
        %v4558 = vsel %vm4546, %v4525, %v4094
        %v4559 = vsel %vm4546, %v4526, %v4096
        %v4560 = vsel %vm4546, %v4527, %v4098
        %v4561 = vsel %vm4546, %v4528, %v4100
        %v4562 = vsel %vm4546, %v4529, %v4102
        %v4563 = vsel %vm4546, %v4530, %v4104
        %v4564 = vsel %vm4546, %v4531, %v4106
        %v4565 = vsel %vm4546, %v4532, %v4108
        %v4566 = vsel %vm4546, %v4533, %v4110
        %v4567 = vsel %vm4546, %v4534, %v4112
        %v4568 = vsel %vm4546, %v4535, %v4114
        %v4569 = vsel %vm4546, %v4536, %v4116
        %v4570 = vsel %vm4546, %v4537, %v4118
        %v4571 = vsel %vm4546, %v4538, %v4120
        %v4572 = vsel %vm4546, %v4539, %v4122
        %v4573 = vsel %vm4546, %v4540, %v4124
        %v4574 = vsel %vm4546, %v4541, %v4126
        %v4575 = vsel %vm4546, %v4542, %v4128
        %v4576 = vsel %vm4546, %v4543, %v4130
        %v4577 = vsel %vm4546, %v4544, %v4132
        %v4578 = vsel %vm4546, %v4545, %v4134
        %vm4579 = vcmask 457728
        %v4580 = vsel %vm4579, %v4547, %v4168
        %v4581 = vsel %vm4579, %v4548, %v4170
        %v4582 = vsel %vm4579, %v4549, %v4172
        %v4583 = vsel %vm4579, %v4550, %v4174
        %v4584 = vsel %vm4579, %v4551, %v4176
        %v4585 = vsel %vm4579, %v4552, %v4178
        %v4586 = vsel %vm4579, %v4553, %v4180
        %v4587 = vsel %vm4579, %v4554, %v4182
        %v4588 = vsel %vm4579, %v4555, %v4184
        %v4589 = vsel %vm4579, %v4556, %v4186
        %v4590 = vsel %vm4579, %v4557, %v4188
        %v4591 = vsel %vm4579, %v4558, %v4190
        %v4592 = vsel %vm4579, %v4559, %v4192
        %v4593 = vsel %vm4579, %v4560, %v4194
        %v4594 = vsel %vm4579, %v4561, %v4196
        %v4595 = vsel %vm4579, %v4562, %v4198
        %v4596 = vsel %vm4579, %v4563, %v4200
        %v4597 = vsel %vm4579, %v4564, %v4202
        %v4598 = vsel %vm4579, %v4565, %v4204
        %v4599 = vsel %vm4579, %v4566, %v4206
        %v4600 = vsel %vm4579, %v4567, %v4208
        %v4601 = vsel %vm4579, %v4568, %v4210
        %v4602 = vsel %vm4579, %v4569, %v4212
        %v4603 = vsel %vm4579, %v4570, %v4214
        %v4604 = vsel %vm4579, %v4571, %v4216
        %v4605 = vsel %vm4579, %v4572, %v4218
        %v4606 = vsel %vm4579, %v4573, %v4220
        %v4607 = vsel %vm4579, %v4574, %v4222
        %v4608 = vsel %vm4579, %v4575, %v4224
        %v4609 = vsel %vm4579, %v4576, %v4226
        %v4610 = vsel %vm4579, %v4577, %v4228
        %v4611 = vsel %vm4579, %v4578, %v4228
        %vm4612 = vcmask 523264
        %v4613 = vsel %vm4612, %v4580, %v4291
        %v4614 = vsel %vm4612, %v4581, %v4293
        %v4615 = vsel %vm4612, %v4582, %v4295
        %v4616 = vsel %vm4612, %v4583, %v4297
        %v4617 = vsel %vm4612, %v4584, %v4299
        %v4618 = vsel %vm4612, %v4585, %v4301
        %v4619 = vsel %vm4612, %v4586, %v4303
        %v4620 = vsel %vm4612, %v4587, %v4305
        %v4621 = vsel %vm4612, %v4588, %v4307
        %v4622 = vsel %vm4612, %v4589, %v4309
        %v4623 = vsel %vm4612, %v4590, %v4311
        %v4624 = vsel %vm4612, %v4591, %v4313
        %v4625 = vsel %vm4612, %v4592, %v4315
        %v4626 = vsel %vm4612, %v4593, %v4317
        %v4627 = vsel %vm4612, %v4594, %v4319
        %v4628 = vsel %vm4612, %v4595, %v4321
        %v4629 = vsel %vm4612, %v4596, %v4323
        %v4630 = vsel %vm4612, %v4597, %v4325
        %v4631 = vsel %vm4612, %v4598, %v4327
        %v4632 = vsel %vm4612, %v4599, %v4329
        %v4633 = vsel %vm4612, %v4600, %v4331
        %v4634 = vsel %vm4612, %v4601, %v4333
        %v4635 = vsel %vm4612, %v4602, %v4335
        %v4636 = vsel %vm4612, %v4603, %v4337
        %v4637 = vsel %vm4612, %v4604, %v4339
        %v4638 = vsel %vm4612, %v4605, %v4341
        %v4639 = vsel %vm4612, %v4606, %v4343
        %v4640 = vsel %vm4612, %v4607, %v4345
        %v4641 = vsel %vm4612, %v4608, %v4347
        %v4642 = vsel %vm4612, %v4609, %v4349
        %v4643 = vsel %vm4612, %v4610, %v4351
        %v4644 = vsel %vm4612, %v4611, %v4351
        %v4645 = vld [vmem:[%s7] sm:$0xff]
        %v4646 = vld [vmem:[%s7 + $0x8] sm:$0xff]
        %v4647 = vld [vmem:[%s7 + $0x10] sm:$0xff]
        %v4648 = vld [vmem:[%s7 + $0x18] sm:$0xff]
        %v4649 = vld [vmem:[%s7 + $0x20] sm:$0xff]
        %v4650 = vld [vmem:[%s7 + $0x28] sm:$0xff]
        %v4651 = vld [vmem:[%s7 + $0x30] sm:$0xff]
        %v4652 = vld [vmem:[%s7 + $0x38] sm:$0xff]
        %v4653 = vld [vmem:[%s7 + $0x40] sm:$0xff]
        %v4654 = vld [vmem:[%s9] sm:$0x1]
        %v4656 = vlaneseq
        %v4657 = vshrl.u32 %v4656, 7
        %v4658 = vsub.s32 0, %v4657
        %v4659 = vrot.slane %v4654, %v4658
        %vm4661 = vcmask 588800
        %v4663 = vsel %vm4661, %v4613, 0
        %v4666 = vsel %vm4661, %v4614, 0
        %v4669 = vsel %vm4661, %v4615, 0
        %v4672 = vsel %vm4661, %v4616, 0
        %v4675 = vsel %vm4661, %v4617, 0
        %v4678 = vsel %vm4661, %v4618, 0
        %v4681 = vsel %vm4661, %v4619, 0
        %v4684 = vsel %vm4661, %v4620, 0
        %v4687 = vsel %vm4661, %v4621, 0
        %v4690 = vsel %vm4661, %v4622, 0
        %v4693 = vsel %vm4661, %v4623, 0
        %v4696 = vsel %vm4661, %v4624, 0
        %v4699 = vsel %vm4661, %v4625, 0
        %v4702 = vsel %vm4661, %v4626, 0
        %v4705 = vsel %vm4661, %v4627, 0
        %v4708 = vsel %vm4661, %v4628, 0
        %v4711 = vsel %vm4661, %v4629, 0
        %v4714 = vsel %vm4661, %v4630, 0
        %v4717 = vsel %vm4661, %v4631, 0
        %v4720 = vsel %vm4661, %v4632, 0
        %v4723 = vsel %vm4661, %v4633, 0
        %v4726 = vsel %vm4661, %v4634, 0
        %v4729 = vsel %vm4661, %v4635, 0
        %v4732 = vsel %vm4661, %v4636, 0
        %v4735 = vsel %vm4661, %v4637, 0
        %v4738 = vsel %vm4661, %v4638, 0
        %v4741 = vsel %vm4661, %v4639, 0
        %v4744 = vsel %vm4661, %v4640, 0
        %v4747 = vsel %vm4661, %v4641, 0
        %v4750 = vsel %vm4661, %v4642, 0
        %v4753 = vsel %vm4661, %v4643, 0
        %v4756 = vsel %vm4661, %v4644, 0
        %4758 = vmatprep.subr.mxu0 0.0
        %4759 = vmatpush1.msra.mxu0 %v4645
        %4760 = vmatprep.subr.mxu0 0.0
        %4761 = vmatpush1.msra.mxu0 %v4646
        %4762 = vmatprep.subr.mxu0 0.0
        %4763 = vmatpush1.msra.mxu0 %v4647
        %4764 = vmatprep.subr.mxu0 0.0
        %4765 = vmatpush1.msra.mxu0 %v4648
        %4766 = vmatprep.subr.mxu0 0.0
        %4767 = vmatpush1.msra.mxu0 %v4649
        %4768 = vmatprep.subr.mxu0 0.0
        %4769 = vmatpush1.msra.mxu0 %v4650
        %4770 = vmatprep.subr.mxu0 0.0
        %4771 = vmatpush1.msra.mxu0 %v4651
        %4772 = vmatprep.subr.mxu0 0.0
        %4773 = vmatpush1.msra.mxu0 %v4652
        %4774 = vmatprep.subr.mxu0 0.0
        %4775 = vmatpush1.msra.mxu0 %v4653
        %4776 = vmatprep.subr.mxu0 0.0
        %4777 = vmatpush1.msra.mxu0 0.0
        %4778 = vmatprep.subr.mxu0 0.0
        %4779 = vmatpush1.msra.mxu0 0.0
        %4780 = vmatprep.subr.mxu0 0.0
        %4781 = vmatpush1.msra.mxu0 0.0
        %4782 = vmatprep.subr.mxu0 0.0
        %4783 = vmatpush1.msra.mxu0 0.0
        %4784 = vmatprep.subr.mxu0 0.0
        %4785 = vmatpush1.msra.mxu0 0.0
        %4786 = vmatprep.subr.mxu0 0.0
        %4787 = vmatpush1.msra.mxu0 0.0
        %4788 = vmatprep.subr.mxu0 0.0
        %4789 = vmatpush1.msra.mxu0 0.0
        %4790 = vmatprep.subr.mxu0 0.0
        %4791 = vmatpush1.msra.mxu0 0.0
        %4792 = vmatprep.subr.mxu0 0.0
        %4793 = vmatpush1.msra.mxu0 0.0
        %4794 = vmatprep.subr.mxu0 0.0
        %4795 = vmatpush1.msra.mxu0 0.0
        %4796 = vmatprep.subr.mxu0 0.0
        %4797 = vmatpush1.msra.mxu0 0.0
        %4798 = vmatprep.subr.mxu0 0.0
        %4799 = vmatpush1.msra.mxu0 0.0
        %4800 = vmatprep.subr.mxu0 0.0
        %4801 = vmatpush1.msra.mxu0 0.0
        %4802 = vmatprep.subr.mxu0 0.0
        %4803 = vmatpush1.msra.mxu0 0.0
        %4804 = vmatprep.subr.mxu0 0.0
        %4805 = vmatpush1.msra.mxu0 0.0
        %4806 = vmatprep.subr.mxu0 0.0
        %4807 = vmatpush1.msra.mxu0 0.0
        %4808 = vmatprep.subr.mxu0 0.0
        %4809 = vmatpush1.msra.mxu0 0.0
        %4810 = vmatprep.subr.mxu0 0.0
        %4811 = vmatpush1.msra.mxu0 0.0
        %4812 = vmatprep.subr.mxu0 0.0
        %4813 = vmatpush1.msra.mxu0 0.0
        %4814 = vmatprep.subr.mxu0 0.0
        %4815 = vmatpush1.msra.mxu0 0.0
        %4816 = vmatprep.subr.mxu0 0.0
        %4817 = vmatpush1.msra.mxu0 0.0
        %4818 = vmatprep.subr.mxu0 0.0
        %4819 = vmatpush1.msra.mxu0 0.0
        %4820 = vmatprep.subr.mxu0 0.0
        %4821 = vmatpush1.msra.mxu0 0.0
        %4822 = vmatprep.mubr.f32.mxu0 0.0
        %4823 = vmatmul.mubr.f32.gmra.mrb[0].mxu0 %v4663
        %v4824 = vpop.f32.mrb[0].mxu0
        %v4825 = vadd.f32 %v4659, %v4824
        %v4826 = vpop.f32.mrb[0].mxu0
        %4827 = vmatprep.mubr.f32.mxu0 0.0
        %4828 = vmatmul.mubr.f32.gmra.mrb[0].mxu0 %v4666
        %v4829 = vpop.f32.mrb[0].mxu0
        %v4830 = vadd.f32 %v4659, %v4829
        %v4831 = vpop.f32.mrb[0].mxu0
        %4832 = vmatprep.mubr.f32.mxu0 0.0
        %4833 = vmatmul.mubr.f32.gmra.mrb[0].mxu0 %v4669
        %v4834 = vpop.f32.mrb[0].mxu0
        %v4835 = vadd.f32 %v4659, %v4834
        %v4836 = vpop.f32.mrb[0].mxu0
        %4837 = vmatprep.mubr.f32.mxu0 0.0
        %4838 = vmatmul.mubr.f32.gmra.mrb[0].mxu0 %v4672
        %v4839 = vpop.f32.mrb[0].mxu0
        %v4840 = vadd.f32 %v4659, %v4839
        %v4841 = vpop.f32.mrb[0].mxu0
        %4842 = vmatprep.mubr.f32.mxu0 0.0
        %4843 = vmatmul.mubr.f32.gmra.mrb[0].mxu0 %v4675
        %v4844 = vpop.f32.mrb[0].mxu0
        %v4845 = vadd.f32 %v4659, %v4844
        %v4846 = vpop.f32.mrb[0].mxu0
        %4847 = vmatprep.mubr.f32.mxu0 0.0
        %4848 = vmatmul.mubr.f32.gmra.mrb[0].mxu0 %v4678
        %v4849 = vpop.f32.mrb[0].mxu0
        %v4850 = vadd.f32 %v4659, %v4849
        %v4851 = vpop.f32.mrb[0].mxu0
        %4852 = vmatprep.mubr.f32.mxu0 0.0
        %4853 = vmatmul.mubr.f32.gmra.mrb[0].mxu0 %v4681
        %v4854 = vpop.f32.mrb[0].mxu0
        %v4855 = vadd.f32 %v4659, %v4854
        %v4856 = vpop.f32.mrb[0].mxu0
        %4857 = vmatprep.mubr.f32.mxu0 0.0
        %4858 = vmatmul.mubr.f32.gmra.mrb[0].mxu0 %v4684
        %v4859 = vpop.f32.mrb[0].mxu0
        %v4860 = vadd.f32 %v4659, %v4859
        %v4861 = vpop.f32.mrb[0].mxu0
        %4862 = vmatprep.mubr.f32.mxu0 0.0
        %4863 = vmatmul.mubr.f32.gmra.mrb[0].mxu0 %v4687
        %v4864 = vpop.f32.mrb[0].mxu0
        %v4865 = vadd.f32 %v4659, %v4864
        %v4866 = vpop.f32.mrb[0].mxu0
        %4867 = vmatprep.mubr.f32.mxu0 0.0
        %4868 = vmatmul.mubr.f32.gmra.mrb[0].mxu0 %v4690
        %v4869 = vpop.f32.mrb[0].mxu0
        %v4870 = vadd.f32 %v4659, %v4869
        %v4871 = vpop.f32.mrb[0].mxu0
        %4872 = vmatprep.mubr.f32.mxu0 0.0
        %4873 = vmatmul.mubr.f32.gmra.mrb[0].mxu0 %v4693
        %v4874 = vpop.f32.mrb[0].mxu0
        %v4875 = vadd.f32 %v4659, %v4874
        %v4876 = vpop.f32.mrb[0].mxu0
        %4877 = vmatprep.mubr.f32.mxu0 0.0
        %4878 = vmatmul.mubr.f32.gmra.mrb[0].mxu0 %v4696
        %v4879 = vpop.f32.mrb[0].mxu0
        %v4880 = vadd.f32 %v4659, %v4879
        %v4881 = vpop.f32.mrb[0].mxu0
        %4882 = vmatprep.mubr.f32.mxu0 0.0
        %4883 = vmatmul.mubr.f32.gmra.mrb[0].mxu0 %v4699
        %v4884 = vpop.f32.mrb[0].mxu0
        %v4885 = vadd.f32 %v4659, %v4884
        %v4886 = vpop.f32.mrb[0].mxu0
        %4887 = vmatprep.mubr.f32.mxu0 0.0
        %4888 = vmatmul.mubr.f32.gmra.mrb[0].mxu0 %v4702
        %v4889 = vpop.f32.mrb[0].mxu0
        %v4890 = vadd.f32 %v4659, %v4889
        %v4891 = vpop.f32.mrb[0].mxu0
        %4892 = vmatprep.mubr.f32.mxu0 0.0
        %4893 = vmatmul.mubr.f32.gmra.mrb[0].mxu0 %v4705
        %v4894 = vpop.f32.mrb[0].mxu0
        %v4895 = vadd.f32 %v4659, %v4894
        %v4896 = vpop.f32.mrb[0].mxu0
        %4897 = vmatprep.mubr.f32.mxu0 0.0
        %4898 = vmatmul.mubr.f32.gmra.mrb[0].mxu0 %v4708
        %v4899 = vpop.f32.mrb[0].mxu0
        %v4900 = vadd.f32 %v4659, %v4899
        %v4901 = vpop.f32.mrb[0].mxu0
        %4902 = vmatprep.mubr.f32.mxu0 0.0
        %4903 = vmatmul.mubr.f32.gmra.mrb[0].mxu0 %v4711
        %v4904 = vpop.f32.mrb[0].mxu0
        %v4905 = vadd.f32 %v4659, %v4904
        %v4906 = vpop.f32.mrb[0].mxu0
        %4907 = vmatprep.mubr.f32.mxu0 0.0
        %4908 = vmatmul.mubr.f32.gmra.mrb[0].mxu0 %v4714
        %v4909 = vpop.f32.mrb[0].mxu0
        %v4910 = vadd.f32 %v4659, %v4909
        %v4911 = vpop.f32.mrb[0].mxu0
        %4912 = vmatprep.mubr.f32.mxu0 0.0
        %4913 = vmatmul.mubr.f32.gmra.mrb[0].mxu0 %v4717
        %v4914 = vpop.f32.mrb[0].mxu0
        %v4915 = vadd.f32 %v4659, %v4914
        %v4916 = vpop.f32.mrb[0].mxu0
        %4917 = vmatprep.mubr.f32.mxu0 0.0
        %4918 = vmatmul.mubr.f32.gmra.mrb[0].mxu0 %v4720
        %v4919 = vpop.f32.mrb[0].mxu0
        %v4920 = vadd.f32 %v4659, %v4919
        %v4921 = vpop.f32.mrb[0].mxu0
        %4922 = vmatprep.mubr.f32.mxu0 0.0
        %4923 = vmatmul.mubr.f32.gmra.mrb[0].mxu0 %v4723
        %v4924 = vpop.f32.mrb[0].mxu0
        %v4925 = vadd.f32 %v4659, %v4924
        %v4926 = vpop.f32.mrb[0].mxu0
        %4927 = vmatprep.mubr.f32.mxu0 0.0
        %4928 = vmatmul.mubr.f32.gmra.mrb[0].mxu0 %v4726
        %v4929 = vpop.f32.mrb[0].mxu0
        %v4930 = vadd.f32 %v4659, %v4929
        %v4931 = vpop.f32.mrb[0].mxu0
        %4932 = vmatprep.mubr.f32.mxu0 0.0
        %4933 = vmatmul.mubr.f32.gmra.mrb[0].mxu0 %v4729
        %v4934 = vpop.f32.mrb[0].mxu0
        %v4935 = vadd.f32 %v4659, %v4934
        %v4936 = vpop.f32.mrb[0].mxu0
        %4937 = vmatprep.mubr.f32.mxu0 0.0
        %4938 = vmatmul.mubr.f32.gmra.mrb[0].mxu0 %v4732
        %v4939 = vpop.f32.mrb[0].mxu0
        %v4940 = vadd.f32 %v4659, %v4939
        %v4941 = vpop.f32.mrb[0].mxu0
        %4942 = vmatprep.mubr.f32.mxu0 0.0
        %4943 = vmatmul.mubr.f32.gmra.mrb[0].mxu0 %v4735
        %v4944 = vpop.f32.mrb[0].mxu0
        %v4945 = vadd.f32 %v4659, %v4944
        %v4946 = vpop.f32.mrb[0].mxu0
        %4947 = vmatprep.mubr.f32.mxu0 0.0
        %4948 = vmatmul.mubr.f32.gmra.mrb[0].mxu0 %v4738
        %v4949 = vpop.f32.mrb[0].mxu0
        %v4950 = vadd.f32 %v4659, %v4949
        %v4951 = vpop.f32.mrb[0].mxu0
        %4952 = vmatprep.mubr.f32.mxu0 0.0
        %4953 = vmatmul.mubr.f32.gmra.mrb[0].mxu0 %v4741
        %v4954 = vpop.f32.mrb[0].mxu0
        %v4955 = vadd.f32 %v4659, %v4954
        %v4956 = vpop.f32.mrb[0].mxu0
        %4957 = vmatprep.mubr.f32.mxu0 0.0
        %4958 = vmatmul.mubr.f32.gmra.mrb[0].mxu0 %v4744
        %v4959 = vpop.f32.mrb[0].mxu0
        %v4960 = vadd.f32 %v4659, %v4959
        %v4961 = vpop.f32.mrb[0].mxu0
        %4962 = vmatprep.mubr.f32.mxu0 0.0
        %4963 = vmatmul.mubr.f32.gmra.mrb[0].mxu0 %v4747
        %v4964 = vpop.f32.mrb[0].mxu0
        %v4965 = vadd.f32 %v4659, %v4964
        %v4966 = vpop.f32.mrb[0].mxu0
        %4967 = vmatprep.mubr.f32.mxu0 0.0
        %4968 = vmatmul.mubr.f32.gmra.mrb[0].mxu0 %v4750
        %v4969 = vpop.f32.mrb[0].mxu0
        %v4970 = vadd.f32 %v4659, %v4969
        %v4971 = vpop.f32.mrb[0].mxu0
        %4972 = vmatprep.mubr.f32.mxu0 0.0
        %4973 = vmatmul.mubr.f32.gmra.mrb[0].mxu0 %v4753
        %v4974 = vpop.f32.mrb[0].mxu0
        %v4975 = vadd.f32 %v4659, %v4974
        %v4976 = vpop.f32.mrb[0].mxu0
        %4977 = vmatprep.mubr.f32.mxu0 0.0
        %4978 = vmatmul.mubr.f32.gmra.mrb[0].mxu0 %v4756
        %v4979 = vpop.f32.mrb[0].mxu0
        %v4980 = vadd.f32 %v4659, %v4979
        %v4981 = vpop.f32.mrb[0].mxu0
        %4982 = vdwg.mxu0
        %v4983 = vmax.f32 %v4825, 0.0
        %v4984 = vmax.f32 %v4830, 0.0
        %v4985 = vmax.f32 %v4835, 0.0
        %v4986 = vmax.f32 %v4840, 0.0
        %v4987 = vmax.f32 %v4845, 0.0
        %v4988 = vmax.f32 %v4850, 0.0
        %v4989 = vmax.f32 %v4855, 0.0
        %v4990 = vmax.f32 %v4860, 0.0
        %v4991 = vmax.f32 %v4865, 0.0
        %v4992 = vmax.f32 %v4870, 0.0
        %v4993 = vmax.f32 %v4875, 0.0
        %v4994 = vmax.f32 %v4880, 0.0
        %v4995 = vmax.f32 %v4885, 0.0
        %v4996 = vmax.f32 %v4890, 0.0
        %v4997 = vmax.f32 %v4895, 0.0
        %v4998 = vmax.f32 %v4900, 0.0
        %v4999 = vmax.f32 %v4905, 0.0
        %v5000 = vmax.f32 %v4910, 0.0
        %v5001 = vmax.f32 %v4915, 0.0
        %v5002 = vmax.f32 %v4920, 0.0
        %v5003 = vmax.f32 %v4925, 0.0
        %v5004 = vmax.f32 %v4930, 0.0
        %v5005 = vmax.f32 %v4935, 0.0
        %v5006 = vmax.f32 %v4940, 0.0
        %v5007 = vmax.f32 %v4945, 0.0
        %v5008 = vmax.f32 %v4950, 0.0
        %v5009 = vmax.f32 %v4955, 0.0
        %v5010 = vmax.f32 %v4960, 0.0
        %v5011 = vmax.f32 %v4965, 0.0
        %v5012 = vmax.f32 %v4970, 0.0
        %v5013 = vmax.f32 %v4975, 0.0
        %v5014 = vmax.f32 %v4980, 0.0
        %v5015 = vld [vmem:[%s51] sm:$0xff]
        %v5016 = vld [vmem:[%s51 + $0x8] sm:$0xff]
        %v5017 = vld [vmem:[%s51 + $0x10] sm:$0xff]
        %v5018 = vld [vmem:[%s51 + $0x18] sm:$0xff]
        %v5019 = vld [vmem:[%s51 + $0x20] sm:$0xff]
        %v5020 = vld [vmem:[%s51 + $0x28] sm:$0xff]
        %v5021 = vld [vmem:[%s51 + $0x30] sm:$0xff]
        %v5022 = vld [vmem:[%s51 + $0x38] sm:$0xff]
        %v5023 = vld [vmem:[%s51 + $0x40] sm:$0xff]
        %v5024 = vld [vmem:[%s51 + $0x48] sm:$0xff]
        %v5025 = vld [vmem:[%s51 + $0x50] sm:$0xff]
        %v5026 = vld [vmem:[%s51 + $0x58] sm:$0xff]
        %v5027 = vld [vmem:[%s51 + $0x60] sm:$0xff]
        %v5028 = vld [vmem:[%s51 + $0x68] sm:$0xff]
        %v5029 = vld [vmem:[%s51 + $0x70] sm:$0xff]
        %v5030 = vld [vmem:[%s51 + $0x78] sm:$0xff]
        %5031 = vmatprep.subr.mxu0 0.0
        %5032 = vmatpush1.msra.mxu0 %v4983
        %5033 = vmatprep.subr.mxu0 0.0
        %5034 = vmatpush1.msra.mxu0 %v4984
        %5035 = vmatprep.subr.mxu0 0.0
        %5036 = vmatpush1.msra.mxu0 %v4985
        %5037 = vmatprep.subr.mxu0 0.0
        %5038 = vmatpush1.msra.mxu0 %v4986
        %5039 = vmatprep.subr.mxu0 0.0
        %5040 = vmatpush1.msra.mxu0 %v4987
        %5041 = vmatprep.subr.mxu0 0.0
        %5042 = vmatpush1.msra.mxu0 %v4988
        %5043 = vmatprep.subr.mxu0 0.0
        %5044 = vmatpush1.msra.mxu0 %v4989
        %5045 = vmatprep.subr.mxu0 0.0
        %5046 = vmatpush1.msra.mxu0 %v4990
        %5047 = vmatprep.subr.mxu0 0.0
        %5048 = vmatpush1.msra.mxu0 %v4991
        %5049 = vmatprep.subr.mxu0 0.0
        %5050 = vmatpush1.msra.mxu0 %v4992
        %5051 = vmatprep.subr.mxu0 0.0
        %5052 = vmatpush1.msra.mxu0 %v4993
        %5053 = vmatprep.subr.mxu0 0.0
        %5054 = vmatpush1.msra.mxu0 %v4994
        %5055 = vmatprep.subr.mxu0 0.0
        %5056 = vmatpush1.msra.mxu0 %v4995
        %5057 = vmatprep.subr.mxu0 0.0
        %5058 = vmatpush1.msra.mxu0 %v4996
        %5059 = vmatprep.subr.mxu0 0.0
        %5060 = vmatpush1.msra.mxu0 %v4997
        %5061 = vmatprep.subr.mxu0 0.0
        %5062 = vmatpush1.msra.mxu0 %v4998
        %5063 = vmatprep.subr.mxu0 0.0
        %5064 = vmatpush1.msra.mxu0 %v4999
        %5065 = vmatprep.subr.mxu0 0.0
        %5066 = vmatpush1.msra.mxu0 %v5000
        %5067 = vmatprep.subr.mxu0 0.0
        %5068 = vmatpush1.msra.mxu0 %v5001
        %5069 = vmatprep.subr.mxu0 0.0
        %5070 = vmatpush1.msra.mxu0 %v5002
        %5071 = vmatprep.subr.mxu0 0.0
        %5072 = vmatpush1.msra.mxu0 %v5003
        %5073 = vmatprep.subr.mxu0 0.0
        %5074 = vmatpush1.msra.mxu0 %v5004
        %5075 = vmatprep.subr.mxu0 0.0
        %5076 = vmatpush1.msra.mxu0 %v5005
        %5077 = vmatprep.subr.mxu0 0.0
        %5078 = vmatpush1.msra.mxu0 %v5006
        %5079 = vmatprep.subr.mxu0 0.0
        %5080 = vmatpush1.msra.mxu0 %v5007
        %5081 = vmatprep.subr.mxu0 0.0
        %5082 = vmatpush1.msra.mxu0 %v5008
        %5083 = vmatprep.subr.mxu0 0.0
        %5084 = vmatpush1.msra.mxu0 %v5009
        %5085 = vmatprep.subr.mxu0 0.0
        %5086 = vmatpush1.msra.mxu0 %v5010
        %5087 = vmatprep.subr.mxu0 0.0
        %5088 = vmatpush1.msra.mxu0 %v5011
        %5089 = vmatprep.subr.mxu0 0.0
        %5090 = vmatpush1.msra.mxu0 %v5012
        %5091 = vmatprep.subr.mxu0 0.0
        %5092 = vmatpush1.msra.mxu0 %v5013
        %5093 = vmatprep.subr.mxu0 0.0
        %5094 = vmatpush1.msra.mxu0 %v5014
        %5095 = vmatprep.mubr.f32.mxu0 %v5016
        %5096 = vmatmul.mubr.f32.gmra.mrb[0].mxu0 %v5015
        %v5097 = vpop.f32.mrb[0].mxu0
        %v5098 = vadd.f32 0.0, %v5097
        %v5099 = vpop.f32.mrb[0].mxu0
        %5100 = vmatprep.mubr.f32.mxu0 %v5018
        %5101 = vmatmul.mubr.f32.gmra.mrb[0].mxu0 %v5017
        %v5102 = vpop.f32.mrb[0].mxu0
        %v5103 = vadd.f32 0.0, %v5102
        %v5104 = vpop.f32.mrb[0].mxu0
        %5105 = vmatprep.mubr.f32.mxu0 %v5020
        %5106 = vmatmul.mubr.f32.gmra.mrb[0].mxu0 %v5019
        %v5107 = vpop.f32.mrb[0].mxu0
        %v5108 = vadd.f32 0.0, %v5107
        %v5109 = vpop.f32.mrb[0].mxu0
        %5110 = vmatprep.mubr.f32.mxu0 %v5022
        %5111 = vmatmul.mubr.f32.gmra.mrb[0].mxu0 %v5021
        %v5112 = vpop.f32.mrb[0].mxu0
        %v5113 = vadd.f32 0.0, %v5112
        %v5114 = vpop.f32.mrb[0].mxu0
        %5115 = vmatprep.mubr.f32.mxu0 %v5024
        %5116 = vmatmul.mubr.f32.gmra.mrb[0].mxu0 %v5023
        %v5117 = vpop.f32.mrb[0].mxu0
        %v5118 = vadd.f32 0.0, %v5117
        %v5119 = vpop.f32.mrb[0].mxu0
        %5120 = vmatprep.mubr.f32.mxu0 %v5026
        %5121 = vmatmul.mubr.f32.gmra.mrb[0].mxu0 %v5025
        %v5122 = vpop.f32.mrb[0].mxu0
        %v5123 = vadd.f32 0.0, %v5122
        %v5124 = vpop.f32.mrb[0].mxu0
        %5125 = vmatprep.mubr.f32.mxu0 %v5028
        %5126 = vmatmul.mubr.f32.gmra.mrb[0].mxu0 %v5027
        %v5127 = vpop.f32.mrb[0].mxu0
        %v5128 = vadd.f32 0.0, %v5127
        %v5129 = vpop.f32.mrb[0].mxu0
        %5130 = vmatprep.mubr.f32.mxu0 %v5030
        %5131 = vmatmul.mubr.f32.gmra.mrb[0].mxu0 %v5029
        %v5132 = vpop.f32.mrb[0].mxu0
        %v5133 = vadd.f32 0.0, %v5132
        %v5134 = vpop.f32.mrb[0].mxu0
        %5135 = vdwg.mxu0
        %v5136 = vand.u32 %v962, 7
        %v5137 = vand.u32 %v963, 7
        %v5138 = vand.u32 %v964, 7
        %v5139 = vand.u32 %v965, 7
        %v5140 = vand.u32 %v966, 7
        %v5141 = vand.u32 %v967, 7
        %v5142 = vand.u32 %v968, 7
        %v5143 = vand.u32 %v969, 7
        %v5151 = vrot.slane %v5098, 7
        %v5152 = vrot.slane %v5103, 7
        %v5153 = vsel %vm1056, %v5151, %v5152
        %v5154 = vrot.slane %v5108, 7
        %v5155 = vsel %vm1056, %v5152, %v5154
        %v5156 = vrot.slane %v5113, 7
        %v5157 = vsel %vm1056, %v5154, %v5156
        %v5158 = vrot.slane %v5118, 7
        %v5159 = vsel %vm1056, %v5156, %v5158
        %v5160 = vrot.slane %v5123, 7
        %v5161 = vsel %vm1056, %v5158, %v5160
        %v5162 = vrot.slane %v5128, 7
        %v5163 = vsel %vm1056, %v5160, %v5162
        %v5171 = vsel %vm1056, 0.0, %v5151
        %vm5172 = vcmp.eq.s32.totalorder %v5136, 0
        %vm5173 = vcmp.eq.s32.totalorder %v5137, 0
        %vm5174 = vcmp.eq.s32.totalorder %v5138, 0
        %vm5175 = vcmp.eq.s32.totalorder %v5139, 0
        %vm5176 = vcmp.eq.s32.totalorder %v5140, 0
        %vm5177 = vcmp.eq.s32.totalorder %v5141, 0
        %vm5178 = vcmp.eq.s32.totalorder %v5142, 0
        %vm5179 = vcmp.eq.s32.totalorder %v5143, 0
        %v5180 = vsel %vm5173, 0.0, %v5171
        %v5181 = vsel %vm5174, 0.0, %v5153
        %v5182 = vsel %vm5175, 0.0, %v5155
        %v5183 = vsel %vm5176, 0.0, %v5157
        %v5184 = vsel %vm5177, 0.0, %v5159
        %v5185 = vsel %vm5178, 0.0, %v5161
        %v5186 = vsel %vm5179, 0.0, %v5163
        %v5188 = vrot.slane %v5098, 1
        %v5189 = vrot.slane %v5103, 1
        %v5190 = vsel %vm1210, %v5188, %v5189
        %v5191 = vrot.slane %v5108, 1
        %v5192 = vsel %vm1210, %v5189, %v5191
        %v5193 = vrot.slane %v5113, 1
        %v5194 = vsel %vm1210, %v5191, %v5193
        %v5195 = vrot.slane %v5118, 1
        %v5196 = vsel %vm1210, %v5193, %v5195
        %v5197 = vrot.slane %v5123, 1
        %v5198 = vsel %vm1210, %v5195, %v5197
        %v5199 = vrot.slane %v5128, 1
        %v5200 = vsel %vm1210, %v5197, %v5199
        %v5201 = vrot.slane %v5133, 1
        %v5202 = vsel %vm1210, %v5199, %v5201
        %v5211 = vsel %vm1210, 0.0, %v5188
        %vm5212 = vcmp.eq.s32.totalorder %v5136, 7
        %vm5213 = vcmp.eq.s32.totalorder %v5137, 7
        %vm5214 = vcmp.eq.s32.totalorder %v5138, 7
        %vm5215 = vcmp.eq.s32.totalorder %v5139, 7
        %vm5216 = vcmp.eq.s32.totalorder %v5140, 7
        %vm5217 = vcmp.eq.s32.totalorder %v5141, 7
        %vm5218 = vcmp.eq.s32.totalorder %v5142, 7
        %vm5219 = vcmp.eq.s32.totalorder %v5143, 7
        %v5220 = vsel %vm5212, 0.0, %v5211
        %v5221 = vsel %vm5213, 0.0, %v5190
        %v5222 = vsel %vm5214, 0.0, %v5192
        %v5223 = vsel %vm5215, 0.0, %v5194
        %v5224 = vsel %vm5216, 0.0, %v5196
        %v5225 = vsel %vm5217, 0.0, %v5198
        %v5226 = vsel %vm5218, 0.0, %v5200
        %v5227 = vsel %vm5219, 0.0, %v5202
        %v5228 = vrot.slane %v5133, 7
        %v5229 = vsel %vm1056, %v5162, %v5228
        %v5231 = vsel %vm5172, 0.0, %v5171
        %v5232 = vsel %vm5173, 0.0, %v5153
        %v5233 = vsel %vm5174, 0.0, %v5155
        %v5234 = vsel %vm5175, 0.0, %v5157
        %v5235 = vsel %vm5176, 0.0, %v5159
        %v5236 = vsel %vm5177, 0.0, %v5161
        %v5237 = vsel %vm5178, 0.0, %v5163
        %v5238 = vsel %vm5179, 0.0, %v5229
        %v5240 = vsel %vm1210, %v5201, 0.0
        %v5241 = vsel %vm5212, 0.0, %v5190
        %v5242 = vsel %vm5213, 0.0, %v5192
        %v5243 = vsel %vm5214, 0.0, %v5194
        %v5244 = vsel %vm5215, 0.0, %v5196
        %v5245 = vsel %vm5216, 0.0, %v5198
        %v5246 = vsel %vm5217, 0.0, %v5200
        %v5247 = vsel %vm5218, 0.0, %v5202
        %v5248 = vsel %vm5219, 0.0, %v5240
        %v5250 = vsel %vm1056, %v5228, 0.0
        %v5251 = vsel %vm5172, 0.0, %v5153
        %v5252 = vsel %vm5173, 0.0, %v5155
        %v5253 = vsel %vm5174, 0.0, %v5157
        %v5254 = vsel %vm5175, 0.0, %v5159
        %v5255 = vsel %vm5176, 0.0, %v5161
        %v5256 = vsel %vm5177, 0.0, %v5163
        %v5257 = vsel %vm5178, 0.0, %v5229
        %v5258 = vsel %vm5179, 0.0, %v5250
        %v5259 = vsel %vm5212, 0.0, %v5192
        %v5260 = vsel %vm5213, 0.0, %v5194
        %v5261 = vsel %vm5214, 0.0, %v5196
        %v5262 = vsel %vm5215, 0.0, %v5198
        %v5263 = vsel %vm5216, 0.0, %v5200
        %v5264 = vsel %vm5217, 0.0, %v5202
        %v5265 = vsel %vm5218, 0.0, %v5240
        %5266 = vrot.lane.b32.xlu0 %v5098, 16
        %v5267 = vpop.permute.xlu0 %5266
        %5268 = vrot.lane.b32.xlu0 %v5103, 16
        %v5269 = vpop.permute.xlu0 %5268
        %5270 = vrot.lane.b32.xlu0 %v5108, 16
        %v5271 = vpop.permute.xlu0 %5270
        %5272 = vrot.lane.b32.xlu0 %v5113, 16
        %v5273 = vpop.permute.xlu0 %5272
        %5274 = vrot.lane.b32.xlu0 %v5118, 16
        %v5275 = vpop.permute.xlu0 %5274
        %5276 = vrot.lane.b32.xlu0 %v5123, 16
        %v5277 = vpop.permute.xlu0 %5276
        %5278 = vrot.lane.b32.xlu0 %v5128, 16
        %v5279 = vpop.permute.xlu0 %5278
        %5295 = vrot.lane.b32.xlu0 %v5220, 32
        %v5296 = vpop.permute.xlu0 %5295
        %5297 = vrot.lane.b32.xlu0 %v5221, 32
        %v5298 = vpop.permute.xlu0 %5297
        %5299 = vrot.lane.b32.xlu0 %v5222, 32
        %v5300 = vpop.permute.xlu0 %5299
        %5301 = vrot.lane.b32.xlu0 %v5223, 32
        %v5302 = vpop.permute.xlu0 %5301
        %5303 = vrot.lane.b32.xlu0 %v5224, 32
        %v5304 = vpop.permute.xlu0 %5303
        %5305 = vrot.lane.b32.xlu0 %v5225, 32
        %v5306 = vpop.permute.xlu0 %5305
        %5307 = vrot.lane.b32.xlu0 %v5226, 32
        %v5308 = vpop.permute.xlu0 %5307
        %5309 = vrot.lane.b32.xlu0 %v5227, 32
        %v5310 = vpop.permute.xlu0 %5309
        %5327 = vrot.lane.b32.xlu0 %v5231, 48
        %v5328 = vpop.permute.xlu0 %5327
        %5329 = vrot.lane.b32.xlu0 %v5232, 48
        %v5330 = vpop.permute.xlu0 %5329
        %5331 = vrot.lane.b32.xlu0 %v5233, 48
        %v5332 = vpop.permute.xlu0 %5331
        %5333 = vrot.lane.b32.xlu0 %v5234, 48
        %v5334 = vpop.permute.xlu0 %5333
        %5335 = vrot.lane.b32.xlu0 %v5235, 48
        %v5336 = vpop.permute.xlu0 %5335
        %5337 = vrot.lane.b32.xlu0 %v5236, 48
        %v5338 = vpop.permute.xlu0 %5337
        %5339 = vrot.lane.b32.xlu0 %v5237, 48
        %v5340 = vpop.permute.xlu0 %5339
        %5341 = vrot.lane.b32.xlu0 %v5238, 48
        %v5342 = vpop.permute.xlu0 %5341
        %5351 = vrot.lane.b32.xlu0 %v5098, 64
        %v5352 = vpop.permute.xlu0 %5351
        %5353 = vrot.lane.b32.xlu0 %v5103, 64
        %v5354 = vpop.permute.xlu0 %5353
        %5355 = vrot.lane.b32.xlu0 %v5108, 64
        %v5356 = vpop.permute.xlu0 %5355
        %5357 = vrot.lane.b32.xlu0 %v5113, 64
        %v5358 = vpop.permute.xlu0 %5357
        %5359 = vrot.lane.b32.xlu0 %v5118, 64
        %v5360 = vpop.permute.xlu0 %5359
        %5361 = vrot.lane.b32.xlu0 %v5123, 64
        %v5362 = vpop.permute.xlu0 %5361
        %5363 = vrot.lane.b32.xlu0 %v5128, 64
        %v5364 = vpop.permute.xlu0 %5363
        %5365 = vrot.lane.b32.xlu0 %v5133, 64
        %v5366 = vpop.permute.xlu0 %5365
        %5383 = vrot.lane.b32.xlu0 %v5241, 80
        %v5384 = vpop.permute.xlu0 %5383
        %5385 = vrot.lane.b32.xlu0 %v5242, 80
        %v5386 = vpop.permute.xlu0 %5385
        %5387 = vrot.lane.b32.xlu0 %v5243, 80
        %v5388 = vpop.permute.xlu0 %5387
        %5389 = vrot.lane.b32.xlu0 %v5244, 80
        %v5390 = vpop.permute.xlu0 %5389
        %5391 = vrot.lane.b32.xlu0 %v5245, 80
        %v5392 = vpop.permute.xlu0 %5391
        %5393 = vrot.lane.b32.xlu0 %v5246, 80
        %v5394 = vpop.permute.xlu0 %5393
        %5395 = vrot.lane.b32.xlu0 %v5247, 80
        %v5396 = vpop.permute.xlu0 %5395
        %5397 = vrot.lane.b32.xlu0 %v5248, 80
        %v5398 = vpop.permute.xlu0 %5397
        %5415 = vrot.lane.b32.xlu0 %v5251, 96
        %v5416 = vpop.permute.xlu0 %5415
        %5417 = vrot.lane.b32.xlu0 %v5252, 96
        %v5418 = vpop.permute.xlu0 %5417
        %5419 = vrot.lane.b32.xlu0 %v5253, 96
        %v5420 = vpop.permute.xlu0 %5419
        %5421 = vrot.lane.b32.xlu0 %v5254, 96
        %v5422 = vpop.permute.xlu0 %5421
        %5423 = vrot.lane.b32.xlu0 %v5255, 96
        %v5424 = vpop.permute.xlu0 %5423
        %5425 = vrot.lane.b32.xlu0 %v5256, 96
        %v5426 = vpop.permute.xlu0 %5425
        %5427 = vrot.lane.b32.xlu0 %v5257, 96
        %v5428 = vpop.permute.xlu0 %5427
        %5429 = vrot.lane.b32.xlu0 %v5258, 96
        %v5430 = vpop.permute.xlu0 %5429
        %5439 = vrot.lane.b32.xlu0 %v5103, 112
        %v5440 = vpop.permute.xlu0 %5439
        %5441 = vrot.lane.b32.xlu0 %v5108, 112
        %v5442 = vpop.permute.xlu0 %5441
        %5443 = vrot.lane.b32.xlu0 %v5113, 112
        %v5444 = vpop.permute.xlu0 %5443
        %5445 = vrot.lane.b32.xlu0 %v5118, 112
        %v5446 = vpop.permute.xlu0 %5445
        %5447 = vrot.lane.b32.xlu0 %v5123, 112
        %v5448 = vpop.permute.xlu0 %5447
        %5449 = vrot.lane.b32.xlu0 %v5128, 112
        %v5450 = vpop.permute.xlu0 %5449
        %5451 = vrot.lane.b32.xlu0 %v5133, 112
        %v5452 = vpop.permute.xlu0 %5451
        %5453 = vrot.lane.b32.xlu0 0.0, 112
        %v5454 = vpop.permute.xlu0 %5453
        %v5463 = vsel %vm4415, 0.0, %v3593
        %v5464 = vsel %vm4415, %v5180, %v5267
        %v5465 = vsel %vm4415, %v5181, %v5269
        %v5466 = vsel %vm4415, %v5182, %v5271
        %v5467 = vsel %vm4415, %v5183, %v5273
        %v5468 = vsel %vm4415, %v5184, %v5275
        %v5469 = vsel %vm4415, %v5185, %v5277
        %v5470 = vsel %vm4415, %v5186, %v5279
        %v5471 = vsel %vm4480, %v5463, %v5296
        %v5472 = vsel %vm4480, %v5464, %v5298
        %v5473 = vsel %vm4480, %v5465, %v5300
        %v5474 = vsel %vm4480, %v5466, %v5302
        %v5475 = vsel %vm4480, %v5467, %v5304
        %v5476 = vsel %vm4480, %v5468, %v5306
        %v5477 = vsel %vm4480, %v5469, %v5308
        %v5478 = vsel %vm4480, %v5470, %v5310
        %v5479 = vsel %vm4546, %v5471, %v5328
        %v5480 = vsel %vm4546, %v5472, %v5330
        %v5481 = vsel %vm4546, %v5473, %v5332
        %v5482 = vsel %vm4546, %v5474, %v5334
        %v5483 = vsel %vm4546, %v5475, %v5336
        %v5484 = vsel %vm4546, %v5476, %v5338
        %v5485 = vsel %vm4546, %v5477, %v5340
        %v5486 = vsel %vm4546, %v5478, %v5342
        %v5487 = vsel %vm4612, %v5479, %v5352
        %v5488 = vsel %vm4612, %v5480, %v5354
        %v5489 = vsel %vm4612, %v5481, %v5356
        %v5490 = vsel %vm4612, %v5482, %v5358
        %v5491 = vsel %vm4612, %v5483, %v5360
        %v5492 = vsel %vm4612, %v5484, %v5362
        %v5493 = vsel %vm4612, %v5485, %v5364
        %v5494 = vsel %vm4612, %v5486, %v5366
        %vm5495 = vcmask 654336
        %v5496 = vsel %vm5495, %v5487, %v5384
        %v5497 = vsel %vm5495, %v5488, %v5386
        %v5498 = vsel %vm5495, %v5489, %v5388
        %v5499 = vsel %vm5495, %v5490, %v5390
        %v5500 = vsel %vm5495, %v5491, %v5392
        %v5501 = vsel %vm5495, %v5492, %v5394
        %v5502 = vsel %vm5495, %v5493, %v5396
        %v5503 = vsel %vm5495, %v5494, %v5398
        %vm5504 = vcmask 785408
        %v5505 = vsel %vm5504, %v5496, %v5416
        %v5506 = vsel %vm5504, %v5497, %v5418
        %v5507 = vsel %vm5504, %v5498, %v5420
        %v5508 = vsel %vm5504, %v5499, %v5422
        %v5509 = vsel %vm5504, %v5500, %v5424
        %v5510 = vsel %vm5504, %v5501, %v5426
        %v5511 = vsel %vm5504, %v5502, %v5428
        %v5512 = vsel %vm5504, %v5503, %v5430
        %vm5513 = vcmask 916480
        %v5514 = vsel %vm5513, %v5505, %v5440
        %v5515 = vsel %vm5513, %v5506, %v5442
        %v5516 = vsel %vm5513, %v5507, %v5444
        %v5517 = vsel %vm5513, %v5508, %v5446
        %v5518 = vsel %vm5513, %v5509, %v5448
        %v5519 = vsel %vm5513, %v5510, %v5450
        %v5520 = vsel %vm5513, %v5511, %v5452
        %v5521 = vsel %vm5513, %v5512, %v5454
        %v5522 = vld [vmem:[%s11] sm:$0xff]
        %v5523 = vld [vmem:[%s11 + $0x8] sm:$0xff]
        %v5524 = vld [vmem:[%s11 + $0x10] sm:$0xff]
        %v5525 = vld [vmem:[%s11 + $0x18] sm:$0xff]
        %v5526 = vld [vmem:[%s11 + $0x20] sm:$0xff]
        %v5527 = vld [vmem:[%s11 + $0x28] sm:$0xff]
        %v5528 = vld [vmem:[%s11 + $0x30] sm:$0xff]
        %v5529 = vld [vmem:[%s11 + $0x38] sm:$0xff]
        %v5530 = vld [vmem:[%s11 + $0x40] sm:$0xff]
        %v5531 = vld [vmem:[%s11 + $0x48] sm:$0xff]
        %v5532 = vld [vmem:[%s11 + $0x50] sm:$0xff]
        %v5533 = vld [vmem:[%s11 + $0x58] sm:$0xff]
        %v5534 = vld [vmem:[%s11 + $0x60] sm:$0xff]
        %v5535 = vld [vmem:[%s11 + $0x68] sm:$0xff]
        %v5536 = vld [vmem:[%s11 + $0x70] sm:$0xff]
        %v5537 = vld [vmem:[%s11 + $0x78] sm:$0xff]
        %v5538 = vld [vmem:[%s11 + $0x80] sm:$0xff]
        %v5539 = vld [vmem:[%s11 + $0x88] sm:$0xff]
        %v5540 = vld [vmem:[%s13] sm:$0x1]
        %v5542 = vlaneseq
        %v5543 = vshrl.u32 %v5542, 7
        %v5544 = vsub.s32 0, %v5543
        %v5545 = vrot.slane %v5540, %v5544
        %v5548 = vsel %vm4415, %v5259, 0
        %v5551 = vsel %vm4415, %v5260, 0
        %v5554 = vsel %vm4415, %v5261, 0
        %v5557 = vsel %vm4415, %v5262, 0
        %v5560 = vsel %vm4415, %v5263, 0
        %v5563 = vsel %vm4415, %v5264, 0
        %v5566 = vsel %vm4415, %v5265, 0
        %v5568 = vsel %vm4415, 0.0, 0
        %5570 = vmatprep.subr.mxu0 0.0
        %5571 = vmatpush1.msra.mxu0 %v5522
        %5572 = vmatprep.subr.mxu0 0.0
        %5573 = vmatpush1.msra.mxu0 %v5523
        %5574 = vmatprep.subr.mxu0 0.0
        %5575 = vmatpush1.msra.mxu0 %v5524
        %5576 = vmatprep.subr.mxu0 0.0
        %5577 = vmatpush1.msra.mxu0 %v5525
        %5578 = vmatprep.subr.mxu0 0.0
        %5579 = vmatpush1.msra.mxu0 %v5526
        %5580 = vmatprep.subr.mxu0 0.0
        %5581 = vmatpush1.msra.mxu0 %v5527
        %5582 = vmatprep.subr.mxu0 0.0
        %5583 = vmatpush1.msra.mxu0 %v5528
        %5584 = vmatprep.subr.mxu0 0.0
        %5585 = vmatpush1.msra.mxu0 %v5529
        %5586 = vmatprep.subr.mxu0 0.0
        %5587 = vmatpush1.msra.mxu0 %v5530
        %5588 = vmatprep.subr.mxu0 0.0
        %5589 = vmatpush1.msra.mxu0 %v5531
        %5590 = vmatprep.subr.mxu0 0.0
        %5591 = vmatpush1.msra.mxu0 %v5532
        %5592 = vmatprep.subr.mxu0 0.0
        %5593 = vmatpush1.msra.mxu0 %v5533
        %5594 = vmatprep.subr.mxu0 0.0
        %5595 = vmatpush1.msra.mxu0 %v5534
        %5596 = vmatprep.subr.mxu0 0.0
        %5597 = vmatpush1.msra.mxu0 %v5535
        %5598 = vmatprep.subr.mxu0 0.0
        %5599 = vmatpush1.msra.mxu0 %v5536
        %5600 = vmatprep.subr.mxu0 0.0
        %5601 = vmatpush1.msra.mxu0 %v5537
        %5602 = vmatprep.subr.mxu0 0.0
        %5603 = vmatpush1.msra.mxu0 %v5538
        %5604 = vmatprep.subr.mxu0 0.0
        %5605 = vmatpush1.msra.mxu0 %v5539
        %5606 = vmatprep.subr.mxu0 0.0
        %5607 = vmatpush1.msra.mxu0 0.0
        %5608 = vmatprep.subr.mxu0 0.0
        %5609 = vmatpush1.msra.mxu0 0.0
        %5610 = vmatprep.subr.mxu0 0.0
        %5611 = vmatpush1.msra.mxu0 0.0
        %5612 = vmatprep.subr.mxu0 0.0
        %5613 = vmatpush1.msra.mxu0 0.0
        %5614 = vmatprep.subr.mxu0 0.0
        %5615 = vmatpush1.msra.mxu0 0.0
        %5616 = vmatprep.subr.mxu0 0.0
        %5617 = vmatpush1.msra.mxu0 0.0
        %5618 = vmatprep.subr.mxu0 0.0
        %5619 = vmatpush1.msra.mxu0 0.0
        %5620 = vmatprep.subr.mxu0 0.0
        %5621 = vmatpush1.msra.mxu0 0.0
        %5622 = vmatprep.subr.mxu0 0.0
        %5623 = vmatpush1.msra.mxu0 0.0
        %5624 = vmatprep.subr.mxu0 0.0
        %5625 = vmatpush1.msra.mxu0 0.0
        %5626 = vmatprep.subr.mxu0 0.0
        %5627 = vmatpush1.msra.mxu0 0.0
        %5628 = vmatprep.subr.mxu0 0.0
        %5629 = vmatpush1.msra.mxu0 0.0
        %5630 = vmatprep.subr.mxu0 0.0
        %5631 = vmatpush1.msra.mxu0 0.0
        %5632 = vmatprep.subr.mxu0 0.0
        %5633 = vmatpush1.msra.mxu0 0.0
        %5634 = vmatprep.mubr.f32.mxu0 %v5548
        %5635 = vmatmul.mubr.f32.gmra.mrb[0].mxu0 %v5514
        %v5636 = vpop.f32.mrb[0].mxu0
        %v5637 = vadd.f32 %v5545, %v5636
        %v5638 = vpop.f32.mrb[0].mxu0
        %5639 = vmatprep.mubr.f32.mxu0 %v5551
        %5640 = vmatmul.mubr.f32.gmra.mrb[0].mxu0 %v5515
        %v5641 = vpop.f32.mrb[0].mxu0
        %v5642 = vadd.f32 %v5545, %v5641
        %v5643 = vpop.f32.mrb[0].mxu0
        %5644 = vmatprep.mubr.f32.mxu0 %v5554
        %5645 = vmatmul.mubr.f32.gmra.mrb[0].mxu0 %v5516
        %v5646 = vpop.f32.mrb[0].mxu0
        %v5647 = vadd.f32 %v5545, %v5646
        %v5648 = vpop.f32.mrb[0].mxu0
        %5649 = vmatprep.mubr.f32.mxu0 %v5557
        %5650 = vmatmul.mubr.f32.gmra.mrb[0].mxu0 %v5517
        %v5651 = vpop.f32.mrb[0].mxu0
        %v5652 = vadd.f32 %v5545, %v5651
        %v5653 = vpop.f32.mrb[0].mxu0
        %5654 = vmatprep.mubr.f32.mxu0 %v5560
        %5655 = vmatmul.mubr.f32.gmra.mrb[0].mxu0 %v5518
        %v5656 = vpop.f32.mrb[0].mxu0
        %v5657 = vadd.f32 %v5545, %v5656
        %v5658 = vpop.f32.mrb[0].mxu0
        %5659 = vmatprep.mubr.f32.mxu0 %v5563
        %5660 = vmatmul.mubr.f32.gmra.mrb[0].mxu0 %v5519
        %v5661 = vpop.f32.mrb[0].mxu0
        %v5662 = vadd.f32 %v5545, %v5661
        %v5663 = vpop.f32.mrb[0].mxu0
        %5664 = vmatprep.mubr.f32.mxu0 %v5566
        %5665 = vmatmul.mubr.f32.gmra.mrb[0].mxu0 %v5520
        %v5666 = vpop.f32.mrb[0].mxu0
        %v5667 = vadd.f32 %v5545, %v5666
        %v5668 = vpop.f32.mrb[0].mxu0
        %5669 = vmatprep.mubr.f32.mxu0 %v5568
        %5670 = vmatmul.mubr.f32.gmra.mrb[0].mxu0 %v5521
        %v5671 = vpop.f32.mrb[0].mxu0
        %v5672 = vadd.f32 %v5545, %v5671
        %v5673 = vpop.f32.mrb[0].mxu0
        %5674 = vdwg.mxu0
        %v5675 = vmax.f32 %v5637, 0.0
        %v5676 = vmax.f32 %v5642, 0.0
        %v5677 = vmax.f32 %v5647, 0.0
        %v5678 = vmax.f32 %v5652, 0.0
        %v5679 = vmax.f32 %v5657, 0.0
        %v5680 = vmax.f32 %v5662, 0.0
        %v5681 = vmax.f32 %v5667, 0.0
        %v5682 = vmax.f32 %v5672, 0.0
        %v5683 = vld [vmem:[%s53] sm:$0xff]
        %v5684 = vld [vmem:[%s53 + $0x8] sm:$0xff]
        %v5686 = vsel %vm4612, %v5683, 0
        %v5689 = vsel %vm4612, %v5684, 0
        %5691 = vmatprep.subr.mxu0 0.0
        %5692 = vmatpush1.msra.mxu0 %v5675
        %5693 = vmatprep.subr.mxu0 0.0
        %5694 = vmatpush1.msra.mxu0 %v5676
        %5695 = vmatprep.subr.mxu0 0.0
        %5696 = vmatpush1.msra.mxu0 %v5677
        %5697 = vmatprep.subr.mxu0 0.0
        %5698 = vmatpush1.msra.mxu0 %v5678
        %5699 = vmatprep.subr.mxu0 0.0
        %5700 = vmatpush1.msra.mxu0 %v5679
        %5701 = vmatprep.subr.mxu0 0.0
        %5702 = vmatpush1.msra.mxu0 %v5680
        %5703 = vmatprep.subr.mxu0 0.0
        %5704 = vmatpush1.msra.mxu0 %v5681
        %5705 = vmatprep.subr.mxu0 0.0
        %5706 = vmatpush1.msra.mxu0 %v5682
        %5707 = vmatprep.subr.mxu0 0.0
        %5708 = vmatpush1.msra.mxu0 0.0
        %5709 = vmatprep.subr.mxu0 0.0
        %5710 = vmatpush1.msra.mxu0 0.0
        %5711 = vmatprep.subr.mxu0 0.0
        %5712 = vmatpush1.msra.mxu0 0.0
        %5713 = vmatprep.subr.mxu0 0.0
        %5714 = vmatpush1.msra.mxu0 0.0
        %5715 = vmatprep.subr.mxu0 0.0
        %5716 = vmatpush1.msra.mxu0 0.0
        %5717 = vmatprep.subr.mxu0 0.0
        %5718 = vmatpush1.msra.mxu0 0.0
        %5719 = vmatprep.subr.mxu0 0.0
        %5720 = vmatpush1.msra.mxu0 0.0
        %5721 = vmatprep.subr.mxu0 0.0
        %5722 = vmatpush1.msra.mxu0 0.0
        %5723 = vmatprep.subr.mxu0 0.0
        %5724 = vmatpush1.msra.mxu0 0.0
        %5725 = vmatprep.subr.mxu0 0.0
        %5726 = vmatpush1.msra.mxu0 0.0
        %5727 = vmatprep.subr.mxu0 0.0
        %5728 = vmatpush1.msra.mxu0 0.0
        %5729 = vmatprep.subr.mxu0 0.0
        %5730 = vmatpush1.msra.mxu0 0.0
        %5731 = vmatprep.subr.mxu0 0.0
        %5732 = vmatpush1.msra.mxu0 0.0
        %5733 = vmatprep.subr.mxu0 0.0
        %5734 = vmatpush1.msra.mxu0 0.0
        %5735 = vmatprep.subr.mxu0 0.0
        %5736 = vmatpush1.msra.mxu0 0.0
        %5737 = vmatprep.subr.mxu0 0.0
        %5738 = vmatpush1.msra.mxu0 0.0
        %5739 = vmatprep.subr.mxu0 0.0
        %5740 = vmatpush1.msra.mxu0 0.0
        %5741 = vmatprep.subr.mxu0 0.0
        %5742 = vmatpush1.msra.mxu0 0.0
        %5743 = vmatprep.subr.mxu0 0.0
        %5744 = vmatpush1.msra.mxu0 0.0
        %5745 = vmatprep.subr.mxu0 0.0
        %5746 = vmatpush1.msra.mxu0 0.0
        %5747 = vmatprep.subr.mxu0 0.0
        %5748 = vmatpush1.msra.mxu0 0.0
        %5749 = vmatprep.subr.mxu0 0.0
        %5750 = vmatpush1.msra.mxu0 0.0
        %5751 = vmatprep.subr.mxu0 0.0
        %5752 = vmatpush1.msra.mxu0 0.0
        %5753 = vmatprep.subr.mxu0 0.0
        %5754 = vmatpush1.msra.mxu0 0.0
        %5755 = vmatprep.mubr.f32.mxu0 0.0
        %5756 = vmatmul.mubr.f32.gmra.mrb[0].mxu0 %v5686
        %v5757 = vpop.f32.mrb[0].mxu0
        %v5758 = vadd.f32 0.0, %v5757
        %v5759 = vpop.f32.mrb[0].mxu0
        %5760 = vmatprep.mubr.f32.mxu0 0.0
        %5761 = vmatmul.mubr.f32.gmra.mrb[0].mxu0 %v5689
        %v5762 = vpop.f32.mrb[0].mxu0
        %v5763 = vadd.f32 0.0, %v5762
        %v5764 = vpop.f32.mrb[0].mxu0
        %5765 = vdwg.mxu0
        %v5766 = vand.u32 %v962, 3
        %v5767 = vand.u32 %v963, 3
        %vm5770 = vcmask 1044480
        %v5771 = vrot.slane %v5758, 3
        %v5772 = vrot.slane %v5763, 3
        %v5773 = vsel %vm5770, %v5771, %v5772
        %v5776 = vsel %vm5770, 0.0, %v5771
        %vm5777 = vcmp.eq.s32.totalorder %v5766, 0
        %vm5778 = vcmp.eq.s32.totalorder %v5767, 0
        %v5779 = vsel %vm5777, 0.0, %v5776
        %v5780 = vsel %vm5778, 0.0, %v5773
        %vm5781 = vcmask 1043456
        %v5782 = vrot.slane %v5758, 4
        %v5783 = vrot.slane %v5763, 4
        %v5784 = vsel %vm5781, %v5782, %v5783
        %v5786 = vsel %vm5781, 0.0, %v5782
        %v5787 = vrot.slane %v5758, 5
        %v5788 = vrot.slane %v5763, 5
        %v5789 = vsel %vm2793, %v5787, %v5788
        %v5792 = vsel %vm2793, 0.0, %v5787
        %vm5793 = vcmp.eq.s32.totalorder %v5766, 3
        %vm5794 = vcmp.eq.s32.totalorder %v5767, 3
        %v5795 = vsel %vm5793, 0.0, %v5792
        %v5796 = vsel %vm5794, 0.0, %v5789
        %v5797 = vrot.slane %v5758, 7
        %v5798 = vrot.slane %v5763, 7
        %v5799 = vsel %vm1056, %v5797, %v5798
        %v5802 = vsel %vm1056, 0.0, %v5797
        %v5803 = vsel %vm5777, 0.0, %v5802
        %v5804 = vsel %vm5778, 0.0, %v5799
        %v5805 = vrot.slane %v5758, 1
        %v5806 = vrot.slane %v5763, 1
        %v5807 = vsel %vm1210, %v5805, %v5806
        %v5810 = vsel %vm1210, %v5806, 0.0
        %v5811 = vsel %vm5793, 0.0, %v5807
        %v5812 = vsel %vm5794, 0.0, %v5810
        %v5814 = vsel %vm5770, %v5772, 0.0
        %v5815 = vsel %vm5777, 0.0, %v5773
        %v5816 = vsel %vm5778, 0.0, %v5814
        %v5818 = vsel %vm5781, %v5783, 0.0
        %v5820 = vsel %vm2793, %v5788, 0.0
        %v5821 = vsel %vm5793, 0.0, %v5789
        %v5822 = vsel %vm5794, 0.0, %v5820
        %5824 = vrot.lane.b32.xlu0 %v5786, 32
        %v5825 = vpop.permute.xlu0 %5824
        %5826 = vrot.lane.b32.xlu0 %v5784, 32
        %v5827 = vpop.permute.xlu0 %5826
        %5832 = vrot.lane.b32.xlu0 %v5795, 64
        %v5833 = vpop.permute.xlu0 %5832
        %5834 = vrot.lane.b32.xlu0 %v5796, 64
        %v5835 = vpop.permute.xlu0 %5834
        %5840 = vrot.lane.b32.xlu0 %v5803, 96
        %v5841 = vpop.permute.xlu0 %5840
        %5842 = vrot.lane.b32.xlu0 %v5804, 96
        %v5843 = vpop.permute.xlu0 %5842
        %5848 = vrot.lane.b32.xlu0 %v5811, 32
        %v5849 = vpop.permute.xlu0 %5848
        %5850 = vrot.lane.b32.xlu0 %v5812, 32
        %v5851 = vpop.permute.xlu0 %5850
        %5856 = vrot.lane.b32.xlu0 %v5815, 64
        %v5857 = vpop.permute.xlu0 %5856
        %5858 = vrot.lane.b32.xlu0 %v5816, 64
        %v5859 = vpop.permute.xlu0 %5858
        %5863 = vrot.lane.b32.xlu0 %v5784, 96
        %v5864 = vpop.permute.xlu0 %5863
        %5865 = vrot.lane.b32.xlu0 %v5818, 96
        %v5866 = vpop.permute.xlu0 %5865
        %v5869 = vsel %vm4480, %v5779, %v5825
        %v5870 = vsel %vm4480, %v5780, %v5827
        %v5871 = vsel %vm4612, %v5869, %v5833
        %v5872 = vsel %vm4612, %v5870, %v5835
        %v5873 = vsel %vm5504, %v5871, %v5841
        %v5874 = vsel %vm5504, %v5872, %v5843
        %v5875 = vsel %vm4480, %v5758, %v5849
        %v5876 = vsel %vm4480, %v5763, %v5851
        %v5877 = vsel %vm4612, %v5875, %v5857
        %v5878 = vsel %vm4612, %v5876, %v5859
        %v5879 = vsel %vm5504, %v5877, %v5864
        %v5880 = vsel %vm5504, %v5878, %v5866
        %v5881 = vld [vmem:[%s15] sm:$0xff]
        %v5882 = vld [vmem:[%s15 + $0x8] sm:$0xff]
        %v5883 = vld [vmem:[%s15 + $0x10] sm:$0xff]
        %v5884 = vld [vmem:[%s15 + $0x18] sm:$0xff]
        %v5885 = vld [vmem:[%s15 + $0x20] sm:$0xff]
        %v5886 = vld [vmem:[%s15 + $0x28] sm:$0xff]
        %v5887 = vld [vmem:[%s15 + $0x30] sm:$0xff]
        %v5888 = vld [vmem:[%s15 + $0x38] sm:$0xff]
        %v5889 = vld [vmem:[%s15 + $0x40] sm:$0xff]
        %v5890 = vld [vmem:[%s15 + $0x48] sm:$0xff]
        %v5891 = vld [vmem:[%s15 + $0x50] sm:$0xff]
        %v5892 = vld [vmem:[%s15 + $0x58] sm:$0xff]
        %v5893 = vld [vmem:[%s15 + $0x60] sm:$0xff]
        %v5894 = vld [vmem:[%s15 + $0x68] sm:$0xff]
        %v5895 = vld [vmem:[%s15 + $0x70] sm:$0xff]
        %v5896 = vld [vmem:[%s15 + $0x78] sm:$0xff]
        %v5897 = vld [vmem:[%s15 + $0x80] sm:$0xff]
        %v5898 = vld [vmem:[%s15 + $0x88] sm:$0xff]
        %v5899 = vld [vmem:[%s15 + $0x90] sm:$0xff]
        %v5900 = vld [vmem:[%s15 + $0x98] sm:$0xff]
        %v5901 = vld [vmem:[%s15 + $0xa0] sm:$0xff]
        %v5902 = vld [vmem:[%s15 + $0xa8] sm:$0xff]
        %v5903 = vld [vmem:[%s15 + $0xb0] sm:$0xff]
        %v5904 = vld [vmem:[%s15 + $0xb8] sm:$0xff]
        %v5905 = vld [vmem:[%s15 + $0xc0] sm:$0xff]
        %v5906 = vld [vmem:[%s15 + $0xc8] sm:$0xff]
        %v5907 = vld [vmem:[%s15 + $0xd0] sm:$0xff]
        %v5908 = vld [vmem:[%s15 + $0xd8] sm:$0xff]
        %v5909 = vld [vmem:[%s15 + $0xe0] sm:$0xff]
        %v5910 = vld [vmem:[%s15 + $0xe8] sm:$0xff]
        %v5911 = vld [vmem:[%s15 + $0xf0] sm:$0xff]
        %v5912 = vld [vmem:[%s15 + $0xf8] sm:$0xff]
        %v5913 = vld [vmem:[%s15 + $0x100] sm:$0xff]
        %v5914 = vld [vmem:[%s15 + $0x108] sm:$0xff]
        %v5915 = vld [vmem:[%s15 + $0x110] sm:$0xff]
        %v5916 = vld [vmem:[%s15 + $0x118] sm:$0xff]
        %v5917 = vld [vmem:[%s17] sm:$0x1]
        %v5919 = vlaneseq
        %v5920 = vshrl.u32 %v5919, 7
        %v5921 = vsub.s32 0, %v5920
        %v5922 = vrot.slane %v5917, %v5921
        %v5925 = vsel %vm4480, %v5821, 0
        %v5928 = vsel %vm4480, %v5822, 0
        %5930 = vmatprep.subr.mxu0 0.0
        %5931 = vmatpush1.msra.mxu0 %v5881
        %5932 = vmatprep.subr.mxu0 0.0
        %5933 = vmatpush1.msra.mxu0 %v5882
        %5934 = vmatprep.subr.mxu0 0.0
        %5935 = vmatpush1.msra.mxu0 %v5883
        %5936 = vmatprep.subr.mxu0 0.0
        %5937 = vmatpush1.msra.mxu0 %v5884
        %5938 = vmatprep.subr.mxu0 0.0
        %5939 = vmatpush1.msra.mxu0 %v5885
        %5940 = vmatprep.subr.mxu0 0.0
        %5941 = vmatpush1.msra.mxu0 %v5886
        %5942 = vmatprep.subr.mxu0 0.0
        %5943 = vmatpush1.msra.mxu0 %v5887
        %5944 = vmatprep.subr.mxu0 0.0
        %5945 = vmatpush1.msra.mxu0 %v5888
        %5946 = vmatprep.subr.mxu0 0.0
        %5947 = vmatpush1.msra.mxu0 %v5889
        %5948 = vmatprep.subr.mxu0 0.0
        %5949 = vmatpush1.msra.mxu0 %v5890
        %5950 = vmatprep.subr.mxu0 0.0
        %5951 = vmatpush1.msra.mxu0 %v5891
        %5952 = vmatprep.subr.mxu0 0.0
        %5953 = vmatpush1.msra.mxu0 %v5892
        %5954 = vmatprep.subr.mxu0 0.0
        %5955 = vmatpush1.msra.mxu0 %v5893
        %5956 = vmatprep.subr.mxu0 0.0
        %5957 = vmatpush1.msra.mxu0 %v5894
        %5958 = vmatprep.subr.mxu0 0.0
        %5959 = vmatpush1.msra.mxu0 %v5895
        %5960 = vmatprep.subr.mxu0 0.0
        %5961 = vmatpush1.msra.mxu0 %v5896
        %5962 = vmatprep.subr.mxu0 0.0
        %5963 = vmatpush1.msra.mxu0 %v5897
        %5964 = vmatprep.subr.mxu0 0.0
        %5965 = vmatpush1.msra.mxu0 %v5898
        %5966 = vmatprep.subr.mxu0 0.0
        %5967 = vmatpush1.msra.mxu0 %v5899
        %5968 = vmatprep.subr.mxu0 0.0
        %5969 = vmatpush1.msra.mxu0 %v5900
        %5970 = vmatprep.subr.mxu0 0.0
        %5971 = vmatpush1.msra.mxu0 %v5901
        %5972 = vmatprep.subr.mxu0 0.0
        %5973 = vmatpush1.msra.mxu0 %v5902
        %5974 = vmatprep.subr.mxu0 0.0
        %5975 = vmatpush1.msra.mxu0 %v5903
        %5976 = vmatprep.subr.mxu0 0.0
        %5977 = vmatpush1.msra.mxu0 %v5904
        %5978 = vmatprep.subr.mxu0 0.0
        %5979 = vmatpush1.msra.mxu0 %v5905
        %5980 = vmatprep.subr.mxu0 0.0
        %5981 = vmatpush1.msra.mxu0 %v5906
        %5982 = vmatprep.subr.mxu0 0.0
        %5983 = vmatpush1.msra.mxu0 %v5907
        %5984 = vmatprep.subr.mxu0 0.0
        %5985 = vmatpush1.msra.mxu0 %v5908
        %5986 = vmatprep.subr.mxu0 0.0
        %5987 = vmatpush1.msra.mxu0 %v5909
        %5988 = vmatprep.subr.mxu0 0.0
        %5989 = vmatpush1.msra.mxu0 %v5910
        %5990 = vmatprep.subr.mxu0 0.0
        %5991 = vmatpush1.msra.mxu0 %v5911
        %5992 = vmatprep.subr.mxu0 0.0
        %5993 = vmatpush1.msra.mxu0 %v5912
        %5994 = vmatprep.mubr.f32.mxu0 %v5879
        %5995 = vmatmul.mubr.f32.gmra.mrb[0].mxu0 %v5873
        %v5996 = vpop.f32.mrb[0].mxu0
        %v5997 = vadd.f32 %v5922, %v5996
        %v5998 = vpop.f32.mrb[0].mxu0
        %5999 = vmatprep.mubr.f32.mxu0 %v5880
        %6000 = vmatmul.mubr.f32.gmra.mrb[0].mxu0 %v5874
        %v6001 = vpop.f32.mrb[0].mxu0
        %v6002 = vadd.f32 %v5922, %v6001
        %v6003 = vpop.f32.mrb[0].mxu0
        %6004 = vdwg.mxu0
        %6005 = vmatprep.subr.mxu0 0.0
        %6006 = vmatpush1.msra.mxu0 %v5913
        %6007 = vmatprep.subr.mxu0 0.0
        %6008 = vmatpush1.msra.mxu0 %v5914
        %6009 = vmatprep.subr.mxu0 0.0
        %6010 = vmatpush1.msra.mxu0 %v5915
        %6011 = vmatprep.subr.mxu0 0.0
        %6012 = vmatpush1.msra.mxu0 %v5916
        %6013 = vmatprep.subr.mxu0 0.0
        %6014 = vmatpush1.msra.mxu0 0.0
        %6015 = vmatprep.subr.mxu0 0.0
        %6016 = vmatpush1.msra.mxu0 0.0
        %6017 = vmatprep.subr.mxu0 0.0
        %6018 = vmatpush1.msra.mxu0 0.0
        %6019 = vmatprep.subr.mxu0 0.0
        %6020 = vmatpush1.msra.mxu0 0.0
        %6021 = vmatprep.subr.mxu0 0.0
        %6022 = vmatpush1.msra.mxu0 0.0
        %6023 = vmatprep.subr.mxu0 0.0
        %6024 = vmatpush1.msra.mxu0 0.0
        %6025 = vmatprep.subr.mxu0 0.0
        %6026 = vmatpush1.msra.mxu0 0.0
        %6027 = vmatprep.subr.mxu0 0.0
        %6028 = vmatpush1.msra.mxu0 0.0
        %6029 = vmatprep.subr.mxu0 0.0
        %6030 = vmatpush1.msra.mxu0 0.0
        %6031 = vmatprep.subr.mxu0 0.0
        %6032 = vmatpush1.msra.mxu0 0.0
        %6033 = vmatprep.subr.mxu0 0.0
        %6034 = vmatpush1.msra.mxu0 0.0
        %6035 = vmatprep.subr.mxu0 0.0
        %6036 = vmatpush1.msra.mxu0 0.0
        %6037 = vmatprep.subr.mxu0 0.0
        %6038 = vmatpush1.msra.mxu0 0.0
        %6039 = vmatprep.subr.mxu0 0.0
        %6040 = vmatpush1.msra.mxu0 0.0
        %6041 = vmatprep.subr.mxu0 0.0
        %6042 = vmatpush1.msra.mxu0 0.0
        %6043 = vmatprep.subr.mxu0 0.0
        %6044 = vmatpush1.msra.mxu0 0.0
        %6045 = vmatprep.subr.mxu0 0.0
        %6046 = vmatpush1.msra.mxu0 0.0
        %6047 = vmatprep.subr.mxu0 0.0
        %6048 = vmatpush1.msra.mxu0 0.0
        %6049 = vmatprep.subr.mxu0 0.0
        %6050 = vmatpush1.msra.mxu0 0.0
        %6051 = vmatprep.subr.mxu0 0.0
        %6052 = vmatpush1.msra.mxu0 0.0
        %6053 = vmatprep.subr.mxu0 0.0
        %6054 = vmatpush1.msra.mxu0 0.0
        %6055 = vmatprep.subr.mxu0 0.0
        %6056 = vmatpush1.msra.mxu0 0.0
        %6057 = vmatprep.subr.mxu0 0.0
        %6058 = vmatpush1.msra.mxu0 0.0
        %6059 = vmatprep.subr.mxu0 0.0
        %6060 = vmatpush1.msra.mxu0 0.0
        %6061 = vmatprep.subr.mxu0 0.0
        %6062 = vmatpush1.msra.mxu0 0.0
        %6063 = vmatprep.subr.mxu0 0.0
        %6064 = vmatpush1.msra.mxu0 0.0
        %6065 = vmatprep.subr.mxu0 0.0
        %6066 = vmatpush1.msra.mxu0 0.0
        %6067 = vmatprep.subr.mxu0 0.0
        %6068 = vmatpush1.msra.mxu0 0.0
        %6069 = vmatprep.mubr.f32.mxu0 0.0
        %6070 = vmatmul.mubr.f32.gmra.mrb[0].mxu0 %v5925
        %v6071 = vpop.f32.mrb[0].mxu0
        %v6072 = vadd.f32 %v5997, %v6071
        %v6073 = vpop.f32.mrb[0].mxu0
        %6074 = vmatprep.mubr.f32.mxu0 0.0
        %6075 = vmatmul.mubr.f32.gmra.mrb[0].mxu0 %v5928
        %v6076 = vpop.f32.mrb[0].mxu0
        %v6077 = vadd.f32 %v6002, %v6076
        %v6078 = vpop.f32.mrb[0].mxu0
        %6079 = vdwg.mxu0
        %v6080 = vmax.f32 %v6072, 0.0
        %v6081 = vmax.f32 %v6077, 0.0
        %v6082 = vld [vmem:[%s55] sm:$0xf]
        %v6084 = vsel %vm4415, %v6082, 0
        %6086 = vmatprep.subr.mxu0 0.0
        %6087 = vmatpush1.msra.mxu0 %v6080
        %6088 = vmatprep.subr.mxu0 0.0
        %6089 = vmatpush1.msra.mxu0 %v6081
        %6090 = vmatprep.subr.mxu0 0.0
        %6091 = vmatpush1.msra.mxu0 0.0
        %6092 = vmatprep.subr.mxu0 0.0
        %6093 = vmatpush1.msra.mxu0 0.0
        %6094 = vmatprep.subr.mxu0 0.0
        %6095 = vmatpush1.msra.mxu0 0.0
        %6096 = vmatprep.subr.mxu0 0.0
        %6097 = vmatpush1.msra.mxu0 0.0
        %6098 = vmatprep.subr.mxu0 0.0
        %6099 = vmatpush1.msra.mxu0 0.0
        %6100 = vmatprep.subr.mxu0 0.0
        %6101 = vmatpush1.msra.mxu0 0.0
        %6102 = vmatprep.subr.mxu0 0.0
        %6103 = vmatpush1.msra.mxu0 0.0
        %6104 = vmatprep.subr.mxu0 0.0
        %6105 = vmatpush1.msra.mxu0 0.0
        %6106 = vmatprep.subr.mxu0 0.0
        %6107 = vmatpush1.msra.mxu0 0.0
        %6108 = vmatprep.subr.mxu0 0.0
        %6109 = vmatpush1.msra.mxu0 0.0
        %6110 = vmatprep.subr.mxu0 0.0
        %6111 = vmatpush1.msra.mxu0 0.0
        %6112 = vmatprep.subr.mxu0 0.0
        %6113 = vmatpush1.msra.mxu0 0.0
        %6114 = vmatprep.subr.mxu0 0.0
        %6115 = vmatpush1.msra.mxu0 0.0
        %6116 = vmatprep.subr.mxu0 0.0
        %6117 = vmatpush1.msra.mxu0 0.0
        %6118 = vmatprep.subr.mxu0 0.0
        %6119 = vmatpush1.msra.mxu0 0.0
        %6120 = vmatprep.subr.mxu0 0.0
        %6121 = vmatpush1.msra.mxu0 0.0
        %6122 = vmatprep.subr.mxu0 0.0
        %6123 = vmatpush1.msra.mxu0 0.0
        %6124 = vmatprep.subr.mxu0 0.0
        %6125 = vmatpush1.msra.mxu0 0.0
        %6126 = vmatprep.subr.mxu0 0.0
        %6127 = vmatpush1.msra.mxu0 0.0
        %6128 = vmatprep.subr.mxu0 0.0
        %6129 = vmatpush1.msra.mxu0 0.0
        %6130 = vmatprep.subr.mxu0 0.0
        %6131 = vmatpush1.msra.mxu0 0.0
        %6132 = vmatprep.subr.mxu0 0.0
        %6133 = vmatpush1.msra.mxu0 0.0
        %6134 = vmatprep.subr.mxu0 0.0
        %6135 = vmatpush1.msra.mxu0 0.0
        %6136 = vmatprep.subr.mxu0 0.0
        %6137 = vmatpush1.msra.mxu0 0.0
        %6138 = vmatprep.subr.mxu0 0.0
        %6139 = vmatpush1.msra.mxu0 0.0
        %6140 = vmatprep.subr.mxu0 0.0
        %6141 = vmatpush1.msra.mxu0 0.0
        %6142 = vmatprep.subr.mxu0 0.0
        %6143 = vmatpush1.msra.mxu0 0.0
        %6144 = vmatprep.subr.mxu0 0.0
        %6145 = vmatpush1.msra.mxu0 0.0
        %6146 = vmatprep.subr.mxu0 0.0
        %6147 = vmatpush1.msra.mxu0 0.0
        %6148 = vmatprep.subr.mxu0 0.0
        %6149 = vmatpush1.msra.mxu0 0.0
        %6150 = vmatprep.mubr.f32.mxu0 0.0
        %6151 = vmatmul.mubr.f32.gmra.mrb[0].mxu0 %v6084
        %v6152 = vpop.f32.mrb[0].mxu0
        %v6153 = vadd.f32 0.0, %v6152
        %v6154 = vpop.f32.mrb[0].mxu0
        %6155 = vdwg.mxu0
        %v6156 = vand.u32 %v962, 1
        %v6158 = vrot.slane %v6153, 5
        %v6160 = vsel %vm2793, 0.0, %v6158
        %vm6161 = vcmp.eq.s32.totalorder %v6156, 0
        %v6162 = vsel %vm6161, 0.0, %v6160
        %v6163 = vrot.slane %v6153, 6
        %vm6165 = vcmask 1041408
        %v6166 = vsel %vm6165, 0.0, %v6163
        %v6167 = vrot.slane %v6153, 7
        %v6169 = vsel %vm1056, 0.0, %v6167
        %vm6170 = vcmp.eq.s32.totalorder %v6156, 1
        %v6171 = vsel %vm6170, 0.0, %v6169
        %v6172 = vsel %vm6161, 0.0, %v6169
        %v6173 = vrot.slane %v6153, 1
        %v6175 = vsel %vm2793, %v6173, 0.0
        %v6176 = vsel %vm6170, 0.0, %v6175
        %v6177 = vsel %vm6161, 0.0, %v6175
        %v6178 = vrot.slane %v6153, 2
        %v6180 = vsel %vm6165, %v6178, 0.0
        %v6181 = vrot.slane %v6153, 3
        %v6183 = vsel %vm1056, %v6181, 0.0
        %v6184 = vsel %vm6170, 0.0, %v6183
        %6186 = vrot.lane.b32.xlu0 %v6166, 64
        %v6187 = vpop.permute.xlu0 %6186
        %6190 = vrot.lane.b32.xlu0 %v6172, 64
        %v6191 = vpop.permute.xlu0 %6190
        %6194 = vrot.lane.b32.xlu0 %v6176, 64
        %v6195 = vpop.permute.xlu0 %6194
        %6198 = vrot.lane.b32.xlu0 %v6180, 64
        %v6199 = vpop.permute.xlu0 %6198
        %v6201 = vsel %vm4612, %v6162, %v6187
        %v6202 = vsel %vm4612, %v6171, %v6191
        %v6203 = vsel %vm4612, %v6153, %v6195
        %v6204 = vsel %vm4612, %v6177, %v6199
        %v6205 = vld [vmem:[%s19] sm:$0xff]
        %v6206 = vld [vmem:[%s19 + $0x8] sm:$0xff]
        %v6207 = vld [vmem:[%s19 + $0x10] sm:$0xff]
        %v6208 = vld [vmem:[%s19 + $0x18] sm:$0xff]
        %v6209 = vld [vmem:[%s19 + $0x20] sm:$0xff]
        %v6210 = vld [vmem:[%s19 + $0x28] sm:$0xff]
        %v6211 = vld [vmem:[%s19 + $0x30] sm:$0xff]
        %v6212 = vld [vmem:[%s19 + $0x38] sm:$0xff]
        %v6213 = vld [vmem:[%s19 + $0x40] sm:$0xff]
        %v6214 = vld [vmem:[%s19 + $0x48] sm:$0xff]
        %v6215 = vld [vmem:[%s19 + $0x50] sm:$0xff]
        %v6216 = vld [vmem:[%s19 + $0x58] sm:$0xff]
        %v6217 = vld [vmem:[%s19 + $0x60] sm:$0xff]
        %v6218 = vld [vmem:[%s19 + $0x68] sm:$0xff]
        %v6219 = vld [vmem:[%s19 + $0x70] sm:$0xff]
        %v6220 = vld [vmem:[%s19 + $0x78] sm:$0xff]
        %v6221 = vld [vmem:[%s19 + $0x80] sm:$0xff]
        %v6222 = vld [vmem:[%s19 + $0x88] sm:$0xff]
        %v6223 = vld [vmem:[%s19 + $0x90] sm:$0xff]
        %v6224 = vld [vmem:[%s19 + $0x98] sm:$0xff]
        %v6225 = vld [vmem:[%s19 + $0xa0] sm:$0xff]
        %v6226 = vld [vmem:[%s19 + $0xa8] sm:$0xff]
        %v6227 = vld [vmem:[%s19 + $0xb0] sm:$0xff]
        %v6228 = vld [vmem:[%s19 + $0xb8] sm:$0xff]
        %v6229 = vld [vmem:[%s19 + $0xc0] sm:$0xff]
        %v6230 = vld [vmem:[%s19 + $0xc8] sm:$0xff]
        %v6231 = vld [vmem:[%s19 + $0xd0] sm:$0xff]
        %v6232 = vld [vmem:[%s19 + $0xd8] sm:$0xff]
        %v6233 = vld [vmem:[%s19 + $0xe0] sm:$0xff]
        %v6234 = vld [vmem:[%s19 + $0xe8] sm:$0xff]
        %v6235 = vld [vmem:[%s19 + $0xf0] sm:$0xff]
        %v6236 = vld [vmem:[%s19 + $0xf8] sm:$0xff]
        %v6237 = vld [vmem:[%s19 + $0x100] sm:$0xff]
        %v6238 = vld [vmem:[%s19 + $0x108] sm:$0xff]
        %v6239 = vld [vmem:[%s19 + $0x110] sm:$0xff]
        %v6240 = vld [vmem:[%s19 + $0x118] sm:$0xff]
        %v6241 = vld [vmem:[%s19 + $0x120] sm:$0xff]
        %v6242 = vld [vmem:[%s19 + $0x128] sm:$0xff]
        %v6243 = vld [vmem:[%s19 + $0x130] sm:$0xff]
        %v6244 = vld [vmem:[%s19 + $0x138] sm:$0xff]
        %v6245 = vld [vmem:[%s19 + $0x140] sm:$0xff]
        %v6246 = vld [vmem:[%s19 + $0x148] sm:$0xff]
        %v6247 = vld [vmem:[%s19 + $0x150] sm:$0xff]
        %v6248 = vld [vmem:[%s19 + $0x158] sm:$0xff]
        %v6249 = vld [vmem:[%s19 + $0x160] sm:$0xff]
        %v6250 = vld [vmem:[%s19 + $0x168] sm:$0xff]
        %v6251 = vld [vmem:[%s19 + $0x170] sm:$0xff]
        %v6252 = vld [vmem:[%s19 + $0x178] sm:$0xff]
        %v6253 = vld [vmem:[%s19 + $0x180] sm:$0xff]
        %v6254 = vld [vmem:[%s19 + $0x188] sm:$0xff]
        %v6255 = vld [vmem:[%s19 + $0x190] sm:$0xff]
        %v6256 = vld [vmem:[%s19 + $0x198] sm:$0xff]
        %v6257 = vld [vmem:[%s19 + $0x1a0] sm:$0xff]
        %v6258 = vld [vmem:[%s19 + $0x1a8] sm:$0xff]
        %v6259 = vld [vmem:[%s19 + $0x1b0] sm:$0xff]
        %v6260 = vld [vmem:[%s19 + $0x1b8] sm:$0xff]
        %v6261 = vld [vmem:[%s19 + $0x1c0] sm:$0xff]
        %v6262 = vld [vmem:[%s19 + $0x1c8] sm:$0xff]
        %v6263 = vld [vmem:[%s19 + $0x1d0] sm:$0xff]
        %v6264 = vld [vmem:[%s19 + $0x1d8] sm:$0xff]
        %v6265 = vld [vmem:[%s19 + $0x1e0] sm:$0xff]
        %v6266 = vld [vmem:[%s19 + $0x1e8] sm:$0xff]
        %v6267 = vld [vmem:[%s19 + $0x1f0] sm:$0xff]
        %v6268 = vld [vmem:[%s19 + $0x1f8] sm:$0xff]
        %v6269 = vld [vmem:[%s19 + $0x200] sm:$0xff]
        %v6270 = vld [vmem:[%s19 + $0x208] sm:$0xff]
        %v6271 = vld [vmem:[%s19 + $0x210] sm:$0xff]
        %v6272 = vld [vmem:[%s19 + $0x218] sm:$0xff]
        %v6273 = vld [vmem:[%s19 + $0x220] sm:$0xff]
        %v6274 = vld [vmem:[%s19 + $0x228] sm:$0xff]
        %v6275 = vld [vmem:[%s19 + $0x230] sm:$0xff]
        %v6276 = vld [vmem:[%s19 + $0x238] sm:$0xff]
        %v6277 = vld [vmem:[%s21] sm:$0x1]
        %v6279 = vlaneseq
        %v6280 = vshrl.u32 %v6279, 7
        %v6281 = vsub.s32 0, %v6280
        %v6282 = vrot.slane %v6277, %v6281
        %v6285 = vsel %vm4612, %v6184, 0
        %6287 = vmatprep.subr.mxu0 0.0
        %6288 = vmatpush1.msra.mxu0 %v6205
        %6289 = vmatprep.subr.mxu0 0.0
        %6290 = vmatpush1.msra.mxu0 %v6206
        %6291 = vmatprep.subr.mxu0 0.0
        %6292 = vmatpush1.msra.mxu0 %v6207
        %6293 = vmatprep.subr.mxu0 0.0
        %6294 = vmatpush1.msra.mxu0 %v6208
        %6295 = vmatprep.subr.mxu0 0.0
        %6296 = vmatpush1.msra.mxu0 %v6209
        %6297 = vmatprep.subr.mxu0 0.0
        %6298 = vmatpush1.msra.mxu0 %v6210
        %6299 = vmatprep.subr.mxu0 0.0
        %6300 = vmatpush1.msra.mxu0 %v6211
        %6301 = vmatprep.subr.mxu0 0.0
        %6302 = vmatpush1.msra.mxu0 %v6212
        %6303 = vmatprep.subr.mxu0 0.0
        %6304 = vmatpush1.msra.mxu0 %v6213
        %6305 = vmatprep.subr.mxu0 0.0
        %6306 = vmatpush1.msra.mxu0 %v6214
        %6307 = vmatprep.subr.mxu0 0.0
        %6308 = vmatpush1.msra.mxu0 %v6215
        %6309 = vmatprep.subr.mxu0 0.0
        %6310 = vmatpush1.msra.mxu0 %v6216
        %6311 = vmatprep.subr.mxu0 0.0
        %6312 = vmatpush1.msra.mxu0 %v6217
        %6313 = vmatprep.subr.mxu0 0.0
        %6314 = vmatpush1.msra.mxu0 %v6218
        %6315 = vmatprep.subr.mxu0 0.0
        %6316 = vmatpush1.msra.mxu0 %v6219
        %6317 = vmatprep.subr.mxu0 0.0
        %6318 = vmatpush1.msra.mxu0 %v6220
        %6319 = vmatprep.subr.mxu0 0.0
        %6320 = vmatpush1.msra.mxu0 %v6221
        %6321 = vmatprep.subr.mxu0 0.0
        %6322 = vmatpush1.msra.mxu0 %v6222
        %6323 = vmatprep.subr.mxu0 0.0
        %6324 = vmatpush1.msra.mxu0 %v6223
        %6325 = vmatprep.subr.mxu0 0.0
        %6326 = vmatpush1.msra.mxu0 %v6224
        %6327 = vmatprep.subr.mxu0 0.0
        %6328 = vmatpush1.msra.mxu0 %v6225
        %6329 = vmatprep.subr.mxu0 0.0
        %6330 = vmatpush1.msra.mxu0 %v6226
        %6331 = vmatprep.subr.mxu0 0.0
        %6332 = vmatpush1.msra.mxu0 %v6227
        %6333 = vmatprep.subr.mxu0 0.0
        %6334 = vmatpush1.msra.mxu0 %v6228
        %6335 = vmatprep.subr.mxu0 0.0
        %6336 = vmatpush1.msra.mxu0 %v6229
        %6337 = vmatprep.subr.mxu0 0.0
        %6338 = vmatpush1.msra.mxu0 %v6230
        %6339 = vmatprep.subr.mxu0 0.0
        %6340 = vmatpush1.msra.mxu0 %v6231
        %6341 = vmatprep.subr.mxu0 0.0
        %6342 = vmatpush1.msra.mxu0 %v6232
        %6343 = vmatprep.subr.mxu0 0.0
        %6344 = vmatpush1.msra.mxu0 %v6233
        %6345 = vmatprep.subr.mxu0 0.0
        %6346 = vmatpush1.msra.mxu0 %v6234
        %6347 = vmatprep.subr.mxu0 0.0
        %6348 = vmatpush1.msra.mxu0 %v6235
        %6349 = vmatprep.subr.mxu0 0.0
        %6350 = vmatpush1.msra.mxu0 %v6236
        %6351 = vmatprep.mubr.f32.mxu0 %v6202
        %6352 = vmatmul.mubr.f32.gmra.mrb[0].mxu0 %v6201
        %v6353 = vpop.f32.mrb[0].mxu0
        %v6354 = vadd.f32 %v6282, %v6353
        %v6355 = vpop.f32.mrb[0].mxu0
        %6356 = vdwg.mxu0
        %6357 = vmatprep.subr.mxu0 0.0
        %6358 = vmatpush1.msra.mxu0 %v6237
        %6359 = vmatprep.subr.mxu0 0.0
        %6360 = vmatpush1.msra.mxu0 %v6238
        %6361 = vmatprep.subr.mxu0 0.0
        %6362 = vmatpush1.msra.mxu0 %v6239
        %6363 = vmatprep.subr.mxu0 0.0
        %6364 = vmatpush1.msra.mxu0 %v6240
        %6365 = vmatprep.subr.mxu0 0.0
        %6366 = vmatpush1.msra.mxu0 %v6241
        %6367 = vmatprep.subr.mxu0 0.0
        %6368 = vmatpush1.msra.mxu0 %v6242
        %6369 = vmatprep.subr.mxu0 0.0
        %6370 = vmatpush1.msra.mxu0 %v6243
        %6371 = vmatprep.subr.mxu0 0.0
        %6372 = vmatpush1.msra.mxu0 %v6244
        %6373 = vmatprep.subr.mxu0 0.0
        %6374 = vmatpush1.msra.mxu0 %v6245
        %6375 = vmatprep.subr.mxu0 0.0
        %6376 = vmatpush1.msra.mxu0 %v6246
        %6377 = vmatprep.subr.mxu0 0.0
        %6378 = vmatpush1.msra.mxu0 %v6247
        %6379 = vmatprep.subr.mxu0 0.0
        %6380 = vmatpush1.msra.mxu0 %v6248
        %6381 = vmatprep.subr.mxu0 0.0
        %6382 = vmatpush1.msra.mxu0 %v6249
        %6383 = vmatprep.subr.mxu0 0.0
        %6384 = vmatpush1.msra.mxu0 %v6250
        %6385 = vmatprep.subr.mxu0 0.0
        %6386 = vmatpush1.msra.mxu0 %v6251
        %6387 = vmatprep.subr.mxu0 0.0
        %6388 = vmatpush1.msra.mxu0 %v6252
        %6389 = vmatprep.subr.mxu0 0.0
        %6390 = vmatpush1.msra.mxu0 %v6253
        %6391 = vmatprep.subr.mxu0 0.0
        %6392 = vmatpush1.msra.mxu0 %v6254
        %6393 = vmatprep.subr.mxu0 0.0
        %6394 = vmatpush1.msra.mxu0 %v6255
        %6395 = vmatprep.subr.mxu0 0.0
        %6396 = vmatpush1.msra.mxu0 %v6256
        %6397 = vmatprep.subr.mxu0 0.0
        %6398 = vmatpush1.msra.mxu0 %v6257
        %6399 = vmatprep.subr.mxu0 0.0
        %6400 = vmatpush1.msra.mxu0 %v6258
        %6401 = vmatprep.subr.mxu0 0.0
        %6402 = vmatpush1.msra.mxu0 %v6259
        %6403 = vmatprep.subr.mxu0 0.0
        %6404 = vmatpush1.msra.mxu0 %v6260
        %6405 = vmatprep.subr.mxu0 0.0
        %6406 = vmatpush1.msra.mxu0 %v6261
        %6407 = vmatprep.subr.mxu0 0.0
        %6408 = vmatpush1.msra.mxu0 %v6262
        %6409 = vmatprep.subr.mxu0 0.0
        %6410 = vmatpush1.msra.mxu0 %v6263
        %6411 = vmatprep.subr.mxu0 0.0
        %6412 = vmatpush1.msra.mxu0 %v6264
        %6413 = vmatprep.subr.mxu0 0.0
        %6414 = vmatpush1.msra.mxu0 %v6265
        %6415 = vmatprep.subr.mxu0 0.0
        %6416 = vmatpush1.msra.mxu0 %v6266
        %6417 = vmatprep.subr.mxu0 0.0
        %6418 = vmatpush1.msra.mxu0 %v6267
        %6419 = vmatprep.subr.mxu0 0.0
        %6420 = vmatpush1.msra.mxu0 %v6268
        %6421 = vmatprep.mubr.f32.mxu0 %v6204
        %6422 = vmatmul.mubr.f32.gmra.mrb[0].mxu0 %v6203
        %v6423 = vpop.f32.mrb[0].mxu0
        %v6424 = vadd.f32 %v6354, %v6423
        %v6425 = vpop.f32.mrb[0].mxu0
        %6426 = vdwg.mxu0
        %6427 = vmatprep.subr.mxu0 0.0
        %6428 = vmatpush1.msra.mxu0 %v6269
        %6429 = vmatprep.subr.mxu0 0.0
        %6430 = vmatpush1.msra.mxu0 %v6270
        %6431 = vmatprep.subr.mxu0 0.0
        %6432 = vmatpush1.msra.mxu0 %v6271
        %6433 = vmatprep.subr.mxu0 0.0
        %6434 = vmatpush1.msra.mxu0 %v6272
        %6435 = vmatprep.subr.mxu0 0.0
        %6436 = vmatpush1.msra.mxu0 %v6273
        %6437 = vmatprep.subr.mxu0 0.0
        %6438 = vmatpush1.msra.mxu0 %v6274
        %6439 = vmatprep.subr.mxu0 0.0
        %6440 = vmatpush1.msra.mxu0 %v6275
        %6441 = vmatprep.subr.mxu0 0.0
        %6442 = vmatpush1.msra.mxu0 %v6276
        %6443 = vmatprep.subr.mxu0 0.0
        %6444 = vmatpush1.msra.mxu0 0.0
        %6445 = vmatprep.subr.mxu0 0.0
        %6446 = vmatpush1.msra.mxu0 0.0
        %6447 = vmatprep.subr.mxu0 0.0
        %6448 = vmatpush1.msra.mxu0 0.0
        %6449 = vmatprep.subr.mxu0 0.0
        %6450 = vmatpush1.msra.mxu0 0.0
        %6451 = vmatprep.subr.mxu0 0.0
        %6452 = vmatpush1.msra.mxu0 0.0
        %6453 = vmatprep.subr.mxu0 0.0
        %6454 = vmatpush1.msra.mxu0 0.0
        %6455 = vmatprep.subr.mxu0 0.0
        %6456 = vmatpush1.msra.mxu0 0.0
        %6457 = vmatprep.subr.mxu0 0.0
        %6458 = vmatpush1.msra.mxu0 0.0
        %6459 = vmatprep.subr.mxu0 0.0
        %6460 = vmatpush1.msra.mxu0 0.0
        %6461 = vmatprep.subr.mxu0 0.0
        %6462 = vmatpush1.msra.mxu0 0.0
        %6463 = vmatprep.subr.mxu0 0.0
        %6464 = vmatpush1.msra.mxu0 0.0
        %6465 = vmatprep.subr.mxu0 0.0
        %6466 = vmatpush1.msra.mxu0 0.0
        %6467 = vmatprep.subr.mxu0 0.0
        %6468 = vmatpush1.msra.mxu0 0.0
        %6469 = vmatprep.subr.mxu0 0.0
        %6470 = vmatpush1.msra.mxu0 0.0
        %6471 = vmatprep.subr.mxu0 0.0
        %6472 = vmatpush1.msra.mxu0 0.0
        %6473 = vmatprep.subr.mxu0 0.0
        %6474 = vmatpush1.msra.mxu0 0.0
        %6475 = vmatprep.subr.mxu0 0.0
        %6476 = vmatpush1.msra.mxu0 0.0
        %6477 = vmatprep.subr.mxu0 0.0
        %6478 = vmatpush1.msra.mxu0 0.0
        %6479 = vmatprep.subr.mxu0 0.0
        %6480 = vmatpush1.msra.mxu0 0.0
        %6481 = vmatprep.subr.mxu0 0.0
        %6482 = vmatpush1.msra.mxu0 0.0
        %6483 = vmatprep.subr.mxu0 0.0
        %6484 = vmatpush1.msra.mxu0 0.0
        %6485 = vmatprep.subr.mxu0 0.0
        %6486 = vmatpush1.msra.mxu0 0.0
        %6487 = vmatprep.subr.mxu0 0.0
        %6488 = vmatpush1.msra.mxu0 0.0
        %6489 = vmatprep.subr.mxu0 0.0
        %6490 = vmatpush1.msra.mxu0 0.0
        %6491 = vmatprep.mubr.f32.mxu0 0.0
        %6492 = vmatmul.mubr.f32.gmra.mrb[0].mxu0 %v6285
        %v6493 = vpop.f32.mrb[0].mxu0
        %v6494 = vadd.f32 %v6424, %v6493
        %v6495 = vpop.f32.mrb[0].mxu0
        %6496 = vdwg.mxu0
        %v6497 = vmax.f32 %v6494, 0.0
        %v6498 = vld [vmem:[%s57] sm:$0xff]
        %v6499 = vld [vmem:[%s57 + $0x8] sm:$0xff]
        %vm6500 = vcmask 31744
        %v6502 = vsel %vm6500, %v6498, 0
        %v6505 = vsel %vm6500, %v6499, 0
        %v6508 = vsel %vm5781, %v6497, 0
        %6510 = vmatprep.subr.mxu0 0.0
        %6511 = vmatpush1.msra.mxu0 %v6508
        %6512 = vmatprep.subr.mxu0 0.0
        %6513 = vmatpush1.msra.mxu0 0.0
        %6514 = vmatprep.subr.mxu0 0.0
        %6515 = vmatpush1.msra.mxu0 0.0
        %6516 = vmatprep.subr.mxu0 0.0
        %6517 = vmatpush1.msra.mxu0 0.0
        %6518 = vmatprep.subr.mxu0 0.0
        %6519 = vmatpush1.msra.mxu0 0.0
        %6520 = vmatprep.subr.mxu0 0.0
        %6521 = vmatpush1.msra.mxu0 0.0
        %6522 = vmatprep.subr.mxu0 0.0
        %6523 = vmatpush1.msra.mxu0 0.0
        %6524 = vmatprep.subr.mxu0 0.0
        %6525 = vmatpush1.msra.mxu0 0.0
        %6526 = vmatprep.subr.mxu0 0.0
        %6527 = vmatpush1.msra.mxu0 0.0
        %6528 = vmatprep.subr.mxu0 0.0
        %6529 = vmatpush1.msra.mxu0 0.0
        %6530 = vmatprep.subr.mxu0 0.0
        %6531 = vmatpush1.msra.mxu0 0.0
        %6532 = vmatprep.subr.mxu0 0.0
        %6533 = vmatpush1.msra.mxu0 0.0
        %6534 = vmatprep.subr.mxu0 0.0
        %6535 = vmatpush1.msra.mxu0 0.0
        %6536 = vmatprep.subr.mxu0 0.0
        %6537 = vmatpush1.msra.mxu0 0.0
        %6538 = vmatprep.subr.mxu0 0.0
        %6539 = vmatpush1.msra.mxu0 0.0
        %6540 = vmatprep.subr.mxu0 0.0
        %6541 = vmatpush1.msra.mxu0 0.0
        %6542 = vmatprep.subr.mxu0 0.0
        %6543 = vmatpush1.msra.mxu0 0.0
        %6544 = vmatprep.subr.mxu0 0.0
        %6545 = vmatpush1.msra.mxu0 0.0
        %6546 = vmatprep.subr.mxu0 0.0
        %6547 = vmatpush1.msra.mxu0 0.0
        %6548 = vmatprep.subr.mxu0 0.0
        %6549 = vmatpush1.msra.mxu0 0.0
        %6550 = vmatprep.subr.mxu0 0.0
        %6551 = vmatpush1.msra.mxu0 0.0
        %6552 = vmatprep.subr.mxu0 0.0
        %6553 = vmatpush1.msra.mxu0 0.0
        %6554 = vmatprep.subr.mxu0 0.0
        %6555 = vmatpush1.msra.mxu0 0.0
        %6556 = vmatprep.subr.mxu0 0.0
        %6557 = vmatpush1.msra.mxu0 0.0
        %6558 = vmatprep.subr.mxu0 0.0
        %6559 = vmatpush1.msra.mxu0 0.0
        %6560 = vmatprep.subr.mxu0 0.0
        %6561 = vmatpush1.msra.mxu0 0.0
        %6562 = vmatprep.subr.mxu0 0.0
        %6563 = vmatpush1.msra.mxu0 0.0
        %6564 = vmatprep.subr.mxu0 0.0
        %6565 = vmatpush1.msra.mxu0 0.0
        %6566 = vmatprep.subr.mxu0 0.0
        %6567 = vmatpush1.msra.mxu0 0.0
        %6568 = vmatprep.subr.mxu0 0.0
        %6569 = vmatpush1.msra.mxu0 0.0
        %6570 = vmatprep.subr.mxu0 0.0
        %6571 = vmatpush1.msra.mxu0 0.0
        %6572 = vmatprep.subr.mxu0 0.0
        %6573 = vmatpush1.msra.mxu0 0.0
        %6574 = vmatprep.mubr.f32.mxu0 0.0
        %6575 = vmatmul.mubr.f32.gmra.mrb[0].mxu0 %v6502
        %v6576 = vpop.f32.mrb[0].mxu0
        %v6577 = vadd.f32 %v5758, %v6576
        %v6578 = vpop.f32.mrb[0].mxu0
        %6579 = vmatprep.mubr.f32.mxu0 0.0
        %6580 = vmatmul.mubr.f32.gmra.mrb[0].mxu0 %v6505
        %v6581 = vpop.f32.mrb[0].mxu0
        %v6582 = vadd.f32 %v5763, %v6581
        %v6583 = vpop.f32.mrb[0].mxu0
        %6584 = vdwg.mxu0
        %v6587 = vrot.slane %v6577, 3
        %v6588 = vrot.slane %v6582, 3
        %v6589 = vsel %vm5770, %v6587, %v6588
        %v6592 = vsel %vm5770, 0.0, %v6587
        %v6593 = vsel %vm5777, 0.0, %v6592
        %v6594 = vsel %vm5778, 0.0, %v6589
        %v6595 = vrot.slane %v6577, 4
        %v6596 = vrot.slane %v6582, 4
        %v6597 = vsel %vm5781, %v6595, %v6596
        %v6599 = vsel %vm5781, 0.0, %v6595
        %v6600 = vrot.slane %v6577, 5
        %v6601 = vrot.slane %v6582, 5
        %v6602 = vsel %vm2793, %v6600, %v6601
        %v6605 = vsel %vm2793, 0.0, %v6600
        %v6606 = vsel %vm5793, 0.0, %v6605
        %v6607 = vsel %vm5794, 0.0, %v6602
        %v6608 = vrot.slane %v6577, 7
        %v6609 = vrot.slane %v6582, 7
        %v6610 = vsel %vm1056, %v6608, %v6609
        %v6613 = vsel %vm1056, 0.0, %v6608
        %v6614 = vsel %vm5777, 0.0, %v6613
        %v6615 = vsel %vm5778, 0.0, %v6610
        %v6616 = vrot.slane %v6577, 1
        %v6617 = vrot.slane %v6582, 1
        %v6618 = vsel %vm1210, %v6616, %v6617
        %v6621 = vsel %vm1210, %v6617, 0.0
        %v6622 = vsel %vm5793, 0.0, %v6618
        %v6623 = vsel %vm5794, 0.0, %v6621
        %v6625 = vsel %vm5770, %v6588, 0.0
        %v6626 = vsel %vm5777, 0.0, %v6589
        %v6627 = vsel %vm5778, 0.0, %v6625
        %v6629 = vsel %vm5781, %v6596, 0.0
        %v6631 = vsel %vm2793, %v6601, 0.0
        %v6632 = vsel %vm5793, 0.0, %v6602
        %v6633 = vsel %vm5794, 0.0, %v6631
        %6635 = vrot.lane.b32.xlu0 %v6599, 32
        %v6636 = vpop.permute.xlu0 %6635
        %6637 = vrot.lane.b32.xlu0 %v6597, 32
        %v6638 = vpop.permute.xlu0 %6637
        %6643 = vrot.lane.b32.xlu0 %v6606, 64
        %v6644 = vpop.permute.xlu0 %6643
        %6645 = vrot.lane.b32.xlu0 %v6607, 64
        %v6646 = vpop.permute.xlu0 %6645
        %6651 = vrot.lane.b32.xlu0 %v6614, 96
        %v6652 = vpop.permute.xlu0 %6651
        %6653 = vrot.lane.b32.xlu0 %v6615, 96
        %v6654 = vpop.permute.xlu0 %6653
        %6659 = vrot.lane.b32.xlu0 %v6622, 32
        %v6660 = vpop.permute.xlu0 %6659
        %6661 = vrot.lane.b32.xlu0 %v6623, 32
        %v6662 = vpop.permute.xlu0 %6661
        %6667 = vrot.lane.b32.xlu0 %v6626, 64
        %v6668 = vpop.permute.xlu0 %6667
        %6669 = vrot.lane.b32.xlu0 %v6627, 64
        %v6670 = vpop.permute.xlu0 %6669
        %6674 = vrot.lane.b32.xlu0 %v6597, 96
        %v6675 = vpop.permute.xlu0 %6674
        %6676 = vrot.lane.b32.xlu0 %v6629, 96
        %v6677 = vpop.permute.xlu0 %6676
        %v6680 = vsel %vm4480, %v6593, %v6636
        %v6681 = vsel %vm4480, %v6594, %v6638
        %v6682 = vsel %vm4612, %v6680, %v6644
        %v6683 = vsel %vm4612, %v6681, %v6646
        %v6684 = vsel %vm5504, %v6682, %v6652
        %v6685 = vsel %vm5504, %v6683, %v6654
        %v6686 = vsel %vm4480, %v6577, %v6660
        %v6687 = vsel %vm4480, %v6582, %v6662
        %v6688 = vsel %vm4612, %v6686, %v6668
        %v6689 = vsel %vm4612, %v6687, %v6670
        %v6690 = vsel %vm5504, %v6688, %v6675
        %v6691 = vsel %vm5504, %v6689, %v6677
        %v6692 = vld [vmem:[%s23] sm:$0xff]
        %v6693 = vld [vmem:[%s23 + $0x8] sm:$0xff]
        %v6694 = vld [vmem:[%s23 + $0x10] sm:$0xff]
        %v6695 = vld [vmem:[%s23 + $0x18] sm:$0xff]
        %v6696 = vld [vmem:[%s23 + $0x20] sm:$0xff]
        %v6697 = vld [vmem:[%s23 + $0x28] sm:$0xff]
        %v6698 = vld [vmem:[%s23 + $0x30] sm:$0xff]
        %v6699 = vld [vmem:[%s23 + $0x38] sm:$0xff]
        %v6700 = vld [vmem:[%s23 + $0x40] sm:$0xff]
        %v6701 = vld [vmem:[%s23 + $0x48] sm:$0xff]
        %v6702 = vld [vmem:[%s23 + $0x50] sm:$0xff]
        %v6703 = vld [vmem:[%s23 + $0x58] sm:$0xff]
        %v6704 = vld [vmem:[%s23 + $0x60] sm:$0xff]
        %v6705 = vld [vmem:[%s23 + $0x68] sm:$0xff]
        %v6706 = vld [vmem:[%s23 + $0x70] sm:$0xff]
        %v6707 = vld [vmem:[%s23 + $0x78] sm:$0xff]
        %v6708 = vld [vmem:[%s23 + $0x80] sm:$0xff]
        %v6709 = vld [vmem:[%s23 + $0x88] sm:$0xff]
        %v6710 = vld [vmem:[%s23 + $0x90] sm:$0xff]
        %v6711 = vld [vmem:[%s23 + $0x98] sm:$0xff]
        %v6712 = vld [vmem:[%s23 + $0xa0] sm:$0xff]
        %v6713 = vld [vmem:[%s23 + $0xa8] sm:$0xff]
        %v6714 = vld [vmem:[%s23 + $0xb0] sm:$0xff]
        %v6715 = vld [vmem:[%s23 + $0xb8] sm:$0xff]
        %v6716 = vld [vmem:[%s23 + $0xc0] sm:$0xff]
        %v6717 = vld [vmem:[%s23 + $0xc8] sm:$0xff]
        %v6718 = vld [vmem:[%s23 + $0xd0] sm:$0xff]
        %v6719 = vld [vmem:[%s23 + $0xd8] sm:$0xff]
        %v6720 = vld [vmem:[%s23 + $0xe0] sm:$0xff]
        %v6721 = vld [vmem:[%s23 + $0xe8] sm:$0xff]
        %v6722 = vld [vmem:[%s23 + $0xf0] sm:$0xff]
        %v6723 = vld [vmem:[%s23 + $0xf8] sm:$0xff]
        %v6724 = vld [vmem:[%s23 + $0x100] sm:$0xff]
        %v6725 = vld [vmem:[%s23 + $0x108] sm:$0xff]
        %v6726 = vld [vmem:[%s23 + $0x110] sm:$0xff]
        %v6727 = vld [vmem:[%s23 + $0x118] sm:$0xff]
        %v6728 = vld [vmem:[%s25] sm:$0x1]
        %v6730 = vlaneseq
        %v6731 = vshrl.u32 %v6730, 7
        %v6732 = vsub.s32 0, %v6731
        %v6733 = vrot.slane %v6728, %v6732
        %v6736 = vsel %vm4480, %v6632, 0
        %v6739 = vsel %vm4480, %v6633, 0
        %6741 = vmatprep.subr.mxu0 0.0
        %6742 = vmatpush1.msra.mxu0 %v6692
        %6743 = vmatprep.subr.mxu0 0.0
        %6744 = vmatpush1.msra.mxu0 %v6693
        %6745 = vmatprep.subr.mxu0 0.0
        %6746 = vmatpush1.msra.mxu0 %v6694
        %6747 = vmatprep.subr.mxu0 0.0
        %6748 = vmatpush1.msra.mxu0 %v6695
        %6749 = vmatprep.subr.mxu0 0.0
        %6750 = vmatpush1.msra.mxu0 %v6696
        %6751 = vmatprep.subr.mxu0 0.0
        %6752 = vmatpush1.msra.mxu0 %v6697
        %6753 = vmatprep.subr.mxu0 0.0
        %6754 = vmatpush1.msra.mxu0 %v6698
        %6755 = vmatprep.subr.mxu0 0.0
        %6756 = vmatpush1.msra.mxu0 %v6699
        %6757 = vmatprep.subr.mxu0 0.0
        %6758 = vmatpush1.msra.mxu0 %v6700
        %6759 = vmatprep.subr.mxu0 0.0
        %6760 = vmatpush1.msra.mxu0 %v6701
        %6761 = vmatprep.subr.mxu0 0.0
        %6762 = vmatpush1.msra.mxu0 %v6702
        %6763 = vmatprep.subr.mxu0 0.0
        %6764 = vmatpush1.msra.mxu0 %v6703
        %6765 = vmatprep.subr.mxu0 0.0
        %6766 = vmatpush1.msra.mxu0 %v6704
        %6767 = vmatprep.subr.mxu0 0.0
        %6768 = vmatpush1.msra.mxu0 %v6705
        %6769 = vmatprep.subr.mxu0 0.0
        %6770 = vmatpush1.msra.mxu0 %v6706
        %6771 = vmatprep.subr.mxu0 0.0
        %6772 = vmatpush1.msra.mxu0 %v6707
        %6773 = vmatprep.subr.mxu0 0.0
        %6774 = vmatpush1.msra.mxu0 %v6708
        %6775 = vmatprep.subr.mxu0 0.0
        %6776 = vmatpush1.msra.mxu0 %v6709
        %6777 = vmatprep.subr.mxu0 0.0
        %6778 = vmatpush1.msra.mxu0 %v6710
        %6779 = vmatprep.subr.mxu0 0.0
        %6780 = vmatpush1.msra.mxu0 %v6711
        %6781 = vmatprep.subr.mxu0 0.0
        %6782 = vmatpush1.msra.mxu0 %v6712
        %6783 = vmatprep.subr.mxu0 0.0
        %6784 = vmatpush1.msra.mxu0 %v6713
        %6785 = vmatprep.subr.mxu0 0.0
        %6786 = vmatpush1.msra.mxu0 %v6714
        %6787 = vmatprep.subr.mxu0 0.0
        %6788 = vmatpush1.msra.mxu0 %v6715
        %6789 = vmatprep.subr.mxu0 0.0
        %6790 = vmatpush1.msra.mxu0 %v6716
        %6791 = vmatprep.subr.mxu0 0.0
        %6792 = vmatpush1.msra.mxu0 %v6717
        %6793 = vmatprep.subr.mxu0 0.0
        %6794 = vmatpush1.msra.mxu0 %v6718
        %6795 = vmatprep.subr.mxu0 0.0
        %6796 = vmatpush1.msra.mxu0 %v6719
        %6797 = vmatprep.subr.mxu0 0.0
        %6798 = vmatpush1.msra.mxu0 %v6720
        %6799 = vmatprep.subr.mxu0 0.0
        %6800 = vmatpush1.msra.mxu0 %v6721
        %6801 = vmatprep.subr.mxu0 0.0
        %6802 = vmatpush1.msra.mxu0 %v6722
        %6803 = vmatprep.subr.mxu0 0.0
        %6804 = vmatpush1.msra.mxu0 %v6723
        %6805 = vmatprep.mubr.f32.mxu0 %v6690
        %6806 = vmatmul.mubr.f32.gmra.mrb[0].mxu0 %v6684
        %v6807 = vpop.f32.mrb[0].mxu0
        %v6808 = vadd.f32 %v6733, %v6807
        %v6809 = vpop.f32.mrb[0].mxu0
        %6810 = vmatprep.mubr.f32.mxu0 %v6691
        %6811 = vmatmul.mubr.f32.gmra.mrb[0].mxu0 %v6685
        %v6812 = vpop.f32.mrb[0].mxu0
        %v6813 = vadd.f32 %v6733, %v6812
        %v6814 = vpop.f32.mrb[0].mxu0
        %6815 = vdwg.mxu0
        %6816 = vmatprep.subr.mxu0 0.0
        %6817 = vmatpush1.msra.mxu0 %v6724
        %6818 = vmatprep.subr.mxu0 0.0
        %6819 = vmatpush1.msra.mxu0 %v6725
        %6820 = vmatprep.subr.mxu0 0.0
        %6821 = vmatpush1.msra.mxu0 %v6726
        %6822 = vmatprep.subr.mxu0 0.0
        %6823 = vmatpush1.msra.mxu0 %v6727
        %6824 = vmatprep.subr.mxu0 0.0
        %6825 = vmatpush1.msra.mxu0 0.0
        %6826 = vmatprep.subr.mxu0 0.0
        %6827 = vmatpush1.msra.mxu0 0.0
        %6828 = vmatprep.subr.mxu0 0.0
        %6829 = vmatpush1.msra.mxu0 0.0
        %6830 = vmatprep.subr.mxu0 0.0
        %6831 = vmatpush1.msra.mxu0 0.0
        %6832 = vmatprep.subr.mxu0 0.0
        %6833 = vmatpush1.msra.mxu0 0.0
        %6834 = vmatprep.subr.mxu0 0.0
        %6835 = vmatpush1.msra.mxu0 0.0
        %6836 = vmatprep.subr.mxu0 0.0
        %6837 = vmatpush1.msra.mxu0 0.0
        %6838 = vmatprep.subr.mxu0 0.0
        %6839 = vmatpush1.msra.mxu0 0.0
        %6840 = vmatprep.subr.mxu0 0.0
        %6841 = vmatpush1.msra.mxu0 0.0
        %6842 = vmatprep.subr.mxu0 0.0
        %6843 = vmatpush1.msra.mxu0 0.0
        %6844 = vmatprep.subr.mxu0 0.0
        %6845 = vmatpush1.msra.mxu0 0.0
        %6846 = vmatprep.subr.mxu0 0.0
        %6847 = vmatpush1.msra.mxu0 0.0
        %6848 = vmatprep.subr.mxu0 0.0
        %6849 = vmatpush1.msra.mxu0 0.0
        %6850 = vmatprep.subr.mxu0 0.0
        %6851 = vmatpush1.msra.mxu0 0.0
        %6852 = vmatprep.subr.mxu0 0.0
        %6853 = vmatpush1.msra.mxu0 0.0
        %6854 = vmatprep.subr.mxu0 0.0
        %6855 = vmatpush1.msra.mxu0 0.0
        %6856 = vmatprep.subr.mxu0 0.0
        %6857 = vmatpush1.msra.mxu0 0.0
        %6858 = vmatprep.subr.mxu0 0.0
        %6859 = vmatpush1.msra.mxu0 0.0
        %6860 = vmatprep.subr.mxu0 0.0
        %6861 = vmatpush1.msra.mxu0 0.0
        %6862 = vmatprep.subr.mxu0 0.0
        %6863 = vmatpush1.msra.mxu0 0.0
        %6864 = vmatprep.subr.mxu0 0.0
        %6865 = vmatpush1.msra.mxu0 0.0
        %6866 = vmatprep.subr.mxu0 0.0
        %6867 = vmatpush1.msra.mxu0 0.0
        %6868 = vmatprep.subr.mxu0 0.0
        %6869 = vmatpush1.msra.mxu0 0.0
        %6870 = vmatprep.subr.mxu0 0.0
        %6871 = vmatpush1.msra.mxu0 0.0
        %6872 = vmatprep.subr.mxu0 0.0
        %6873 = vmatpush1.msra.mxu0 0.0
        %6874 = vmatprep.subr.mxu0 0.0
        %6875 = vmatpush1.msra.mxu0 0.0
        %6876 = vmatprep.subr.mxu0 0.0
        %6877 = vmatpush1.msra.mxu0 0.0
        %6878 = vmatprep.subr.mxu0 0.0
        %6879 = vmatpush1.msra.mxu0 0.0
        %6880 = vmatprep.mubr.f32.mxu0 0.0
        %6881 = vmatmul.mubr.f32.gmra.mrb[0].mxu0 %v6736
        %v6882 = vpop.f32.mrb[0].mxu0
        %v6883 = vadd.f32 %v6808, %v6882
        %v6884 = vpop.f32.mrb[0].mxu0
        %6885 = vmatprep.mubr.f32.mxu0 0.0
        %6886 = vmatmul.mubr.f32.gmra.mrb[0].mxu0 %v6739
        %v6887 = vpop.f32.mrb[0].mxu0
        %v6888 = vadd.f32 %v6813, %v6887
        %v6889 = vpop.f32.mrb[0].mxu0
        %6890 = vdwg.mxu0
        %v6891 = vmax.f32 %v6883, 0.0
        %v6892 = vmax.f32 %v6888, 0.0
        %v6893 = vld [vmem:[%s27] sm:$0xff]
        %v6894 = vld [vmem:[%s27 + $0x8] sm:$0xff]
        %v6895 = vld [vmem:[%s27 + $0x10] sm:$0xff]
        %v6896 = vld [vmem:[%s27 + $0x18] sm:$0xff]
        %v6897 = vld [vmem:[%s27 + $0x20] sm:$0xff]
        %v6898 = vld [vmem:[%s27 + $0x28] sm:$0xff]
        %v6899 = vld [vmem:[%s27 + $0x30] sm:$0xff]
        %v6900 = vld [vmem:[%s27 + $0x38] sm:$0xff]
        %v6901 = vld [vmem:[%s27 + $0x40] sm:$0xff]
        %v6902 = vld [vmem:[%s27 + $0x48] sm:$0xff]
        %v6903 = vld [vmem:[%s27 + $0x50] sm:$0xff]
        %v6904 = vld [vmem:[%s27 + $0x58] sm:$0xff]
        %v6905 = vld [vmem:[%s27 + $0x60] sm:$0xff]
        %v6906 = vld [vmem:[%s27 + $0x68] sm:$0xff]
        %v6907 = vld [vmem:[%s27 + $0x70] sm:$0xff]
        %v6908 = vld [vmem:[%s27 + $0x78] sm:$0xff]
        %v6909 = vld [vmem:[%s27 + $0x80] sm:$0xff]
        %v6910 = vld [vmem:[%s27 + $0x88] sm:$0xff]
        %v6911 = vld [vmem:[%s27 + $0x90] sm:$0xff]
        %v6912 = vld [vmem:[%s27 + $0x98] sm:$0xff]
        %v6913 = vld [vmem:[%s27 + $0xa0] sm:$0xff]
        %v6914 = vld [vmem:[%s27 + $0xa8] sm:$0xff]
        %v6915 = vld [vmem:[%s27 + $0xb0] sm:$0xff]
        %v6916 = vld [vmem:[%s27 + $0xb8] sm:$0xff]
        %v6917 = vld [vmem:[%s27 + $0xc0] sm:$0xff]
        %v6918 = vld [vmem:[%s27 + $0xc8] sm:$0xff]
        %v6919 = vld [vmem:[%s27 + $0xd0] sm:$0xff]
        %v6920 = vld [vmem:[%s27 + $0xd8] sm:$0xff]
        %v6921 = vld [vmem:[%s27 + $0xe0] sm:$0xff]
        %v6922 = vld [vmem:[%s27 + $0xe8] sm:$0xff]
        %v6923 = vld [vmem:[%s27 + $0xf0] sm:$0xff]
        %v6924 = vld [vmem:[%s27 + $0xf8] sm:$0xff]
        %v6925 = vld [vmem:[%s27 + $0x100] sm:$0xff]
        %v6926 = vld [vmem:[%s27 + $0x108] sm:$0xff]
        %v6927 = vld [vmem:[%s27 + $0x110] sm:$0xff]
        %v6928 = vld [vmem:[%s27 + $0x118] sm:$0xff]
        %v6929 = vld [vmem:[%s29] sm:$0x1]
        %v6931 = vlaneseq
        %v6932 = vshrl.u32 %v6931, 7
        %v6933 = vsub.s32 0, %v6932
        %v6934 = vrot.slane %v6929, %v6933
        %6936 = vmatprep.subr.mxu0 0.0
        %6937 = vmatpush1.msra.mxu0 %v6893
        %6938 = vmatprep.subr.mxu0 0.0
        %6939 = vmatpush1.msra.mxu0 %v6894
        %6940 = vmatprep.subr.mxu0 0.0
        %6941 = vmatpush1.msra.mxu0 %v6895
        %6942 = vmatprep.subr.mxu0 0.0
        %6943 = vmatpush1.msra.mxu0 %v6896
        %6944 = vmatprep.subr.mxu0 0.0
        %6945 = vmatpush1.msra.mxu0 %v6897
        %6946 = vmatprep.subr.mxu0 0.0
        %6947 = vmatpush1.msra.mxu0 %v6898
        %6948 = vmatprep.subr.mxu0 0.0
        %6949 = vmatpush1.msra.mxu0 %v6899
        %6950 = vmatprep.subr.mxu0 0.0
        %6951 = vmatpush1.msra.mxu0 %v6900
        %6952 = vmatprep.subr.mxu0 0.0
        %6953 = vmatpush1.msra.mxu0 %v6901
        %6954 = vmatprep.subr.mxu0 0.0
        %6955 = vmatpush1.msra.mxu0 %v6902
        %6956 = vmatprep.subr.mxu0 0.0
        %6957 = vmatpush1.msra.mxu0 %v6903
        %6958 = vmatprep.subr.mxu0 0.0
        %6959 = vmatpush1.msra.mxu0 %v6904
        %6960 = vmatprep.subr.mxu0 0.0
        %6961 = vmatpush1.msra.mxu0 %v6905
        %6962 = vmatprep.subr.mxu0 0.0
        %6963 = vmatpush1.msra.mxu0 %v6906
        %6964 = vmatprep.subr.mxu0 0.0
        %6965 = vmatpush1.msra.mxu0 %v6907
        %6966 = vmatprep.subr.mxu0 0.0
        %6967 = vmatpush1.msra.mxu0 %v6908
        %6968 = vmatprep.subr.mxu0 0.0
        %6969 = vmatpush1.msra.mxu0 %v6909
        %6970 = vmatprep.subr.mxu0 0.0
        %6971 = vmatpush1.msra.mxu0 %v6910
        %6972 = vmatprep.subr.mxu0 0.0
        %6973 = vmatpush1.msra.mxu0 %v6911
        %6974 = vmatprep.subr.mxu0 0.0
        %6975 = vmatpush1.msra.mxu0 %v6912
        %6976 = vmatprep.subr.mxu0 0.0
        %6977 = vmatpush1.msra.mxu0 %v6913
        %6978 = vmatprep.subr.mxu0 0.0
        %6979 = vmatpush1.msra.mxu0 %v6914
        %6980 = vmatprep.subr.mxu0 0.0
        %6981 = vmatpush1.msra.mxu0 %v6915
        %6982 = vmatprep.subr.mxu0 0.0
        %6983 = vmatpush1.msra.mxu0 %v6916
        %6984 = vmatprep.subr.mxu0 0.0
        %6985 = vmatpush1.msra.mxu0 %v6917
        %6986 = vmatprep.subr.mxu0 0.0
        %6987 = vmatpush1.msra.mxu0 %v6918
        %6988 = vmatprep.subr.mxu0 0.0
        %6989 = vmatpush1.msra.mxu0 %v6919
        %6990 = vmatprep.subr.mxu0 0.0
        %6991 = vmatpush1.msra.mxu0 %v6920
        %6992 = vmatprep.subr.mxu0 0.0
        %6993 = vmatpush1.msra.mxu0 %v6921
        %6994 = vmatprep.subr.mxu0 0.0
        %6995 = vmatpush1.msra.mxu0 %v6922
        %6996 = vmatprep.subr.mxu0 0.0
        %6997 = vmatpush1.msra.mxu0 %v6923
        %6998 = vmatprep.subr.mxu0 0.0
        %6999 = vmatpush1.msra.mxu0 %v6924
        %7000 = vmatprep.mubr.f32.mxu0 %v5879
        %7001 = vmatmul.mubr.f32.gmra.mrb[0].mxu0 %v5873
        %v7002 = vpop.f32.mrb[0].mxu0
        %v7003 = vadd.f32 %v6934, %v7002
        %v7004 = vpop.f32.mrb[0].mxu0
        %7005 = vmatprep.mubr.f32.mxu0 %v5880
        %7006 = vmatmul.mubr.f32.gmra.mrb[0].mxu0 %v5874
        %v7007 = vpop.f32.mrb[0].mxu0
        %v7008 = vadd.f32 %v6934, %v7007
        %v7009 = vpop.f32.mrb[0].mxu0
        %7010 = vdwg.mxu0
        %7011 = vmatprep.subr.mxu0 0.0
        %7012 = vmatpush1.msra.mxu0 %v6925
        %7013 = vmatprep.subr.mxu0 0.0
        %7014 = vmatpush1.msra.mxu0 %v6926
        %7015 = vmatprep.subr.mxu0 0.0
        %7016 = vmatpush1.msra.mxu0 %v6927
        %7017 = vmatprep.subr.mxu0 0.0
        %7018 = vmatpush1.msra.mxu0 %v6928
        %7019 = vmatprep.subr.mxu0 0.0
        %7020 = vmatpush1.msra.mxu0 0.0
        %7021 = vmatprep.subr.mxu0 0.0
        %7022 = vmatpush1.msra.mxu0 0.0
        %7023 = vmatprep.subr.mxu0 0.0
        %7024 = vmatpush1.msra.mxu0 0.0
        %7025 = vmatprep.subr.mxu0 0.0
        %7026 = vmatpush1.msra.mxu0 0.0
        %7027 = vmatprep.subr.mxu0 0.0
        %7028 = vmatpush1.msra.mxu0 0.0
        %7029 = vmatprep.subr.mxu0 0.0
        %7030 = vmatpush1.msra.mxu0 0.0
        %7031 = vmatprep.subr.mxu0 0.0
        %7032 = vmatpush1.msra.mxu0 0.0
        %7033 = vmatprep.subr.mxu0 0.0
        %7034 = vmatpush1.msra.mxu0 0.0
        %7035 = vmatprep.subr.mxu0 0.0
        %7036 = vmatpush1.msra.mxu0 0.0
        %7037 = vmatprep.subr.mxu0 0.0
        %7038 = vmatpush1.msra.mxu0 0.0
        %7039 = vmatprep.subr.mxu0 0.0
        %7040 = vmatpush1.msra.mxu0 0.0
        %7041 = vmatprep.subr.mxu0 0.0
        %7042 = vmatpush1.msra.mxu0 0.0
        %7043 = vmatprep.subr.mxu0 0.0
        %7044 = vmatpush1.msra.mxu0 0.0
        %7045 = vmatprep.subr.mxu0 0.0
        %7046 = vmatpush1.msra.mxu0 0.0
        %7047 = vmatprep.subr.mxu0 0.0
        %7048 = vmatpush1.msra.mxu0 0.0
        %7049 = vmatprep.subr.mxu0 0.0
        %7050 = vmatpush1.msra.mxu0 0.0
        %7051 = vmatprep.subr.mxu0 0.0
        %7052 = vmatpush1.msra.mxu0 0.0
        %7053 = vmatprep.subr.mxu0 0.0
        %7054 = vmatpush1.msra.mxu0 0.0
        %7055 = vmatprep.subr.mxu0 0.0
        %7056 = vmatpush1.msra.mxu0 0.0
        %7057 = vmatprep.subr.mxu0 0.0
        %7058 = vmatpush1.msra.mxu0 0.0
        %7059 = vmatprep.subr.mxu0 0.0
        %7060 = vmatpush1.msra.mxu0 0.0
        %7061 = vmatprep.subr.mxu0 0.0
        %7062 = vmatpush1.msra.mxu0 0.0
        %7063 = vmatprep.subr.mxu0 0.0
        %7064 = vmatpush1.msra.mxu0 0.0
        %7065 = vmatprep.subr.mxu0 0.0
        %7066 = vmatpush1.msra.mxu0 0.0
        %7067 = vmatprep.subr.mxu0 0.0
        %7068 = vmatpush1.msra.mxu0 0.0
        %7069 = vmatprep.subr.mxu0 0.0
        %7070 = vmatpush1.msra.mxu0 0.0
        %7071 = vmatprep.subr.mxu0 0.0
        %7072 = vmatpush1.msra.mxu0 0.0
        %7073 = vmatprep.subr.mxu0 0.0
        %7074 = vmatpush1.msra.mxu0 0.0
        %7075 = vmatprep.mubr.f32.mxu0 0.0
        %7076 = vmatmul.mubr.f32.gmra.mrb[0].mxu0 %v5925
        %v7077 = vpop.f32.mrb[0].mxu0
        %v7078 = vadd.f32 %v7003, %v7077
        %v7079 = vpop.f32.mrb[0].mxu0
        %7080 = vmatprep.mubr.f32.mxu0 0.0
        %7081 = vmatmul.mubr.f32.gmra.mrb[0].mxu0 %v5928
        %v7082 = vpop.f32.mrb[0].mxu0
        %v7083 = vadd.f32 %v7008, %v7082
        %v7084 = vpop.f32.mrb[0].mxu0
        %7085 = vdwg.mxu0
        %v7086 = vmax.f32 %v7078, 0.0
        %v7087 = vmax.f32 %v7083, 0.0
        %v7088 = vld [vmem:[%s59] sm:$0xff]
        %v7089 = vld [vmem:[%s59 + $0x8] sm:$0xff]
        %v7090 = vld [vmem:[%s59 + $0x10] sm:$0xff]
        %v7091 = vld [vmem:[%s59 + $0x18] sm:$0xff]
        %v7092 = vld [vmem:[%s59 + $0x20] sm:$0xff]
        %v7093 = vld [vmem:[%s59 + $0x28] sm:$0xff]
        %v7094 = vld [vmem:[%s59 + $0x30] sm:$0xff]
        %v7095 = vld [vmem:[%s59 + $0x38] sm:$0xff]
        %v7097 = vsel %vm4415, %v7088, 0
        %v7100 = vsel %vm4415, %v7089, 0
        %v7103 = vsel %vm4415, %v7090, 0
        %v7106 = vsel %vm4415, %v7091, 0
        %v7109 = vsel %vm4415, %v7092, 0
        %v7112 = vsel %vm4415, %v7093, 0
        %v7115 = vsel %vm4415, %v7094, 0
        %v7118 = vsel %vm4415, %v7095, 0
        %7120 = vmatprep.subr.mxu0 0.0
        %7121 = vmatpush1.msra.mxu0 %v7086
        %7122 = vmatprep.subr.mxu0 0.0
        %7123 = vmatpush1.msra.mxu0 %v7087
        %7124 = vmatprep.subr.mxu0 0.0
        %7125 = vmatpush1.msra.mxu0 0.0
        %7126 = vmatprep.subr.mxu0 0.0
        %7127 = vmatpush1.msra.mxu0 0.0
        %7128 = vmatprep.subr.mxu0 0.0
        %7129 = vmatpush1.msra.mxu0 0.0
        %7130 = vmatprep.subr.mxu0 0.0
        %7131 = vmatpush1.msra.mxu0 0.0
        %7132 = vmatprep.subr.mxu0 0.0
        %7133 = vmatpush1.msra.mxu0 0.0
        %7134 = vmatprep.subr.mxu0 0.0
        %7135 = vmatpush1.msra.mxu0 0.0
        %7136 = vmatprep.subr.mxu0 0.0
        %7137 = vmatpush1.msra.mxu0 0.0
        %7138 = vmatprep.subr.mxu0 0.0
        %7139 = vmatpush1.msra.mxu0 0.0
        %7140 = vmatprep.subr.mxu0 0.0
        %7141 = vmatpush1.msra.mxu0 0.0
        %7142 = vmatprep.subr.mxu0 0.0
        %7143 = vmatpush1.msra.mxu0 0.0
        %7144 = vmatprep.subr.mxu0 0.0
        %7145 = vmatpush1.msra.mxu0 0.0
        %7146 = vmatprep.subr.mxu0 0.0
        %7147 = vmatpush1.msra.mxu0 0.0
        %7148 = vmatprep.subr.mxu0 0.0
        %7149 = vmatpush1.msra.mxu0 0.0
        %7150 = vmatprep.subr.mxu0 0.0
        %7151 = vmatpush1.msra.mxu0 0.0
        %7152 = vmatprep.subr.mxu0 0.0
        %7153 = vmatpush1.msra.mxu0 0.0
        %7154 = vmatprep.subr.mxu0 0.0
        %7155 = vmatpush1.msra.mxu0 0.0
        %7156 = vmatprep.subr.mxu0 0.0
        %7157 = vmatpush1.msra.mxu0 0.0
        %7158 = vmatprep.subr.mxu0 0.0
        %7159 = vmatpush1.msra.mxu0 0.0
        %7160 = vmatprep.subr.mxu0 0.0
        %7161 = vmatpush1.msra.mxu0 0.0
        %7162 = vmatprep.subr.mxu0 0.0
        %7163 = vmatpush1.msra.mxu0 0.0
        %7164 = vmatprep.subr.mxu0 0.0
        %7165 = vmatpush1.msra.mxu0 0.0
        %7166 = vmatprep.subr.mxu0 0.0
        %7167 = vmatpush1.msra.mxu0 0.0
        %7168 = vmatprep.subr.mxu0 0.0
        %7169 = vmatpush1.msra.mxu0 0.0
        %7170 = vmatprep.subr.mxu0 0.0
        %7171 = vmatpush1.msra.mxu0 0.0
        %7172 = vmatprep.subr.mxu0 0.0
        %7173 = vmatpush1.msra.mxu0 0.0
        %7174 = vmatprep.subr.mxu0 0.0
        %7175 = vmatpush1.msra.mxu0 0.0
        %7176 = vmatprep.subr.mxu0 0.0
        %7177 = vmatpush1.msra.mxu0 0.0
        %7178 = vmatprep.subr.mxu0 0.0
        %7179 = vmatpush1.msra.mxu0 0.0
        %7180 = vmatprep.subr.mxu0 0.0
        %7181 = vmatpush1.msra.mxu0 0.0
        %7182 = vmatprep.subr.mxu0 0.0
        %7183 = vmatpush1.msra.mxu0 0.0
        %7184 = vmatprep.mubr.f32.mxu0 0.0
        %7185 = vmatmul.mubr.f32.gmra.mrb[0].mxu0 %v7097
        %v7186 = vpop.f32.mrb[0].mxu0
        %v7187 = vadd.f32 %v5098, %v7186
        %v7188 = vpop.f32.mrb[0].mxu0
        %7189 = vmatprep.mubr.f32.mxu0 0.0
        %7190 = vmatmul.mubr.f32.gmra.mrb[0].mxu0 %v7100
        %v7191 = vpop.f32.mrb[0].mxu0
        %v7192 = vadd.f32 %v5103, %v7191
        %v7193 = vpop.f32.mrb[0].mxu0
        %7194 = vmatprep.mubr.f32.mxu0 0.0
        %7195 = vmatmul.mubr.f32.gmra.mrb[0].mxu0 %v7103
        %v7196 = vpop.f32.mrb[0].mxu0
        %v7197 = vadd.f32 %v5108, %v7196
        %v7198 = vpop.f32.mrb[0].mxu0
        %7199 = vmatprep.mubr.f32.mxu0 0.0
        %7200 = vmatmul.mubr.f32.gmra.mrb[0].mxu0 %v7106
        %v7201 = vpop.f32.mrb[0].mxu0
        %v7202 = vadd.f32 %v5113, %v7201
        %v7203 = vpop.f32.mrb[0].mxu0
        %7204 = vmatprep.mubr.f32.mxu0 0.0
        %7205 = vmatmul.mubr.f32.gmra.mrb[0].mxu0 %v7109
        %v7206 = vpop.f32.mrb[0].mxu0
        %v7207 = vadd.f32 %v5118, %v7206
        %v7208 = vpop.f32.mrb[0].mxu0
        %7209 = vmatprep.mubr.f32.mxu0 0.0
        %7210 = vmatmul.mubr.f32.gmra.mrb[0].mxu0 %v7112
        %v7211 = vpop.f32.mrb[0].mxu0
        %v7212 = vadd.f32 %v5123, %v7211
        %v7213 = vpop.f32.mrb[0].mxu0
        %7214 = vmatprep.mubr.f32.mxu0 0.0
        %7215 = vmatmul.mubr.f32.gmra.mrb[0].mxu0 %v7115
        %v7216 = vpop.f32.mrb[0].mxu0
        %v7217 = vadd.f32 %v5128, %v7216
        %v7218 = vpop.f32.mrb[0].mxu0
        %7219 = vmatprep.mubr.f32.mxu0 0.0
        %7220 = vmatmul.mubr.f32.gmra.mrb[0].mxu0 %v7118
        %v7221 = vpop.f32.mrb[0].mxu0
        %v7222 = vadd.f32 %v5133, %v7221
        %v7223 = vpop.f32.mrb[0].mxu0
        %7224 = vdwg.mxu0
        %v7232 = vrot.slane %v7187, 7
        %v7233 = vrot.slane %v7192, 7
        %v7234 = vsel %vm1056, %v7232, %v7233
        %v7235 = vrot.slane %v7197, 7
        %v7236 = vsel %vm1056, %v7233, %v7235
        %v7237 = vrot.slane %v7202, 7
        %v7238 = vsel %vm1056, %v7235, %v7237
        %v7239 = vrot.slane %v7207, 7
        %v7240 = vsel %vm1056, %v7237, %v7239
        %v7241 = vrot.slane %v7212, 7
        %v7242 = vsel %vm1056, %v7239, %v7241
        %v7243 = vrot.slane %v7217, 7
        %v7244 = vsel %vm1056, %v7241, %v7243
        %v7252 = vsel %vm1056, 0.0, %v7232
        %v7253 = vsel %vm5173, 0.0, %v7252
        %v7254 = vsel %vm5174, 0.0, %v7234
        %v7255 = vsel %vm5175, 0.0, %v7236
        %v7256 = vsel %vm5176, 0.0, %v7238
        %v7257 = vsel %vm5177, 0.0, %v7240
        %v7258 = vsel %vm5178, 0.0, %v7242
        %v7259 = vsel %vm5179, 0.0, %v7244
        %v7261 = vrot.slane %v7187, 1
        %v7262 = vrot.slane %v7192, 1
        %v7263 = vsel %vm1210, %v7261, %v7262
        %v7264 = vrot.slane %v7197, 1
        %v7265 = vsel %vm1210, %v7262, %v7264
        %v7266 = vrot.slane %v7202, 1
        %v7267 = vsel %vm1210, %v7264, %v7266
        %v7268 = vrot.slane %v7207, 1
        %v7269 = vsel %vm1210, %v7266, %v7268
        %v7270 = vrot.slane %v7212, 1
        %v7271 = vsel %vm1210, %v7268, %v7270
        %v7272 = vrot.slane %v7217, 1
        %v7273 = vsel %vm1210, %v7270, %v7272
        %v7274 = vrot.slane %v7222, 1
        %v7275 = vsel %vm1210, %v7272, %v7274
        %v7284 = vsel %vm1210, 0.0, %v7261
        %v7285 = vsel %vm5212, 0.0, %v7284
        %v7286 = vsel %vm5213, 0.0, %v7263
        %v7287 = vsel %vm5214, 0.0, %v7265
        %v7288 = vsel %vm5215, 0.0, %v7267
        %v7289 = vsel %vm5216, 0.0, %v7269
        %v7290 = vsel %vm5217, 0.0, %v7271
        %v7291 = vsel %vm5218, 0.0, %v7273
        %v7292 = vsel %vm5219, 0.0, %v7275
        %v7293 = vrot.slane %v7222, 7
        %v7294 = vsel %vm1056, %v7243, %v7293
        %v7296 = vsel %vm5172, 0.0, %v7252
        %v7297 = vsel %vm5173, 0.0, %v7234
        %v7298 = vsel %vm5174, 0.0, %v7236
        %v7299 = vsel %vm5175, 0.0, %v7238
        %v7300 = vsel %vm5176, 0.0, %v7240
        %v7301 = vsel %vm5177, 0.0, %v7242
        %v7302 = vsel %vm5178, 0.0, %v7244
        %v7303 = vsel %vm5179, 0.0, %v7294
        %v7305 = vsel %vm1210, %v7274, 0.0
        %v7306 = vsel %vm5212, 0.0, %v7263
        %v7307 = vsel %vm5213, 0.0, %v7265
        %v7308 = vsel %vm5214, 0.0, %v7267
        %v7309 = vsel %vm5215, 0.0, %v7269
        %v7310 = vsel %vm5216, 0.0, %v7271
        %v7311 = vsel %vm5217, 0.0, %v7273
        %v7312 = vsel %vm5218, 0.0, %v7275
        %v7313 = vsel %vm5219, 0.0, %v7305
        %v7315 = vsel %vm1056, %v7293, 0.0
        %v7316 = vsel %vm5172, 0.0, %v7234
        %v7317 = vsel %vm5173, 0.0, %v7236
        %v7318 = vsel %vm5174, 0.0, %v7238
        %v7319 = vsel %vm5175, 0.0, %v7240
        %v7320 = vsel %vm5176, 0.0, %v7242
        %v7321 = vsel %vm5177, 0.0, %v7244
        %v7322 = vsel %vm5178, 0.0, %v7294
        %v7323 = vsel %vm5179, 0.0, %v7315
        %v7324 = vsel %vm5212, 0.0, %v7265
        %v7325 = vsel %vm5213, 0.0, %v7267
        %v7326 = vsel %vm5214, 0.0, %v7269
        %v7327 = vsel %vm5215, 0.0, %v7271
        %v7328 = vsel %vm5216, 0.0, %v7273
        %v7329 = vsel %vm5217, 0.0, %v7275
        %v7330 = vsel %vm5218, 0.0, %v7305
        %7331 = vrot.lane.b32.xlu0 %v7187, 16
        %v7332 = vpop.permute.xlu0 %7331
        %7333 = vrot.lane.b32.xlu0 %v7192, 16
        %v7334 = vpop.permute.xlu0 %7333
        %7335 = vrot.lane.b32.xlu0 %v7197, 16
        %v7336 = vpop.permute.xlu0 %7335
        %7337 = vrot.lane.b32.xlu0 %v7202, 16
        %v7338 = vpop.permute.xlu0 %7337
        %7339 = vrot.lane.b32.xlu0 %v7207, 16
        %v7340 = vpop.permute.xlu0 %7339
        %7341 = vrot.lane.b32.xlu0 %v7212, 16
        %v7342 = vpop.permute.xlu0 %7341
        %7343 = vrot.lane.b32.xlu0 %v7217, 16
        %v7344 = vpop.permute.xlu0 %7343
        %7360 = vrot.lane.b32.xlu0 %v7285, 32
        %v7361 = vpop.permute.xlu0 %7360
        %7362 = vrot.lane.b32.xlu0 %v7286, 32
        %v7363 = vpop.permute.xlu0 %7362
        %7364 = vrot.lane.b32.xlu0 %v7287, 32
        %v7365 = vpop.permute.xlu0 %7364
        %7366 = vrot.lane.b32.xlu0 %v7288, 32
        %v7367 = vpop.permute.xlu0 %7366
        %7368 = vrot.lane.b32.xlu0 %v7289, 32
        %v7369 = vpop.permute.xlu0 %7368
        %7370 = vrot.lane.b32.xlu0 %v7290, 32
        %v7371 = vpop.permute.xlu0 %7370
        %7372 = vrot.lane.b32.xlu0 %v7291, 32
        %v7373 = vpop.permute.xlu0 %7372
        %7374 = vrot.lane.b32.xlu0 %v7292, 32
        %v7375 = vpop.permute.xlu0 %7374
        %7392 = vrot.lane.b32.xlu0 %v7296, 48
        %v7393 = vpop.permute.xlu0 %7392
        %7394 = vrot.lane.b32.xlu0 %v7297, 48
        %v7395 = vpop.permute.xlu0 %7394
        %7396 = vrot.lane.b32.xlu0 %v7298, 48
        %v7397 = vpop.permute.xlu0 %7396
        %7398 = vrot.lane.b32.xlu0 %v7299, 48
        %v7399 = vpop.permute.xlu0 %7398
        %7400 = vrot.lane.b32.xlu0 %v7300, 48
        %v7401 = vpop.permute.xlu0 %7400
        %7402 = vrot.lane.b32.xlu0 %v7301, 48
        %v7403 = vpop.permute.xlu0 %7402
        %7404 = vrot.lane.b32.xlu0 %v7302, 48
        %v7405 = vpop.permute.xlu0 %7404
        %7406 = vrot.lane.b32.xlu0 %v7303, 48
        %v7407 = vpop.permute.xlu0 %7406
        %7416 = vrot.lane.b32.xlu0 %v7187, 64
        %v7417 = vpop.permute.xlu0 %7416
        %7418 = vrot.lane.b32.xlu0 %v7192, 64
        %v7419 = vpop.permute.xlu0 %7418
        %7420 = vrot.lane.b32.xlu0 %v7197, 64
        %v7421 = vpop.permute.xlu0 %7420
        %7422 = vrot.lane.b32.xlu0 %v7202, 64
        %v7423 = vpop.permute.xlu0 %7422
        %7424 = vrot.lane.b32.xlu0 %v7207, 64
        %v7425 = vpop.permute.xlu0 %7424
        %7426 = vrot.lane.b32.xlu0 %v7212, 64
        %v7427 = vpop.permute.xlu0 %7426
        %7428 = vrot.lane.b32.xlu0 %v7217, 64
        %v7429 = vpop.permute.xlu0 %7428
        %7430 = vrot.lane.b32.xlu0 %v7222, 64
        %v7431 = vpop.permute.xlu0 %7430
        %7448 = vrot.lane.b32.xlu0 %v7306, 80
        %v7449 = vpop.permute.xlu0 %7448
        %7450 = vrot.lane.b32.xlu0 %v7307, 80
        %v7451 = vpop.permute.xlu0 %7450
        %7452 = vrot.lane.b32.xlu0 %v7308, 80
        %v7453 = vpop.permute.xlu0 %7452
        %7454 = vrot.lane.b32.xlu0 %v7309, 80
        %v7455 = vpop.permute.xlu0 %7454
        %7456 = vrot.lane.b32.xlu0 %v7310, 80
        %v7457 = vpop.permute.xlu0 %7456
        %7458 = vrot.lane.b32.xlu0 %v7311, 80
        %v7459 = vpop.permute.xlu0 %7458
        %7460 = vrot.lane.b32.xlu0 %v7312, 80
        %v7461 = vpop.permute.xlu0 %7460
        %7462 = vrot.lane.b32.xlu0 %v7313, 80
        %v7463 = vpop.permute.xlu0 %7462
        %7480 = vrot.lane.b32.xlu0 %v7316, 96
        %v7481 = vpop.permute.xlu0 %7480
        %7482 = vrot.lane.b32.xlu0 %v7317, 96
        %v7483 = vpop.permute.xlu0 %7482
        %7484 = vrot.lane.b32.xlu0 %v7318, 96
        %v7485 = vpop.permute.xlu0 %7484
        %7486 = vrot.lane.b32.xlu0 %v7319, 96
        %v7487 = vpop.permute.xlu0 %7486
        %7488 = vrot.lane.b32.xlu0 %v7320, 96
        %v7489 = vpop.permute.xlu0 %7488
        %7490 = vrot.lane.b32.xlu0 %v7321, 96
        %v7491 = vpop.permute.xlu0 %7490
        %7492 = vrot.lane.b32.xlu0 %v7322, 96
        %v7493 = vpop.permute.xlu0 %7492
        %7494 = vrot.lane.b32.xlu0 %v7323, 96
        %v7495 = vpop.permute.xlu0 %7494
        %7504 = vrot.lane.b32.xlu0 %v7192, 112
        %v7505 = vpop.permute.xlu0 %7504
        %7506 = vrot.lane.b32.xlu0 %v7197, 112
        %v7507 = vpop.permute.xlu0 %7506
        %7508 = vrot.lane.b32.xlu0 %v7202, 112
        %v7509 = vpop.permute.xlu0 %7508
        %7510 = vrot.lane.b32.xlu0 %v7207, 112
        %v7511 = vpop.permute.xlu0 %7510
        %7512 = vrot.lane.b32.xlu0 %v7212, 112
        %v7513 = vpop.permute.xlu0 %7512
        %7514 = vrot.lane.b32.xlu0 %v7217, 112
        %v7515 = vpop.permute.xlu0 %7514
        %7516 = vrot.lane.b32.xlu0 %v7222, 112
        %v7517 = vpop.permute.xlu0 %7516
        %v7525 = vsel %vm4415, %v7253, %v7332
        %v7526 = vsel %vm4415, %v7254, %v7334
        %v7527 = vsel %vm4415, %v7255, %v7336
        %v7528 = vsel %vm4415, %v7256, %v7338
        %v7529 = vsel %vm4415, %v7257, %v7340
        %v7530 = vsel %vm4415, %v7258, %v7342
        %v7531 = vsel %vm4415, %v7259, %v7344
        %v7532 = vsel %vm4480, %v5463, %v7361
        %v7533 = vsel %vm4480, %v7525, %v7363
        %v7534 = vsel %vm4480, %v7526, %v7365
        %v7535 = vsel %vm4480, %v7527, %v7367
        %v7536 = vsel %vm4480, %v7528, %v7369
        %v7537 = vsel %vm4480, %v7529, %v7371
        %v7538 = vsel %vm4480, %v7530, %v7373
        %v7539 = vsel %vm4480, %v7531, %v7375
        %v7540 = vsel %vm4546, %v7532, %v7393
        %v7541 = vsel %vm4546, %v7533, %v7395
        %v7542 = vsel %vm4546, %v7534, %v7397
        %v7543 = vsel %vm4546, %v7535, %v7399
        %v7544 = vsel %vm4546, %v7536, %v7401
        %v7545 = vsel %vm4546, %v7537, %v7403
        %v7546 = vsel %vm4546, %v7538, %v7405
        %v7547 = vsel %vm4546, %v7539, %v7407
        %v7548 = vsel %vm4612, %v7540, %v7417
        %v7549 = vsel %vm4612, %v7541, %v7419
        %v7550 = vsel %vm4612, %v7542, %v7421
        %v7551 = vsel %vm4612, %v7543, %v7423
        %v7552 = vsel %vm4612, %v7544, %v7425
        %v7553 = vsel %vm4612, %v7545, %v7427
        %v7554 = vsel %vm4612, %v7546, %v7429
        %v7555 = vsel %vm4612, %v7547, %v7431
        %v7556 = vsel %vm5495, %v7548, %v7449
        %v7557 = vsel %vm5495, %v7549, %v7451
        %v7558 = vsel %vm5495, %v7550, %v7453
        %v7559 = vsel %vm5495, %v7551, %v7455
        %v7560 = vsel %vm5495, %v7552, %v7457
        %v7561 = vsel %vm5495, %v7553, %v7459
        %v7562 = vsel %vm5495, %v7554, %v7461
        %v7563 = vsel %vm5495, %v7555, %v7463
        %v7564 = vsel %vm5504, %v7556, %v7481
        %v7565 = vsel %vm5504, %v7557, %v7483
        %v7566 = vsel %vm5504, %v7558, %v7485
        %v7567 = vsel %vm5504, %v7559, %v7487
        %v7568 = vsel %vm5504, %v7560, %v7489
        %v7569 = vsel %vm5504, %v7561, %v7491
        %v7570 = vsel %vm5504, %v7562, %v7493
        %v7571 = vsel %vm5504, %v7563, %v7495
        %v7572 = vsel %vm5513, %v7564, %v7505
        %v7573 = vsel %vm5513, %v7565, %v7507
        %v7574 = vsel %vm5513, %v7566, %v7509
        %v7575 = vsel %vm5513, %v7567, %v7511
        %v7576 = vsel %vm5513, %v7568, %v7513
        %v7577 = vsel %vm5513, %v7569, %v7515
        %v7578 = vsel %vm5513, %v7570, %v7517
        %v7579 = vsel %vm5513, %v7571, %v5454
        %v7580 = vld [vmem:[%s31] sm:$0xff]
        %v7581 = vld [vmem:[%s31 + $0x8] sm:$0xff]
        %v7582 = vld [vmem:[%s31 + $0x10] sm:$0xff]
        %v7583 = vld [vmem:[%s31 + $0x18] sm:$0xff]
        %v7584 = vld [vmem:[%s31 + $0x20] sm:$0xff]
        %v7585 = vld [vmem:[%s31 + $0x28] sm:$0xff]
        %v7586 = vld [vmem:[%s31 + $0x30] sm:$0xff]
        %v7587 = vld [vmem:[%s31 + $0x38] sm:$0xff]
        %v7588 = vld [vmem:[%s31 + $0x40] sm:$0xff]
        %v7589 = vld [vmem:[%s31 + $0x48] sm:$0xff]
        %v7590 = vld [vmem:[%s31 + $0x50] sm:$0xff]
        %v7591 = vld [vmem:[%s31 + $0x58] sm:$0xff]
        %v7592 = vld [vmem:[%s31 + $0x60] sm:$0xff]
        %v7593 = vld [vmem:[%s31 + $0x68] sm:$0xff]
        %v7594 = vld [vmem:[%s31 + $0x70] sm:$0xff]
        %v7595 = vld [vmem:[%s31 + $0x78] sm:$0xff]
        %v7596 = vld [vmem:[%s31 + $0x80] sm:$0xff]
        %v7597 = vld [vmem:[%s31 + $0x88] sm:$0xff]
        %v7598 = vld [vmem:[%s33] sm:$0x1]
        %v7600 = vlaneseq
        %v7601 = vshrl.u32 %v7600, 7
        %v7602 = vsub.s32 0, %v7601
        %v7603 = vrot.slane %v7598, %v7602
        %v7606 = vsel %vm4415, %v7324, 0
        %v7609 = vsel %vm4415, %v7325, 0
        %v7612 = vsel %vm4415, %v7326, 0
        %v7615 = vsel %vm4415, %v7327, 0
        %v7618 = vsel %vm4415, %v7328, 0
        %v7621 = vsel %vm4415, %v7329, 0
        %v7624 = vsel %vm4415, %v7330, 0
        %7626 = vmatprep.subr.mxu0 0.0
        %7627 = vmatpush1.msra.mxu0 %v7580
        %7628 = vmatprep.subr.mxu0 0.0
        %7629 = vmatpush1.msra.mxu0 %v7581
        %7630 = vmatprep.subr.mxu0 0.0
        %7631 = vmatpush1.msra.mxu0 %v7582
        %7632 = vmatprep.subr.mxu0 0.0
        %7633 = vmatpush1.msra.mxu0 %v7583
        %7634 = vmatprep.subr.mxu0 0.0
        %7635 = vmatpush1.msra.mxu0 %v7584
        %7636 = vmatprep.subr.mxu0 0.0
        %7637 = vmatpush1.msra.mxu0 %v7585
        %7638 = vmatprep.subr.mxu0 0.0
        %7639 = vmatpush1.msra.mxu0 %v7586
        %7640 = vmatprep.subr.mxu0 0.0
        %7641 = vmatpush1.msra.mxu0 %v7587
        %7642 = vmatprep.subr.mxu0 0.0
        %7643 = vmatpush1.msra.mxu0 %v7588
        %7644 = vmatprep.subr.mxu0 0.0
        %7645 = vmatpush1.msra.mxu0 %v7589
        %7646 = vmatprep.subr.mxu0 0.0
        %7647 = vmatpush1.msra.mxu0 %v7590
        %7648 = vmatprep.subr.mxu0 0.0
        %7649 = vmatpush1.msra.mxu0 %v7591
        %7650 = vmatprep.subr.mxu0 0.0
        %7651 = vmatpush1.msra.mxu0 %v7592
        %7652 = vmatprep.subr.mxu0 0.0
        %7653 = vmatpush1.msra.mxu0 %v7593
        %7654 = vmatprep.subr.mxu0 0.0
        %7655 = vmatpush1.msra.mxu0 %v7594
        %7656 = vmatprep.subr.mxu0 0.0
        %7657 = vmatpush1.msra.mxu0 %v7595
        %7658 = vmatprep.subr.mxu0 0.0
        %7659 = vmatpush1.msra.mxu0 %v7596
        %7660 = vmatprep.subr.mxu0 0.0
        %7661 = vmatpush1.msra.mxu0 %v7597
        %7662 = vmatprep.subr.mxu0 0.0
        %7663 = vmatpush1.msra.mxu0 0.0
        %7664 = vmatprep.subr.mxu0 0.0
        %7665 = vmatpush1.msra.mxu0 0.0
        %7666 = vmatprep.subr.mxu0 0.0
        %7667 = vmatpush1.msra.mxu0 0.0
        %7668 = vmatprep.subr.mxu0 0.0
        %7669 = vmatpush1.msra.mxu0 0.0
        %7670 = vmatprep.subr.mxu0 0.0
        %7671 = vmatpush1.msra.mxu0 0.0
        %7672 = vmatprep.subr.mxu0 0.0
        %7673 = vmatpush1.msra.mxu0 0.0
        %7674 = vmatprep.subr.mxu0 0.0
        %7675 = vmatpush1.msra.mxu0 0.0
        %7676 = vmatprep.subr.mxu0 0.0
        %7677 = vmatpush1.msra.mxu0 0.0
        %7678 = vmatprep.subr.mxu0 0.0
        %7679 = vmatpush1.msra.mxu0 0.0
        %7680 = vmatprep.subr.mxu0 0.0
        %7681 = vmatpush1.msra.mxu0 0.0
        %7682 = vmatprep.subr.mxu0 0.0
        %7683 = vmatpush1.msra.mxu0 0.0
        %7684 = vmatprep.subr.mxu0 0.0
        %7685 = vmatpush1.msra.mxu0 0.0
        %7686 = vmatprep.subr.mxu0 0.0
        %7687 = vmatpush1.msra.mxu0 0.0
        %7688 = vmatprep.subr.mxu0 0.0
        %7689 = vmatpush1.msra.mxu0 0.0
        %7690 = vmatprep.mubr.f32.mxu0 %v7606
        %7691 = vmatmul.mubr.f32.gmra.mrb[0].mxu0 %v7572
        %v7692 = vpop.f32.mrb[0].mxu0
        %v7693 = vadd.f32 %v7603, %v7692
        %v7694 = vpop.f32.mrb[0].mxu0
        %7695 = vmatprep.mubr.f32.mxu0 %v7609
        %7696 = vmatmul.mubr.f32.gmra.mrb[0].mxu0 %v7573
        %v7697 = vpop.f32.mrb[0].mxu0
        %v7698 = vadd.f32 %v7603, %v7697
        %v7699 = vpop.f32.mrb[0].mxu0
        %7700 = vmatprep.mubr.f32.mxu0 %v7612
        %7701 = vmatmul.mubr.f32.gmra.mrb[0].mxu0 %v7574
        %v7702 = vpop.f32.mrb[0].mxu0
        %v7703 = vadd.f32 %v7603, %v7702
        %v7704 = vpop.f32.mrb[0].mxu0
        %7705 = vmatprep.mubr.f32.mxu0 %v7615
        %7706 = vmatmul.mubr.f32.gmra.mrb[0].mxu0 %v7575
        %v7707 = vpop.f32.mrb[0].mxu0
        %v7708 = vadd.f32 %v7603, %v7707
        %v7709 = vpop.f32.mrb[0].mxu0
        %7710 = vmatprep.mubr.f32.mxu0 %v7618
        %7711 = vmatmul.mubr.f32.gmra.mrb[0].mxu0 %v7576
        %v7712 = vpop.f32.mrb[0].mxu0
        %v7713 = vadd.f32 %v7603, %v7712
        %v7714 = vpop.f32.mrb[0].mxu0
        %7715 = vmatprep.mubr.f32.mxu0 %v7621
        %7716 = vmatmul.mubr.f32.gmra.mrb[0].mxu0 %v7577
        %v7717 = vpop.f32.mrb[0].mxu0
        %v7718 = vadd.f32 %v7603, %v7717
        %v7719 = vpop.f32.mrb[0].mxu0
        %7720 = vmatprep.mubr.f32.mxu0 %v7624
        %7721 = vmatmul.mubr.f32.gmra.mrb[0].mxu0 %v7578
        %v7722 = vpop.f32.mrb[0].mxu0
        %v7723 = vadd.f32 %v7603, %v7722
        %v7724 = vpop.f32.mrb[0].mxu0
        %7725 = vmatprep.mubr.f32.mxu0 %v5568
        %7726 = vmatmul.mubr.f32.gmra.mrb[0].mxu0 %v7579
        %v7727 = vpop.f32.mrb[0].mxu0
        %v7728 = vadd.f32 %v7603, %v7727
        %v7729 = vpop.f32.mrb[0].mxu0
        %7730 = vdwg.mxu0
        %v7731 = vmax.f32 %v7693, 0.0
        %v7732 = vmax.f32 %v7698, 0.0
        %v7733 = vmax.f32 %v7703, 0.0
        %v7734 = vmax.f32 %v7708, 0.0
        %v7735 = vmax.f32 %v7713, 0.0
        %v7736 = vmax.f32 %v7718, 0.0
        %v7737 = vmax.f32 %v7723, 0.0
        %v7738 = vmax.f32 %v7728, 0.0
        %v7741 = vrot.slane %v6891, 3
        %v7742 = vrot.slane %v6892, 3
        %v7743 = vsel %vm5770, %v7741, %v7742
        %v7746 = vsel %vm5770, 0.0, %v7741
        %v7747 = vsel %vm5777, 0.0, %v7746
        %v7748 = vsel %vm5778, 0.0, %v7743
        %v7749 = vrot.slane %v6891, 4
        %v7750 = vrot.slane %v6892, 4
        %v7751 = vsel %vm5781, %v7749, %v7750
        %v7753 = vsel %vm5781, 0.0, %v7749
        %v7754 = vrot.slane %v6891, 5
        %v7755 = vrot.slane %v6892, 5
        %v7756 = vsel %vm2793, %v7754, %v7755
        %v7759 = vsel %vm2793, 0.0, %v7754
        %v7760 = vsel %vm5793, 0.0, %v7759
        %v7761 = vsel %vm5794, 0.0, %v7756
        %v7762 = vrot.slane %v6891, 7
        %v7763 = vrot.slane %v6892, 7
        %v7764 = vsel %vm1056, %v7762, %v7763
        %v7767 = vsel %vm1056, 0.0, %v7762
        %v7768 = vsel %vm5777, 0.0, %v7767
        %v7769 = vsel %vm5778, 0.0, %v7764
        %v7770 = vrot.slane %v6891, 1
        %v7771 = vrot.slane %v6892, 1
        %v7772 = vsel %vm1210, %v7770, %v7771
        %v7775 = vsel %vm1210, %v7771, 0.0
        %v7776 = vsel %vm5793, 0.0, %v7772
        %v7777 = vsel %vm5794, 0.0, %v7775
        %v7779 = vsel %vm5770, %v7742, 0.0
        %v7780 = vsel %vm5777, 0.0, %v7743
        %v7781 = vsel %vm5778, 0.0, %v7779
        %v7783 = vsel %vm5781, %v7750, 0.0
        %v7785 = vsel %vm2793, %v7755, 0.0
        %v7786 = vsel %vm5793, 0.0, %v7756
        %v7787 = vsel %vm5794, 0.0, %v7785
        %7789 = vrot.lane.b32.xlu0 %v7753, 32
        %v7790 = vpop.permute.xlu0 %7789
        %7791 = vrot.lane.b32.xlu0 %v7751, 32
        %v7792 = vpop.permute.xlu0 %7791
        %7797 = vrot.lane.b32.xlu0 %v7760, 64
        %v7798 = vpop.permute.xlu0 %7797
        %7799 = vrot.lane.b32.xlu0 %v7761, 64
        %v7800 = vpop.permute.xlu0 %7799
        %7805 = vrot.lane.b32.xlu0 %v7768, 96
        %v7806 = vpop.permute.xlu0 %7805
        %7807 = vrot.lane.b32.xlu0 %v7769, 96
        %v7808 = vpop.permute.xlu0 %7807
        %7813 = vrot.lane.b32.xlu0 %v7776, 32
        %v7814 = vpop.permute.xlu0 %7813
        %7815 = vrot.lane.b32.xlu0 %v7777, 32
        %v7816 = vpop.permute.xlu0 %7815
        %7821 = vrot.lane.b32.xlu0 %v7780, 64
        %v7822 = vpop.permute.xlu0 %7821
        %7823 = vrot.lane.b32.xlu0 %v7781, 64
        %v7824 = vpop.permute.xlu0 %7823
        %7828 = vrot.lane.b32.xlu0 %v7751, 96
        %v7829 = vpop.permute.xlu0 %7828
        %7830 = vrot.lane.b32.xlu0 %v7783, 96
        %v7831 = vpop.permute.xlu0 %7830
        %v7834 = vsel %vm4480, %v7747, %v7790
        %v7835 = vsel %vm4480, %v7748, %v7792
        %v7836 = vsel %vm4612, %v7834, %v7798
        %v7837 = vsel %vm4612, %v7835, %v7800
        %v7838 = vsel %vm5504, %v7836, %v7806
        %v7839 = vsel %vm5504, %v7837, %v7808
        %v7840 = vsel %vm4480, %v6891, %v7814
        %v7841 = vsel %vm4480, %v6892, %v7816
        %v7842 = vsel %vm4612, %v7840, %v7822
        %v7843 = vsel %vm4612, %v7841, %v7824
        %v7844 = vsel %vm5504, %v7842, %v7829
        %v7845 = vsel %vm5504, %v7843, %v7831
        %v7846 = vld [vmem:[%s35] sm:$0xff]
        %v7847 = vld [vmem:[%s35 + $0x8] sm:$0xff]
        %v7848 = vld [vmem:[%s35 + $0x10] sm:$0xff]
        %v7849 = vld [vmem:[%s35 + $0x18] sm:$0xff]
        %v7850 = vld [vmem:[%s35 + $0x20] sm:$0xff]
        %v7851 = vld [vmem:[%s35 + $0x28] sm:$0xff]
        %v7852 = vld [vmem:[%s35 + $0x30] sm:$0xff]
        %v7853 = vld [vmem:[%s35 + $0x38] sm:$0xff]
        %v7854 = vld [vmem:[%s35 + $0x40] sm:$0xff]
        %v7855 = vld [vmem:[%s35 + $0x48] sm:$0xff]
        %v7856 = vld [vmem:[%s35 + $0x50] sm:$0xff]
        %v7857 = vld [vmem:[%s35 + $0x58] sm:$0xff]
        %v7858 = vld [vmem:[%s35 + $0x60] sm:$0xff]
        %v7859 = vld [vmem:[%s35 + $0x68] sm:$0xff]
        %v7860 = vld [vmem:[%s35 + $0x70] sm:$0xff]
        %v7861 = vld [vmem:[%s35 + $0x78] sm:$0xff]
        %v7862 = vld [vmem:[%s35 + $0x80] sm:$0xff]
        %v7863 = vld [vmem:[%s35 + $0x88] sm:$0xff]
        %v7864 = vld [vmem:[%s35 + $0x90] sm:$0xff]
        %v7865 = vld [vmem:[%s35 + $0x98] sm:$0xff]
        %v7866 = vld [vmem:[%s35 + $0xa0] sm:$0xff]
        %v7867 = vld [vmem:[%s35 + $0xa8] sm:$0xff]
        %v7868 = vld [vmem:[%s35 + $0xb0] sm:$0xff]
        %v7869 = vld [vmem:[%s35 + $0xb8] sm:$0xff]
        %v7870 = vld [vmem:[%s35 + $0xc0] sm:$0xff]
        %v7871 = vld [vmem:[%s35 + $0xc8] sm:$0xff]
        %v7872 = vld [vmem:[%s35 + $0xd0] sm:$0xff]
        %v7873 = vld [vmem:[%s35 + $0xd8] sm:$0xff]
        %v7874 = vld [vmem:[%s35 + $0xe0] sm:$0xff]
        %v7875 = vld [vmem:[%s35 + $0xe8] sm:$0xff]
        %v7876 = vld [vmem:[%s35 + $0xf0] sm:$0xff]
        %v7877 = vld [vmem:[%s35 + $0xf8] sm:$0xff]
        %v7878 = vld [vmem:[%s35 + $0x100] sm:$0xff]
        %v7879 = vld [vmem:[%s35 + $0x108] sm:$0xff]
        %v7880 = vld [vmem:[%s35 + $0x110] sm:$0xff]
        %v7881 = vld [vmem:[%s35 + $0x118] sm:$0xff]
        %v7882 = vld [vmem:[%s37] sm:$0x1]
        %v7884 = vlaneseq
        %v7885 = vshrl.u32 %v7884, 7
        %v7886 = vsub.s32 0, %v7885
        %v7887 = vrot.slane %v7882, %v7886
        %v7890 = vsel %vm4480, %v7786, 0
        %v7893 = vsel %vm4480, %v7787, 0
        %7895 = vmatprep.subr.mxu0 0.0
        %7896 = vmatpush1.msra.mxu0 %v7846
        %7897 = vmatprep.subr.mxu0 0.0
        %7898 = vmatpush1.msra.mxu0 %v7847
        %7899 = vmatprep.subr.mxu0 0.0
        %7900 = vmatpush1.msra.mxu0 %v7848
        %7901 = vmatprep.subr.mxu0 0.0
        %7902 = vmatpush1.msra.mxu0 %v7849
        %7903 = vmatprep.subr.mxu0 0.0
        %7904 = vmatpush1.msra.mxu0 %v7850
        %7905 = vmatprep.subr.mxu0 0.0
        %7906 = vmatpush1.msra.mxu0 %v7851
        %7907 = vmatprep.subr.mxu0 0.0
        %7908 = vmatpush1.msra.mxu0 %v7852
        %7909 = vmatprep.subr.mxu0 0.0
        %7910 = vmatpush1.msra.mxu0 %v7853
        %7911 = vmatprep.subr.mxu0 0.0
        %7912 = vmatpush1.msra.mxu0 %v7854
        %7913 = vmatprep.subr.mxu0 0.0
        %7914 = vmatpush1.msra.mxu0 %v7855
        %7915 = vmatprep.subr.mxu0 0.0
        %7916 = vmatpush1.msra.mxu0 %v7856
        %7917 = vmatprep.subr.mxu0 0.0
        %7918 = vmatpush1.msra.mxu0 %v7857
        %7919 = vmatprep.subr.mxu0 0.0
        %7920 = vmatpush1.msra.mxu0 %v7858
        %7921 = vmatprep.subr.mxu0 0.0
        %7922 = vmatpush1.msra.mxu0 %v7859
        %7923 = vmatprep.subr.mxu0 0.0
        %7924 = vmatpush1.msra.mxu0 %v7860
        %7925 = vmatprep.subr.mxu0 0.0
        %7926 = vmatpush1.msra.mxu0 %v7861
        %7927 = vmatprep.subr.mxu0 0.0
        %7928 = vmatpush1.msra.mxu0 %v7862
        %7929 = vmatprep.subr.mxu0 0.0
        %7930 = vmatpush1.msra.mxu0 %v7863
        %7931 = vmatprep.subr.mxu0 0.0
        %7932 = vmatpush1.msra.mxu0 %v7864
        %7933 = vmatprep.subr.mxu0 0.0
        %7934 = vmatpush1.msra.mxu0 %v7865
        %7935 = vmatprep.subr.mxu0 0.0
        %7936 = vmatpush1.msra.mxu0 %v7866
        %7937 = vmatprep.subr.mxu0 0.0
        %7938 = vmatpush1.msra.mxu0 %v7867
        %7939 = vmatprep.subr.mxu0 0.0
        %7940 = vmatpush1.msra.mxu0 %v7868
        %7941 = vmatprep.subr.mxu0 0.0
        %7942 = vmatpush1.msra.mxu0 %v7869
        %7943 = vmatprep.subr.mxu0 0.0
        %7944 = vmatpush1.msra.mxu0 %v7870
        %7945 = vmatprep.subr.mxu0 0.0
        %7946 = vmatpush1.msra.mxu0 %v7871
        %7947 = vmatprep.subr.mxu0 0.0
        %7948 = vmatpush1.msra.mxu0 %v7872
        %7949 = vmatprep.subr.mxu0 0.0
        %7950 = vmatpush1.msra.mxu0 %v7873
        %7951 = vmatprep.subr.mxu0 0.0
        %7952 = vmatpush1.msra.mxu0 %v7874
        %7953 = vmatprep.subr.mxu0 0.0
        %7954 = vmatpush1.msra.mxu0 %v7875
        %7955 = vmatprep.subr.mxu0 0.0
        %7956 = vmatpush1.msra.mxu0 %v7876
        %7957 = vmatprep.subr.mxu0 0.0
        %7958 = vmatpush1.msra.mxu0 %v7877
        %7959 = vmatprep.mubr.f32.mxu0 %v7844
        %7960 = vmatmul.mubr.f32.gmra.mrb[0].mxu0 %v7838
        %v7961 = vpop.f32.mrb[0].mxu0
        %v7962 = vadd.f32 %v7887, %v7961
        %v7963 = vpop.f32.mrb[0].mxu0
        %7964 = vmatprep.mubr.f32.mxu0 %v7845
        %7965 = vmatmul.mubr.f32.gmra.mrb[0].mxu0 %v7839
        %v7966 = vpop.f32.mrb[0].mxu0
        %v7967 = vadd.f32 %v7887, %v7966
        %v7968 = vpop.f32.mrb[0].mxu0
        %7969 = vdwg.mxu0
        %7970 = vmatprep.subr.mxu0 0.0
        %7971 = vmatpush1.msra.mxu0 %v7878
        %7972 = vmatprep.subr.mxu0 0.0
        %7973 = vmatpush1.msra.mxu0 %v7879
        %7974 = vmatprep.subr.mxu0 0.0
        %7975 = vmatpush1.msra.mxu0 %v7880
        %7976 = vmatprep.subr.mxu0 0.0
        %7977 = vmatpush1.msra.mxu0 %v7881
        %7978 = vmatprep.subr.mxu0 0.0
        %7979 = vmatpush1.msra.mxu0 0.0
        %7980 = vmatprep.subr.mxu0 0.0
        %7981 = vmatpush1.msra.mxu0 0.0
        %7982 = vmatprep.subr.mxu0 0.0
        %7983 = vmatpush1.msra.mxu0 0.0
        %7984 = vmatprep.subr.mxu0 0.0
        %7985 = vmatpush1.msra.mxu0 0.0
        %7986 = vmatprep.subr.mxu0 0.0
        %7987 = vmatpush1.msra.mxu0 0.0
        %7988 = vmatprep.subr.mxu0 0.0
        %7989 = vmatpush1.msra.mxu0 0.0
        %7990 = vmatprep.subr.mxu0 0.0
        %7991 = vmatpush1.msra.mxu0 0.0
        %7992 = vmatprep.subr.mxu0 0.0
        %7993 = vmatpush1.msra.mxu0 0.0
        %7994 = vmatprep.subr.mxu0 0.0
        %7995 = vmatpush1.msra.mxu0 0.0
        %7996 = vmatprep.subr.mxu0 0.0
        %7997 = vmatpush1.msra.mxu0 0.0
        %7998 = vmatprep.subr.mxu0 0.0
        %7999 = vmatpush1.msra.mxu0 0.0
        %8000 = vmatprep.subr.mxu0 0.0
        %8001 = vmatpush1.msra.mxu0 0.0
        %8002 = vmatprep.subr.mxu0 0.0
        %8003 = vmatpush1.msra.mxu0 0.0
        %8004 = vmatprep.subr.mxu0 0.0
        %8005 = vmatpush1.msra.mxu0 0.0
        %8006 = vmatprep.subr.mxu0 0.0
        %8007 = vmatpush1.msra.mxu0 0.0
        %8008 = vmatprep.subr.mxu0 0.0
        %8009 = vmatpush1.msra.mxu0 0.0
        %8010 = vmatprep.subr.mxu0 0.0
        %8011 = vmatpush1.msra.mxu0 0.0
        %8012 = vmatprep.subr.mxu0 0.0
        %8013 = vmatpush1.msra.mxu0 0.0
        %8014 = vmatprep.subr.mxu0 0.0
        %8015 = vmatpush1.msra.mxu0 0.0
        %8016 = vmatprep.subr.mxu0 0.0
        %8017 = vmatpush1.msra.mxu0 0.0
        %8018 = vmatprep.subr.mxu0 0.0
        %8019 = vmatpush1.msra.mxu0 0.0
        %8020 = vmatprep.subr.mxu0 0.0
        %8021 = vmatpush1.msra.mxu0 0.0
        %8022 = vmatprep.subr.mxu0 0.0
        %8023 = vmatpush1.msra.mxu0 0.0
        %8024 = vmatprep.subr.mxu0 0.0
        %8025 = vmatpush1.msra.mxu0 0.0
        %8026 = vmatprep.subr.mxu0 0.0
        %8027 = vmatpush1.msra.mxu0 0.0
        %8028 = vmatprep.subr.mxu0 0.0
        %8029 = vmatpush1.msra.mxu0 0.0
        %8030 = vmatprep.subr.mxu0 0.0
        %8031 = vmatpush1.msra.mxu0 0.0
        %8032 = vmatprep.subr.mxu0 0.0
        %8033 = vmatpush1.msra.mxu0 0.0
        %8034 = vmatprep.mubr.f32.mxu0 0.0
        %8035 = vmatmul.mubr.f32.gmra.mrb[0].mxu0 %v7890
        %v8036 = vpop.f32.mrb[0].mxu0
        %v8037 = vadd.f32 %v7962, %v8036
        %v8038 = vpop.f32.mrb[0].mxu0
        %8039 = vmatprep.mubr.f32.mxu0 0.0
        %8040 = vmatmul.mubr.f32.gmra.mrb[0].mxu0 %v7893
        %v8041 = vpop.f32.mrb[0].mxu0
        %v8042 = vadd.f32 %v7967, %v8041
        %v8043 = vpop.f32.mrb[0].mxu0
        %8044 = vdwg.mxu0
        %v8045 = vmax.f32 %v8037, 0.0
        %v8046 = vmax.f32 %v8042, 0.0
        %8047 = vmatprep.subr.mxu0 0.0
        %8048 = vmatpush1.msra.mxu0 %v8045
        %8049 = vmatprep.subr.mxu0 0.0
        %8050 = vmatpush1.msra.mxu0 %v8046
        %8051 = vmatprep.subr.mxu0 0.0
        %8052 = vmatpush1.msra.mxu0 0.0
        %8053 = vmatprep.subr.mxu0 0.0
        %8054 = vmatpush1.msra.mxu0 0.0
        %8055 = vmatprep.subr.mxu0 0.0
        %8056 = vmatpush1.msra.mxu0 0.0
        %8057 = vmatprep.subr.mxu0 0.0
        %8058 = vmatpush1.msra.mxu0 0.0
        %8059 = vmatprep.subr.mxu0 0.0
        %8060 = vmatpush1.msra.mxu0 0.0
        %8061 = vmatprep.subr.mxu0 0.0
        %8062 = vmatpush1.msra.mxu0 0.0
        %8063 = vmatprep.subr.mxu0 0.0
        %8064 = vmatpush1.msra.mxu0 0.0
        %8065 = vmatprep.subr.mxu0 0.0
        %8066 = vmatpush1.msra.mxu0 0.0
        %8067 = vmatprep.subr.mxu0 0.0
        %8068 = vmatpush1.msra.mxu0 0.0
        %8069 = vmatprep.subr.mxu0 0.0
        %8070 = vmatpush1.msra.mxu0 0.0
        %8071 = vmatprep.subr.mxu0 0.0
        %8072 = vmatpush1.msra.mxu0 0.0
        %8073 = vmatprep.subr.mxu0 0.0
        %8074 = vmatpush1.msra.mxu0 0.0
        %8075 = vmatprep.subr.mxu0 0.0
        %8076 = vmatpush1.msra.mxu0 0.0
        %8077 = vmatprep.subr.mxu0 0.0
        %8078 = vmatpush1.msra.mxu0 0.0
        %8079 = vmatprep.subr.mxu0 0.0
        %8080 = vmatpush1.msra.mxu0 0.0
        %8081 = vmatprep.subr.mxu0 0.0
        %8082 = vmatpush1.msra.mxu0 0.0
        %8083 = vmatprep.subr.mxu0 0.0
        %8084 = vmatpush1.msra.mxu0 0.0
        %8085 = vmatprep.subr.mxu0 0.0
        %8086 = vmatpush1.msra.mxu0 0.0
        %8087 = vmatprep.subr.mxu0 0.0
        %8088 = vmatpush1.msra.mxu0 0.0
        %8089 = vmatprep.subr.mxu0 0.0
        %8090 = vmatpush1.msra.mxu0 0.0
        %8091 = vmatprep.subr.mxu0 0.0
        %8092 = vmatpush1.msra.mxu0 0.0
        %8093 = vmatprep.subr.mxu0 0.0
        %8094 = vmatpush1.msra.mxu0 0.0
        %8095 = vmatprep.subr.mxu0 0.0
        %8096 = vmatpush1.msra.mxu0 0.0
        %8097 = vmatprep.subr.mxu0 0.0
        %8098 = vmatpush1.msra.mxu0 0.0
        %8099 = vmatprep.subr.mxu0 0.0
        %8100 = vmatpush1.msra.mxu0 0.0
        %8101 = vmatprep.subr.mxu0 0.0
        %8102 = vmatpush1.msra.mxu0 0.0
        %8103 = vmatprep.subr.mxu0 0.0
        %8104 = vmatpush1.msra.mxu0 0.0
        %8105 = vmatprep.subr.mxu0 0.0
        %8106 = vmatpush1.msra.mxu0 0.0
        %8107 = vmatprep.subr.mxu0 0.0
        %8108 = vmatpush1.msra.mxu0 0.0
        %8109 = vmatprep.subr.mxu0 0.0
        %8110 = vmatpush1.msra.mxu0 0.0
        %8111 = vmatprep.mubr.f32.mxu0 0.0
        %8112 = vmatmul.mubr.f32.gmra.mrb[0].mxu0 %v7097
        %v8113 = vpop.f32.mrb[0].mxu0
        %v8114 = vadd.f32 %v7731, %v8113
        %v8115 = vpop.f32.mrb[0].mxu0
        %8116 = vmatprep.mubr.f32.mxu0 0.0
        %8117 = vmatmul.mubr.f32.gmra.mrb[0].mxu0 %v7100
        %v8118 = vpop.f32.mrb[0].mxu0
        %v8119 = vadd.f32 %v7732, %v8118
        %v8120 = vpop.f32.mrb[0].mxu0
        %8121 = vmatprep.mubr.f32.mxu0 0.0
        %8122 = vmatmul.mubr.f32.gmra.mrb[0].mxu0 %v7103
        %v8123 = vpop.f32.mrb[0].mxu0
        %v8124 = vadd.f32 %v7733, %v8123
        %v8125 = vpop.f32.mrb[0].mxu0
        %8126 = vmatprep.mubr.f32.mxu0 0.0
        %8127 = vmatmul.mubr.f32.gmra.mrb[0].mxu0 %v7106
        %v8128 = vpop.f32.mrb[0].mxu0
        %v8129 = vadd.f32 %v7734, %v8128
        %v8130 = vpop.f32.mrb[0].mxu0
        %8131 = vmatprep.mubr.f32.mxu0 0.0
        %8132 = vmatmul.mubr.f32.gmra.mrb[0].mxu0 %v7109
        %v8133 = vpop.f32.mrb[0].mxu0
        %v8134 = vadd.f32 %v7735, %v8133
        %v8135 = vpop.f32.mrb[0].mxu0
        %8136 = vmatprep.mubr.f32.mxu0 0.0
        %8137 = vmatmul.mubr.f32.gmra.mrb[0].mxu0 %v7112
        %v8138 = vpop.f32.mrb[0].mxu0
        %v8139 = vadd.f32 %v7736, %v8138
        %v8140 = vpop.f32.mrb[0].mxu0
        %8141 = vmatprep.mubr.f32.mxu0 0.0
        %8142 = vmatmul.mubr.f32.gmra.mrb[0].mxu0 %v7115
        %v8143 = vpop.f32.mrb[0].mxu0
        %v8144 = vadd.f32 %v7737, %v8143
        %v8145 = vpop.f32.mrb[0].mxu0
        %8146 = vmatprep.mubr.f32.mxu0 0.0
        %8147 = vmatmul.mubr.f32.gmra.mrb[0].mxu0 %v7118
        %v8148 = vpop.f32.mrb[0].mxu0
        %v8149 = vadd.f32 %v7738, %v8148
        %v8150 = vpop.f32.mrb[0].mxu0
        %8151 = vdwg.mxu0
        %v8159 = vrot.slane %v8114, 7
        %v8160 = vrot.slane %v8119, 7
        %v8161 = vsel %vm1056, %v8159, %v8160
        %v8162 = vrot.slane %v8124, 7
        %v8163 = vsel %vm1056, %v8160, %v8162
        %v8164 = vrot.slane %v8129, 7
        %v8165 = vsel %vm1056, %v8162, %v8164
        %v8166 = vrot.slane %v8134, 7
        %v8167 = vsel %vm1056, %v8164, %v8166
        %v8168 = vrot.slane %v8139, 7
        %v8169 = vsel %vm1056, %v8166, %v8168
        %v8170 = vrot.slane %v8144, 7
        %v8171 = vsel %vm1056, %v8168, %v8170
        %v8179 = vsel %vm1056, 0.0, %v8159
        %v8180 = vsel %vm5173, 0.0, %v8179
        %v8181 = vsel %vm5174, 0.0, %v8161
        %v8182 = vsel %vm5175, 0.0, %v8163
        %v8183 = vsel %vm5176, 0.0, %v8165
        %v8184 = vsel %vm5177, 0.0, %v8167
        %v8185 = vsel %vm5178, 0.0, %v8169
        %v8186 = vsel %vm5179, 0.0, %v8171
        %v8188 = vrot.slane %v8114, 1
        %v8189 = vrot.slane %v8119, 1
        %v8190 = vsel %vm1210, %v8188, %v8189
        %v8191 = vrot.slane %v8124, 1
        %v8192 = vsel %vm1210, %v8189, %v8191
        %v8193 = vrot.slane %v8129, 1
        %v8194 = vsel %vm1210, %v8191, %v8193
        %v8195 = vrot.slane %v8134, 1
        %v8196 = vsel %vm1210, %v8193, %v8195
        %v8197 = vrot.slane %v8139, 1
        %v8198 = vsel %vm1210, %v8195, %v8197
        %v8199 = vrot.slane %v8144, 1
        %v8200 = vsel %vm1210, %v8197, %v8199
        %v8201 = vrot.slane %v8149, 1
        %v8202 = vsel %vm1210, %v8199, %v8201
        %v8211 = vsel %vm1210, 0.0, %v8188
        %v8212 = vsel %vm5212, 0.0, %v8211
        %v8213 = vsel %vm5213, 0.0, %v8190
        %v8214 = vsel %vm5214, 0.0, %v8192
        %v8215 = vsel %vm5215, 0.0, %v8194
        %v8216 = vsel %vm5216, 0.0, %v8196
        %v8217 = vsel %vm5217, 0.0, %v8198
        %v8218 = vsel %vm5218, 0.0, %v8200
        %v8219 = vsel %vm5219, 0.0, %v8202
        %v8220 = vrot.slane %v8149, 7
        %v8221 = vsel %vm1056, %v8170, %v8220
        %v8223 = vsel %vm5172, 0.0, %v8179
        %v8224 = vsel %vm5173, 0.0, %v8161
        %v8225 = vsel %vm5174, 0.0, %v8163
        %v8226 = vsel %vm5175, 0.0, %v8165
        %v8227 = vsel %vm5176, 0.0, %v8167
        %v8228 = vsel %vm5177, 0.0, %v8169
        %v8229 = vsel %vm5178, 0.0, %v8171
        %v8230 = vsel %vm5179, 0.0, %v8221
        %v8232 = vsel %vm1210, %v8201, 0.0
        %v8233 = vsel %vm5212, 0.0, %v8190
        %v8234 = vsel %vm5213, 0.0, %v8192
        %v8235 = vsel %vm5214, 0.0, %v8194
        %v8236 = vsel %vm5215, 0.0, %v8196
        %v8237 = vsel %vm5216, 0.0, %v8198
        %v8238 = vsel %vm5217, 0.0, %v8200
        %v8239 = vsel %vm5218, 0.0, %v8202
        %v8240 = vsel %vm5219, 0.0, %v8232
        %v8242 = vsel %vm1056, %v8220, 0.0
        %v8243 = vsel %vm5172, 0.0, %v8161
        %v8244 = vsel %vm5173, 0.0, %v8163
        %v8245 = vsel %vm5174, 0.0, %v8165
        %v8246 = vsel %vm5175, 0.0, %v8167
        %v8247 = vsel %vm5176, 0.0, %v8169
        %v8248 = vsel %vm5177, 0.0, %v8171
        %v8249 = vsel %vm5178, 0.0, %v8221
        %v8250 = vsel %vm5179, 0.0, %v8242
        %v8251 = vsel %vm5212, 0.0, %v8192
        %v8252 = vsel %vm5213, 0.0, %v8194
        %v8253 = vsel %vm5214, 0.0, %v8196
        %v8254 = vsel %vm5215, 0.0, %v8198
        %v8255 = vsel %vm5216, 0.0, %v8200
        %v8256 = vsel %vm5217, 0.0, %v8202
        %v8257 = vsel %vm5218, 0.0, %v8232
        %8258 = vrot.lane.b32.xlu0 %v8114, 16
        %v8259 = vpop.permute.xlu0 %8258
        %8260 = vrot.lane.b32.xlu0 %v8119, 16
        %v8261 = vpop.permute.xlu0 %8260
        %8262 = vrot.lane.b32.xlu0 %v8124, 16
        %v8263 = vpop.permute.xlu0 %8262
        %8264 = vrot.lane.b32.xlu0 %v8129, 16
        %v8265 = vpop.permute.xlu0 %8264
        %8266 = vrot.lane.b32.xlu0 %v8134, 16
        %v8267 = vpop.permute.xlu0 %8266
        %8268 = vrot.lane.b32.xlu0 %v8139, 16
        %v8269 = vpop.permute.xlu0 %8268
        %8270 = vrot.lane.b32.xlu0 %v8144, 16
        %v8271 = vpop.permute.xlu0 %8270
        %8287 = vrot.lane.b32.xlu0 %v8212, 32
        %v8288 = vpop.permute.xlu0 %8287
        %8289 = vrot.lane.b32.xlu0 %v8213, 32
        %v8290 = vpop.permute.xlu0 %8289
        %8291 = vrot.lane.b32.xlu0 %v8214, 32
        %v8292 = vpop.permute.xlu0 %8291
        %8293 = vrot.lane.b32.xlu0 %v8215, 32
        %v8294 = vpop.permute.xlu0 %8293
        %8295 = vrot.lane.b32.xlu0 %v8216, 32
        %v8296 = vpop.permute.xlu0 %8295
        %8297 = vrot.lane.b32.xlu0 %v8217, 32
        %v8298 = vpop.permute.xlu0 %8297
        %8299 = vrot.lane.b32.xlu0 %v8218, 32
        %v8300 = vpop.permute.xlu0 %8299
        %8301 = vrot.lane.b32.xlu0 %v8219, 32
        %v8302 = vpop.permute.xlu0 %8301
        %8319 = vrot.lane.b32.xlu0 %v8223, 48
        %v8320 = vpop.permute.xlu0 %8319
        %8321 = vrot.lane.b32.xlu0 %v8224, 48
        %v8322 = vpop.permute.xlu0 %8321
        %8323 = vrot.lane.b32.xlu0 %v8225, 48
        %v8324 = vpop.permute.xlu0 %8323
        %8325 = vrot.lane.b32.xlu0 %v8226, 48
        %v8326 = vpop.permute.xlu0 %8325
        %8327 = vrot.lane.b32.xlu0 %v8227, 48
        %v8328 = vpop.permute.xlu0 %8327
        %8329 = vrot.lane.b32.xlu0 %v8228, 48
        %v8330 = vpop.permute.xlu0 %8329
        %8331 = vrot.lane.b32.xlu0 %v8229, 48
        %v8332 = vpop.permute.xlu0 %8331
        %8333 = vrot.lane.b32.xlu0 %v8230, 48
        %v8334 = vpop.permute.xlu0 %8333
        %8343 = vrot.lane.b32.xlu0 %v8114, 64
        %v8344 = vpop.permute.xlu0 %8343
        %8345 = vrot.lane.b32.xlu0 %v8119, 64
        %v8346 = vpop.permute.xlu0 %8345
        %8347 = vrot.lane.b32.xlu0 %v8124, 64
        %v8348 = vpop.permute.xlu0 %8347
        %8349 = vrot.lane.b32.xlu0 %v8129, 64
        %v8350 = vpop.permute.xlu0 %8349
        %8351 = vrot.lane.b32.xlu0 %v8134, 64
        %v8352 = vpop.permute.xlu0 %8351
        %8353 = vrot.lane.b32.xlu0 %v8139, 64
        %v8354 = vpop.permute.xlu0 %8353
        %8355 = vrot.lane.b32.xlu0 %v8144, 64
        %v8356 = vpop.permute.xlu0 %8355
        %8357 = vrot.lane.b32.xlu0 %v8149, 64
        %v8358 = vpop.permute.xlu0 %8357
        %8375 = vrot.lane.b32.xlu0 %v8233, 80
        %v8376 = vpop.permute.xlu0 %8375
        %8377 = vrot.lane.b32.xlu0 %v8234, 80
        %v8378 = vpop.permute.xlu0 %8377
        %8379 = vrot.lane.b32.xlu0 %v8235, 80
        %v8380 = vpop.permute.xlu0 %8379
        %8381 = vrot.lane.b32.xlu0 %v8236, 80
        %v8382 = vpop.permute.xlu0 %8381
        %8383 = vrot.lane.b32.xlu0 %v8237, 80
        %v8384 = vpop.permute.xlu0 %8383
        %8385 = vrot.lane.b32.xlu0 %v8238, 80
        %v8386 = vpop.permute.xlu0 %8385
        %8387 = vrot.lane.b32.xlu0 %v8239, 80
        %v8388 = vpop.permute.xlu0 %8387
        %8389 = vrot.lane.b32.xlu0 %v8240, 80
        %v8390 = vpop.permute.xlu0 %8389
        %8407 = vrot.lane.b32.xlu0 %v8243, 96
        %v8408 = vpop.permute.xlu0 %8407
        %8409 = vrot.lane.b32.xlu0 %v8244, 96
        %v8410 = vpop.permute.xlu0 %8409
        %8411 = vrot.lane.b32.xlu0 %v8245, 96
        %v8412 = vpop.permute.xlu0 %8411
        %8413 = vrot.lane.b32.xlu0 %v8246, 96
        %v8414 = vpop.permute.xlu0 %8413
        %8415 = vrot.lane.b32.xlu0 %v8247, 96
        %v8416 = vpop.permute.xlu0 %8415
        %8417 = vrot.lane.b32.xlu0 %v8248, 96
        %v8418 = vpop.permute.xlu0 %8417
        %8419 = vrot.lane.b32.xlu0 %v8249, 96
        %v8420 = vpop.permute.xlu0 %8419
        %8421 = vrot.lane.b32.xlu0 %v8250, 96
        %v8422 = vpop.permute.xlu0 %8421
        %8431 = vrot.lane.b32.xlu0 %v8119, 112
        %v8432 = vpop.permute.xlu0 %8431
        %8433 = vrot.lane.b32.xlu0 %v8124, 112
        %v8434 = vpop.permute.xlu0 %8433
        %8435 = vrot.lane.b32.xlu0 %v8129, 112
        %v8436 = vpop.permute.xlu0 %8435
        %8437 = vrot.lane.b32.xlu0 %v8134, 112
        %v8438 = vpop.permute.xlu0 %8437
        %8439 = vrot.lane.b32.xlu0 %v8139, 112
        %v8440 = vpop.permute.xlu0 %8439
        %8441 = vrot.lane.b32.xlu0 %v8144, 112
        %v8442 = vpop.permute.xlu0 %8441
        %8443 = vrot.lane.b32.xlu0 %v8149, 112
        %v8444 = vpop.permute.xlu0 %8443
        %v8452 = vsel %vm4415, %v8180, %v8259
        %v8453 = vsel %vm4415, %v8181, %v8261
        %v8454 = vsel %vm4415, %v8182, %v8263
        %v8455 = vsel %vm4415, %v8183, %v8265
        %v8456 = vsel %vm4415, %v8184, %v8267
        %v8457 = vsel %vm4415, %v8185, %v8269
        %v8458 = vsel %vm4415, %v8186, %v8271
        %v8459 = vsel %vm4480, %v5463, %v8288
        %v8460 = vsel %vm4480, %v8452, %v8290
        %v8461 = vsel %vm4480, %v8453, %v8292
        %v8462 = vsel %vm4480, %v8454, %v8294
        %v8463 = vsel %vm4480, %v8455, %v8296
        %v8464 = vsel %vm4480, %v8456, %v8298
        %v8465 = vsel %vm4480, %v8457, %v8300
        %v8466 = vsel %vm4480, %v8458, %v8302
        %v8467 = vsel %vm4546, %v8459, %v8320
        %v8468 = vsel %vm4546, %v8460, %v8322
        %v8469 = vsel %vm4546, %v8461, %v8324
        %v8470 = vsel %vm4546, %v8462, %v8326
        %v8471 = vsel %vm4546, %v8463, %v8328
        %v8472 = vsel %vm4546, %v8464, %v8330
        %v8473 = vsel %vm4546, %v8465, %v8332
        %v8474 = vsel %vm4546, %v8466, %v8334
        %v8475 = vsel %vm4612, %v8467, %v8344
        %v8476 = vsel %vm4612, %v8468, %v8346
        %v8477 = vsel %vm4612, %v8469, %v8348
        %v8478 = vsel %vm4612, %v8470, %v8350
        %v8479 = vsel %vm4612, %v8471, %v8352
        %v8480 = vsel %vm4612, %v8472, %v8354
        %v8481 = vsel %vm4612, %v8473, %v8356
        %v8482 = vsel %vm4612, %v8474, %v8358
        %v8483 = vsel %vm5495, %v8475, %v8376
        %v8484 = vsel %vm5495, %v8476, %v8378
        %v8485 = vsel %vm5495, %v8477, %v8380
        %v8486 = vsel %vm5495, %v8478, %v8382
        %v8487 = vsel %vm5495, %v8479, %v8384
        %v8488 = vsel %vm5495, %v8480, %v8386
        %v8489 = vsel %vm5495, %v8481, %v8388
        %v8490 = vsel %vm5495, %v8482, %v8390
        %v8491 = vsel %vm5504, %v8483, %v8408
        %v8492 = vsel %vm5504, %v8484, %v8410
        %v8493 = vsel %vm5504, %v8485, %v8412
        %v8494 = vsel %vm5504, %v8486, %v8414
        %v8495 = vsel %vm5504, %v8487, %v8416
        %v8496 = vsel %vm5504, %v8488, %v8418
        %v8497 = vsel %vm5504, %v8489, %v8420
        %v8498 = vsel %vm5504, %v8490, %v8422
        %v8499 = vsel %vm5513, %v8491, %v8432
        %v8500 = vsel %vm5513, %v8492, %v8434
        %v8501 = vsel %vm5513, %v8493, %v8436
        %v8502 = vsel %vm5513, %v8494, %v8438
        %v8503 = vsel %vm5513, %v8495, %v8440
        %v8504 = vsel %vm5513, %v8496, %v8442
        %v8505 = vsel %vm5513, %v8497, %v8444
        %v8506 = vsel %vm5513, %v8498, %v5454
        %v8507 = vld [vmem:[%s39] sm:$0xff]
        %v8508 = vld [vmem:[%s39 + $0x8] sm:$0xff]
        %v8509 = vld [vmem:[%s39 + $0x10] sm:$0xff]
        %v8510 = vld [vmem:[%s39 + $0x18] sm:$0xff]
        %v8511 = vld [vmem:[%s39 + $0x20] sm:$0xff]
        %v8512 = vld [vmem:[%s39 + $0x28] sm:$0xff]
        %v8513 = vld [vmem:[%s39 + $0x30] sm:$0xff]
        %v8514 = vld [vmem:[%s39 + $0x38] sm:$0xff]
        %v8515 = vld [vmem:[%s39 + $0x40] sm:$0xff]
        %v8516 = vld [vmem:[%s39 + $0x48] sm:$0xff]
        %v8517 = vld [vmem:[%s39 + $0x50] sm:$0xff]
        %v8518 = vld [vmem:[%s39 + $0x58] sm:$0xff]
        %v8519 = vld [vmem:[%s39 + $0x60] sm:$0xff]
        %v8520 = vld [vmem:[%s39 + $0x68] sm:$0xff]
        %v8521 = vld [vmem:[%s39 + $0x70] sm:$0xff]
        %v8522 = vld [vmem:[%s39 + $0x78] sm:$0xff]
        %v8523 = vld [vmem:[%s39 + $0x80] sm:$0xff]
        %v8524 = vld [vmem:[%s39 + $0x88] sm:$0xff]
        %v8525 = vld [vmem:[%s41] sm:$0x1]
        %v8527 = vlaneseq
        %v8528 = vshrl.u32 %v8527, 7
        %v8529 = vsub.s32 0, %v8528
        %v8530 = vrot.slane %v8525, %v8529
        %v8533 = vsel %vm4415, %v8251, 0
        %v8536 = vsel %vm4415, %v8252, 0
        %v8539 = vsel %vm4415, %v8253, 0
        %v8542 = vsel %vm4415, %v8254, 0
        %v8545 = vsel %vm4415, %v8255, 0
        %v8548 = vsel %vm4415, %v8256, 0
        %v8551 = vsel %vm4415, %v8257, 0
        %8553 = vmatprep.subr.mxu0 0.0
        %8554 = vmatpush1.msra.mxu0 %v8507
        %8555 = vmatprep.subr.mxu0 0.0
        %8556 = vmatpush1.msra.mxu0 %v8508
        %8557 = vmatprep.subr.mxu0 0.0
        %8558 = vmatpush1.msra.mxu0 %v8509
        %8559 = vmatprep.subr.mxu0 0.0
        %8560 = vmatpush1.msra.mxu0 %v8510
        %8561 = vmatprep.subr.mxu0 0.0
        %8562 = vmatpush1.msra.mxu0 %v8511
        %8563 = vmatprep.subr.mxu0 0.0
        %8564 = vmatpush1.msra.mxu0 %v8512
        %8565 = vmatprep.subr.mxu0 0.0
        %8566 = vmatpush1.msra.mxu0 %v8513
        %8567 = vmatprep.subr.mxu0 0.0
        %8568 = vmatpush1.msra.mxu0 %v8514
        %8569 = vmatprep.subr.mxu0 0.0
        %8570 = vmatpush1.msra.mxu0 %v8515
        %8571 = vmatprep.subr.mxu0 0.0
        %8572 = vmatpush1.msra.mxu0 %v8516
        %8573 = vmatprep.subr.mxu0 0.0
        %8574 = vmatpush1.msra.mxu0 %v8517
        %8575 = vmatprep.subr.mxu0 0.0
        %8576 = vmatpush1.msra.mxu0 %v8518
        %8577 = vmatprep.subr.mxu0 0.0
        %8578 = vmatpush1.msra.mxu0 %v8519
        %8579 = vmatprep.subr.mxu0 0.0
        %8580 = vmatpush1.msra.mxu0 %v8520
        %8581 = vmatprep.subr.mxu0 0.0
        %8582 = vmatpush1.msra.mxu0 %v8521
        %8583 = vmatprep.subr.mxu0 0.0
        %8584 = vmatpush1.msra.mxu0 %v8522
        %8585 = vmatprep.subr.mxu0 0.0
        %8586 = vmatpush1.msra.mxu0 %v8523
        %8587 = vmatprep.subr.mxu0 0.0
        %8588 = vmatpush1.msra.mxu0 %v8524
        %8589 = vmatprep.subr.mxu0 0.0
        %8590 = vmatpush1.msra.mxu0 0.0
        %8591 = vmatprep.subr.mxu0 0.0
        %8592 = vmatpush1.msra.mxu0 0.0
        %8593 = vmatprep.subr.mxu0 0.0
        %8594 = vmatpush1.msra.mxu0 0.0
        %8595 = vmatprep.subr.mxu0 0.0
        %8596 = vmatpush1.msra.mxu0 0.0
        %8597 = vmatprep.subr.mxu0 0.0
        %8598 = vmatpush1.msra.mxu0 0.0
        %8599 = vmatprep.subr.mxu0 0.0
        %8600 = vmatpush1.msra.mxu0 0.0
        %8601 = vmatprep.subr.mxu0 0.0
        %8602 = vmatpush1.msra.mxu0 0.0
        %8603 = vmatprep.subr.mxu0 0.0
        %8604 = vmatpush1.msra.mxu0 0.0
        %8605 = vmatprep.subr.mxu0 0.0
        %8606 = vmatpush1.msra.mxu0 0.0
        %8607 = vmatprep.subr.mxu0 0.0
        %8608 = vmatpush1.msra.mxu0 0.0
        %8609 = vmatprep.subr.mxu0 0.0
        %8610 = vmatpush1.msra.mxu0 0.0
        %8611 = vmatprep.subr.mxu0 0.0
        %8612 = vmatpush1.msra.mxu0 0.0
        %8613 = vmatprep.subr.mxu0 0.0
        %8614 = vmatpush1.msra.mxu0 0.0
        %8615 = vmatprep.subr.mxu0 0.0
        %8616 = vmatpush1.msra.mxu0 0.0
        %8617 = vmatprep.mubr.f32.mxu0 %v8533
        %8618 = vmatmul.mubr.f32.gmra.mrb[0].mxu0 %v8499
        %v8619 = vpop.f32.mrb[0].mxu0
        %v8620 = vadd.f32 %v8530, %v8619
        %v8621 = vpop.f32.mrb[0].mxu0
        %8622 = vmatprep.mubr.f32.mxu0 %v8536
        %8623 = vmatmul.mubr.f32.gmra.mrb[0].mxu0 %v8500
        %v8624 = vpop.f32.mrb[0].mxu0
        %v8625 = vadd.f32 %v8530, %v8624
        %v8626 = vpop.f32.mrb[0].mxu0
        %8627 = vmatprep.mubr.f32.mxu0 %v8539
        %8628 = vmatmul.mubr.f32.gmra.mrb[0].mxu0 %v8501
        %v8629 = vpop.f32.mrb[0].mxu0
        %v8630 = vadd.f32 %v8530, %v8629
        %v8631 = vpop.f32.mrb[0].mxu0
        %8632 = vmatprep.mubr.f32.mxu0 %v8542
        %8633 = vmatmul.mubr.f32.gmra.mrb[0].mxu0 %v8502
        %v8634 = vpop.f32.mrb[0].mxu0
        %v8635 = vadd.f32 %v8530, %v8634
        %v8636 = vpop.f32.mrb[0].mxu0
        %8637 = vmatprep.mubr.f32.mxu0 %v8545
        %8638 = vmatmul.mubr.f32.gmra.mrb[0].mxu0 %v8503
        %v8639 = vpop.f32.mrb[0].mxu0
        %v8640 = vadd.f32 %v8530, %v8639
        %v8641 = vpop.f32.mrb[0].mxu0
        %8642 = vmatprep.mubr.f32.mxu0 %v8548
        %8643 = vmatmul.mubr.f32.gmra.mrb[0].mxu0 %v8504
        %v8644 = vpop.f32.mrb[0].mxu0
        %v8645 = vadd.f32 %v8530, %v8644
        %v8646 = vpop.f32.mrb[0].mxu0
        %8647 = vmatprep.mubr.f32.mxu0 %v8551
        %8648 = vmatmul.mubr.f32.gmra.mrb[0].mxu0 %v8505
        %v8649 = vpop.f32.mrb[0].mxu0
        %v8650 = vadd.f32 %v8530, %v8649
        %v8651 = vpop.f32.mrb[0].mxu0
        %8652 = vmatprep.mubr.f32.mxu0 %v5568
        %8653 = vmatmul.mubr.f32.gmra.mrb[0].mxu0 %v8506
        %v8654 = vpop.f32.mrb[0].mxu0
        %v8655 = vadd.f32 %v8530, %v8654
        %v8656 = vpop.f32.mrb[0].mxu0
        %8657 = vdwg.mxu0
        %v8658 = vmax.f32 %v8620, 0.0
        %v8659 = vmax.f32 %v8625, 0.0
        %v8660 = vmax.f32 %v8630, 0.0
        %v8661 = vmax.f32 %v8635, 0.0
        %v8662 = vmax.f32 %v8640, 0.0
        %v8663 = vmax.f32 %v8645, 0.0
        %v8664 = vmax.f32 %v8650, 0.0
        %v8665 = vmax.f32 %v8655, 0.0
        %v8666 = vld [vmem:[%s43] sm:$0xff]
        %v8667 = vld [vmem:[%s43 + $0x8] sm:$0xff]
        %v8668 = vld [vmem:[%s43 + $0x10] sm:$0xff]
        %v8669 = vld [vmem:[%s43 + $0x18] sm:$0xff]
        %v8670 = vld [vmem:[%s43 + $0x20] sm:$0xff]
        %v8671 = vld [vmem:[%s43 + $0x28] sm:$0xff]
        %v8672 = vld [vmem:[%s43 + $0x30] sm:$0xff]
        %v8673 = vld [vmem:[%s43 + $0x38] sm:$0xff]
        %v8674 = vld [vmem:[%s43 + $0x40] sm:$0xff]
        %v8675 = vld [vmem:[%s43 + $0x48] sm:$0xff]
        %v8676 = vld [vmem:[%s43 + $0x50] sm:$0xff]
        %v8677 = vld [vmem:[%s43 + $0x58] sm:$0xff]
        %v8678 = vld [vmem:[%s43 + $0x60] sm:$0xff]
        %v8679 = vld [vmem:[%s43 + $0x68] sm:$0xff]
        %v8680 = vld [vmem:[%s43 + $0x70] sm:$0xff]
        %v8681 = vld [vmem:[%s43 + $0x78] sm:$0xff]
        %v8682 = vld [vmem:[%s43 + $0x80] sm:$0xff]
        %v8683 = vld [vmem:[%s43 + $0x88] sm:$0xff]
        %v8684 = vld [vmem:[%s43 + $0x90] sm:$0xff]
        %v8685 = vld [vmem:[%s43 + $0x98] sm:$0xff]
        %v8686 = vld [vmem:[%s43 + $0xa0] sm:$0xff]
        %v8687 = vld [vmem:[%s43 + $0xa8] sm:$0xff]
        %v8688 = vld [vmem:[%s43 + $0xb0] sm:$0xff]
        %v8689 = vld [vmem:[%s43 + $0xb8] sm:$0xff]
        %v8690 = vld [vmem:[%s43 + $0xc0] sm:$0xff]
        %v8691 = vld [vmem:[%s43 + $0xc8] sm:$0xff]
        %v8692 = vld [vmem:[%s43 + $0xd0] sm:$0xff]
        %v8693 = vld [vmem:[%s43 + $0xd8] sm:$0xff]
        %v8694 = vld [vmem:[%s43 + $0xe0] sm:$0xff]
        %v8695 = vld [vmem:[%s43 + $0xe8] sm:$0xff]
        %v8696 = vld [vmem:[%s43 + $0xf0] sm:$0xff]
        %v8697 = vld [vmem:[%s43 + $0xf8] sm:$0xff]
        %v8698 = vld [vmem:[%s43 + $0x100] sm:$0xff]
        %v8699 = vld [vmem:[%s43 + $0x108] sm:$0xff]
        %v8700 = vld [vmem:[%s43 + $0x110] sm:$0xff]
        %v8701 = vld [vmem:[%s43 + $0x118] sm:$0xff]
        %v8702 = vld [vmem:[%s45] sm:$0x1]
        %v8704 = vlaneseq
        %v8705 = vshrl.u32 %v8704, 7
        %v8706 = vsub.s32 0, %v8705
        %v8707 = vrot.slane %v8702, %v8706
        %8709 = vmatprep.subr.mxu0 0.0
        %8710 = vmatpush1.msra.mxu0 %v8666
        %8711 = vmatprep.subr.mxu0 0.0
        %8712 = vmatpush1.msra.mxu0 %v8667
        %8713 = vmatprep.subr.mxu0 0.0
        %8714 = vmatpush1.msra.mxu0 %v8668
        %8715 = vmatprep.subr.mxu0 0.0
        %8716 = vmatpush1.msra.mxu0 %v8669
        %8717 = vmatprep.subr.mxu0 0.0
        %8718 = vmatpush1.msra.mxu0 %v8670
        %8719 = vmatprep.subr.mxu0 0.0
        %8720 = vmatpush1.msra.mxu0 %v8671
        %8721 = vmatprep.subr.mxu0 0.0
        %8722 = vmatpush1.msra.mxu0 %v8672
        %8723 = vmatprep.subr.mxu0 0.0
        %8724 = vmatpush1.msra.mxu0 %v8673
        %8725 = vmatprep.subr.mxu0 0.0
        %8726 = vmatpush1.msra.mxu0 %v8674
        %8727 = vmatprep.subr.mxu0 0.0
        %8728 = vmatpush1.msra.mxu0 %v8675
        %8729 = vmatprep.subr.mxu0 0.0
        %8730 = vmatpush1.msra.mxu0 %v8676
        %8731 = vmatprep.subr.mxu0 0.0
        %8732 = vmatpush1.msra.mxu0 %v8677
        %8733 = vmatprep.subr.mxu0 0.0
        %8734 = vmatpush1.msra.mxu0 %v8678
        %8735 = vmatprep.subr.mxu0 0.0
        %8736 = vmatpush1.msra.mxu0 %v8679
        %8737 = vmatprep.subr.mxu0 0.0
        %8738 = vmatpush1.msra.mxu0 %v8680
        %8739 = vmatprep.subr.mxu0 0.0
        %8740 = vmatpush1.msra.mxu0 %v8681
        %8741 = vmatprep.subr.mxu0 0.0
        %8742 = vmatpush1.msra.mxu0 %v8682
        %8743 = vmatprep.subr.mxu0 0.0
        %8744 = vmatpush1.msra.mxu0 %v8683
        %8745 = vmatprep.subr.mxu0 0.0
        %8746 = vmatpush1.msra.mxu0 %v8684
        %8747 = vmatprep.subr.mxu0 0.0
        %8748 = vmatpush1.msra.mxu0 %v8685
        %8749 = vmatprep.subr.mxu0 0.0
        %8750 = vmatpush1.msra.mxu0 %v8686
        %8751 = vmatprep.subr.mxu0 0.0
        %8752 = vmatpush1.msra.mxu0 %v8687
        %8753 = vmatprep.subr.mxu0 0.0
        %8754 = vmatpush1.msra.mxu0 %v8688
        %8755 = vmatprep.subr.mxu0 0.0
        %8756 = vmatpush1.msra.mxu0 %v8689
        %8757 = vmatprep.subr.mxu0 0.0
        %8758 = vmatpush1.msra.mxu0 %v8690
        %8759 = vmatprep.subr.mxu0 0.0
        %8760 = vmatpush1.msra.mxu0 %v8691
        %8761 = vmatprep.subr.mxu0 0.0
        %8762 = vmatpush1.msra.mxu0 %v8692
        %8763 = vmatprep.subr.mxu0 0.0
        %8764 = vmatpush1.msra.mxu0 %v8693
        %8765 = vmatprep.subr.mxu0 0.0
        %8766 = vmatpush1.msra.mxu0 %v8694
        %8767 = vmatprep.subr.mxu0 0.0
        %8768 = vmatpush1.msra.mxu0 %v8695
        %8769 = vmatprep.subr.mxu0 0.0
        %8770 = vmatpush1.msra.mxu0 %v8696
        %8771 = vmatprep.subr.mxu0 0.0
        %8772 = vmatpush1.msra.mxu0 %v8697
        %8773 = vmatprep.mubr.f32.mxu0 %v7844
        %8774 = vmatmul.mubr.f32.gmra.mrb[0].mxu0 %v7838
        %v8775 = vpop.f32.mrb[0].mxu0
        %v8776 = vadd.f32 %v8707, %v8775
        %v8777 = vpop.f32.mrb[0].mxu0
        %8778 = vmatprep.mubr.f32.mxu0 %v7845
        %8779 = vmatmul.mubr.f32.gmra.mrb[0].mxu0 %v7839
        %v8780 = vpop.f32.mrb[0].mxu0
        %v8781 = vadd.f32 %v8707, %v8780
        %v8782 = vpop.f32.mrb[0].mxu0
        %8783 = vdwg.mxu0
        %8784 = vmatprep.subr.mxu0 0.0
        %8785 = vmatpush1.msra.mxu0 %v8698
        %8786 = vmatprep.subr.mxu0 0.0
        %8787 = vmatpush1.msra.mxu0 %v8699
        %8788 = vmatprep.subr.mxu0 0.0
        %8789 = vmatpush1.msra.mxu0 %v8700
        %8790 = vmatprep.subr.mxu0 0.0
        %8791 = vmatpush1.msra.mxu0 %v8701
        %8792 = vmatprep.subr.mxu0 0.0
        %8793 = vmatpush1.msra.mxu0 0.0
        %8794 = vmatprep.subr.mxu0 0.0
        %8795 = vmatpush1.msra.mxu0 0.0
        %8796 = vmatprep.subr.mxu0 0.0
        %8797 = vmatpush1.msra.mxu0 0.0
        %8798 = vmatprep.subr.mxu0 0.0
        %8799 = vmatpush1.msra.mxu0 0.0
        %8800 = vmatprep.subr.mxu0 0.0
        %8801 = vmatpush1.msra.mxu0 0.0
        %8802 = vmatprep.subr.mxu0 0.0
        %8803 = vmatpush1.msra.mxu0 0.0
        %8804 = vmatprep.subr.mxu0 0.0
        %8805 = vmatpush1.msra.mxu0 0.0
        %8806 = vmatprep.subr.mxu0 0.0
        %8807 = vmatpush1.msra.mxu0 0.0
        %8808 = vmatprep.subr.mxu0 0.0
        %8809 = vmatpush1.msra.mxu0 0.0
        %8810 = vmatprep.subr.mxu0 0.0
        %8811 = vmatpush1.msra.mxu0 0.0
        %8812 = vmatprep.subr.mxu0 0.0
        %8813 = vmatpush1.msra.mxu0 0.0
        %8814 = vmatprep.subr.mxu0 0.0
        %8815 = vmatpush1.msra.mxu0 0.0
        %8816 = vmatprep.subr.mxu0 0.0
        %8817 = vmatpush1.msra.mxu0 0.0
        %8818 = vmatprep.subr.mxu0 0.0
        %8819 = vmatpush1.msra.mxu0 0.0
        %8820 = vmatprep.subr.mxu0 0.0
        %8821 = vmatpush1.msra.mxu0 0.0
        %8822 = vmatprep.subr.mxu0 0.0
        %8823 = vmatpush1.msra.mxu0 0.0
        %8824 = vmatprep.subr.mxu0 0.0
        %8825 = vmatpush1.msra.mxu0 0.0
        %8826 = vmatprep.subr.mxu0 0.0
        %8827 = vmatpush1.msra.mxu0 0.0
        %8828 = vmatprep.subr.mxu0 0.0
        %8829 = vmatpush1.msra.mxu0 0.0
        %8830 = vmatprep.subr.mxu0 0.0
        %8831 = vmatpush1.msra.mxu0 0.0
        %8832 = vmatprep.subr.mxu0 0.0
        %8833 = vmatpush1.msra.mxu0 0.0
        %8834 = vmatprep.subr.mxu0 0.0
        %8835 = vmatpush1.msra.mxu0 0.0
        %8836 = vmatprep.subr.mxu0 0.0
        %8837 = vmatpush1.msra.mxu0 0.0
        %8838 = vmatprep.subr.mxu0 0.0
        %8839 = vmatpush1.msra.mxu0 0.0
        %8840 = vmatprep.subr.mxu0 0.0
        %8841 = vmatpush1.msra.mxu0 0.0
        %8842 = vmatprep.subr.mxu0 0.0
        %8843 = vmatpush1.msra.mxu0 0.0
        %8844 = vmatprep.subr.mxu0 0.0
        %8845 = vmatpush1.msra.mxu0 0.0
        %8846 = vmatprep.subr.mxu0 0.0
        %8847 = vmatpush1.msra.mxu0 0.0
        %8848 = vmatprep.mubr.f32.mxu0 0.0
        %8849 = vmatmul.mubr.f32.gmra.mrb[0].mxu0 %v7890
        %v8850 = vpop.f32.mrb[0].mxu0
        %v8851 = vadd.f32 %v8776, %v8850
        %v8852 = vpop.f32.mrb[0].mxu0
        %8853 = vmatprep.mubr.f32.mxu0 0.0
        %8854 = vmatmul.mubr.f32.gmra.mrb[0].mxu0 %v7893
        %v8855 = vpop.f32.mrb[0].mxu0
        %v8856 = vadd.f32 %v8781, %v8855
        %v8857 = vpop.f32.mrb[0].mxu0
        %8858 = vdwg.mxu0
        %v8859 = vmax.f32 %v8851, 0.0
        %v8860 = vmax.f32 %v8856, 0.0
        %8861 = vmatprep.subr.mxu0 0.0
        %8862 = vmatpush1.msra.mxu0 %v8859
        %8863 = vmatprep.subr.mxu0 0.0
        %8864 = vmatpush1.msra.mxu0 %v8860
        %8865 = vmatprep.subr.mxu0 0.0
        %8866 = vmatpush1.msra.mxu0 0.0
        %8867 = vmatprep.subr.mxu0 0.0
        %8868 = vmatpush1.msra.mxu0 0.0
        %8869 = vmatprep.subr.mxu0 0.0
        %8870 = vmatpush1.msra.mxu0 0.0
        %8871 = vmatprep.subr.mxu0 0.0
        %8872 = vmatpush1.msra.mxu0 0.0
        %8873 = vmatprep.subr.mxu0 0.0
        %8874 = vmatpush1.msra.mxu0 0.0
        %8875 = vmatprep.subr.mxu0 0.0
        %8876 = vmatpush1.msra.mxu0 0.0
        %8877 = vmatprep.subr.mxu0 0.0
        %8878 = vmatpush1.msra.mxu0 0.0
        %8879 = vmatprep.subr.mxu0 0.0
        %8880 = vmatpush1.msra.mxu0 0.0
        %8881 = vmatprep.subr.mxu0 0.0
        %8882 = vmatpush1.msra.mxu0 0.0
        %8883 = vmatprep.subr.mxu0 0.0
        %8884 = vmatpush1.msra.mxu0 0.0
        %8885 = vmatprep.subr.mxu0 0.0
        %8886 = vmatpush1.msra.mxu0 0.0
        %8887 = vmatprep.subr.mxu0 0.0
        %8888 = vmatpush1.msra.mxu0 0.0
        %8889 = vmatprep.subr.mxu0 0.0
        %8890 = vmatpush1.msra.mxu0 0.0
        %8891 = vmatprep.subr.mxu0 0.0
        %8892 = vmatpush1.msra.mxu0 0.0
        %8893 = vmatprep.subr.mxu0 0.0
        %8894 = vmatpush1.msra.mxu0 0.0
        %8895 = vmatprep.subr.mxu0 0.0
        %8896 = vmatpush1.msra.mxu0 0.0
        %8897 = vmatprep.subr.mxu0 0.0
        %8898 = vmatpush1.msra.mxu0 0.0
        %8899 = vmatprep.subr.mxu0 0.0
        %8900 = vmatpush1.msra.mxu0 0.0
        %8901 = vmatprep.subr.mxu0 0.0
        %8902 = vmatpush1.msra.mxu0 0.0
        %8903 = vmatprep.subr.mxu0 0.0
        %8904 = vmatpush1.msra.mxu0 0.0
        %8905 = vmatprep.subr.mxu0 0.0
        %8906 = vmatpush1.msra.mxu0 0.0
        %8907 = vmatprep.subr.mxu0 0.0
        %8908 = vmatpush1.msra.mxu0 0.0
        %8909 = vmatprep.subr.mxu0 0.0
        %8910 = vmatpush1.msra.mxu0 0.0
        %8911 = vmatprep.subr.mxu0 0.0
        %8912 = vmatpush1.msra.mxu0 0.0
        %8913 = vmatprep.subr.mxu0 0.0
        %8914 = vmatpush1.msra.mxu0 0.0
        %8915 = vmatprep.subr.mxu0 0.0
        %8916 = vmatpush1.msra.mxu0 0.0
        %8917 = vmatprep.subr.mxu0 0.0
        %8918 = vmatpush1.msra.mxu0 0.0
        %8919 = vmatprep.subr.mxu0 0.0
        %8920 = vmatpush1.msra.mxu0 0.0
        %8921 = vmatprep.subr.mxu0 0.0
        %8922 = vmatpush1.msra.mxu0 0.0
        %8923 = vmatprep.subr.mxu0 0.0
        %8924 = vmatpush1.msra.mxu0 0.0
        %8925 = vmatprep.mubr.f32.mxu0 0.0
        %8926 = vmatmul.mubr.f32.gmra.mrb[0].mxu0 %v7097
        %v8927 = vpop.f32.mrb[0].mxu0
        %v8928 = vadd.f32 %v8658, %v8927
        %v8929 = vpop.f32.mrb[0].mxu0
        %8930 = vmatprep.mubr.f32.mxu0 0.0
        %8931 = vmatmul.mubr.f32.gmra.mrb[0].mxu0 %v7100
        %v8932 = vpop.f32.mrb[0].mxu0
        %v8933 = vadd.f32 %v8659, %v8932
        %v8934 = vpop.f32.mrb[0].mxu0
        %8935 = vmatprep.mubr.f32.mxu0 0.0
        %8936 = vmatmul.mubr.f32.gmra.mrb[0].mxu0 %v7103
        %v8937 = vpop.f32.mrb[0].mxu0
        %v8938 = vadd.f32 %v8660, %v8937
        %v8939 = vpop.f32.mrb[0].mxu0
        %8940 = vmatprep.mubr.f32.mxu0 0.0
        %8941 = vmatmul.mubr.f32.gmra.mrb[0].mxu0 %v7106
        %v8942 = vpop.f32.mrb[0].mxu0
        %v8943 = vadd.f32 %v8661, %v8942
        %v8944 = vpop.f32.mrb[0].mxu0
        %8945 = vmatprep.mubr.f32.mxu0 0.0
        %8946 = vmatmul.mubr.f32.gmra.mrb[0].mxu0 %v7109
        %v8947 = vpop.f32.mrb[0].mxu0
        %v8948 = vadd.f32 %v8662, %v8947
        %v8949 = vpop.f32.mrb[0].mxu0
        %8950 = vmatprep.mubr.f32.mxu0 0.0
        %8951 = vmatmul.mubr.f32.gmra.mrb[0].mxu0 %v7112
        %v8952 = vpop.f32.mrb[0].mxu0
        %v8953 = vadd.f32 %v8663, %v8952
        %v8954 = vpop.f32.mrb[0].mxu0
        %8955 = vmatprep.mubr.f32.mxu0 0.0
        %8956 = vmatmul.mubr.f32.gmra.mrb[0].mxu0 %v7115
        %v8957 = vpop.f32.mrb[0].mxu0
        %v8958 = vadd.f32 %v8664, %v8957
        %v8959 = vpop.f32.mrb[0].mxu0
        %8960 = vmatprep.mubr.f32.mxu0 0.0
        %8961 = vmatmul.mubr.f32.gmra.mrb[0].mxu0 %v7118
        %v8962 = vpop.f32.mrb[0].mxu0
        %v8963 = vadd.f32 %v8665, %v8962
        %v8964 = vpop.f32.mrb[0].mxu0
        %8965 = vdwg.mxu0
        %v8973 = vrot.slane %v8928, 7
        %v8974 = vrot.slane %v8933, 7
        %v8975 = vsel %vm1056, %v8973, %v8974
        %v8976 = vrot.slane %v8938, 7
        %v8977 = vsel %vm1056, %v8974, %v8976
        %v8978 = vrot.slane %v8943, 7
        %v8979 = vsel %vm1056, %v8976, %v8978
        %v8980 = vrot.slane %v8948, 7
        %v8981 = vsel %vm1056, %v8978, %v8980
        %v8982 = vrot.slane %v8953, 7
        %v8983 = vsel %vm1056, %v8980, %v8982
        %v8984 = vrot.slane %v8958, 7
        %v8985 = vsel %vm1056, %v8982, %v8984
        %v8993 = vsel %vm1056, 0.0, %v8973
        %v8994 = vsel %vm5173, 0.0, %v8993
        %v8995 = vsel %vm5174, 0.0, %v8975
        %v8996 = vsel %vm5175, 0.0, %v8977
        %v8997 = vsel %vm5176, 0.0, %v8979
        %v8998 = vsel %vm5177, 0.0, %v8981
        %v8999 = vsel %vm5178, 0.0, %v8983
        %v9000 = vsel %vm5179, 0.0, %v8985
        %v9002 = vrot.slane %v8928, 1
        %v9003 = vrot.slane %v8933, 1
        %v9004 = vsel %vm1210, %v9002, %v9003
        %v9005 = vrot.slane %v8938, 1
        %v9006 = vsel %vm1210, %v9003, %v9005
        %v9007 = vrot.slane %v8943, 1
        %v9008 = vsel %vm1210, %v9005, %v9007
        %v9009 = vrot.slane %v8948, 1
        %v9010 = vsel %vm1210, %v9007, %v9009
        %v9011 = vrot.slane %v8953, 1
        %v9012 = vsel %vm1210, %v9009, %v9011
        %v9013 = vrot.slane %v8958, 1
        %v9014 = vsel %vm1210, %v9011, %v9013
        %v9015 = vrot.slane %v8963, 1
        %v9016 = vsel %vm1210, %v9013, %v9015
        %v9025 = vsel %vm1210, 0.0, %v9002
        %v9026 = vsel %vm5212, 0.0, %v9025
        %v9027 = vsel %vm5213, 0.0, %v9004
        %v9028 = vsel %vm5214, 0.0, %v9006
        %v9029 = vsel %vm5215, 0.0, %v9008
        %v9030 = vsel %vm5216, 0.0, %v9010
        %v9031 = vsel %vm5217, 0.0, %v9012
        %v9032 = vsel %vm5218, 0.0, %v9014
        %v9033 = vsel %vm5219, 0.0, %v9016
        %v9034 = vrot.slane %v8963, 7
        %v9035 = vsel %vm1056, %v8984, %v9034
        %v9037 = vsel %vm5172, 0.0, %v8993
        %v9038 = vsel %vm5173, 0.0, %v8975
        %v9039 = vsel %vm5174, 0.0, %v8977
        %v9040 = vsel %vm5175, 0.0, %v8979
        %v9041 = vsel %vm5176, 0.0, %v8981
        %v9042 = vsel %vm5177, 0.0, %v8983
        %v9043 = vsel %vm5178, 0.0, %v8985
        %v9044 = vsel %vm5179, 0.0, %v9035
        %v9046 = vsel %vm1210, %v9015, 0.0
        %v9047 = vsel %vm5212, 0.0, %v9004
        %v9048 = vsel %vm5213, 0.0, %v9006
        %v9049 = vsel %vm5214, 0.0, %v9008
        %v9050 = vsel %vm5215, 0.0, %v9010
        %v9051 = vsel %vm5216, 0.0, %v9012
        %v9052 = vsel %vm5217, 0.0, %v9014
        %v9053 = vsel %vm5218, 0.0, %v9016
        %v9054 = vsel %vm5219, 0.0, %v9046
        %v9056 = vsel %vm1056, %v9034, 0.0
        %v9057 = vsel %vm5172, 0.0, %v8975
        %v9058 = vsel %vm5173, 0.0, %v8977
        %v9059 = vsel %vm5174, 0.0, %v8979
        %v9060 = vsel %vm5175, 0.0, %v8981
        %v9061 = vsel %vm5176, 0.0, %v8983
        %v9062 = vsel %vm5177, 0.0, %v8985
        %v9063 = vsel %vm5178, 0.0, %v9035
        %v9064 = vsel %vm5179, 0.0, %v9056
        %v9065 = vsel %vm5212, 0.0, %v9006
        %v9066 = vsel %vm5213, 0.0, %v9008
        %v9067 = vsel %vm5214, 0.0, %v9010
        %v9068 = vsel %vm5215, 0.0, %v9012
        %v9069 = vsel %vm5216, 0.0, %v9014
        %v9070 = vsel %vm5217, 0.0, %v9016
        %v9071 = vsel %vm5218, 0.0, %v9046
        %9072 = vrot.lane.b32.xlu0 %v8928, 16
        %v9073 = vpop.permute.xlu0 %9072
        %9074 = vrot.lane.b32.xlu0 %v8933, 16
        %v9075 = vpop.permute.xlu0 %9074
        %9076 = vrot.lane.b32.xlu0 %v8938, 16
        %v9077 = vpop.permute.xlu0 %9076
        %9078 = vrot.lane.b32.xlu0 %v8943, 16
        %v9079 = vpop.permute.xlu0 %9078
        %9080 = vrot.lane.b32.xlu0 %v8948, 16
        %v9081 = vpop.permute.xlu0 %9080
        %9082 = vrot.lane.b32.xlu0 %v8953, 16
        %v9083 = vpop.permute.xlu0 %9082
        %9084 = vrot.lane.b32.xlu0 %v8958, 16
        %v9085 = vpop.permute.xlu0 %9084
        %9101 = vrot.lane.b32.xlu0 %v9026, 32
        %v9102 = vpop.permute.xlu0 %9101
        %9103 = vrot.lane.b32.xlu0 %v9027, 32
        %v9104 = vpop.permute.xlu0 %9103
        %9105 = vrot.lane.b32.xlu0 %v9028, 32
        %v9106 = vpop.permute.xlu0 %9105
        %9107 = vrot.lane.b32.xlu0 %v9029, 32
        %v9108 = vpop.permute.xlu0 %9107
        %9109 = vrot.lane.b32.xlu0 %v9030, 32
        %v9110 = vpop.permute.xlu0 %9109
        %9111 = vrot.lane.b32.xlu0 %v9031, 32
        %v9112 = vpop.permute.xlu0 %9111
        %9113 = vrot.lane.b32.xlu0 %v9032, 32
        %v9114 = vpop.permute.xlu0 %9113
        %9115 = vrot.lane.b32.xlu0 %v9033, 32
        %v9116 = vpop.permute.xlu0 %9115
        %9133 = vrot.lane.b32.xlu0 %v9037, 48
        %v9134 = vpop.permute.xlu0 %9133
        %9135 = vrot.lane.b32.xlu0 %v9038, 48
        %v9136 = vpop.permute.xlu0 %9135
        %9137 = vrot.lane.b32.xlu0 %v9039, 48
        %v9138 = vpop.permute.xlu0 %9137
        %9139 = vrot.lane.b32.xlu0 %v9040, 48
        %v9140 = vpop.permute.xlu0 %9139
        %9141 = vrot.lane.b32.xlu0 %v9041, 48
        %v9142 = vpop.permute.xlu0 %9141
        %9143 = vrot.lane.b32.xlu0 %v9042, 48
        %v9144 = vpop.permute.xlu0 %9143
        %9145 = vrot.lane.b32.xlu0 %v9043, 48
        %v9146 = vpop.permute.xlu0 %9145
        %9147 = vrot.lane.b32.xlu0 %v9044, 48
        %v9148 = vpop.permute.xlu0 %9147
        %9157 = vrot.lane.b32.xlu0 %v8928, 64
        %v9158 = vpop.permute.xlu0 %9157
        %9159 = vrot.lane.b32.xlu0 %v8933, 64
        %v9160 = vpop.permute.xlu0 %9159
        %9161 = vrot.lane.b32.xlu0 %v8938, 64
        %v9162 = vpop.permute.xlu0 %9161
        %9163 = vrot.lane.b32.xlu0 %v8943, 64
        %v9164 = vpop.permute.xlu0 %9163
        %9165 = vrot.lane.b32.xlu0 %v8948, 64
        %v9166 = vpop.permute.xlu0 %9165
        %9167 = vrot.lane.b32.xlu0 %v8953, 64
        %v9168 = vpop.permute.xlu0 %9167
        %9169 = vrot.lane.b32.xlu0 %v8958, 64
        %v9170 = vpop.permute.xlu0 %9169
        %9171 = vrot.lane.b32.xlu0 %v8963, 64
        %v9172 = vpop.permute.xlu0 %9171
        %9189 = vrot.lane.b32.xlu0 %v9047, 80
        %v9190 = vpop.permute.xlu0 %9189
        %9191 = vrot.lane.b32.xlu0 %v9048, 80
        %v9192 = vpop.permute.xlu0 %9191
        %9193 = vrot.lane.b32.xlu0 %v9049, 80
        %v9194 = vpop.permute.xlu0 %9193
        %9195 = vrot.lane.b32.xlu0 %v9050, 80
        %v9196 = vpop.permute.xlu0 %9195
        %9197 = vrot.lane.b32.xlu0 %v9051, 80
        %v9198 = vpop.permute.xlu0 %9197
        %9199 = vrot.lane.b32.xlu0 %v9052, 80
        %v9200 = vpop.permute.xlu0 %9199
        %9201 = vrot.lane.b32.xlu0 %v9053, 80
        %v9202 = vpop.permute.xlu0 %9201
        %9203 = vrot.lane.b32.xlu0 %v9054, 80
        %v9204 = vpop.permute.xlu0 %9203
        %9221 = vrot.lane.b32.xlu0 %v9057, 96
        %v9222 = vpop.permute.xlu0 %9221
        %9223 = vrot.lane.b32.xlu0 %v9058, 96
        %v9224 = vpop.permute.xlu0 %9223
        %9225 = vrot.lane.b32.xlu0 %v9059, 96
        %v9226 = vpop.permute.xlu0 %9225
        %9227 = vrot.lane.b32.xlu0 %v9060, 96
        %v9228 = vpop.permute.xlu0 %9227
        %9229 = vrot.lane.b32.xlu0 %v9061, 96
        %v9230 = vpop.permute.xlu0 %9229
        %9231 = vrot.lane.b32.xlu0 %v9062, 96
        %v9232 = vpop.permute.xlu0 %9231
        %9233 = vrot.lane.b32.xlu0 %v9063, 96
        %v9234 = vpop.permute.xlu0 %9233
        %9235 = vrot.lane.b32.xlu0 %v9064, 96
        %v9236 = vpop.permute.xlu0 %9235
        %9245 = vrot.lane.b32.xlu0 %v8933, 112
        %v9246 = vpop.permute.xlu0 %9245
        %9247 = vrot.lane.b32.xlu0 %v8938, 112
        %v9248 = vpop.permute.xlu0 %9247
        %9249 = vrot.lane.b32.xlu0 %v8943, 112
        %v9250 = vpop.permute.xlu0 %9249
        %9251 = vrot.lane.b32.xlu0 %v8948, 112
        %v9252 = vpop.permute.xlu0 %9251
        %9253 = vrot.lane.b32.xlu0 %v8953, 112
        %v9254 = vpop.permute.xlu0 %9253
        %9255 = vrot.lane.b32.xlu0 %v8958, 112
        %v9256 = vpop.permute.xlu0 %9255
        %9257 = vrot.lane.b32.xlu0 %v8963, 112
        %v9258 = vpop.permute.xlu0 %9257
        %v9266 = vsel %vm4415, %v8994, %v9073
        %v9267 = vsel %vm4415, %v8995, %v9075
        %v9268 = vsel %vm4415, %v8996, %v9077
        %v9269 = vsel %vm4415, %v8997, %v9079
        %v9270 = vsel %vm4415, %v8998, %v9081
        %v9271 = vsel %vm4415, %v8999, %v9083
        %v9272 = vsel %vm4415, %v9000, %v9085
        %v9273 = vsel %vm4480, %v5463, %v9102
        %v9274 = vsel %vm4480, %v9266, %v9104
        %v9275 = vsel %vm4480, %v9267, %v9106
        %v9276 = vsel %vm4480, %v9268, %v9108
        %v9277 = vsel %vm4480, %v9269, %v9110
        %v9278 = vsel %vm4480, %v9270, %v9112
        %v9279 = vsel %vm4480, %v9271, %v9114
        %v9280 = vsel %vm4480, %v9272, %v9116
        %v9281 = vsel %vm4546, %v9273, %v9134
        %v9282 = vsel %vm4546, %v9274, %v9136
        %v9283 = vsel %vm4546, %v9275, %v9138
        %v9284 = vsel %vm4546, %v9276, %v9140
        %v9285 = vsel %vm4546, %v9277, %v9142
        %v9286 = vsel %vm4546, %v9278, %v9144
        %v9287 = vsel %vm4546, %v9279, %v9146
        %v9288 = vsel %vm4546, %v9280, %v9148
        %v9289 = vsel %vm4612, %v9281, %v9158
        %v9290 = vsel %vm4612, %v9282, %v9160
        %v9291 = vsel %vm4612, %v9283, %v9162
        %v9292 = vsel %vm4612, %v9284, %v9164
        %v9293 = vsel %vm4612, %v9285, %v9166
        %v9294 = vsel %vm4612, %v9286, %v9168
        %v9295 = vsel %vm4612, %v9287, %v9170
        %v9296 = vsel %vm4612, %v9288, %v9172
        %v9297 = vsel %vm5495, %v9289, %v9190
        %v9298 = vsel %vm5495, %v9290, %v9192
        %v9299 = vsel %vm5495, %v9291, %v9194
        %v9300 = vsel %vm5495, %v9292, %v9196
        %v9301 = vsel %vm5495, %v9293, %v9198
        %v9302 = vsel %vm5495, %v9294, %v9200
        %v9303 = vsel %vm5495, %v9295, %v9202
        %v9304 = vsel %vm5495, %v9296, %v9204
        %v9305 = vsel %vm5504, %v9297, %v9222
        %v9306 = vsel %vm5504, %v9298, %v9224
        %v9307 = vsel %vm5504, %v9299, %v9226
        %v9308 = vsel %vm5504, %v9300, %v9228
        %v9309 = vsel %vm5504, %v9301, %v9230
        %v9310 = vsel %vm5504, %v9302, %v9232
        %v9311 = vsel %vm5504, %v9303, %v9234
        %v9312 = vsel %vm5504, %v9304, %v9236
        %v9313 = vsel %vm5513, %v9305, %v9246
        %v9314 = vsel %vm5513, %v9306, %v9248
        %v9315 = vsel %vm5513, %v9307, %v9250
        %v9316 = vsel %vm5513, %v9308, %v9252
        %v9317 = vsel %vm5513, %v9309, %v9254
        %v9318 = vsel %vm5513, %v9310, %v9256
        %v9319 = vsel %vm5513, %v9311, %v9258
        %v9320 = vsel %vm5513, %v9312, %v5454
        %v9321 = vld [vmem:[%s47] sm:$0xff]
        %v9322 = vld [vmem:[%s47 + $0x8] sm:$0xff]
        %v9323 = vld [vmem:[%s47 + $0x10] sm:$0xff]
        %v9324 = vld [vmem:[%s47 + $0x18] sm:$0xff]
        %v9325 = vld [vmem:[%s47 + $0x20] sm:$0xff]
        %v9326 = vld [vmem:[%s47 + $0x28] sm:$0xff]
        %v9327 = vld [vmem:[%s47 + $0x30] sm:$0xff]
        %v9328 = vld [vmem:[%s47 + $0x38] sm:$0xff]
        %v9329 = vld [vmem:[%s47 + $0x40] sm:$0xff]
        %v9330 = vld [vmem:[%s47 + $0x48] sm:$0xff]
        %v9331 = vld [vmem:[%s47 + $0x50] sm:$0xff]
        %v9332 = vld [vmem:[%s47 + $0x58] sm:$0xff]
        %v9333 = vld [vmem:[%s47 + $0x60] sm:$0xff]
        %v9334 = vld [vmem:[%s47 + $0x68] sm:$0xff]
        %v9335 = vld [vmem:[%s47 + $0x70] sm:$0xff]
        %v9336 = vld [vmem:[%s47 + $0x78] sm:$0xff]
        %v9337 = vld [vmem:[%s47 + $0x80] sm:$0xff]
        %v9338 = vld [vmem:[%s47 + $0x88] sm:$0xff]
        %v9339 = vld [vmem:[%s49] sm:$0x1]
        %v9341 = vlaneseq
        %v9342 = vshrl.u32 %v9341, 7
        %v9343 = vsub.s32 0, %v9342
        %v9344 = vrot.slane %v9339, %v9343
        %v9347 = vsel %vm4415, %v9065, 0
        %v9350 = vsel %vm4415, %v9066, 0
        %v9353 = vsel %vm4415, %v9067, 0
        %v9356 = vsel %vm4415, %v9068, 0
        %v9359 = vsel %vm4415, %v9069, 0
        %v9362 = vsel %vm4415, %v9070, 0
        %v9365 = vsel %vm4415, %v9071, 0
        %9367 = vmatprep.subr.mxu0 0.0
        %9368 = vmatpush1.msra.mxu0 %v9321
        %9369 = vmatprep.subr.mxu0 0.0
        %9370 = vmatpush1.msra.mxu0 %v9322
        %9371 = vmatprep.subr.mxu0 0.0
        %9372 = vmatpush1.msra.mxu0 %v9323
        %9373 = vmatprep.subr.mxu0 0.0
        %9374 = vmatpush1.msra.mxu0 %v9324
        %9375 = vmatprep.subr.mxu0 0.0
        %9376 = vmatpush1.msra.mxu0 %v9325
        %9377 = vmatprep.subr.mxu0 0.0
        %9378 = vmatpush1.msra.mxu0 %v9326
        %9379 = vmatprep.subr.mxu0 0.0
        %9380 = vmatpush1.msra.mxu0 %v9327
        %9381 = vmatprep.subr.mxu0 0.0
        %9382 = vmatpush1.msra.mxu0 %v9328
        %9383 = vmatprep.subr.mxu0 0.0
        %9384 = vmatpush1.msra.mxu0 %v9329
        %9385 = vmatprep.subr.mxu0 0.0
        %9386 = vmatpush1.msra.mxu0 %v9330
        %9387 = vmatprep.subr.mxu0 0.0
        %9388 = vmatpush1.msra.mxu0 %v9331
        %9389 = vmatprep.subr.mxu0 0.0
        %9390 = vmatpush1.msra.mxu0 %v9332
        %9391 = vmatprep.subr.mxu0 0.0
        %9392 = vmatpush1.msra.mxu0 %v9333
        %9393 = vmatprep.subr.mxu0 0.0
        %9394 = vmatpush1.msra.mxu0 %v9334
        %9395 = vmatprep.subr.mxu0 0.0
        %9396 = vmatpush1.msra.mxu0 %v9335
        %9397 = vmatprep.subr.mxu0 0.0
        %9398 = vmatpush1.msra.mxu0 %v9336
        %9399 = vmatprep.subr.mxu0 0.0
        %9400 = vmatpush1.msra.mxu0 %v9337
        %9401 = vmatprep.subr.mxu0 0.0
        %9402 = vmatpush1.msra.mxu0 %v9338
        %9403 = vmatprep.subr.mxu0 0.0
        %9404 = vmatpush1.msra.mxu0 0.0
        %9405 = vmatprep.subr.mxu0 0.0
        %9406 = vmatpush1.msra.mxu0 0.0
        %9407 = vmatprep.subr.mxu0 0.0
        %9408 = vmatpush1.msra.mxu0 0.0
        %9409 = vmatprep.subr.mxu0 0.0
        %9410 = vmatpush1.msra.mxu0 0.0
        %9411 = vmatprep.subr.mxu0 0.0
        %9412 = vmatpush1.msra.mxu0 0.0
        %9413 = vmatprep.subr.mxu0 0.0
        %9414 = vmatpush1.msra.mxu0 0.0
        %9415 = vmatprep.subr.mxu0 0.0
        %9416 = vmatpush1.msra.mxu0 0.0
        %9417 = vmatprep.subr.mxu0 0.0
        %9418 = vmatpush1.msra.mxu0 0.0
        %9419 = vmatprep.subr.mxu0 0.0
        %9420 = vmatpush1.msra.mxu0 0.0
        %9421 = vmatprep.subr.mxu0 0.0
        %9422 = vmatpush1.msra.mxu0 0.0
        %9423 = vmatprep.subr.mxu0 0.0
        %9424 = vmatpush1.msra.mxu0 0.0
        %9425 = vmatprep.subr.mxu0 0.0
        %9426 = vmatpush1.msra.mxu0 0.0
        %9427 = vmatprep.subr.mxu0 0.0
        %9428 = vmatpush1.msra.mxu0 0.0
        %9429 = vmatprep.subr.mxu0 0.0
        %9430 = vmatpush1.msra.mxu0 0.0
        %9431 = vmatprep.mubr.f32.mxu0 %v9347
        %9432 = vmatmul.mubr.f32.gmra.mrb[0].mxu0 %v9313
        %v9433 = vpop.f32.mrb[0].mxu0
        %v9434 = vadd.f32 %v9344, %v9433
        %v9435 = vpop.f32.mrb[0].mxu0
        %9436 = vmatprep.mubr.f32.mxu0 %v9350
        %9437 = vmatmul.mubr.f32.gmra.mrb[0].mxu0 %v9314
        %v9438 = vpop.f32.mrb[0].mxu0
        %v9439 = vadd.f32 %v9344, %v9438
        %v9440 = vpop.f32.mrb[0].mxu0
        %9441 = vmatprep.mubr.f32.mxu0 %v9353
        %9442 = vmatmul.mubr.f32.gmra.mrb[0].mxu0 %v9315
        %v9443 = vpop.f32.mrb[0].mxu0
        %v9444 = vadd.f32 %v9344, %v9443
        %v9445 = vpop.f32.mrb[0].mxu0
        %9446 = vmatprep.mubr.f32.mxu0 %v9356
        %9447 = vmatmul.mubr.f32.gmra.mrb[0].mxu0 %v9316
        %v9448 = vpop.f32.mrb[0].mxu0
        %v9449 = vadd.f32 %v9344, %v9448
        %v9450 = vpop.f32.mrb[0].mxu0
        %9451 = vmatprep.mubr.f32.mxu0 %v9359
        %9452 = vmatmul.mubr.f32.gmra.mrb[0].mxu0 %v9317
        %v9453 = vpop.f32.mrb[0].mxu0
        %v9454 = vadd.f32 %v9344, %v9453
        %v9455 = vpop.f32.mrb[0].mxu0
        %9456 = vmatprep.mubr.f32.mxu0 %v9362
        %9457 = vmatmul.mubr.f32.gmra.mrb[0].mxu0 %v9318
        %v9458 = vpop.f32.mrb[0].mxu0
        %v9459 = vadd.f32 %v9344, %v9458
        %v9460 = vpop.f32.mrb[0].mxu0
        %9461 = vmatprep.mubr.f32.mxu0 %v9365
        %9462 = vmatmul.mubr.f32.gmra.mrb[0].mxu0 %v9319
        %v9463 = vpop.f32.mrb[0].mxu0
        %v9464 = vadd.f32 %v9344, %v9463
        %v9465 = vpop.f32.mrb[0].mxu0
        %9466 = vmatprep.mubr.f32.mxu0 %v5568
        %9467 = vmatmul.mubr.f32.gmra.mrb[0].mxu0 %v9320
        %v9468 = vpop.f32.mrb[0].mxu0
        %v9469 = vadd.f32 %v9344, %v9468
        %v9470 = vpop.f32.mrb[0].mxu0
        %9471 = vdwg.mxu0
        %v9472 = vmax.f32 %v9434, 0.0
        %v9473 = vmax.f32 %v9439, 0.0
        %v9474 = vmax.f32 %v9444, 0.0
        %v9475 = vmax.f32 %v9449, 0.0
        %v9476 = vmax.f32 %v9454, 0.0
        %v9477 = vmax.f32 %v9459, 0.0
        %v9478 = vmax.f32 %v9464, 0.0
        %v9479 = vmax.f32 %v9469, 0.0
        %9480 = vst.msk [vmem:[%s923] sm:$0xff] %vm4415, %v9472
        %9481 = vst.msk [vmem:[%s923 + $0x8] sm:$0xff] %vm4415, %v9473
        %9482 = vst.msk [vmem:[%s923 + $0x10] sm:$0xff] %vm4415, %v9474
        %9483 = vst.msk [vmem:[%s923 + $0x18] sm:$0xff] %vm4415, %v9475
        %9484 = vst.msk [vmem:[%s923 + $0x20] sm:$0xff] %vm4415, %v9476
        %9485 = vst.msk [vmem:[%s923 + $0x28] sm:$0xff] %vm4415, %v9477
        %9486 = vst.msk [vmem:[%s923 + $0x30] sm:$0xff] %vm4415, %v9478
        %9487 = vst.msk [vmem:[%s923 + $0x38] sm:$0xff] %vm4415, %v9479
        %s9488 = sand.u32 %s718, 1
        %s9489 = scalar_lea.sflag [#allocation3], %s9488
        %s9490 = sand.u32 %s718, 1
        %s9491 = smul.addr %s9490, 64
        %s9492 = scalar_lea.vmem [#allocation2], %s9491
        // Predicated region
        $region141: #{dla_compose_forward.1} parent=139 // pred_check
          %p9493 = pneg %p728
        $region142: #{dla_compose_forward.1} parent=139 // pred_check_branch
          %9495 = sbr.rel (%p9493) target = $region144
        $region143: #{dla_compose_forward.1} parent=139 // pred_region
          %s9497 = ssub.s32 1024, 1024
          %9498 = vsyncadd %s9489, %s9497
          %s9499 = smul.addr %s75, 8
          %s9500 = smul.addr %s9499, 128
          %s9501 = scalar_lea.hbm %s61, %s9500
          %s9502 = sshll.u32 %s9492, 4
          %s9503 = int_to_ptr.vmem [resolvable:$true] %s9502
          %9508 = dma.vmem_to_hbm [thread:$0]  %s9503, 1024, %s9501, %s9489, 128, 128, 8
        $region144: #{dla_compose_forward.1} parent=139 // pred_fallthru
          _
      $region140: #{dla_compose_forward.1} parent=5 // pred_fallthru
        _
      %p9509 = scmp.le.s32.totalorder 2, %s70
      // Predicated region
      $region145: #{dla_compose_forward.1} parent=5 // pred_check
        %p9510 = pneg %p9509
      $region146: #{dla_compose_forward.1} parent=5 // pred_check_branch
        %9512 = sbr.rel (%p9510) target = $region148
      $region147: #{dla_compose_forward.1} parent=5 // pred_region
        %s9513 = ssub.s32 %s70, 2
        // Predicated region
        $region149: #{dla_compose_forward.1} parent=147 // pred_check
          %p9514 = pneg %p734
        $region150: #{dla_compose_forward.1} parent=147 // pred_check_branch
          %9516 = sbr.rel (%p9514) target = $region152
        $region151: #{dla_compose_forward.1} parent=147 // pred_region
          %s9517 = sand.u32 %s719, 1
          %s9518 = scalar_lea.sflag [#allocation3], %s9517
          %s9519 = sand.u32 %s719, 1
          %s9520 = smul.addr %s9519, 64
          %s9521 = scalar_lea.vmem [#allocation2], %s9520
          %9522 = dma.done %s9518, 1024
        $region152: #{dla_compose_forward.1} parent=147 // pred_fallthru
          _
      $region148: #{dla_compose_forward.1} parent=5 // pred_fallthru
        _
    $region6: #{dla_compose_forward.1} parent=1 // loop_footer
      %s74 = sadd.s32 1, %s70
    $region7: #{dla_compose_forward.1} parent=1 // loop_footer_branch
      %69 = sbr.rel target = $region3
    $region8: #{dla_compose_forward.1} parent=1 // loop_exit
      _
    %9523 = vsyncpa [#allocation3], 1
    %s9524 = scalar_lea.sflag [#allocation3], 1
    %9525 = vsyncpa %s9524, 1

</llo_original>
